<compile_context>
chip_gen: v6e
topology: v6e:2x2x1
jax: 0.10.0
libtpu: 0.0.40
codegen_flags: <defaults>
</compile_context>

<pallas_src>
import math

import jax
import jax.numpy as jnp
from jax.experimental import pallas as pl
from jax.experimental.pallas import tpu as pltpu

D_IN = 32            # stands in for X_train.shape[1]
BATCH = 8
TB_DEFAULT = 256     # batch tile (rows per grid step)
WEIGHT_DTYPE = jnp.bfloat16


def _round_up(x, m):
    return ((x + m - 1) // m) * m


# ----------------------------------------------------------------------------
# Static layer plan + packed-parameter layout (128-lane-aligned offsets).
#   ("lin"|"lin_gelu", fan_in, fan_out, bias_offset)
#   ("res", n, b1_off, gamma_off, beta_off, b2_off)
# ----------------------------------------------------------------------------
def build_plan(d_in):
    dims = [
        # encoder
        ("lin_gelu", d_in, 1024), ("lin_gelu", 1024, 512), ("lin_gelu", 512, 256),
        ("res", 256, 256), ("lin_gelu", 256, 128), ("lin", 128, 64), ("res", 64, 64),
        # decoder
        ("lin_gelu", 64, 128), ("lin_gelu", 128, 256), ("lin_gelu", 256, 512),
        ("res", 512, 512), ("lin_gelu", 512, 1024), ("lin", 1024, d_in),
        ("res", d_in, d_in),
    ]
    plan = []
    off = 0

    def alloc(n):
        nonlocal off
        o = off
        off += _round_up(n, 128)   # keep every slice lane-aligned
        return o

    for kind, fin, fout in dims:
        if kind == "res":
            n = fin
            plan.append(("res", n, alloc(n), alloc(n), alloc(n), alloc(n)))
        else:
            plan.append((kind, fin, fout, alloc(fout)))
    return tuple(plan), off           # (plan, packed_size)


# ----------------------------------------------------------------------------
# In-kernel math helpers (all element-wise math in f32)
# ----------------------------------------------------------------------------
def _gelu(x):
    # Exact (erf-based) GELU, matching torch.nn.GELU() default.
    return 0.5 * x * (1.0 + jax.lax.erf(x * (1.0 / math.sqrt(2.0))))


def _linear(x_f32, w_ref, b_f32):
    # bf16 MXU matmul with f32 accumulation; bias add in f32.
    y = jnp.dot(x_f32.astype(w_ref.dtype), w_ref[...],
                preferred_element_type=jnp.float32)
    return y + b_f32


# ----------------------------------------------------------------------------
# Kernel factory: refs = (x_tile, packed_small, *weights, out_tile)
# ----------------------------------------------------------------------------
def _make_kernel(plan):
    def kernel(x_ref, small_ref, *rest):
        out_ref = rest[-1]
        w_refs = rest[:-1]

        x = x_ref[...].astype(jnp.float32)
        wi = 0
        for entry in plan:
            if entry[0] == "res":
                _, n, ob1, og, obt, ob2 = entry
                w1, w2 = w_refs[wi], w_refs[wi + 1]
                wi += 2
                # out = x + Linear2( LeakyReLU( LayerNorm( Linear1(x) ) ) )
                h = _linear(x, w1, small_ref[:, ob1:ob1 + n])
                mean = jnp.mean(h, axis=-1, keepdims=True)
                var = jnp.mean(jnp.square(h - mean), axis=-1, keepdims=True)
                h = (h - mean) * jax.lax.rsqrt(var + 1e-5)
                h = h * small_ref[:, og:og + n] + small_ref[:, obt:obt + n]
                h = jnp.where(h >= 0.0, h, 0.01 * h)          # LeakyReLU(0.01)
                x = x + _linear(h, w2, small_ref[:, ob2:ob2 + n])
            else:
                kind, fin, fout, ob = entry
                w = w_refs[wi]
                wi += 1
                x = _linear(x, w, small_ref[:, ob:ob + fout])
                if kind == "lin_gelu":
                    x = _gelu(x)                               # Dropout = identity (eval)
        out_ref[...] = x.astype(out_ref.dtype)
    return kernel


# ----------------------------------------------------------------------------
# Wrapper: one pallas_call; grid over batch tiles; weights stay VMEM-resident.
# ----------------------------------------------------------------------------
def autoencoder_forward(x, weights, packed_small, plan, *, tb=TB_DEFAULT):
    B, D = x.shape
    tb = min(tb, _round_up(B, 8))
    Bp = _round_up(B, tb)
    if Bp != B:
        x = jnp.pad(x, ((0, Bp - B), (0, 0)))
    grid = (Bp // tb,)

    # Advisory cost estimate (helps XLA overlap neighbors with this call).
    macs = 0
    gelu_width = 0
    for entry in plan:
        if entry[0] == "res":
            macs += 2 * entry[1] * entry[1]
        else:
            macs += entry[1] * entry[2]
            if entry[0] == "lin_gelu":
                gelu_width += entry[2]
    weight_bytes = sum(int(w.size) * w.dtype.itemsize for w in weights)
    bytes_accessed = (weight_bytes + int(packed_small.size) * 4
                      + 2 * Bp * D * x.dtype.itemsize)

    in_specs = (
        [pl.BlockSpec((tb, D), lambda i: (i, 0)),                       # x tile
         pl.BlockSpec(packed_small.shape, lambda i: (0, 0))]            # packed small params
        + [pl.BlockSpec(w.shape, lambda i: (0, 0)) for w in weights]    # resident weights
    )

    out = pl.pallas_call(
        _make_kernel(plan),
        out_shape=jax.ShapeDtypeStruct((Bp, D), x.dtype),
        grid=grid,
        in_specs=in_specs,
        out_specs=pl.BlockSpec((tb, D), lambda i: (i, 0)),
        compiler_params=pltpu.CompilerParams(
            dimension_semantics=("parallel",),
            vmem_limit_bytes=48 * 1024 * 1024),
        cost_estimate=pl.CostEstimate(
            flops=int(2 * macs * Bp),
            transcendentals=int(gelu_width * Bp),
            bytes_accessed=int(bytes_accessed)),
    )(x, packed_small, *weights)
    return out[:B]


# ----------------------------------------------------------------------------
# Deterministic parameter initialization (PyTorch-default-style uniform).
# Weights are (in_features, out_features) bf16; all small vectors are packed
# into one (1, packed_size) f32 array at 128-lane-aligned offsets.
# ----------------------------------------------------------------------------
def _pad128(v):
    n = v.shape[1]
    p = _round_up(n, 128) - n
    return jnp.pad(v, ((0, 0), (0, p))) if p else v


def _init_linear(key, fan_in, fan_out, weight_dtype):
    kw, kb = jax.random.split(key)
    bound = 1.0 / math.sqrt(fan_in)
    w = jax.random.uniform(kw, (fan_in, fan_out), jnp.float32, -bound, bound)
    b = jax.random.uniform(kb, (1, fan_out), jnp.float32, -bound, bound)
    return w.astype(weight_dtype), b


def init_autoencoder_params(key, plan, weight_dtype=WEIGHT_DTYPE):
    keys = jax.random.split(key, len(plan))
    weights, segments = [], []
    for k, entry in zip(keys, plan):
        if entry[0] == "res":
            n = entry[1]
            k1, k2 = jax.random.split(k)
            w1, b1 = _init_linear(k1, n, n, weight_dtype)
            w2, b2 = _init_linear(k2, n, n, weight_dtype)
            gamma = jnp.ones((1, n), jnp.float32)    # LayerNorm weight
            beta = jnp.zeros((1, n), jnp.float32)    # LayerNorm bias
            weights += [w1, w2]
            segments += [_pad128(b1), _pad128(gamma), _pad128(beta), _pad128(b2)]
        else:
            _, fin, fout, _ = entry
            w, b = _init_linear(k, fin, fout, weight_dtype)
            weights.append(w)
            segments.append(_pad128(b))
    packed_small = jnp.concatenate(segments, axis=1)
    return weights, packed_small


if __name__ == "__main__":
    key = jax.random.PRNGKey(0)
    k_params, k_x = jax.random.split(key)

    plan, packed_size = build_plan(D_IN)
    weights, packed_small = init_autoencoder_params(k_params, plan)
    assert packed_small.shape == (1, packed_size)

    x = jax.random.normal(k_x, (BATCH, D_IN), jnp.float32)

    fwd = jax.jit(lambda xx, ww, ss: autoencoder_forward(xx, ww, ss, plan))
    out = jax.block_until_ready(fwd(x, weights, packed_small))

    assert out.shape == (BATCH, D_IN), out.shape
    assert bool(jnp.all(jnp.isfinite(out)))
    print("KERNEL_OK")
</pallas_src>

<mosaic_0001>
module attributes {stable_mosaic.version = 11 : i64} {
  func.func @kernel(%arg0: i32, %arg1: memref<8x32xf32, #tpu.memory_space<vmem>>, %arg2: memref<1x8192xf32, #tpu.memory_space<vmem>>, %arg3: memref<32x1024xbf16, #tpu.memory_space<vmem>>, %arg4: memref<1024x512xbf16, #tpu.memory_space<vmem>>, %arg5: memref<512x256xbf16, #tpu.memory_space<vmem>>, %arg6: memref<256x256xbf16, #tpu.memory_space<vmem>>, %arg7: memref<256x256xbf16, #tpu.memory_space<vmem>>, %arg8: memref<256x128xbf16, #tpu.memory_space<vmem>>, %arg9: memref<128x64xbf16, #tpu.memory_space<vmem>>, %arg10: memref<64x64xbf16, #tpu.memory_space<vmem>>, %arg11: memref<64x64xbf16, #tpu.memory_space<vmem>>, %arg12: memref<64x128xbf16, #tpu.memory_space<vmem>>, %arg13: memref<128x256xbf16, #tpu.memory_space<vmem>>, %arg14: memref<256x512xbf16, #tpu.memory_space<vmem>>, %arg15: memref<512x512xbf16, #tpu.memory_space<vmem>>, %arg16: memref<512x512xbf16, #tpu.memory_space<vmem>>, %arg17: memref<512x1024xbf16, #tpu.memory_space<vmem>>, %arg18: memref<1024x32xbf16, #tpu.memory_space<vmem>>, %arg19: memref<32x32xbf16, #tpu.memory_space<vmem>>, %arg20: memref<32x32xbf16, #tpu.memory_space<vmem>>, %arg21: memref<8x32xf32, #tpu.memory_space<vmem>>) attributes {dimension_semantics = [#tpu.dimension_semantics<parallel>], iteration_bounds = array<i64: 1>, scalar_prefetch = 0 : i64, scratch_operands = 0 : i64, tpu.core_type = #tpu.core_type<tc>, window_params = [{transform_indices = @transform_0, window_bounds = array<i64: 8, 32>}, {pipeline_mode = #tpu.pipeline_mode<synchronous>, transform_indices = @transform_1, window_bounds = array<i64: 1, 8192>}, {pipeline_mode = #tpu.pipeline_mode<synchronous>, transform_indices = @transform_2, window_bounds = array<i64: 32, 1024>}, {pipeline_mode = #tpu.pipeline_mode<synchronous>, transform_indices = @transform_3, window_bounds = array<i64: 1024, 512>}, {pipeline_mode = #tpu.pipeline_mode<synchronous>, transform_indices = @transform_4, window_bounds = array<i64: 512, 256>}, {pipeline_mode = #tpu.pipeline_mode<synchronous>, transform_indices = @transform_5, window_bounds = array<i64: 256, 256>}, {pipeline_mode = #tpu.pipeline_mode<synchronous>, transform_indices = @transform_6, window_bounds = array<i64: 256, 256>}, {pipeline_mode = #tpu.pipeline_mode<synchronous>, transform_indices = @transform_7, window_bounds = array<i64: 256, 128>}, {pipeline_mode = #tpu.pipeline_mode<synchronous>, transform_indices = @transform_8, window_bounds = array<i64: 128, 64>}, {pipeline_mode = #tpu.pipeline_mode<synchronous>, transform_indices = @transform_9, window_bounds = array<i64: 64, 64>}, {pipeline_mode = #tpu.pipeline_mode<synchronous>, transform_indices = @transform_10, window_bounds = array<i64: 64, 64>}, {pipeline_mode = #tpu.pipeline_mode<synchronous>, transform_indices = @transform_11, window_bounds = array<i64: 64, 128>}, {pipeline_mode = #tpu.pipeline_mode<synchronous>, transform_indices = @transform_12, window_bounds = array<i64: 128, 256>}, {pipeline_mode = #tpu.pipeline_mode<synchronous>, transform_indices = @transform_13, window_bounds = array<i64: 256, 512>}, {pipeline_mode = #tpu.pipeline_mode<synchronous>, transform_indices = @transform_14, window_bounds = array<i64: 512, 512>}, {pipeline_mode = #tpu.pipeline_mode<synchronous>, transform_indices = @transform_15, window_bounds = array<i64: 512, 512>}, {pipeline_mode = #tpu.pipeline_mode<synchronous>, transform_indices = @transform_16, window_bounds = array<i64: 512, 1024>}, {pipeline_mode = #tpu.pipeline_mode<synchronous>, transform_indices = @transform_17, window_bounds = array<i64: 1024, 32>}, {pipeline_mode = #tpu.pipeline_mode<synchronous>, transform_indices = @transform_18, window_bounds = array<i64: 32, 32>}, {pipeline_mode = #tpu.pipeline_mode<synchronous>, transform_indices = @transform_19, window_bounds = array<i64: 32, 32>}, {transform_indices = @transform_20, window_bounds = array<i64: 8, 32>}]} {
    %c0 = arith.constant 0 : index
    %c0_0 = arith.constant 0 : index
    %0 = vector.load %arg1[%c0, %c0_0] : memref<8x32xf32, #tpu.memory_space<vmem>>, vector<8x32xf32>
    %c0_1 = arith.constant 0 : index
    %c0_2 = arith.constant 0 : index
    %1 = vector.load %arg2[%c0_1, %c0_2] : memref<1x8192xf32, #tpu.memory_space<vmem>>, vector<1x1024xf32>
    %2 = arith.truncf %0 : vector<8x32xf32> to vector<8x32xbf16>
    %c0_3 = arith.constant 0 : index
    %c0_4 = arith.constant 0 : index
    %3 = vector.load %arg3[%c0_3, %c0_4] : memref<32x1024xbf16, #tpu.memory_space<vmem>>, vector<32x1024xbf16>
    %cst = arith.constant dense<0.000000e+00> : vector<8x1024xf32>
    %4 = tpu.matmul %2, %3, %cst {dimension_numbers = #tpu.dot_dimension_numbers<[1], [0], [0], [1], [0, 0, 1, 1], [], []>} : vector<8x32xbf16>, vector<32x1024xbf16>, vector<8x1024xf32> -> vector<8x1024xf32>
    %5 = vector.broadcast %1 : vector<1x1024xf32> to vector<8x1024xf32>
    %6 = arith.addf %4, %5 : vector<8x1024xf32>
    %cst_5 = arith.constant 5.000000e-01 : f32
    %7 = vector.broadcast %cst_5 : f32 to vector<8x1024xf32>
    %8 = arith.mulf %7, %6 : vector<8x1024xf32>
    %cst_6 = arith.constant 0.707106769 : f32
    %9 = vector.broadcast %cst_6 : f32 to vector<8x1024xf32>
    %10 = arith.mulf %6, %9 : vector<8x1024xf32>
    %11 = math.erf %10 : vector<8x1024xf32>
    %cst_7 = arith.constant 1.000000e+00 : f32
    %12 = vector.broadcast %cst_7 : f32 to vector<8x1024xf32>
    %13 = arith.addf %12, %11 : vector<8x1024xf32>
    %14 = arith.mulf %8, %13 : vector<8x1024xf32>
    %c0_8 = arith.constant 0 : index
    %c1024 = arith.constant 1024 : index
    %15 = vector.load %arg2[%c0_8, %c1024] : memref<1x8192xf32, #tpu.memory_space<vmem>>, vector<1x512xf32>
    %16 = arith.truncf %14 : vector<8x1024xf32> to vector<8x1024xbf16>
    %c0_9 = arith.constant 0 : index
    %c0_10 = arith.constant 0 : index
    %17 = vector.load %arg4[%c0_9, %c0_10] : memref<1024x512xbf16, #tpu.memory_space<vmem>>, vector<1024x512xbf16>
    %cst_11 = arith.constant dense<0.000000e+00> : vector<8x512xf32>
    %18 = tpu.matmul %16, %17, %cst_11 {dimension_numbers = #tpu.dot_dimension_numbers<[1], [0], [0], [1], [0, 0, 1, 1], [], []>} : vector<8x1024xbf16>, vector<1024x512xbf16>, vector<8x512xf32> -> vector<8x512xf32>
    %19 = vector.broadcast %15 : vector<1x512xf32> to vector<8x512xf32>
    %20 = arith.addf %18, %19 : vector<8x512xf32>
    %cst_12 = arith.constant 5.000000e-01 : f32
    %21 = vector.broadcast %cst_12 : f32 to vector<8x512xf32>
    %22 = arith.mulf %21, %20 : vector<8x512xf32>
    %cst_13 = arith.constant 0.707106769 : f32
    %23 = vector.broadcast %cst_13 : f32 to vector<8x512xf32>
    %24 = arith.mulf %20, %23 : vector<8x512xf32>
    %25 = math.erf %24 : vector<8x512xf32>
    %cst_14 = arith.constant 1.000000e+00 : f32
    %26 = vector.broadcast %cst_14 : f32 to vector<8x512xf32>
    %27 = arith.addf %26, %25 : vector<8x512xf32>
    %28 = arith.mulf %22, %27 : vector<8x512xf32>
    %c0_15 = arith.constant 0 : index
    %c1536 = arith.constant 1536 : index
    %29 = vector.load %arg2[%c0_15, %c1536] : memref<1x8192xf32, #tpu.memory_space<vmem>>, vector<1x256xf32>
    %30 = arith.truncf %28 : vector<8x512xf32> to vector<8x512xbf16>
    %c0_16 = arith.constant 0 : index
    %c0_17 = arith.constant 0 : index
    %31 = vector.load %arg5[%c0_16, %c0_17] : memref<512x256xbf16, #tpu.memory_space<vmem>>, vector<512x256xbf16>
    %cst_18 = arith.constant dense<0.000000e+00> : vector<8x256xf32>
    %32 = tpu.matmul %30, %31, %cst_18 {dimension_numbers = #tpu.dot_dimension_numbers<[1], [0], [0], [1], [0, 0, 1, 1], [], []>} : vector<8x512xbf16>, vector<512x256xbf16>, vector<8x256xf32> -> vector<8x256xf32>
    %33 = vector.broadcast %29 : vector<1x256xf32> to vector<8x256xf32>
    %34 = arith.addf %32, %33 : vector<8x256xf32>
    %cst_19 = arith.constant 5.000000e-01 : f32
    %35 = vector.broadcast %cst_19 : f32 to vector<8x256xf32>
    %36 = arith.mulf %35, %34 : vector<8x256xf32>
    %cst_20 = arith.constant 0.707106769 : f32
    %37 = vector.broadcast %cst_20 : f32 to vector<8x256xf32>
    %38 = arith.mulf %34, %37 : vector<8x256xf32>
    %39 = math.erf %38 : vector<8x256xf32>
    %cst_21 = arith.constant 1.000000e+00 : f32
    %40 = vector.broadcast %cst_21 : f32 to vector<8x256xf32>
    %41 = arith.addf %40, %39 : vector<8x256xf32>
    %42 = arith.mulf %36, %41 : vector<8x256xf32>
    %c0_22 = arith.constant 0 : index
    %c1792 = arith.constant 1792 : index
    %43 = vector.load %arg2[%c0_22, %c1792] : memref<1x8192xf32, #tpu.memory_space<vmem>>, vector<1x256xf32>
    %44 = arith.truncf %42 : vector<8x256xf32> to vector<8x256xbf16>
    %c0_23 = arith.constant 0 : index
    %c0_24 = arith.constant 0 : index
    %45 = vector.load %arg6[%c0_23, %c0_24] : memref<256x256xbf16, #tpu.memory_space<vmem>>, vector<256x256xbf16>
    %cst_25 = arith.constant dense<0.000000e+00> : vector<8x256xf32>
    %46 = tpu.matmul %44, %45, %cst_25 {dimension_numbers = #tpu.dot_dimension_numbers<[1], [0], [0], [1], [0, 0, 1, 1], [], []>} : vector<8x256xbf16>, vector<256x256xbf16>, vector<8x256xf32> -> vector<8x256xf32>
    %47 = vector.broadcast %43 : vector<1x256xf32> to vector<8x256xf32>
    %48 = arith.addf %46, %47 : vector<8x256xf32>
    %cst_26 = arith.constant dense<0.000000e+00> : vector<8xf32>
    %49 = vector.multi_reduction <add>, %48, %cst_26 [1] : vector<8x256xf32> to vector<8xf32>
    %50 = vector.shape_cast %49 : vector<8xf32> to vector<8x1xf32>
    %cst_27 = arith.constant 2.560000e+02 : f32
    %51 = vector.broadcast %cst_27 : f32 to vector<8x1xf32>
    %52 = arith.divf %50, %51 : vector<8x1xf32>
    %53 = vector.broadcast %52 : vector<8x1xf32> to vector<8x256xf32>
    %54 = arith.subf %48, %53 : vector<8x256xf32>
    %55 = arith.mulf %54, %54 : vector<8x256xf32>
    %cst_28 = arith.constant dense<0.000000e+00> : vector<8xf32>
    %56 = vector.multi_reduction <add>, %55, %cst_28 [1] : vector<8x256xf32> to vector<8xf32>
    %57 = vector.shape_cast %56 : vector<8xf32> to vector<8x1xf32>
    %cst_29 = arith.constant 2.560000e+02 : f32
    %58 = vector.broadcast %cst_29 : f32 to vector<8x1xf32>
    %59 = arith.divf %57, %58 : vector<8x1xf32>
    %60 = vector.broadcast %52 : vector<8x1xf32> to vector<8x256xf32>
    %61 = arith.subf %48, %60 : vector<8x256xf32>
    %cst_30 = arith.constant 9.99999974E-6 : f32
    %62 = vector.broadcast %cst_30 : f32 to vector<8x1xf32>
    %63 = arith.addf %59, %62 : vector<8x1xf32>
    %64 = math.rsqrt %63 : vector<8x1xf32>
    %65 = vector.broadcast %64 : vector<8x1xf32> to vector<8x256xf32>
    %66 = arith.mulf %61, %65 : vector<8x256xf32>
    %c0_31 = arith.constant 0 : index
    %c2048 = arith.constant 2048 : index
    %67 = vector.load %arg2[%c0_31, %c2048] : memref<1x8192xf32, #tpu.memory_space<vmem>>, vector<1x256xf32>
    %68 = vector.broadcast %67 : vector<1x256xf32> to vector<8x256xf32>
    %69 = arith.mulf %66, %68 : vector<8x256xf32>
    %c0_32 = arith.constant 0 : index
    %c2304 = arith.constant 2304 : index
    %70 = vector.load %arg2[%c0_32, %c2304] : memref<1x8192xf32, #tpu.memory_space<vmem>>, vector<1x256xf32>
    %71 = vector.broadcast %70 : vector<1x256xf32> to vector<8x256xf32>
    %72 = arith.addf %69, %71 : vector<8x256xf32>
    %cst_33 = arith.constant 0.000000e+00 : f32
    %73 = vector.broadcast %cst_33 : f32 to vector<8x256xf32>
    %74 = arith.cmpf oge, %72, %73 : vector<8x256xf32>
    %cst_34 = arith.constant 0.00999999977 : f32
    %75 = vector.broadcast %cst_34 : f32 to vector<8x256xf32>
    %76 = arith.mulf %75, %72 : vector<8x256xf32>
    %77 = arith.select %74, %72, %76 : vector<8x256xi1>, vector<8x256xf32>
    %c0_35 = arith.constant 0 : index
    %c2560 = arith.constant 2560 : index
    %78 = vector.load %arg2[%c0_35, %c2560] : memref<1x8192xf32, #tpu.memory_space<vmem>>, vector<1x256xf32>
    %79 = arith.truncf %77 : vector<8x256xf32> to vector<8x256xbf16>
    %c0_36 = arith.constant 0 : index
    %c0_37 = arith.constant 0 : index
    %80 = vector.load %arg7[%c0_36, %c0_37] : memref<256x256xbf16, #tpu.memory_space<vmem>>, vector<256x256xbf16>
    %cst_38 = arith.constant dense<0.000000e+00> : vector<8x256xf32>
    %81 = tpu.matmul %79, %80, %cst_38 {dimension_numbers = #tpu.dot_dimension_numbers<[1], [0], [0], [1], [0, 0, 1, 1], [], []>} : vector<8x256xbf16>, vector<256x256xbf16>, vector<8x256xf32> -> vector<8x256xf32>
    %82 = vector.broadcast %78 : vector<1x256xf32> to vector<8x256xf32>
    %83 = arith.addf %81, %82 : vector<8x256xf32>
    %84 = arith.addf %42, %83 : vector<8x256xf32>
    %c0_39 = arith.constant 0 : index
    %c2816 = arith.constant 2816 : index
    %85 = vector.load %arg2[%c0_39, %c2816] : memref<1x8192xf32, #tpu.memory_space<vmem>>, vector<1x128xf32>
    %86 = arith.truncf %84 : vector<8x256xf32> to vector<8x256xbf16>
    %c0_40 = arith.constant 0 : index
    %c0_41 = arith.constant 0 : index
    %87 = vector.load %arg8[%c0_40, %c0_41] : memref<256x128xbf16, #tpu.memory_space<vmem>>, vector<256x128xbf16>
    %cst_42 = arith.constant dense<0.000000e+00> : vector<8x128xf32>
    %88 = tpu.matmul %86, %87, %cst_42 {dimension_numbers = #tpu.dot_dimension_numbers<[1], [0], [0], [1], [0, 0, 1, 1], [], []>} : vector<8x256xbf16>, vector<256x128xbf16>, vector<8x128xf32> -> vector<8x128xf32>
    %89 = vector.broadcast %85 : vector<1x128xf32> to vector<8x128xf32>
    %90 = arith.addf %88, %89 : vector<8x128xf32>
    %cst_43 = arith.constant 5.000000e-01 : f32
    %91 = vector.broadcast %cst_43 : f32 to vector<8x128xf32>
    %92 = arith.mulf %91, %90 : vector<8x128xf32>
    %cst_44 = arith.constant 0.707106769 : f32
    %93 = vector.broadcast %cst_44 : f32 to vector<8x128xf32>
    %94 = arith.mulf %90, %93 : vector<8x128xf32>
    %95 = math.erf %94 : vector<8x128xf32>
    %cst_45 = arith.constant 1.000000e+00 : f32
    %96 = vector.broadcast %cst_45 : f32 to vector<8x128xf32>
    %97 = arith.addf %96, %95 : vector<8x128xf32>
    %98 = arith.mulf %92, %97 : vector<8x128xf32>
    %c0_46 = arith.constant 0 : index
    %c2944 = arith.constant 2944 : index
    %99 = vector.load %arg2[%c0_46, %c2944] : memref<1x8192xf32, #tpu.memory_space<vmem>>, vector<1x64xf32>
    %100 = arith.truncf %98 : vector<8x128xf32> to vector<8x128xbf16>
    %c0_47 = arith.constant 0 : index
    %c0_48 = arith.constant 0 : index
    %101 = vector.load %arg9[%c0_47, %c0_48] : memref<128x64xbf16, #tpu.memory_space<vmem>>, vector<128x64xbf16>
    %cst_49 = arith.constant dense<0.000000e+00> : vector<8x64xf32>
    %102 = tpu.matmul %100, %101, %cst_49 {dimension_numbers = #tpu.dot_dimension_numbers<[1], [0], [0], [1], [0, 0, 1, 1], [], []>} : vector<8x128xbf16>, vector<128x64xbf16>, vector<8x64xf32> -> vector<8x64xf32>
    %103 = vector.broadcast %99 : vector<1x64xf32> to vector<8x64xf32>
    %104 = arith.addf %102, %103 : vector<8x64xf32>
    %c0_50 = arith.constant 0 : index
    %c3072 = arith.constant 3072 : index
    %105 = vector.load %arg2[%c0_50, %c3072] : memref<1x8192xf32, #tpu.memory_space<vmem>>, vector<1x64xf32>
    %106 = arith.truncf %104 : vector<8x64xf32> to vector<8x64xbf16>
    %c0_51 = arith.constant 0 : index
    %c0_52 = arith.constant 0 : index
    %107 = vector.load %arg10[%c0_51, %c0_52] : memref<64x64xbf16, #tpu.memory_space<vmem>>, vector<64x64xbf16>
    %cst_53 = arith.constant dense<0.000000e+00> : vector<8x64xf32>
    %108 = tpu.matmul %106, %107, %cst_53 {dimension_numbers = #tpu.dot_dimension_numbers<[1], [0], [0], [1], [0, 0, 1, 1], [], []>} : vector<8x64xbf16>, vector<64x64xbf16>, vector<8x64xf32> -> vector<8x64xf32>
    %109 = vector.broadcast %105 : vector<1x64xf32> to vector<8x64xf32>
    %110 = arith.addf %108, %109 : vector<8x64xf32>
    %cst_54 = arith.constant dense<0.000000e+00> : vector<8xf32>
    %111 = vector.multi_reduction <add>, %110, %cst_54 [1] : vector<8x64xf32> to vector<8xf32>
    %112 = vector.shape_cast %111 : vector<8xf32> to vector<8x1xf32>
    %cst_55 = arith.constant 6.400000e+01 : f32
    %113 = vector.broadcast %cst_55 : f32 to vector<8x1xf32>
    %114 = arith.divf %112, %113 : vector<8x1xf32>
    %115 = vector.broadcast %114 : vector<8x1xf32> to vector<8x64xf32>
    %116 = arith.subf %110, %115 : vector<8x64xf32>
    %117 = arith.mulf %116, %116 : vector<8x64xf32>
    %cst_56 = arith.constant dense<0.000000e+00> : vector<8xf32>
    %118 = vector.multi_reduction <add>, %117, %cst_56 [1] : vector<8x64xf32> to vector<8xf32>
    %119 = vector.shape_cast %118 : vector<8xf32> to vector<8x1xf32>
    %cst_57 = arith.constant 6.400000e+01 : f32
    %120 = vector.broadcast %cst_57 : f32 to vector<8x1xf32>
    %121 = arith.divf %119, %120 : vector<8x1xf32>
    %122 = vector.broadcast %114 : vector<8x1xf32> to vector<8x64xf32>
    %123 = arith.subf %110, %122 : vector<8x64xf32>
    %cst_58 = arith.constant 9.99999974E-6 : f32
    %124 = vector.broadcast %cst_58 : f32 to vector<8x1xf32>
    %125 = arith.addf %121, %124 : vector<8x1xf32>
    %126 = math.rsqrt %125 : vector<8x1xf32>
    %127 = vector.broadcast %126 : vector<8x1xf32> to vector<8x64xf32>
    %128 = arith.mulf %123, %127 : vector<8x64xf32>
    %c0_59 = arith.constant 0 : index
    %c3200 = arith.constant 3200 : index
    %129 = vector.load %arg2[%c0_59, %c3200] : memref<1x8192xf32, #tpu.memory_space<vmem>>, vector<1x64xf32>
    %130 = vector.broadcast %129 : vector<1x64xf32> to vector<8x64xf32>
    %131 = arith.mulf %128, %130 : vector<8x64xf32>
    %c0_60 = arith.constant 0 : index
    %c3328 = arith.constant 3328 : index
    %132 = vector.load %arg2[%c0_60, %c3328] : memref<1x8192xf32, #tpu.memory_space<vmem>>, vector<1x64xf32>
    %133 = vector.broadcast %132 : vector<1x64xf32> to vector<8x64xf32>
    %134 = arith.addf %131, %133 : vector<8x64xf32>
    %cst_61 = arith.constant 0.000000e+00 : f32
    %135 = vector.broadcast %cst_61 : f32 to vector<8x64xf32>
    %136 = arith.cmpf oge, %134, %135 : vector<8x64xf32>
    %cst_62 = arith.constant 0.00999999977 : f32
    %137 = vector.broadcast %cst_62 : f32 to vector<8x64xf32>
    %138 = arith.mulf %137, %134 : vector<8x64xf32>
    %139 = arith.select %136, %134, %138 : vector<8x64xi1>, vector<8x64xf32>
    %c0_63 = arith.constant 0 : index
    %c3456 = arith.constant 3456 : index
    %140 = vector.load %arg2[%c0_63, %c3456] : memref<1x8192xf32, #tpu.memory_space<vmem>>, vector<1x64xf32>
    %141 = arith.truncf %139 : vector<8x64xf32> to vector<8x64xbf16>
    %c0_64 = arith.constant 0 : index
    %c0_65 = arith.constant 0 : index
    %142 = vector.load %arg11[%c0_64, %c0_65] : memref<64x64xbf16, #tpu.memory_space<vmem>>, vector<64x64xbf16>
    %cst_66 = arith.constant dense<0.000000e+00> : vector<8x64xf32>
    %143 = tpu.matmul %141, %142, %cst_66 {dimension_numbers = #tpu.dot_dimension_numbers<[1], [0], [0], [1], [0, 0, 1, 1], [], []>} : vector<8x64xbf16>, vector<64x64xbf16>, vector<8x64xf32> -> vector<8x64xf32>
    %144 = vector.broadcast %140 : vector<1x64xf32> to vector<8x64xf32>
    %145 = arith.addf %143, %144 : vector<8x64xf32>
    %146 = arith.addf %104, %145 : vector<8x64xf32>
    %c0_67 = arith.constant 0 : index
    %c3584 = arith.constant 3584 : index
    %147 = vector.load %arg2[%c0_67, %c3584] : memref<1x8192xf32, #tpu.memory_space<vmem>>, vector<1x128xf32>
    %148 = arith.truncf %146 : vector<8x64xf32> to vector<8x64xbf16>
    %c0_68 = arith.constant 0 : index
    %c0_69 = arith.constant 0 : index
    %149 = vector.load %arg12[%c0_68, %c0_69] : memref<64x128xbf16, #tpu.memory_space<vmem>>, vector<64x128xbf16>
    %cst_70 = arith.constant dense<0.000000e+00> : vector<8x128xf32>
    %150 = tpu.matmul %148, %149, %cst_70 {dimension_numbers = #tpu.dot_dimension_numbers<[1], [0], [0], [1], [0, 0, 1, 1], [], []>} : vector<8x64xbf16>, vector<64x128xbf16>, vector<8x128xf32> -> vector<8x128xf32>
    %151 = vector.broadcast %147 : vector<1x128xf32> to vector<8x128xf32>
    %152 = arith.addf %150, %151 : vector<8x128xf32>
    %cst_71 = arith.constant 5.000000e-01 : f32
    %153 = vector.broadcast %cst_71 : f32 to vector<8x128xf32>
    %154 = arith.mulf %153, %152 : vector<8x128xf32>
    %cst_72 = arith.constant 0.707106769 : f32
    %155 = vector.broadcast %cst_72 : f32 to vector<8x128xf32>
    %156 = arith.mulf %152, %155 : vector<8x128xf32>
    %157 = math.erf %156 : vector<8x128xf32>
    %cst_73 = arith.constant 1.000000e+00 : f32
    %158 = vector.broadcast %cst_73 : f32 to vector<8x128xf32>
    %159 = arith.addf %158, %157 : vector<8x128xf32>
    %160 = arith.mulf %154, %159 : vector<8x128xf32>
    %c0_74 = arith.constant 0 : index
    %c3712 = arith.constant 3712 : index
    %161 = vector.load %arg2[%c0_74, %c3712] : memref<1x8192xf32, #tpu.memory_space<vmem>>, vector<1x256xf32>
    %162 = arith.truncf %160 : vector<8x128xf32> to vector<8x128xbf16>
    %c0_75 = arith.constant 0 : index
    %c0_76 = arith.constant 0 : index
    %163 = vector.load %arg13[%c0_75, %c0_76] : memref<128x256xbf16, #tpu.memory_space<vmem>>, vector<128x256xbf16>
    %cst_77 = arith.constant dense<0.000000e+00> : vector<8x256xf32>
    %164 = tpu.matmul %162, %163, %cst_77 {dimension_numbers = #tpu.dot_dimension_numbers<[1], [0], [0], [1], [0, 0, 1, 1], [], []>} : vector<8x128xbf16>, vector<128x256xbf16>, vector<8x256xf32> -> vector<8x256xf32>
    %165 = vector.broadcast %161 : vector<1x256xf32> to vector<8x256xf32>
    %166 = arith.addf %164, %165 : vector<8x256xf32>
    %cst_78 = arith.constant 5.000000e-01 : f32
    %167 = vector.broadcast %cst_78 : f32 to vector<8x256xf32>
    %168 = arith.mulf %167, %166 : vector<8x256xf32>
    %cst_79 = arith.constant 0.707106769 : f32
    %169 = vector.broadcast %cst_79 : f32 to vector<8x256xf32>
    %170 = arith.mulf %166, %169 : vector<8x256xf32>
    %171 = math.erf %170 : vector<8x256xf32>
    %cst_80 = arith.constant 1.000000e+00 : f32
    %172 = vector.broadcast %cst_80 : f32 to vector<8x256xf32>
    %173 = arith.addf %172, %171 : vector<8x256xf32>
    %174 = arith.mulf %168, %173 : vector<8x256xf32>
    %c0_81 = arith.constant 0 : index
    %c3968 = arith.constant 3968 : index
    %175 = vector.load %arg2[%c0_81, %c3968] : memref<1x8192xf32, #tpu.memory_space<vmem>>, vector<1x512xf32>
    %176 = arith.truncf %174 : vector<8x256xf32> to vector<8x256xbf16>
    %c0_82 = arith.constant 0 : index
    %c0_83 = arith.constant 0 : index
    %177 = vector.load %arg14[%c0_82, %c0_83] : memref<256x512xbf16, #tpu.memory_space<vmem>>, vector<256x512xbf16>
    %cst_84 = arith.constant dense<0.000000e+00> : vector<8x512xf32>
    %178 = tpu.matmul %176, %177, %cst_84 {dimension_numbers = #tpu.dot_dimension_numbers<[1], [0], [0], [1], [0, 0, 1, 1], [], []>} : vector<8x256xbf16>, vector<256x512xbf16>, vector<8x512xf32> -> vector<8x512xf32>
    %179 = vector.broadcast %175 : vector<1x512xf32> to vector<8x512xf32>
    %180 = arith.addf %178, %179 : vector<8x512xf32>
    %cst_85 = arith.constant 5.000000e-01 : f32
    %181 = vector.broadcast %cst_85 : f32 to vector<8x512xf32>
    %182 = arith.mulf %181, %180 : vector<8x512xf32>
    %cst_86 = arith.constant 0.707106769 : f32
    %183 = vector.broadcast %cst_86 : f32 to vector<8x512xf32>
    %184 = arith.mulf %180, %183 : vector<8x512xf32>
    %185 = math.erf %184 : vector<8x512xf32>
    %cst_87 = arith.constant 1.000000e+00 : f32
    %186 = vector.broadcast %cst_87 : f32 to vector<8x512xf32>
    %187 = arith.addf %186, %185 : vector<8x512xf32>
    %188 = arith.mulf %182, %187 : vector<8x512xf32>
    %c0_88 = arith.constant 0 : index
    %c4480 = arith.constant 4480 : index
    %189 = vector.load %arg2[%c0_88, %c4480] : memref<1x8192xf32, #tpu.memory_space<vmem>>, vector<1x512xf32>
    %190 = arith.truncf %188 : vector<8x512xf32> to vector<8x512xbf16>
    %c0_89 = arith.constant 0 : index
    %c0_90 = arith.constant 0 : index
    %191 = vector.load %arg15[%c0_89, %c0_90] : memref<512x512xbf16, #tpu.memory_space<vmem>>, vector<512x512xbf16>
    %cst_91 = arith.constant dense<0.000000e+00> : vector<8x512xf32>
    %192 = tpu.matmul %190, %191, %cst_91 {dimension_numbers = #tpu.dot_dimension_numbers<[1], [0], [0], [1], [0, 0, 1, 1], [], []>} : vector<8x512xbf16>, vector<512x512xbf16>, vector<8x512xf32> -> vector<8x512xf32>
    %193 = vector.broadcast %189 : vector<1x512xf32> to vector<8x512xf32>
    %194 = arith.addf %192, %193 : vector<8x512xf32>
    %cst_92 = arith.constant dense<0.000000e+00> : vector<8xf32>
    %195 = vector.multi_reduction <add>, %194, %cst_92 [1] : vector<8x512xf32> to vector<8xf32>
    %196 = vector.shape_cast %195 : vector<8xf32> to vector<8x1xf32>
    %cst_93 = arith.constant 5.120000e+02 : f32
    %197 = vector.broadcast %cst_93 : f32 to vector<8x1xf32>
    %198 = arith.divf %196, %197 : vector<8x1xf32>
    %199 = vector.broadcast %198 : vector<8x1xf32> to vector<8x512xf32>
    %200 = arith.subf %194, %199 : vector<8x512xf32>
    %201 = arith.mulf %200, %200 : vector<8x512xf32>
    %cst_94 = arith.constant dense<0.000000e+00> : vector<8xf32>
    %202 = vector.multi_reduction <add>, %201, %cst_94 [1] : vector<8x512xf32> to vector<8xf32>
    %203 = vector.shape_cast %202 : vector<8xf32> to vector<8x1xf32>
    %cst_95 = arith.constant 5.120000e+02 : f32
    %204 = vector.broadcast %cst_95 : f32 to vector<8x1xf32>
    %205 = arith.divf %203, %204 : vector<8x1xf32>
    %206 = vector.broadcast %198 : vector<8x1xf32> to vector<8x512xf32>
    %207 = arith.subf %194, %206 : vector<8x512xf32>
    %cst_96 = arith.constant 9.99999974E-6 : f32
    %208 = vector.broadcast %cst_96 : f32 to vector<8x1xf32>
    %209 = arith.addf %205, %208 : vector<8x1xf32>
    %210 = math.rsqrt %209 : vector<8x1xf32>
    %211 = vector.broadcast %210 : vector<8x1xf32> to vector<8x512xf32>
    %212 = arith.mulf %207, %211 : vector<8x512xf32>
    %c0_97 = arith.constant 0 : index
    %c4992 = arith.constant 4992 : index
    %213 = vector.load %arg2[%c0_97, %c4992] : memref<1x8192xf32, #tpu.memory_space<vmem>>, vector<1x512xf32>
    %214 = vector.broadcast %213 : vector<1x512xf32> to vector<8x512xf32>
    %215 = arith.mulf %212, %214 : vector<8x512xf32>
    %c0_98 = arith.constant 0 : index
    %c5504 = arith.constant 5504 : index
    %216 = vector.load %arg2[%c0_98, %c5504] : memref<1x8192xf32, #tpu.memory_space<vmem>>, vector<1x512xf32>
    %217 = vector.broadcast %216 : vector<1x512xf32> to vector<8x512xf32>
    %218 = arith.addf %215, %217 : vector<8x512xf32>
    %cst_99 = arith.constant 0.000000e+00 : f32
    %219 = vector.broadcast %cst_99 : f32 to vector<8x512xf32>
    %220 = arith.cmpf oge, %218, %219 : vector<8x512xf32>
    %cst_100 = arith.constant 0.00999999977 : f32
    %221 = vector.broadcast %cst_100 : f32 to vector<8x512xf32>
    %222 = arith.mulf %221, %218 : vector<8x512xf32>
    %223 = arith.select %220, %218, %222 : vector<8x512xi1>, vector<8x512xf32>
    %c0_101 = arith.constant 0 : index
    %c6016 = arith.constant 6016 : index
    %224 = vector.load %arg2[%c0_101, %c6016] : memref<1x8192xf32, #tpu.memory_space<vmem>>, vector<1x512xf32>
    %225 = arith.truncf %223 : vector<8x512xf32> to vector<8x512xbf16>
    %c0_102 = arith.constant 0 : index
    %c0_103 = arith.constant 0 : index
    %226 = vector.load %arg16[%c0_102, %c0_103] : memref<512x512xbf16, #tpu.memory_space<vmem>>, vector<512x512xbf16>
    %cst_104 = arith.constant dense<0.000000e+00> : vector<8x512xf32>
    %227 = tpu.matmul %225, %226, %cst_104 {dimension_numbers = #tpu.dot_dimension_numbers<[1], [0], [0], [1], [0, 0, 1, 1], [], []>} : vector<8x512xbf16>, vector<512x512xbf16>, vector<8x512xf32> -> vector<8x512xf32>
    %228 = vector.broadcast %224 : vector<1x512xf32> to vector<8x512xf32>
    %229 = arith.addf %227, %228 : vector<8x512xf32>
    %230 = arith.addf %188, %229 : vector<8x512xf32>
    %c0_105 = arith.constant 0 : index
    %c6528 = arith.constant 6528 : index
    %231 = vector.load %arg2[%c0_105, %c6528] : memref<1x8192xf32, #tpu.memory_space<vmem>>, vector<1x1024xf32>
    %232 = arith.truncf %230 : vector<8x512xf32> to vector<8x512xbf16>
    %c0_106 = arith.constant 0 : index
    %c0_107 = arith.constant 0 : index
    %233 = vector.load %arg17[%c0_106, %c0_107] : memref<512x1024xbf16, #tpu.memory_space<vmem>>, vector<512x1024xbf16>
    %cst_108 = arith.constant dense<0.000000e+00> : vector<8x1024xf32>
    %234 = tpu.matmul %232, %233, %cst_108 {dimension_numbers = #tpu.dot_dimension_numbers<[1], [0], [0], [1], [0, 0, 1, 1], [], []>} : vector<8x512xbf16>, vector<512x1024xbf16>, vector<8x1024xf32> -> vector<8x1024xf32>
    %235 = vector.broadcast %231 : vector<1x1024xf32> to vector<8x1024xf32>
    %236 = arith.addf %234, %235 : vector<8x1024xf32>
    %cst_109 = arith.constant 5.000000e-01 : f32
    %237 = vector.broadcast %cst_109 : f32 to vector<8x1024xf32>
    %238 = arith.mulf %237, %236 : vector<8x1024xf32>
    %cst_110 = arith.constant 0.707106769 : f32
    %239 = vector.broadcast %cst_110 : f32 to vector<8x1024xf32>
    %240 = arith.mulf %236, %239 : vector<8x1024xf32>
    %241 = math.erf %240 : vector<8x1024xf32>
    %cst_111 = arith.constant 1.000000e+00 : f32
    %242 = vector.broadcast %cst_111 : f32 to vector<8x1024xf32>
    %243 = arith.addf %242, %241 : vector<8x1024xf32>
    %244 = arith.mulf %238, %243 : vector<8x1024xf32>
    %c0_112 = arith.constant 0 : index
    %c7552 = arith.constant 7552 : index
    %245 = vector.load %arg2[%c0_112, %c7552] : memref<1x8192xf32, #tpu.memory_space<vmem>>, vector<1x32xf32>
    %246 = arith.truncf %244 : vector<8x1024xf32> to vector<8x1024xbf16>
    %c0_113 = arith.constant 0 : index
    %c0_114 = arith.constant 0 : index
    %247 = vector.load %arg18[%c0_113, %c0_114] : memref<1024x32xbf16, #tpu.memory_space<vmem>>, vector<1024x32xbf16>
    %cst_115 = arith.constant dense<0.000000e+00> : vector<8x32xf32>
    %248 = tpu.matmul %246, %247, %cst_115 {dimension_numbers = #tpu.dot_dimension_numbers<[1], [0], [0], [1], [0, 0, 1, 1], [], []>} : vector<8x1024xbf16>, vector<1024x32xbf16>, vector<8x32xf32> -> vector<8x32xf32>
    %249 = vector.broadcast %245 : vector<1x32xf32> to vector<8x32xf32>
    %250 = arith.addf %248, %249 : vector<8x32xf32>
    %c0_116 = arith.constant 0 : index
    %c7680 = arith.constant 7680 : index
    %251 = vector.load %arg2[%c0_116, %c7680] : memref<1x8192xf32, #tpu.memory_space<vmem>>, vector<1x32xf32>
    %252 = arith.truncf %250 : vector<8x32xf32> to vector<8x32xbf16>
    %c0_117 = arith.constant 0 : index
    %c0_118 = arith.constant 0 : index
    %253 = vector.load %arg19[%c0_117, %c0_118] : memref<32x32xbf16, #tpu.memory_space<vmem>>, vector<32x32xbf16>
    %cst_119 = arith.constant dense<0.000000e+00> : vector<8x32xf32>
    %254 = tpu.matmul %252, %253, %cst_119 {dimension_numbers = #tpu.dot_dimension_numbers<[1], [0], [0], [1], [0, 0, 1, 1], [], []>} : vector<8x32xbf16>, vector<32x32xbf16>, vector<8x32xf32> -> vector<8x32xf32>
    %255 = vector.broadcast %251 : vector<1x32xf32> to vector<8x32xf32>
    %256 = arith.addf %254, %255 : vector<8x32xf32>
    %cst_120 = arith.constant dense<0.000000e+00> : vector<8xf32>
    %257 = vector.multi_reduction <add>, %256, %cst_120 [1] : vector<8x32xf32> to vector<8xf32>
    %258 = vector.shape_cast %257 : vector<8xf32> to vector<8x1xf32>
    %cst_121 = arith.constant 3.200000e+01 : f32
    %259 = vector.broadcast %cst_121 : f32 to vector<8x1xf32>
    %260 = arith.divf %258, %259 : vector<8x1xf32>
    %261 = vector.broadcast %260 : vector<8x1xf32> to vector<8x32xf32>
    %262 = arith.subf %256, %261 : vector<8x32xf32>
    %263 = arith.mulf %262, %262 : vector<8x32xf32>
    %cst_122 = arith.constant dense<0.000000e+00> : vector<8xf32>
    %264 = vector.multi_reduction <add>, %263, %cst_122 [1] : vector<8x32xf32> to vector<8xf32>
    %265 = vector.shape_cast %264 : vector<8xf32> to vector<8x1xf32>
    %cst_123 = arith.constant 3.200000e+01 : f32
    %266 = vector.broadcast %cst_123 : f32 to vector<8x1xf32>
    %267 = arith.divf %265, %266 : vector<8x1xf32>
    %268 = vector.broadcast %260 : vector<8x1xf32> to vector<8x32xf32>
    %269 = arith.subf %256, %268 : vector<8x32xf32>
    %cst_124 = arith.constant 9.99999974E-6 : f32
    %270 = vector.broadcast %cst_124 : f32 to vector<8x1xf32>
    %271 = arith.addf %267, %270 : vector<8x1xf32>
    %272 = math.rsqrt %271 : vector<8x1xf32>
    %273 = vector.broadcast %272 : vector<8x1xf32> to vector<8x32xf32>
    %274 = arith.mulf %269, %273 : vector<8x32xf32>
    %c0_125 = arith.constant 0 : index
    %c7808 = arith.constant 7808 : index
    %275 = vector.load %arg2[%c0_125, %c7808] : memref<1x8192xf32, #tpu.memory_space<vmem>>, vector<1x32xf32>
    %276 = vector.broadcast %275 : vector<1x32xf32> to vector<8x32xf32>
    %277 = arith.mulf %274, %276 : vector<8x32xf32>
    %c0_126 = arith.constant 0 : index
    %c7936 = arith.constant 7936 : index
    %278 = vector.load %arg2[%c0_126, %c7936] : memref<1x8192xf32, #tpu.memory_space<vmem>>, vector<1x32xf32>
    %279 = vector.broadcast %278 : vector<1x32xf32> to vector<8x32xf32>
    %280 = arith.addf %277, %279 : vector<8x32xf32>
    %cst_127 = arith.constant 0.000000e+00 : f32
    %281 = vector.broadcast %cst_127 : f32 to vector<8x32xf32>
    %282 = arith.cmpf oge, %280, %281 : vector<8x32xf32>
    %cst_128 = arith.constant 0.00999999977 : f32
    %283 = vector.broadcast %cst_128 : f32 to vector<8x32xf32>
    %284 = arith.mulf %283, %280 : vector<8x32xf32>
    %285 = arith.select %282, %280, %284 : vector<8x32xi1>, vector<8x32xf32>
    %c0_129 = arith.constant 0 : index
    %c8064 = arith.constant 8064 : index
    %286 = vector.load %arg2[%c0_129, %c8064] : memref<1x8192xf32, #tpu.memory_space<vmem>>, vector<1x32xf32>
    %287 = arith.truncf %285 : vector<8x32xf32> to vector<8x32xbf16>
    %c0_130 = arith.constant 0 : index
    %c0_131 = arith.constant 0 : index
    %288 = vector.load %arg20[%c0_130, %c0_131] : memref<32x32xbf16, #tpu.memory_space<vmem>>, vector<32x32xbf16>
    %cst_132 = arith.constant dense<0.000000e+00> : vector<8x32xf32>
    %289 = tpu.matmul %287, %288, %cst_132 {dimension_numbers = #tpu.dot_dimension_numbers<[1], [0], [0], [1], [0, 0, 1, 1], [], []>} : vector<8x32xbf16>, vector<32x32xbf16>, vector<8x32xf32> -> vector<8x32xf32>
    %290 = vector.broadcast %286 : vector<1x32xf32> to vector<8x32xf32>
    %291 = arith.addf %289, %290 : vector<8x32xf32>
    %292 = arith.addf %250, %291 : vector<8x32xf32>
    %c0_133 = arith.constant 0 : index
    %c0_134 = arith.constant 0 : index
    %293 = vector.load %arg21[%c0_133, %c0_134] : memref<8x32xf32, #tpu.memory_space<vmem>>, vector<8x32xf32>
    tpu.vector_store %arg21[%c0_133, %c0_134], %292 {strides = array<i32>} : memref<8x32xf32, #tpu.memory_space<vmem>>, vector<8x32xf32>,
    return
  }
  func.func @transform_0(%arg0: i32) -> (i32, i32) {
    %c0_i32 = arith.constant 0 : i32
    %c0_i32_0 = arith.constant 0 : i32
    return %arg0, %c0_i32 : i32, i32
  }
  func.func @transform_1(%arg0: i32) -> (i32, i32) {
    %c0_i32 = arith.constant 0 : i32
    %c0_i32_0 = arith.constant 0 : i32
    %c0_i32_1 = arith.constant 0 : i32
    return %c0_i32, %c0_i32_0 : i32, i32
  }
  func.func @transform_2(%arg0: i32) -> (i32, i32) {
    %c0_i32 = arith.constant 0 : i32
    %c0_i32_0 = arith.constant 0 : i32
    %c0_i32_1 = arith.constant 0 : i32
    return %c0_i32, %c0_i32_0 : i32, i32
  }
  func.func @transform_3(%arg0: i32) -> (i32, i32) {
    %c0_i32 = arith.constant 0 : i32
    %c0_i32_0 = arith.constant 0 : i32
    %c0_i32_1 = arith.constant 0 : i32
    return %c0_i32, %c0_i32_0 : i32, i32
  }
  func.func @transform_4(%arg0: i32) -> (i32, i32) {
    %c0_i32 = arith.constant 0 : i32
    %c0_i32_0 = arith.constant 0 : i32
    %c0_i32_1 = arith.constant 0 : i32
    return %c0_i32, %c0_i32_0 : i32, i32
  }
  func.func @transform_5(%arg0: i32) -> (i32, i32) {
    %c0_i32 = arith.constant 0 : i32
    %c0_i32_0 = arith.constant 0 : i32
    %c0_i32_1 = arith.constant 0 : i32
    return %c0_i32, %c0_i32_0 : i32, i32
  }
  func.func @transform_6(%arg0: i32) -> (i32, i32) {
    %c0_i32 = arith.constant 0 : i32
    %c0_i32_0 = arith.constant 0 : i32
    %c0_i32_1 = arith.constant 0 : i32
    return %c0_i32, %c0_i32_0 : i32, i32
  }
  func.func @transform_7(%arg0: i32) -> (i32, i32) {
    %c0_i32 = arith.constant 0 : i32
    %c0_i32_0 = arith.constant 0 : i32
    %c0_i32_1 = arith.constant 0 : i32
    return %c0_i32, %c0_i32_0 : i32, i32
  }
  func.func @transform_8(%arg0: i32) -> (i32, i32) {
    %c0_i32 = arith.constant 0 : i32
    %c0_i32_0 = arith.constant 0 : i32
    %c0_i32_1 = arith.constant 0 : i32
    return %c0_i32, %c0_i32_0 : i32, i32
  }
  func.func @transform_9(%arg0: i32) -> (i32, i32) {
    %c0_i32 = arith.constant 0 : i32
    %c0_i32_0 = arith.constant 0 : i32
    %c0_i32_1 = arith.constant 0 : i32
    return %c0_i32, %c0_i32_0 : i32, i32
  }
  func.func @transform_10(%arg0: i32) -> (i32, i32) {
    %c0_i32 = arith.constant 0 : i32
    %c0_i32_0 = arith.constant 0 : i32
    %c0_i32_1 = arith.constant 0 : i32
    return %c0_i32, %c0_i32_0 : i32, i32
  }
  func.func @transform_11(%arg0: i32) -> (i32, i32) {
    %c0_i32 = arith.constant 0 : i32
    %c0_i32_0 = arith.constant 0 : i32
    %c0_i32_1 = arith.constant 0 : i32
    return %c0_i32, %c0_i32_0 : i32, i32
  }
  func.func @transform_12(%arg0: i32) -> (i32, i32) {
    %c0_i32 = arith.constant 0 : i32
    %c0_i32_0 = arith.constant 0 : i32
    %c0_i32_1 = arith.constant 0 : i32
    return %c0_i32, %c0_i32_0 : i32, i32
  }
  func.func @transform_13(%arg0: i32) -> (i32, i32) {
    %c0_i32 = arith.constant 0 : i32
    %c0_i32_0 = arith.constant 0 : i32
    %c0_i32_1 = arith.constant 0 : i32
    return %c0_i32, %c0_i32_0 : i32, i32
  }
  func.func @transform_14(%arg0: i32) -> (i32, i32) {
    %c0_i32 = arith.constant 0 : i32
    %c0_i32_0 = arith.constant 0 : i32
    %c0_i32_1 = arith.constant 0 : i32
    return %c0_i32, %c0_i32_0 : i32, i32
  }
  func.func @transform_15(%arg0: i32) -> (i32, i32) {
    %c0_i32 = arith.constant 0 : i32
    %c0_i32_0 = arith.constant 0 : i32
    %c0_i32_1 = arith.constant 0 : i32
    return %c0_i32, %c0_i32_0 : i32, i32
  }
  func.func @transform_16(%arg0: i32) -> (i32, i32) {
    %c0_i32 = arith.constant 0 : i32
    %c0_i32_0 = arith.constant 0 : i32
    %c0_i32_1 = arith.constant 0 : i32
    return %c0_i32, %c0_i32_0 : i32, i32
  }
  func.func @transform_17(%arg0: i32) -> (i32, i32) {
    %c0_i32 = arith.constant 0 : i32
    %c0_i32_0 = arith.constant 0 : i32
    %c0_i32_1 = arith.constant 0 : i32
    return %c0_i32, %c0_i32_0 : i32, i32
  }
  func.func @transform_18(%arg0: i32) -> (i32, i32) {
    %c0_i32 = arith.constant 0 : i32
    %c0_i32_0 = arith.constant 0 : i32
    %c0_i32_1 = arith.constant 0 : i32
    return %c0_i32, %c0_i32_0 : i32, i32
  }
  func.func @transform_19(%arg0: i32) -> (i32, i32) {
    %c0_i32 = arith.constant 0 : i32
    %c0_i32_0 = arith.constant 0 : i32
    %c0_i32_1 = arith.constant 0 : i32
    return %c0_i32, %c0_i32_0 : i32, i32
  }
  func.func @transform_20(%arg0: i32) -> (i32, i32) {
    %c0_i32 = arith.constant 0 : i32
    %c0_i32_0 = arith.constant 0 : i32
    return %arg0, %c0_i32 : i32, i32
  }
}

</mosaic_0001>

<llo_original>
// kernel: _lambda_.1
$region0: #{_lambda_.1}
  #allocation0 [shape = 'u32[]', space=smem, size = 0x4, offset = 0x4, fixed_abs, tag = 'smem constant byte address 0x4 - core index']
  #allocation1 [shape = 'u32[144,128]{1,0:T(1,128)}', space=vmem, size = 0x12000, scoped, tag = 'internal scratch']
  %s0 = inlined_call_operand.hbm [shape: f32[8,32], index: 0, kind: input, shape index: {}]
  %s1 = inlined_call_operand.vmem [shape: f32[1,8192], index: 1, kind: input, shape index: {}]
  %s2 = inlined_call_operand.vmem [shape: bf16[32,1024], index: 2, kind: input, shape index: {}]
  %s3 = inlined_call_operand.hbm [shape: bf16[1024,512], index: 3, kind: input, shape index: {}]
  %s4 = inlined_call_operand.vmem [shape: bf16[512,256], index: 4, kind: input, shape index: {}]
  %s5 = inlined_call_operand.hbm [shape: bf16[256,256], index: 5, kind: input, shape index: {}]
  %s6 = inlined_call_operand.hbm [shape: bf16[256,256], index: 6, kind: input, shape index: {}]
  %s7 = inlined_call_operand.hbm [shape: bf16[256,128], index: 7, kind: input, shape index: {}]
  %s8 = inlined_call_operand.vmem [shape: bf16[128,64], index: 8, kind: input, shape index: {}]
  %s9 = inlined_call_operand.vmem [shape: bf16[64,64], index: 9, kind: input, shape index: {}]
  %s10 = inlined_call_operand.hbm [shape: bf16[64,64], index: 10, kind: input, shape index: {}]
  %s11 = inlined_call_operand.hbm [shape: bf16[64,128], index: 11, kind: input, shape index: {}]
  %s12 = inlined_call_operand.hbm [shape: bf16[128,256], index: 12, kind: input, shape index: {}]
  %s13 = inlined_call_operand.hbm [shape: bf16[256,512], index: 13, kind: input, shape index: {}]
  %s14 = inlined_call_operand.hbm [shape: bf16[512,512], index: 14, kind: input, shape index: {}]
  %s15 = inlined_call_operand.hbm [shape: bf16[512,512], index: 15, kind: input, shape index: {}]
  %s16 = inlined_call_operand.hbm [shape: bf16[512,1024], index: 16, kind: input, shape index: {}]
  %s17 = inlined_call_operand.vmem [shape: bf16[1024,32], index: 17, kind: input, shape index: {}]
  %s18 = inlined_call_operand.vmem [shape: bf16[32,32], index: 18, kind: input, shape index: {}]
  %s19 = inlined_call_operand.hbm [shape: bf16[32,32], index: 19, kind: input, shape index: {}]
  %s20 = inlined_call_operand.hbm [shape: f32[8,32], index: 20, kind: output, shape index: {}]
  %s21 = sld [smem:[#allocation0]]
  $region142: #{_lambda_.1} parent=0
    _
  %s23 = ssub.s32 1, %s21
  %s24 = scalar_select 0, %s23, %s21
  $region1: #{_lambda_.1} parent=0
    #allocation2 [shape = 'u8[4096]{0}', space=vmem, size = 0x1000, scoped, tag = 'input window, operand 0, single buffered']
    #allocation3 [shape = 's32[1]{0}', space=sflag, size = 0x4, scoped, tag = 'scoped memory for _lambda_.1']
    #allocation4 [shape = 's32[1]{0}', space=sflag, size = 0x4, scoped, tag = 'scoped memory for _lambda_.1']
    #allocation5 [shape = 'u8[1048576]{0}', space=vmem, size = 0x100000, scoped, tag = 'input window, operand 3, single buffered']
    #allocation6 [shape = 's32[1]{0}', space=sflag, size = 0x4, scoped, tag = 'scoped memory for _lambda_.1']
    #allocation7 [shape = 'u8[131072]{0}', space=vmem, size = 0x20000, scoped, tag = 'input window, operand 5, single buffered']
    #allocation8 [shape = 'u8[131072]{0}', space=vmem, size = 0x20000, scoped, tag = 'input window, operand 6, single buffered']
    #allocation9 [shape = 's32[1]{0}', space=sflag, size = 0x4, scoped, tag = 'scoped memory for _lambda_.1']
    #allocation10 [shape = 'u8[65536]{0}', space=vmem, size = 0x10000, scoped, tag = 'input window, operand 7, single buffered']
    #allocation11 [shape = 'u8[16384]{0}', space=vmem, size = 0x4000, scoped, tag = 'input window, operand 10, single buffered']
    #allocation12 [shape = 's32[1]{0}', space=sflag, size = 0x4, scoped, tag = 'scoped memory for _lambda_.1']
    #allocation13 [shape = 'u8[16384]{0}', space=vmem, size = 0x4000, scoped, tag = 'input window, operand 11, single buffered']
    #allocation14 [shape = 'u8[65536]{0}', space=vmem, size = 0x10000, scoped, tag = 'input window, operand 12, single buffered']
    #allocation15 [shape = 's32[1]{0}', space=sflag, size = 0x4, scoped, tag = 'scoped memory for _lambda_.1']
    #allocation16 [shape = 'u8[262144]{0}', space=vmem, size = 0x40000, scoped, tag = 'input window, operand 13, single buffered']
    #allocation17 [shape = 'u8[524288]{0}', space=vmem, size = 0x80000, scoped, tag = 'input window, operand 14, single buffered']
    #allocation18 [shape = 's32[1]{0}', space=sflag, size = 0x4, scoped, tag = 'scoped memory for _lambda_.1']
    #allocation19 [shape = 'u8[524288]{0}', space=vmem, size = 0x80000, scoped, tag = 'input window, operand 15, single buffered']
    #allocation20 [shape = 'u8[1048576]{0}', space=vmem, size = 0x100000, scoped, tag = 'input window, operand 16, single buffered']
    #allocation21 [shape = 's32[1]{0}', space=sflag, size = 0x4, scoped, tag = 'scoped memory for _lambda_.1']
    #allocation22 [shape = 'u8[8192]{0}', space=vmem, size = 0x2000, scoped, tag = 'input window, operand 19, single buffered']
    #allocation23 [shape = 'u8[4096]{0}', space=vmem, size = 0x1000, scoped, tag = 'output window, operand 0, single buffered']
    %25 = vsyncpa [#allocation3], 0
    %26 = vsyncpa [#allocation6], 0
    %27 = vsyncpa [#allocation9], 0
    %28 = vsyncpa [#allocation12], 0
    %29 = vsyncpa [#allocation15], 0
    %30 = vsyncpa [#allocation18], 0
    %31 = vsyncpa [#allocation21], 0
    %32 = vsyncpa [#allocation4], 0
    // Predicated region
    $region2: #{_lambda_.1} parent=1 // pred_check
      _
    $region3: #{_lambda_.1} parent=1 // pred_check_branch
      %34 = sbr.rel (0) target = $region5
    $region4: #{_lambda_.1} parent=1 // pred_region
      %s36 = ssub.s32 128, 128
      %37 = vsyncadd [#allocation3], %s36
      %s39 = sshll.u32 [#allocation2], 4
      %s40 = int_to_ptr.vmem [resolvable:$true] %s39
      %42 = dma.hbm_to_vmem [thread:$0]  %s0, 128, %s40, [#allocation3]
    $region5: #{_lambda_.1} parent=1 // pred_fallthru
      _
    // Predicated region
    $region6: #{_lambda_.1} parent=1 // pred_check
      _
    $region7: #{_lambda_.1} parent=1 // pred_check_branch
      %44 = sbr.rel (0) target = $region9
    $region8: #{_lambda_.1} parent=1 // pred_region
      _
    $region9: #{_lambda_.1} parent=1 // pred_fallthru
      _
    // Predicated region
    $region10: #{_lambda_.1} parent=1 // pred_check
      _
    $region11: #{_lambda_.1} parent=1 // pred_check_branch
      %46 = sbr.rel (0) target = $region13
    $region12: #{_lambda_.1} parent=1 // pred_region
      _
    $region13: #{_lambda_.1} parent=1 // pred_fallthru
      _
    // Predicated region
    $region14: #{_lambda_.1} parent=1 // pred_check
      _
    $region15: #{_lambda_.1} parent=1 // pred_check_branch
      %48 = sbr.rel (0) target = $region17
    $region16: #{_lambda_.1} parent=1 // pred_region
      %s50 = ssub.s32 32768, 32768
      %51 = vsyncadd [#allocation6], %s50
      %s52 = sshll.u32 [#allocation5], 4
      %s53 = int_to_ptr.vmem [resolvable:$true] %s52
      %58 = dma.hbm_to_vmem [thread:$0]  %s3, 32768, %s53, [#allocation6], 256, 256, 16
    $region17: #{_lambda_.1} parent=1 // pred_fallthru
      _
    // Predicated region
    $region18: #{_lambda_.1} parent=1 // pred_check
      _
    $region19: #{_lambda_.1} parent=1 // pred_check_branch
      %60 = sbr.rel (0) target = $region21
    $region20: #{_lambda_.1} parent=1 // pred_region
      _
    $region21: #{_lambda_.1} parent=1 // pred_fallthru
      _
    // Predicated region
    $region22: #{_lambda_.1} parent=1 // pred_check
      _
    $region23: #{_lambda_.1} parent=1 // pred_check_branch
      %62 = sbr.rel (0) target = $region25
    $region24: #{_lambda_.1} parent=1 // pred_region
      %s64 = ssub.s32 4096, 4096
      %65 = vsyncadd [#allocation6], %s64
      %s66 = sshll.u32 [#allocation7], 4
      %s67 = int_to_ptr.vmem [resolvable:$true] %s66
      %72 = dma.hbm_to_vmem [thread:$0]  %s5, 4096, %s67, [#allocation6], 128, 128, 8
    $region25: #{_lambda_.1} parent=1 // pred_fallthru
      _
    // Predicated region
    $region26: #{_lambda_.1} parent=1 // pred_check
      _
    $region27: #{_lambda_.1} parent=1 // pred_check_branch
      %74 = sbr.rel (0) target = $region29
    $region28: #{_lambda_.1} parent=1 // pred_region
      %s76 = ssub.s32 4096, 4096
      %77 = vsyncadd [#allocation9], %s76
      %s78 = sshll.u32 [#allocation8], 4
      %s79 = int_to_ptr.vmem [resolvable:$true] %s78
      %84 = dma.hbm_to_vmem [thread:$0]  %s6, 4096, %s79, [#allocation9], 128, 128, 8
    $region29: #{_lambda_.1} parent=1 // pred_fallthru
      _
    // Predicated region
    $region30: #{_lambda_.1} parent=1 // pred_check
      _
    $region31: #{_lambda_.1} parent=1 // pred_check_branch
      %86 = sbr.rel (0) target = $region33
    $region32: #{_lambda_.1} parent=1 // pred_region
      %s88 = ssub.s32 2048, 2048
      %89 = vsyncadd [#allocation9], %s88
      %s90 = sshll.u32 [#allocation10], 4
      %s91 = int_to_ptr.vmem [resolvable:$true] %s90
      %96 = dma.hbm_to_vmem [thread:$0]  %s7, 2048, %s91, [#allocation9], 64, 64, 4
    $region33: #{_lambda_.1} parent=1 // pred_fallthru
      _
    // Predicated region
    $region34: #{_lambda_.1} parent=1 // pred_check
      _
    $region35: #{_lambda_.1} parent=1 // pred_check_branch
      %98 = sbr.rel (0) target = $region37
    $region36: #{_lambda_.1} parent=1 // pred_region
      _
    $region37: #{_lambda_.1} parent=1 // pred_fallthru
      _
    // Predicated region
    $region38: #{_lambda_.1} parent=1 // pred_check
      _
    $region39: #{_lambda_.1} parent=1 // pred_check_branch
      %100 = sbr.rel (0) target = $region41
    $region40: #{_lambda_.1} parent=1 // pred_region
      _
    $region41: #{_lambda_.1} parent=1 // pred_fallthru
      _
    // Predicated region
    $region42: #{_lambda_.1} parent=1 // pred_check
      _
    $region43: #{_lambda_.1} parent=1 // pred_check_branch
      %102 = sbr.rel (0) target = $region45
    $region44: #{_lambda_.1} parent=1 // pred_region
      %s104 = ssub.s32 512, 512
      %105 = vsyncadd [#allocation12], %s104
      %s106 = sshll.u32 [#allocation11], 4
      %s107 = int_to_ptr.vmem [resolvable:$true] %s106
      %112 = dma.hbm_to_vmem [thread:$0]  %s10, 512, %s107, [#allocation12], 64, 64, 4
    $region45: #{_lambda_.1} parent=1 // pred_fallthru
      _
    // Predicated region
    $region46: #{_lambda_.1} parent=1 // pred_check
      _
    $region47: #{_lambda_.1} parent=1 // pred_check_branch
      %114 = sbr.rel (0) target = $region49
    $region48: #{_lambda_.1} parent=1 // pred_region
      %s116 = ssub.s32 512, 512
      %117 = vsyncadd [#allocation12], %s116
      %s118 = sshll.u32 [#allocation13], 4
      %s119 = int_to_ptr.vmem [resolvable:$true] %s118
      %124 = dma.hbm_to_vmem [thread:$0]  %s11, 512, %s119, [#allocation12], 64, 64, 4
    $region49: #{_lambda_.1} parent=1 // pred_fallthru
      _
    // Predicated region
    $region50: #{_lambda_.1} parent=1 // pred_check
      _
    $region51: #{_lambda_.1} parent=1 // pred_check_branch
      %126 = sbr.rel (0) target = $region53
    $region52: #{_lambda_.1} parent=1 // pred_region
      %s128 = ssub.s32 2048, 2048
      %129 = vsyncadd [#allocation15], %s128
      %s130 = sshll.u32 [#allocation14], 4
      %s131 = int_to_ptr.vmem [resolvable:$true] %s130
      %136 = dma.hbm_to_vmem [thread:$0]  %s12, 2048, %s131, [#allocation15], 128, 128, 8
    $region53: #{_lambda_.1} parent=1 // pred_fallthru
      _
    // Predicated region
    $region54: #{_lambda_.1} parent=1 // pred_check
      _
    $region55: #{_lambda_.1} parent=1 // pred_check_branch
      %138 = sbr.rel (0) target = $region57
    $region56: #{_lambda_.1} parent=1 // pred_region
      %s140 = ssub.s32 8192, 8192
      %141 = vsyncadd [#allocation15], %s140
      %s142 = sshll.u32 [#allocation16], 4
      %s143 = int_to_ptr.vmem [resolvable:$true] %s142
      %148 = dma.hbm_to_vmem [thread:$0]  %s13, 8192, %s143, [#allocation15], 256, 256, 16
    $region57: #{_lambda_.1} parent=1 // pred_fallthru
      _
    // Predicated region
    $region58: #{_lambda_.1} parent=1 // pred_check
      _
    $region59: #{_lambda_.1} parent=1 // pred_check_branch
      %150 = sbr.rel (0) target = $region61
    $region60: #{_lambda_.1} parent=1 // pred_region
      %s152 = ssub.s32 16384, 16384
      %153 = vsyncadd [#allocation18], %s152
      %s154 = sshll.u32 [#allocation17], 4
      %s155 = int_to_ptr.vmem [resolvable:$true] %s154
      %160 = dma.hbm_to_vmem [thread:$0]  %s14, 16384, %s155, [#allocation18], 256, 256, 16
    $region61: #{_lambda_.1} parent=1 // pred_fallthru
      _
    // Predicated region
    $region62: #{_lambda_.1} parent=1 // pred_check
      _
    $region63: #{_lambda_.1} parent=1 // pred_check_branch
      %162 = sbr.rel (0) target = $region65
    $region64: #{_lambda_.1} parent=1 // pred_region
      %s164 = ssub.s32 16384, 16384
      %165 = vsyncadd [#allocation18], %s164
      %s166 = sshll.u32 [#allocation19], 4
      %s167 = int_to_ptr.vmem [resolvable:$true] %s166
      %172 = dma.hbm_to_vmem [thread:$0]  %s15, 16384, %s167, [#allocation18], 256, 256, 16
    $region65: #{_lambda_.1} parent=1 // pred_fallthru
      _
    // Predicated region
    $region66: #{_lambda_.1} parent=1 // pred_check
      _
    $region67: #{_lambda_.1} parent=1 // pred_check_branch
      %174 = sbr.rel (0) target = $region69
    $region68: #{_lambda_.1} parent=1 // pred_region
      %s176 = ssub.s32 32768, 32768
      %177 = vsyncadd [#allocation21], %s176
      %s178 = sshll.u32 [#allocation20], 4
      %s179 = int_to_ptr.vmem [resolvable:$true] %s178
      %184 = dma.hbm_to_vmem [thread:$0]  %s16, 32768, %s179, [#allocation21], 512, 512, 32
    $region69: #{_lambda_.1} parent=1 // pred_fallthru
      _
    // Predicated region
    $region70: #{_lambda_.1} parent=1 // pred_check
      _
    $region71: #{_lambda_.1} parent=1 // pred_check_branch
      %186 = sbr.rel (0) target = $region73
    $region72: #{_lambda_.1} parent=1 // pred_region
      _
    $region73: #{_lambda_.1} parent=1 // pred_fallthru
      _
    // Predicated region
    $region74: #{_lambda_.1} parent=1 // pred_check
      _
    $region75: #{_lambda_.1} parent=1 // pred_check_branch
      %188 = sbr.rel (0) target = $region77
    $region76: #{_lambda_.1} parent=1 // pred_region
      _
    $region77: #{_lambda_.1} parent=1 // pred_fallthru
      _
    // Predicated region
    $region78: #{_lambda_.1} parent=1 // pred_check
      _
    $region79: #{_lambda_.1} parent=1 // pred_check_branch
      %190 = sbr.rel (0) target = $region81
    $region80: #{_lambda_.1} parent=1 // pred_region
      %s192 = ssub.s32 256, 256
      %193 = vsyncadd [#allocation21], %s192
      %s194 = sshll.u32 [#allocation22], 4
      %s195 = int_to_ptr.vmem [resolvable:$true] %s194
      %200 = dma.hbm_to_vmem [thread:$0]  %s19, 256, %s195, [#allocation21], 64, 64, 4
    $region81: #{_lambda_.1} parent=1 // pred_fallthru
      _
    // Predicated region
    $region82: #{_lambda_.1} parent=1 // pred_check
      _
    $region83: #{_lambda_.1} parent=1 // pred_check_branch
      %202 = sbr.rel (0) target = $region85
    $region84: #{_lambda_.1} parent=1 // pred_region
      %203 = dma.done [#allocation3], 128
    $region85: #{_lambda_.1} parent=1 // pred_fallthru
      _
    // Predicated region
    $region86: #{_lambda_.1} parent=1 // pred_check
      _
    $region87: #{_lambda_.1} parent=1 // pred_check_branch
      %205 = sbr.rel (0) target = $region89
    $region88: #{_lambda_.1} parent=1 // pred_region
      %206 = dma.done [#allocation6], 32768
    $region89: #{_lambda_.1} parent=1 // pred_fallthru
      _
    // Predicated region
    $region90: #{_lambda_.1} parent=1 // pred_check
      _
    $region91: #{_lambda_.1} parent=1 // pred_check_branch
      %208 = sbr.rel (0) target = $region93
    $region92: #{_lambda_.1} parent=1 // pred_region
      %209 = dma.done [#allocation6], 4096
    $region93: #{_lambda_.1} parent=1 // pred_fallthru
      _
    // Predicated region
    $region94: #{_lambda_.1} parent=1 // pred_check
      _
    $region95: #{_lambda_.1} parent=1 // pred_check_branch
      %211 = sbr.rel (0) target = $region97
    $region96: #{_lambda_.1} parent=1 // pred_region
      %212 = dma.done [#allocation9], 4096
    $region97: #{_lambda_.1} parent=1 // pred_fallthru
      _
    // Predicated region
    $region98: #{_lambda_.1} parent=1 // pred_check
      _
    $region99: #{_lambda_.1} parent=1 // pred_check_branch
      %214 = sbr.rel (0) target = $region101
    $region100: #{_lambda_.1} parent=1 // pred_region
      %215 = dma.done [#allocation9], 2048
    $region101: #{_lambda_.1} parent=1 // pred_fallthru
      _
    // Predicated region
    $region102: #{_lambda_.1} parent=1 // pred_check
      _
    $region103: #{_lambda_.1} parent=1 // pred_check_branch
      %217 = sbr.rel (0) target = $region105
    $region104: #{_lambda_.1} parent=1 // pred_region
      %218 = dma.done [#allocation12], 512
    $region105: #{_lambda_.1} parent=1 // pred_fallthru
      _
    // Predicated region
    $region106: #{_lambda_.1} parent=1 // pred_check
      _
    $region107: #{_lambda_.1} parent=1 // pred_check_branch
      %220 = sbr.rel (0) target = $region109
    $region108: #{_lambda_.1} parent=1 // pred_region
      %221 = dma.done [#allocation12], 512
    $region109: #{_lambda_.1} parent=1 // pred_fallthru
      _
    // Predicated region
    $region110: #{_lambda_.1} parent=1 // pred_check
      _
    $region111: #{_lambda_.1} parent=1 // pred_check_branch
      %223 = sbr.rel (0) target = $region113
    $region112: #{_lambda_.1} parent=1 // pred_region
      %224 = dma.done [#allocation15], 2048
    $region113: #{_lambda_.1} parent=1 // pred_fallthru
      _
    // Predicated region
    $region114: #{_lambda_.1} parent=1 // pred_check
      _
    $region115: #{_lambda_.1} parent=1 // pred_check_branch
      %226 = sbr.rel (0) target = $region117
    $region116: #{_lambda_.1} parent=1 // pred_region
      %227 = dma.done [#allocation15], 8192
    $region117: #{_lambda_.1} parent=1 // pred_fallthru
      _
    // Predicated region
    $region118: #{_lambda_.1} parent=1 // pred_check
      _
    $region119: #{_lambda_.1} parent=1 // pred_check_branch
      %229 = sbr.rel (0) target = $region121
    $region120: #{_lambda_.1} parent=1 // pred_region
      %230 = dma.done [#allocation18], 16384
    $region121: #{_lambda_.1} parent=1 // pred_fallthru
      _
    // Predicated region
    $region122: #{_lambda_.1} parent=1 // pred_check
      _
    $region123: #{_lambda_.1} parent=1 // pred_check_branch
      %232 = sbr.rel (0) target = $region125
    $region124: #{_lambda_.1} parent=1 // pred_region
      %233 = dma.done [#allocation18], 16384
    $region125: #{_lambda_.1} parent=1 // pred_fallthru
      _
    // Predicated region
    $region126: #{_lambda_.1} parent=1 // pred_check
      _
    $region127: #{_lambda_.1} parent=1 // pred_check_branch
      %235 = sbr.rel (0) target = $region129
    $region128: #{_lambda_.1} parent=1 // pred_region
      %236 = dma.done [#allocation21], 32768
    $region129: #{_lambda_.1} parent=1 // pred_fallthru
      _
    // Predicated region
    $region130: #{_lambda_.1} parent=1 // pred_check
      _
    $region131: #{_lambda_.1} parent=1 // pred_check_branch
      %238 = sbr.rel (0) target = $region133
    $region132: #{_lambda_.1} parent=1 // pred_region
      %239 = dma.done [#allocation21], 256
    $region133: #{_lambda_.1} parent=1 // pred_fallthru
      _
    %v241 = vld [vmem:[#allocation2] sm:$0xff]
    %v242 = vld [vmem:[%s1] sm:$0xff]
    %v243 = vpack.c.bf16 %v241, %v241
    %v244 = vld [vmem:[%s2] sm:$0xff]
    %v245 = vld [vmem:[%s2 + $0x8] sm:$0xff]
    %v246 = vld [vmem:[%s2 + $0x10] sm:$0xff]
    %v247 = vld [vmem:[%s2 + $0x18] sm:$0xff]
    %v248 = vld [vmem:[%s2 + $0x20] sm:$0xff]
    %v249 = vld [vmem:[%s2 + $0x28] sm:$0xff]
    %v250 = vld [vmem:[%s2 + $0x30] sm:$0xff]
    %v251 = vld [vmem:[%s2 + $0x38] sm:$0xff]
    %v252 = vld [vmem:[%s2 + $0x40] sm:$0xff]
    %v253 = vld [vmem:[%s2 + $0x48] sm:$0xff]
    %v254 = vld [vmem:[%s2 + $0x50] sm:$0xff]
    %v255 = vld [vmem:[%s2 + $0x58] sm:$0xff]
    %v256 = vld [vmem:[%s2 + $0x60] sm:$0xff]
    %v257 = vld [vmem:[%s2 + $0x68] sm:$0xff]
    %v258 = vld [vmem:[%s2 + $0x70] sm:$0xff]
    %v259 = vld [vmem:[%s2 + $0x78] sm:$0xff]
    %v261 = vlaneseq
    %v262 = vshrl.u32 %v261, 7
    %v263 = vsub.s32 0, %v262
    %v264 = vrot.slane %v242, %v263
    %v265 = vlaneseq
    %v266 = vshrl.u32 %v265, 7
    %v267 = vsub.s32 1, %v266
    %v268 = vrot.slane %v242, %v267
    %v269 = vlaneseq
    %v270 = vshrl.u32 %v269, 7
    %v271 = vsub.s32 2, %v270
    %v272 = vrot.slane %v242, %v271
    %v273 = vlaneseq
    %v274 = vshrl.u32 %v273, 7
    %v275 = vsub.s32 3, %v274
    %v276 = vrot.slane %v242, %v275
    %v277 = vlaneseq
    %v278 = vshrl.u32 %v277, 7
    %v279 = vsub.s32 4, %v278
    %v280 = vrot.slane %v242, %v279
    %v281 = vlaneseq
    %v282 = vshrl.u32 %v281, 7
    %v283 = vsub.s32 5, %v282
    %v284 = vrot.slane %v242, %v283
    %v285 = vlaneseq
    %v286 = vshrl.u32 %v285, 7
    %v287 = vsub.s32 6, %v286
    %v288 = vrot.slane %v242, %v287
    %v289 = vlaneseq
    %v290 = vshrl.u32 %v289, 7
    %v291 = vsub.s32 7, %v290
    %v292 = vrot.slane %v242, %v291
    %v317 = vunpack.c.l.b16 %v244
    %v318 = vunpack.c.h.b16 %v244
    %v319 = vunpack.c.l.b16 %v245
    %v320 = vunpack.c.h.b16 %v245
    %v321 = vunpack.c.l.b16 %v246
    %v322 = vunpack.c.h.b16 %v246
    %v323 = vunpack.c.l.b16 %v247
    %v324 = vunpack.c.h.b16 %v247
    %v325 = vunpack.c.l.b16 %v248
    %v326 = vunpack.c.h.b16 %v248
    %v327 = vunpack.c.l.b16 %v249
    %v328 = vunpack.c.h.b16 %v249
    %v329 = vunpack.c.l.b16 %v250
    %v330 = vunpack.c.h.b16 %v250
    %v331 = vunpack.c.l.b16 %v251
    %v332 = vunpack.c.h.b16 %v251
    %v333 = vunpack.c.l.b16 %v252
    %v334 = vunpack.c.h.b16 %v252
    %v335 = vunpack.c.l.b16 %v253
    %v336 = vunpack.c.h.b16 %v253
    %v337 = vunpack.c.l.b16 %v254
    %v338 = vunpack.c.h.b16 %v254
    %v339 = vunpack.c.l.b16 %v255
    %v340 = vunpack.c.h.b16 %v255
    %v341 = vunpack.c.l.b16 %v256
    %v342 = vunpack.c.h.b16 %v256
    %v343 = vunpack.c.l.b16 %v257
    %v344 = vunpack.c.h.b16 %v257
    %v345 = vunpack.c.l.b16 %v258
    %v346 = vunpack.c.h.b16 %v258
    %v347 = vunpack.c.l.b16 %v259
    %v348 = vunpack.c.h.b16 %v259
    %v349 = vpack.c.b16 %v325, %v317
    %v350 = vpack.c.b16 %v326, %v318
    %v351 = vpack.c.b16 %v327, %v319
    %v352 = vpack.c.b16 %v328, %v320
    %v353 = vpack.c.b16 %v329, %v321
    %v354 = vpack.c.b16 %v330, %v322
    %v355 = vpack.c.b16 %v331, %v323
    %v356 = vpack.c.b16 %v332, %v324
    %v357 = vpack.c.b16 %v341, %v333
    %v358 = vpack.c.b16 %v342, %v334
    %v359 = vpack.c.b16 %v343, %v335
    %v360 = vpack.c.b16 %v344, %v336
    %v361 = vpack.c.b16 %v345, %v337
    %v362 = vpack.c.b16 %v346, %v338
    %v363 = vpack.c.b16 %v347, %v339
    %v364 = vpack.c.b16 %v348, %v340
    %vm381 = vcmask 261120
    %v383 = vsel %vm381, %v243, 0
    %385 = vmatprep.subr.bf16.mxu0 0
    %386 = vmatpush1.bf16.msra.mxu0 0
    %387 = vmatprep.subr.bf16.mxu0 0
    %388 = vmatpush1.bf16.msra.mxu0 0
    %389 = vmatprep.subr.bf16.mxu0 0
    %390 = vmatpush1.bf16.msra.mxu0 0
    %391 = vmatprep.subr.bf16.mxu0 0
    %392 = vmatpush1.bf16.msra.mxu0 0
    %393 = vmatprep.subr.bf16.mxu0 0
    %394 = vmatpush1.bf16.msra.mxu0 0
    %395 = vmatprep.subr.bf16.mxu0 0
    %396 = vmatpush1.bf16.msra.mxu0 0
    %397 = vmatprep.subr.bf16.mxu0 %v358
    %398 = vmatpush1.bf16.msra.mxu0 %v357
    %399 = vmatprep.subr.bf16.mxu0 %v350
    %400 = vmatpush1.bf16.msra.mxu0 %v349
    %401 = vmatprep.subr.bf16.mxu0 0
    %402 = vmatpush2.bf16.msra.mxu0 0
    %403 = vmatprep.subr.bf16.mxu0 0
    %404 = vmatpush2.bf16.msra.mxu0 0
    %405 = vmatprep.subr.bf16.mxu0 0
    %406 = vmatpush2.bf16.msra.mxu0 0
    %407 = vmatprep.subr.bf16.mxu0 0
    %408 = vmatpush2.bf16.msra.mxu0 0
    %409 = vmatprep.subr.bf16.mxu0 0
    %410 = vmatpush2.bf16.msra.mxu0 0
    %411 = vmatprep.subr.bf16.mxu0 0
    %412 = vmatpush2.bf16.msra.mxu0 0
    %413 = vmatprep.subr.bf16.mxu0 0
    %414 = vmatpush2.bf16.msra.mxu0 0
    %415 = vmatprep.subr.bf16.mxu0 0
    %416 = vmatpush2.bf16.msra.mxu0 0
    %417 = vmatprep.mubr.bf16.mxu0 0
    %418 = vmatmul.mubr.bf16.gmra.mxu0 %v383
    %v419 = vpop.f32.mrf.mxu0
    %v420 = vadd.f32 %v264, %v419
    %v421 = vpop.f32.mrf.mxu0
    %v422 = vadd.f32 %v268, %v421
    %v423 = vpop.f32.mrf.mxu0
    %v424 = vpop.f32.mrf.mxu0
    %425 = vdwg.mxu0
    %426 = vmatprep.subr.bf16.mxu0 0
    %427 = vmatpush1.bf16.msra.mxu0 0
    %428 = vmatprep.subr.bf16.mxu0 0
    %429 = vmatpush1.bf16.msra.mxu0 0
    %430 = vmatprep.subr.bf16.mxu0 0
    %431 = vmatpush1.bf16.msra.mxu0 0
    %432 = vmatprep.subr.bf16.mxu0 0
    %433 = vmatpush1.bf16.msra.mxu0 0
    %434 = vmatprep.subr.bf16.mxu0 0
    %435 = vmatpush1.bf16.msra.mxu0 0
    %436 = vmatprep.subr.bf16.mxu0 0
    %437 = vmatpush1.bf16.msra.mxu0 0
    %438 = vmatprep.subr.bf16.mxu0 %v360
    %439 = vmatpush1.bf16.msra.mxu0 %v359
    %440 = vmatprep.subr.bf16.mxu0 %v352
    %441 = vmatpush1.bf16.msra.mxu0 %v351
    %442 = vmatprep.subr.bf16.mxu0 0
    %443 = vmatpush2.bf16.msra.mxu0 0
    %444 = vmatprep.subr.bf16.mxu0 0
    %445 = vmatpush2.bf16.msra.mxu0 0
    %446 = vmatprep.subr.bf16.mxu0 0
    %447 = vmatpush2.bf16.msra.mxu0 0
    %448 = vmatprep.subr.bf16.mxu0 0
    %449 = vmatpush2.bf16.msra.mxu0 0
    %450 = vmatprep.subr.bf16.mxu0 0
    %451 = vmatpush2.bf16.msra.mxu0 0
    %452 = vmatprep.subr.bf16.mxu0 0
    %453 = vmatpush2.bf16.msra.mxu0 0
    %454 = vmatprep.subr.bf16.mxu0 0
    %455 = vmatpush2.bf16.msra.mxu0 0
    %456 = vmatprep.subr.bf16.mxu0 0
    %457 = vmatpush2.bf16.msra.mxu0 0
    %458 = vmatprep.mubr.bf16.mxu0 0
    %459 = vmatmul.mubr.bf16.gmra.mxu0 %v383
    %v460 = vpop.f32.mrf.mxu0
    %v461 = vadd.f32 %v272, %v460
    %v462 = vpop.f32.mrf.mxu0
    %v463 = vadd.f32 %v276, %v462
    %v464 = vpop.f32.mrf.mxu0
    %v465 = vpop.f32.mrf.mxu0
    %466 = vdwg.mxu0
    %467 = vmatprep.subr.bf16.mxu0 0
    %468 = vmatpush1.bf16.msra.mxu0 0
    %469 = vmatprep.subr.bf16.mxu0 0
    %470 = vmatpush1.bf16.msra.mxu0 0
    %471 = vmatprep.subr.bf16.mxu0 0
    %472 = vmatpush1.bf16.msra.mxu0 0
    %473 = vmatprep.subr.bf16.mxu0 0
    %474 = vmatpush1.bf16.msra.mxu0 0
    %475 = vmatprep.subr.bf16.mxu0 0
    %476 = vmatpush1.bf16.msra.mxu0 0
    %477 = vmatprep.subr.bf16.mxu0 0
    %478 = vmatpush1.bf16.msra.mxu0 0
    %479 = vmatprep.subr.bf16.mxu0 %v362
    %480 = vmatpush1.bf16.msra.mxu0 %v361
    %481 = vmatprep.subr.bf16.mxu0 %v354
    %482 = vmatpush1.bf16.msra.mxu0 %v353
    %483 = vmatprep.subr.bf16.mxu0 0
    %484 = vmatpush2.bf16.msra.mxu0 0
    %485 = vmatprep.subr.bf16.mxu0 0
    %486 = vmatpush2.bf16.msra.mxu0 0
    %487 = vmatprep.subr.bf16.mxu0 0
    %488 = vmatpush2.bf16.msra.mxu0 0
    %489 = vmatprep.subr.bf16.mxu0 0
    %490 = vmatpush2.bf16.msra.mxu0 0
    %491 = vmatprep.subr.bf16.mxu0 0
    %492 = vmatpush2.bf16.msra.mxu0 0
    %493 = vmatprep.subr.bf16.mxu0 0
    %494 = vmatpush2.bf16.msra.mxu0 0
    %495 = vmatprep.subr.bf16.mxu0 0
    %496 = vmatpush2.bf16.msra.mxu0 0
    %497 = vmatprep.subr.bf16.mxu0 0
    %498 = vmatpush2.bf16.msra.mxu0 0
    %499 = vmatprep.mubr.bf16.mxu0 0
    %500 = vmatmul.mubr.bf16.gmra.mxu0 %v383
    %v501 = vpop.f32.mrf.mxu0
    %v502 = vadd.f32 %v280, %v501
    %v503 = vpop.f32.mrf.mxu0
    %v504 = vadd.f32 %v284, %v503
    %v505 = vpop.f32.mrf.mxu0
    %v506 = vpop.f32.mrf.mxu0
    %507 = vdwg.mxu0
    %508 = vmatprep.subr.bf16.mxu0 0
    %509 = vmatpush1.bf16.msra.mxu0 0
    %510 = vmatprep.subr.bf16.mxu0 0
    %511 = vmatpush1.bf16.msra.mxu0 0
    %512 = vmatprep.subr.bf16.mxu0 0
    %513 = vmatpush1.bf16.msra.mxu0 0
    %514 = vmatprep.subr.bf16.mxu0 0
    %515 = vmatpush1.bf16.msra.mxu0 0
    %516 = vmatprep.subr.bf16.mxu0 0
    %517 = vmatpush1.bf16.msra.mxu0 0
    %518 = vmatprep.subr.bf16.mxu0 0
    %519 = vmatpush1.bf16.msra.mxu0 0
    %520 = vmatprep.subr.bf16.mxu0 %v364
    %521 = vmatpush1.bf16.msra.mxu0 %v363
    %522 = vmatprep.subr.bf16.mxu0 %v356
    %523 = vmatpush1.bf16.msra.mxu0 %v355
    %524 = vmatprep.subr.bf16.mxu0 0
    %525 = vmatpush2.bf16.msra.mxu0 0
    %526 = vmatprep.subr.bf16.mxu0 0
    %527 = vmatpush2.bf16.msra.mxu0 0
    %528 = vmatprep.subr.bf16.mxu0 0
    %529 = vmatpush2.bf16.msra.mxu0 0
    %530 = vmatprep.subr.bf16.mxu0 0
    %531 = vmatpush2.bf16.msra.mxu0 0
    %532 = vmatprep.subr.bf16.mxu0 0
    %533 = vmatpush2.bf16.msra.mxu0 0
    %534 = vmatprep.subr.bf16.mxu0 0
    %535 = vmatpush2.bf16.msra.mxu0 0
    %536 = vmatprep.subr.bf16.mxu0 0
    %537 = vmatpush2.bf16.msra.mxu0 0
    %538 = vmatprep.subr.bf16.mxu0 0
    %539 = vmatpush2.bf16.msra.mxu0 0
    %540 = vmatprep.mubr.bf16.mxu0 0
    %541 = vmatmul.mubr.bf16.gmra.mxu0 %v383
    %v542 = vpop.f32.mrf.mxu0
    %v543 = vadd.f32 %v288, %v542
    %v544 = vpop.f32.mrf.mxu0
    %v545 = vadd.f32 %v292, %v544
    %v546 = vpop.f32.mrf.mxu0
    %v547 = vpop.f32.mrf.mxu0
    %548 = vdwg.mxu0
    %v549 = vmul.f32 %v420, 0.5
    %v550 = vmul.f32 %v422, 0.5
    %v551 = vmul.f32 %v461, 0.5
    %v552 = vmul.f32 %v463, 0.5
    %v553 = vmul.f32 %v502, 0.5
    %v554 = vmul.f32 %v504, 0.5
    %v555 = vmul.f32 %v543, 0.5
    %v556 = vmul.f32 %v545, 0.5
    %v557 = vmul.f32 %v420, 0.70710677
    %v558 = vmul.f32 %v422, 0.70710677
    %v559 = vmul.f32 %v461, 0.70710677
    %v560 = vmul.f32 %v463, 0.70710677
    %v561 = vmul.f32 %v502, 0.70710677
    %v562 = vmul.f32 %v504, 0.70710677
    %v563 = vmul.f32 %v543, 0.70710677
    %v564 = vmul.f32 %v545, 0.70710677
    %v565 = verf.f32.pop %v557
    %v566 = verf.f32.pop %v558
    %v567 = verf.f32.pop %v559
    %v568 = verf.f32.pop %v560
    %v569 = verf.f32.pop %v561
    %v570 = verf.f32.pop %v562
    %v571 = verf.f32.pop %v563
    %v572 = verf.f32.pop %v564
    %v573 = vadd.f32 %v565, 1.0
    %v574 = vadd.f32 %v566, 1.0
    %v575 = vadd.f32 %v567, 1.0
    %v576 = vadd.f32 %v568, 1.0
    %v577 = vadd.f32 %v569, 1.0
    %v578 = vadd.f32 %v570, 1.0
    %v579 = vadd.f32 %v571, 1.0
    %v580 = vadd.f32 %v572, 1.0
    %v581 = vmul.f32 %v549, %v573
    %v582 = vmul.f32 %v550, %v574
    %v583 = vmul.f32 %v551, %v575
    %v584 = vmul.f32 %v552, %v576
    %v585 = vmul.f32 %v553, %v577
    %v586 = vmul.f32 %v554, %v578
    %v587 = vmul.f32 %v555, %v579
    %v588 = vmul.f32 %v556, %v580
    %v589 = vld [vmem:[%s1 + $0x8] sm:$0xf]
    %v590 = vpack.c.bf16 %v581, %v581
    %v591 = vpack.c.bf16 %v582, %v582
    %v592 = vpack.c.bf16 %v583, %v583
    %v593 = vpack.c.bf16 %v584, %v584
    %v594 = vpack.c.bf16 %v585, %v585
    %v595 = vpack.c.bf16 %v586, %v586
    %v596 = vpack.c.bf16 %v587, %v587
    %v597 = vpack.c.bf16 %v588, %v588
    %v598 = vld [vmem:[#allocation5] sm:$0xff]
    %v599 = vld [vmem:[#allocation5 + $0x8] sm:$0xff]
    %v600 = vld [vmem:[#allocation5 + $0x10] sm:$0xff]
    %v601 = vld [vmem:[#allocation5 + $0x18] sm:$0xff]
    %v602 = vld [vmem:[#allocation5 + $0x20] sm:$0xff]
    %v603 = vld [vmem:[#allocation5 + $0x28] sm:$0xff]
    %v604 = vld [vmem:[#allocation5 + $0x30] sm:$0xff]
    %v605 = vld [vmem:[#allocation5 + $0x38] sm:$0xff]
    %v606 = vld [vmem:[#allocation5 + $0x40] sm:$0xff]
    %v607 = vld [vmem:[#allocation5 + $0x48] sm:$0xff]
    %v608 = vld [vmem:[#allocation5 + $0x50] sm:$0xff]
    %v609 = vld [vmem:[#allocation5 + $0x58] sm:$0xff]
    %v610 = vld [vmem:[#allocation5 + $0x60] sm:$0xff]
    %v611 = vld [vmem:[#allocation5 + $0x68] sm:$0xff]
    %v612 = vld [vmem:[#allocation5 + $0x70] sm:$0xff]
    %v613 = vld [vmem:[#allocation5 + $0x78] sm:$0xff]
    %v614 = vld [vmem:[#allocation5 + $0x80] sm:$0xff]
    %v615 = vld [vmem:[#allocation5 + $0x88] sm:$0xff]
    %v616 = vld [vmem:[#allocation5 + $0x90] sm:$0xff]
    %v617 = vld [vmem:[#allocation5 + $0x98] sm:$0xff]
    %v618 = vld [vmem:[#allocation5 + $0xa0] sm:$0xff]
    %v619 = vld [vmem:[#allocation5 + $0xa8] sm:$0xff]
    %v620 = vld [vmem:[#allocation5 + $0xb0] sm:$0xff]
    %v621 = vld [vmem:[#allocation5 + $0xb8] sm:$0xff]
    %v622 = vld [vmem:[#allocation5 + $0xc0] sm:$0xff]
    %v623 = vld [vmem:[#allocation5 + $0xc8] sm:$0xff]
    %v624 = vld [vmem:[#allocation5 + $0xd0] sm:$0xff]
    %v625 = vld [vmem:[#allocation5 + $0xd8] sm:$0xff]
    %v626 = vld [vmem:[#allocation5 + $0xe0] sm:$0xff]
    %v627 = vld [vmem:[#allocation5 + $0xe8] sm:$0xff]
    %v628 = vld [vmem:[#allocation5 + $0xf0] sm:$0xff]
    %v629 = vld [vmem:[#allocation5 + $0xf8] sm:$0xff]
    %v630 = vld [vmem:[#allocation5 + $0x100] sm:$0xff]
    %v631 = vld [vmem:[#allocation5 + $0x108] sm:$0xff]
    %v632 = vld [vmem:[#allocation5 + $0x110] sm:$0xff]
    %v633 = vld [vmem:[#allocation5 + $0x118] sm:$0xff]
    %v634 = vld [vmem:[#allocation5 + $0x120] sm:$0xff]
    %v635 = vld [vmem:[#allocation5 + $0x128] sm:$0xff]
    %v636 = vld [vmem:[#allocation5 + $0x130] sm:$0xff]
    %v637 = vld [vmem:[#allocation5 + $0x138] sm:$0xff]
    %v638 = vld [vmem:[#allocation5 + $0x140] sm:$0xff]
    %v639 = vld [vmem:[#allocation5 + $0x148] sm:$0xff]
    %v640 = vld [vmem:[#allocation5 + $0x150] sm:$0xff]
    %v641 = vld [vmem:[#allocation5 + $0x158] sm:$0xff]
    %v642 = vld [vmem:[#allocation5 + $0x160] sm:$0xff]
    %v643 = vld [vmem:[#allocation5 + $0x168] sm:$0xff]
    %v644 = vld [vmem:[#allocation5 + $0x170] sm:$0xff]
    %v645 = vld [vmem:[#allocation5 + $0x178] sm:$0xff]
    %v646 = vld [vmem:[#allocation5 + $0x180] sm:$0xff]
    %v647 = vld [vmem:[#allocation5 + $0x188] sm:$0xff]
    %v648 = vld [vmem:[#allocation5 + $0x190] sm:$0xff]
    %v649 = vld [vmem:[#allocation5 + $0x198] sm:$0xff]
    %v650 = vld [vmem:[#allocation5 + $0x1a0] sm:$0xff]
    %v651 = vld [vmem:[#allocation5 + $0x1a8] sm:$0xff]
    %v652 = vld [vmem:[#allocation5 + $0x1b0] sm:$0xff]
    %v653 = vld [vmem:[#allocation5 + $0x1b8] sm:$0xff]
    %v654 = vld [vmem:[#allocation5 + $0x1c0] sm:$0xff]
    %v655 = vld [vmem:[#allocation5 + $0x1c8] sm:$0xff]
    %v656 = vld [vmem:[#allocation5 + $0x1d0] sm:$0xff]
    %v657 = vld [vmem:[#allocation5 + $0x1d8] sm:$0xff]
    %v658 = vld [vmem:[#allocation5 + $0x1e0] sm:$0xff]
    %v659 = vld [vmem:[#allocation5 + $0x1e8] sm:$0xff]
    %v660 = vld [vmem:[#allocation5 + $0x1f0] sm:$0xff]
    %v661 = vld [vmem:[#allocation5 + $0x1f8] sm:$0xff]
    %v662 = vld [vmem:[#allocation5 + $0x200] sm:$0xff]
    %v663 = vld [vmem:[#allocation5 + $0x208] sm:$0xff]
    %v664 = vld [vmem:[#allocation5 + $0x210] sm:$0xff]
    %v665 = vld [vmem:[#allocation5 + $0x218] sm:$0xff]
    %v666 = vld [vmem:[#allocation5 + $0x220] sm:$0xff]
    %v667 = vld [vmem:[#allocation5 + $0x228] sm:$0xff]
    %v668 = vld [vmem:[#allocation5 + $0x230] sm:$0xff]
    %v669 = vld [vmem:[#allocation5 + $0x238] sm:$0xff]
    %v670 = vld [vmem:[#allocation5 + $0x240] sm:$0xff]
    %v671 = vld [vmem:[#allocation5 + $0x248] sm:$0xff]
    %v672 = vld [vmem:[#allocation5 + $0x250] sm:$0xff]
    %v673 = vld [vmem:[#allocation5 + $0x258] sm:$0xff]
    %v674 = vld [vmem:[#allocation5 + $0x260] sm:$0xff]
    %v675 = vld [vmem:[#allocation5 + $0x268] sm:$0xff]
    %v676 = vld [vmem:[#allocation5 + $0x270] sm:$0xff]
    %v677 = vld [vmem:[#allocation5 + $0x278] sm:$0xff]
    %v678 = vld [vmem:[#allocation5 + $0x280] sm:$0xff]
    %v679 = vld [vmem:[#allocation5 + $0x288] sm:$0xff]
    %v680 = vld [vmem:[#allocation5 + $0x290] sm:$0xff]
    %v681 = vld [vmem:[#allocation5 + $0x298] sm:$0xff]
    %v682 = vld [vmem:[#allocation5 + $0x2a0] sm:$0xff]
    %v683 = vld [vmem:[#allocation5 + $0x2a8] sm:$0xff]
    %v684 = vld [vmem:[#allocation5 + $0x2b0] sm:$0xff]
    %v685 = vld [vmem:[#allocation5 + $0x2b8] sm:$0xff]
    %v686 = vld [vmem:[#allocation5 + $0x2c0] sm:$0xff]
    %v687 = vld [vmem:[#allocation5 + $0x2c8] sm:$0xff]
    %v688 = vld [vmem:[#allocation5 + $0x2d0] sm:$0xff]
    %v689 = vld [vmem:[#allocation5 + $0x2d8] sm:$0xff]
    %v690 = vld [vmem:[#allocation5 + $0x2e0] sm:$0xff]
    %v691 = vld [vmem:[#allocation5 + $0x2e8] sm:$0xff]
    %v692 = vld [vmem:[#allocation5 + $0x2f0] sm:$0xff]
    %v693 = vld [vmem:[#allocation5 + $0x2f8] sm:$0xff]
    %v694 = vld [vmem:[#allocation5 + $0x300] sm:$0xff]
    %v695 = vld [vmem:[#allocation5 + $0x308] sm:$0xff]
    %v696 = vld [vmem:[#allocation5 + $0x310] sm:$0xff]
    %v697 = vld [vmem:[#allocation5 + $0x318] sm:$0xff]
    %v698 = vld [vmem:[#allocation5 + $0x320] sm:$0xff]
    %v699 = vld [vmem:[#allocation5 + $0x328] sm:$0xff]
    %v700 = vld [vmem:[#allocation5 + $0x330] sm:$0xff]
    %v701 = vld [vmem:[#allocation5 + $0x338] sm:$0xff]
    %v702 = vld [vmem:[#allocation5 + $0x340] sm:$0xff]
    %v703 = vld [vmem:[#allocation5 + $0x348] sm:$0xff]
    %v704 = vld [vmem:[#allocation5 + $0x350] sm:$0xff]
    %v705 = vld [vmem:[#allocation5 + $0x358] sm:$0xff]
    %v706 = vld [vmem:[#allocation5 + $0x360] sm:$0xff]
    %v707 = vld [vmem:[#allocation5 + $0x368] sm:$0xff]
    %v708 = vld [vmem:[#allocation5 + $0x370] sm:$0xff]
    %v709 = vld [vmem:[#allocation5 + $0x378] sm:$0xff]
    %v710 = vld [vmem:[#allocation5 + $0x380] sm:$0xff]
    %v711 = vld [vmem:[#allocation5 + $0x388] sm:$0xff]
    %v712 = vld [vmem:[#allocation5 + $0x390] sm:$0xff]
    %v713 = vld [vmem:[#allocation5 + $0x398] sm:$0xff]
    %v714 = vld [vmem:[#allocation5 + $0x3a0] sm:$0xff]
    %v715 = vld [vmem:[#allocation5 + $0x3a8] sm:$0xff]
    %v716 = vld [vmem:[#allocation5 + $0x3b0] sm:$0xff]
    %v717 = vld [vmem:[#allocation5 + $0x3b8] sm:$0xff]
    %v718 = vld [vmem:[#allocation5 + $0x3c0] sm:$0xff]
    %v719 = vld [vmem:[#allocation5 + $0x3c8] sm:$0xff]
    %v720 = vld [vmem:[#allocation5 + $0x3d0] sm:$0xff]
    %v721 = vld [vmem:[#allocation5 + $0x3d8] sm:$0xff]
    %v722 = vld [vmem:[#allocation5 + $0x3e0] sm:$0xff]
    %v723 = vld [vmem:[#allocation5 + $0x3e8] sm:$0xff]
    %v724 = vld [vmem:[#allocation5 + $0x3f0] sm:$0xff]
    %v725 = vld [vmem:[#allocation5 + $0x3f8] sm:$0xff]
    %v726 = vld [vmem:[#allocation5 + $0x400] sm:$0xff]
    %v727 = vld [vmem:[#allocation5 + $0x408] sm:$0xff]
    %v728 = vld [vmem:[#allocation5 + $0x410] sm:$0xff]
    %v729 = vld [vmem:[#allocation5 + $0x418] sm:$0xff]
    %v730 = vld [vmem:[#allocation5 + $0x420] sm:$0xff]
    %v731 = vld [vmem:[#allocation5 + $0x428] sm:$0xff]
    %v732 = vld [vmem:[#allocation5 + $0x430] sm:$0xff]
    %v733 = vld [vmem:[#allocation5 + $0x438] sm:$0xff]
    %v734 = vld [vmem:[#allocation5 + $0x440] sm:$0xff]
    %v735 = vld [vmem:[#allocation5 + $0x448] sm:$0xff]
    %v736 = vld [vmem:[#allocation5 + $0x450] sm:$0xff]
    %v737 = vld [vmem:[#allocation5 + $0x458] sm:$0xff]
    %v738 = vld [vmem:[#allocation5 + $0x460] sm:$0xff]
    %v739 = vld [vmem:[#allocation5 + $0x468] sm:$0xff]
    %v740 = vld [vmem:[#allocation5 + $0x470] sm:$0xff]
    %v741 = vld [vmem:[#allocation5 + $0x478] sm:$0xff]
    %v742 = vld [vmem:[#allocation5 + $0x480] sm:$0xff]
    %v743 = vld [vmem:[#allocation5 + $0x488] sm:$0xff]
    %v744 = vld [vmem:[#allocation5 + $0x490] sm:$0xff]
    %v745 = vld [vmem:[#allocation5 + $0x498] sm:$0xff]
    %v746 = vld [vmem:[#allocation5 + $0x4a0] sm:$0xff]
    %v747 = vld [vmem:[#allocation5 + $0x4a8] sm:$0xff]
    %v748 = vld [vmem:[#allocation5 + $0x4b0] sm:$0xff]
    %v749 = vld [vmem:[#allocation5 + $0x4b8] sm:$0xff]
    %v750 = vld [vmem:[#allocation5 + $0x4c0] sm:$0xff]
    %v751 = vld [vmem:[#allocation5 + $0x4c8] sm:$0xff]
    %v752 = vld [vmem:[#allocation5 + $0x4d0] sm:$0xff]
    %v753 = vld [vmem:[#allocation5 + $0x4d8] sm:$0xff]
    %v754 = vld [vmem:[#allocation5 + $0x4e0] sm:$0xff]
    %v755 = vld [vmem:[#allocation5 + $0x4e8] sm:$0xff]
    %v756 = vld [vmem:[#allocation5 + $0x4f0] sm:$0xff]
    %v757 = vld [vmem:[#allocation5 + $0x4f8] sm:$0xff]
    %v758 = vld [vmem:[#allocation5 + $0x500] sm:$0xff]
    %v759 = vld [vmem:[#allocation5 + $0x508] sm:$0xff]
    %v760 = vld [vmem:[#allocation5 + $0x510] sm:$0xff]
    %v761 = vld [vmem:[#allocation5 + $0x518] sm:$0xff]
    %v762 = vld [vmem:[#allocation5 + $0x520] sm:$0xff]
    %v763 = vld [vmem:[#allocation5 + $0x528] sm:$0xff]
    %v764 = vld [vmem:[#allocation5 + $0x530] sm:$0xff]
    %v765 = vld [vmem:[#allocation5 + $0x538] sm:$0xff]
    %v766 = vld [vmem:[#allocation5 + $0x540] sm:$0xff]
    %v767 = vld [vmem:[#allocation5 + $0x548] sm:$0xff]
    %v768 = vld [vmem:[#allocation5 + $0x550] sm:$0xff]
    %v769 = vld [vmem:[#allocation5 + $0x558] sm:$0xff]
    %v770 = vld [vmem:[#allocation5 + $0x560] sm:$0xff]
    %v771 = vld [vmem:[#allocation5 + $0x568] sm:$0xff]
    %v772 = vld [vmem:[#allocation5 + $0x570] sm:$0xff]
    %v773 = vld [vmem:[#allocation5 + $0x578] sm:$0xff]
    %v774 = vld [vmem:[#allocation5 + $0x580] sm:$0xff]
    %v775 = vld [vmem:[#allocation5 + $0x588] sm:$0xff]
    %v776 = vld [vmem:[#allocation5 + $0x590] sm:$0xff]
    %v777 = vld [vmem:[#allocation5 + $0x598] sm:$0xff]
    %v778 = vld [vmem:[#allocation5 + $0x5a0] sm:$0xff]
    %v779 = vld [vmem:[#allocation5 + $0x5a8] sm:$0xff]
    %v780 = vld [vmem:[#allocation5 + $0x5b0] sm:$0xff]
    %v781 = vld [vmem:[#allocation5 + $0x5b8] sm:$0xff]
    %v782 = vld [vmem:[#allocation5 + $0x5c0] sm:$0xff]
    %v783 = vld [vmem:[#allocation5 + $0x5c8] sm:$0xff]
    %v784 = vld [vmem:[#allocation5 + $0x5d0] sm:$0xff]
    %v785 = vld [vmem:[#allocation5 + $0x5d8] sm:$0xff]
    %v786 = vld [vmem:[#allocation5 + $0x5e0] sm:$0xff]
    %v787 = vld [vmem:[#allocation5 + $0x5e8] sm:$0xff]
    %v788 = vld [vmem:[#allocation5 + $0x5f0] sm:$0xff]
    %v789 = vld [vmem:[#allocation5 + $0x5f8] sm:$0xff]
    %v790 = vld [vmem:[#allocation5 + $0x600] sm:$0xff]
    %v791 = vld [vmem:[#allocation5 + $0x608] sm:$0xff]
    %v792 = vld [vmem:[#allocation5 + $0x610] sm:$0xff]
    %v793 = vld [vmem:[#allocation5 + $0x618] sm:$0xff]
    %v794 = vld [vmem:[#allocation5 + $0x620] sm:$0xff]
    %v795 = vld [vmem:[#allocation5 + $0x628] sm:$0xff]
    %v796 = vld [vmem:[#allocation5 + $0x630] sm:$0xff]
    %v797 = vld [vmem:[#allocation5 + $0x638] sm:$0xff]
    %v798 = vld [vmem:[#allocation5 + $0x640] sm:$0xff]
    %v799 = vld [vmem:[#allocation5 + $0x648] sm:$0xff]
    %v800 = vld [vmem:[#allocation5 + $0x650] sm:$0xff]
    %v801 = vld [vmem:[#allocation5 + $0x658] sm:$0xff]
    %v802 = vld [vmem:[#allocation5 + $0x660] sm:$0xff]
    %v803 = vld [vmem:[#allocation5 + $0x668] sm:$0xff]
    %v804 = vld [vmem:[#allocation5 + $0x670] sm:$0xff]
    %v805 = vld [vmem:[#allocation5 + $0x678] sm:$0xff]
    %v806 = vld [vmem:[#allocation5 + $0x680] sm:$0xff]
    %v807 = vld [vmem:[#allocation5 + $0x688] sm:$0xff]
    %v808 = vld [vmem:[#allocation5 + $0x690] sm:$0xff]
    %v809 = vld [vmem:[#allocation5 + $0x698] sm:$0xff]
    %v810 = vld [vmem:[#allocation5 + $0x6a0] sm:$0xff]
    %v811 = vld [vmem:[#allocation5 + $0x6a8] sm:$0xff]
    %v812 = vld [vmem:[#allocation5 + $0x6b0] sm:$0xff]
    %v813 = vld [vmem:[#allocation5 + $0x6b8] sm:$0xff]
    %v814 = vld [vmem:[#allocation5 + $0x6c0] sm:$0xff]
    %v815 = vld [vmem:[#allocation5 + $0x6c8] sm:$0xff]
    %v816 = vld [vmem:[#allocation5 + $0x6d0] sm:$0xff]
    %v817 = vld [vmem:[#allocation5 + $0x6d8] sm:$0xff]
    %v818 = vld [vmem:[#allocation5 + $0x6e0] sm:$0xff]
    %v819 = vld [vmem:[#allocation5 + $0x6e8] sm:$0xff]
    %v820 = vld [vmem:[#allocation5 + $0x6f0] sm:$0xff]
    %v821 = vld [vmem:[#allocation5 + $0x6f8] sm:$0xff]
    %v822 = vld [vmem:[#allocation5 + $0x700] sm:$0xff]
    %v823 = vld [vmem:[#allocation5 + $0x708] sm:$0xff]
    %v824 = vld [vmem:[#allocation5 + $0x710] sm:$0xff]
    %v825 = vld [vmem:[#allocation5 + $0x718] sm:$0xff]
    %v826 = vld [vmem:[#allocation5 + $0x720] sm:$0xff]
    %v827 = vld [vmem:[#allocation5 + $0x728] sm:$0xff]
    %v828 = vld [vmem:[#allocation5 + $0x730] sm:$0xff]
    %v829 = vld [vmem:[#allocation5 + $0x738] sm:$0xff]
    %v830 = vld [vmem:[#allocation5 + $0x740] sm:$0xff]
    %v831 = vld [vmem:[#allocation5 + $0x748] sm:$0xff]
    %v832 = vld [vmem:[#allocation5 + $0x750] sm:$0xff]
    %v833 = vld [vmem:[#allocation5 + $0x758] sm:$0xff]
    %v834 = vld [vmem:[#allocation5 + $0x760] sm:$0xff]
    %v835 = vld [vmem:[#allocation5 + $0x768] sm:$0xff]
    %v836 = vld [vmem:[#allocation5 + $0x770] sm:$0xff]
    %v837 = vld [vmem:[#allocation5 + $0x778] sm:$0xff]
    %v838 = vld [vmem:[#allocation5 + $0x780] sm:$0xff]
    %v839 = vld [vmem:[#allocation5 + $0x788] sm:$0xff]
    %v840 = vld [vmem:[#allocation5 + $0x790] sm:$0xff]
    %v841 = vld [vmem:[#allocation5 + $0x798] sm:$0xff]
    %v842 = vld [vmem:[#allocation5 + $0x7a0] sm:$0xff]
    %v843 = vld [vmem:[#allocation5 + $0x7a8] sm:$0xff]
    %v844 = vld [vmem:[#allocation5 + $0x7b0] sm:$0xff]
    %v845 = vld [vmem:[#allocation5 + $0x7b8] sm:$0xff]
    %v846 = vld [vmem:[#allocation5 + $0x7c0] sm:$0xff]
    %v847 = vld [vmem:[#allocation5 + $0x7c8] sm:$0xff]
    %v848 = vld [vmem:[#allocation5 + $0x7d0] sm:$0xff]
    %v849 = vld [vmem:[#allocation5 + $0x7d8] sm:$0xff]
    %v850 = vld [vmem:[#allocation5 + $0x7e0] sm:$0xff]
    %v851 = vld [vmem:[#allocation5 + $0x7e8] sm:$0xff]
    %v852 = vld [vmem:[#allocation5 + $0x7f0] sm:$0xff]
    %v853 = vld [vmem:[#allocation5 + $0x7f8] sm:$0xff]
    %v855 = vlaneseq
    %v856 = vshrl.u32 %v855, 7
    %v857 = vsub.s32 0, %v856
    %v858 = vrot.slane %v589, %v857
    %v859 = vlaneseq
    %v860 = vshrl.u32 %v859, 7
    %v861 = vsub.s32 1, %v860
    %v862 = vrot.slane %v589, %v861
    %v863 = vlaneseq
    %v864 = vshrl.u32 %v863, 7
    %v865 = vsub.s32 2, %v864
    %v866 = vrot.slane %v589, %v865
    %v867 = vlaneseq
    %v868 = vshrl.u32 %v867, 7
    %v869 = vsub.s32 3, %v868
    %v870 = vrot.slane %v589, %v869
    %v1131 = vunpack.c.l.b16 %v598
    %v1132 = vunpack.c.h.b16 %v598
    %v1133 = vunpack.c.l.b16 %v599
    %v1134 = vunpack.c.h.b16 %v599
    %v1135 = vunpack.c.l.b16 %v600
    %v1136 = vunpack.c.h.b16 %v600
    %v1137 = vunpack.c.l.b16 %v601
    %v1138 = vunpack.c.h.b16 %v601
    %v1139 = vunpack.c.l.b16 %v602
    %v1140 = vunpack.c.h.b16 %v602
    %v1141 = vunpack.c.l.b16 %v603
    %v1142 = vunpack.c.h.b16 %v603
    %v1143 = vunpack.c.l.b16 %v604
    %v1144 = vunpack.c.h.b16 %v604
    %v1145 = vunpack.c.l.b16 %v605
    %v1146 = vunpack.c.h.b16 %v605
    %v1147 = vunpack.c.l.b16 %v606
    %v1148 = vunpack.c.h.b16 %v606
    %v1149 = vunpack.c.l.b16 %v607
    %v1150 = vunpack.c.h.b16 %v607
    %v1151 = vunpack.c.l.b16 %v608
    %v1152 = vunpack.c.h.b16 %v608
    %v1153 = vunpack.c.l.b16 %v609
    %v1154 = vunpack.c.h.b16 %v609
    %v1155 = vunpack.c.l.b16 %v610
    %v1156 = vunpack.c.h.b16 %v610
    %v1157 = vunpack.c.l.b16 %v611
    %v1158 = vunpack.c.h.b16 %v611
    %v1159 = vunpack.c.l.b16 %v612
    %v1160 = vunpack.c.h.b16 %v612
    %v1161 = vunpack.c.l.b16 %v613
    %v1162 = vunpack.c.h.b16 %v613
    %v1163 = vunpack.c.l.b16 %v614
    %v1164 = vunpack.c.h.b16 %v614
    %v1165 = vunpack.c.l.b16 %v615
    %v1166 = vunpack.c.h.b16 %v615
    %v1167 = vunpack.c.l.b16 %v616
    %v1168 = vunpack.c.h.b16 %v616
    %v1169 = vunpack.c.l.b16 %v617
    %v1170 = vunpack.c.h.b16 %v617
    %v1171 = vunpack.c.l.b16 %v618
    %v1172 = vunpack.c.h.b16 %v618
    %v1173 = vunpack.c.l.b16 %v619
    %v1174 = vunpack.c.h.b16 %v619
    %v1175 = vunpack.c.l.b16 %v620
    %v1176 = vunpack.c.h.b16 %v620
    %v1177 = vunpack.c.l.b16 %v621
    %v1178 = vunpack.c.h.b16 %v621
    %v1179 = vunpack.c.l.b16 %v622
    %v1180 = vunpack.c.h.b16 %v622
    %v1181 = vunpack.c.l.b16 %v623
    %v1182 = vunpack.c.h.b16 %v623
    %v1183 = vunpack.c.l.b16 %v624
    %v1184 = vunpack.c.h.b16 %v624
    %v1185 = vunpack.c.l.b16 %v625
    %v1186 = vunpack.c.h.b16 %v625
    %v1187 = vunpack.c.l.b16 %v626
    %v1188 = vunpack.c.h.b16 %v626
    %v1189 = vunpack.c.l.b16 %v627
    %v1190 = vunpack.c.h.b16 %v627
    %v1191 = vunpack.c.l.b16 %v628
    %v1192 = vunpack.c.h.b16 %v628
    %v1193 = vunpack.c.l.b16 %v629
    %v1194 = vunpack.c.h.b16 %v629
    %v1195 = vunpack.c.l.b16 %v630
    %v1196 = vunpack.c.h.b16 %v630
    %v1197 = vunpack.c.l.b16 %v631
    %v1198 = vunpack.c.h.b16 %v631
    %v1199 = vunpack.c.l.b16 %v632
    %v1200 = vunpack.c.h.b16 %v632
    %v1201 = vunpack.c.l.b16 %v633
    %v1202 = vunpack.c.h.b16 %v633
    %v1203 = vunpack.c.l.b16 %v634
    %v1204 = vunpack.c.h.b16 %v634
    %v1205 = vunpack.c.l.b16 %v635
    %v1206 = vunpack.c.h.b16 %v635
    %v1207 = vunpack.c.l.b16 %v636
    %v1208 = vunpack.c.h.b16 %v636
    %v1209 = vunpack.c.l.b16 %v637
    %v1210 = vunpack.c.h.b16 %v637
    %v1211 = vunpack.c.l.b16 %v638
    %v1212 = vunpack.c.h.b16 %v638
    %v1213 = vunpack.c.l.b16 %v639
    %v1214 = vunpack.c.h.b16 %v639
    %v1215 = vunpack.c.l.b16 %v640
    %v1216 = vunpack.c.h.b16 %v640
    %v1217 = vunpack.c.l.b16 %v641
    %v1218 = vunpack.c.h.b16 %v641
    %v1219 = vunpack.c.l.b16 %v642
    %v1220 = vunpack.c.h.b16 %v642
    %v1221 = vunpack.c.l.b16 %v643
    %v1222 = vunpack.c.h.b16 %v643
    %v1223 = vunpack.c.l.b16 %v644
    %v1224 = vunpack.c.h.b16 %v644
    %v1225 = vunpack.c.l.b16 %v645
    %v1226 = vunpack.c.h.b16 %v645
    %v1227 = vunpack.c.l.b16 %v646
    %v1228 = vunpack.c.h.b16 %v646
    %v1229 = vunpack.c.l.b16 %v647
    %v1230 = vunpack.c.h.b16 %v647
    %v1231 = vunpack.c.l.b16 %v648
    %v1232 = vunpack.c.h.b16 %v648
    %v1233 = vunpack.c.l.b16 %v649
    %v1234 = vunpack.c.h.b16 %v649
    %v1235 = vunpack.c.l.b16 %v650
    %v1236 = vunpack.c.h.b16 %v650
    %v1237 = vunpack.c.l.b16 %v651
    %v1238 = vunpack.c.h.b16 %v651
    %v1239 = vunpack.c.l.b16 %v652
    %v1240 = vunpack.c.h.b16 %v652
    %v1241 = vunpack.c.l.b16 %v653
    %v1242 = vunpack.c.h.b16 %v653
    %v1243 = vunpack.c.l.b16 %v654
    %v1244 = vunpack.c.h.b16 %v654
    %v1245 = vunpack.c.l.b16 %v655
    %v1246 = vunpack.c.h.b16 %v655
    %v1247 = vunpack.c.l.b16 %v656
    %v1248 = vunpack.c.h.b16 %v656
    %v1249 = vunpack.c.l.b16 %v657
    %v1250 = vunpack.c.h.b16 %v657
    %v1251 = vunpack.c.l.b16 %v658
    %v1252 = vunpack.c.h.b16 %v658
    %v1253 = vunpack.c.l.b16 %v659
    %v1254 = vunpack.c.h.b16 %v659
    %v1255 = vunpack.c.l.b16 %v660
    %v1256 = vunpack.c.h.b16 %v660
    %v1257 = vunpack.c.l.b16 %v661
    %v1258 = vunpack.c.h.b16 %v661
    %v1259 = vunpack.c.l.b16 %v662
    %v1260 = vunpack.c.h.b16 %v662
    %v1261 = vunpack.c.l.b16 %v663
    %v1262 = vunpack.c.h.b16 %v663
    %v1263 = vunpack.c.l.b16 %v664
    %v1264 = vunpack.c.h.b16 %v664
    %v1265 = vunpack.c.l.b16 %v665
    %v1266 = vunpack.c.h.b16 %v665
    %v1267 = vunpack.c.l.b16 %v666
    %v1268 = vunpack.c.h.b16 %v666
    %v1269 = vunpack.c.l.b16 %v667
    %v1270 = vunpack.c.h.b16 %v667
    %v1271 = vunpack.c.l.b16 %v668
    %v1272 = vunpack.c.h.b16 %v668
    %v1273 = vunpack.c.l.b16 %v669
    %v1274 = vunpack.c.h.b16 %v669
    %v1275 = vunpack.c.l.b16 %v670
    %v1276 = vunpack.c.h.b16 %v670
    %v1277 = vunpack.c.l.b16 %v671
    %v1278 = vunpack.c.h.b16 %v671
    %v1279 = vunpack.c.l.b16 %v672
    %v1280 = vunpack.c.h.b16 %v672
    %v1281 = vunpack.c.l.b16 %v673
    %v1282 = vunpack.c.h.b16 %v673
    %v1283 = vunpack.c.l.b16 %v674
    %v1284 = vunpack.c.h.b16 %v674
    %v1285 = vunpack.c.l.b16 %v675
    %v1286 = vunpack.c.h.b16 %v675
    %v1287 = vunpack.c.l.b16 %v676
    %v1288 = vunpack.c.h.b16 %v676
    %v1289 = vunpack.c.l.b16 %v677
    %v1290 = vunpack.c.h.b16 %v677
    %v1291 = vunpack.c.l.b16 %v678
    %v1292 = vunpack.c.h.b16 %v678
    %v1293 = vunpack.c.l.b16 %v679
    %v1294 = vunpack.c.h.b16 %v679
    %v1295 = vunpack.c.l.b16 %v680
    %v1296 = vunpack.c.h.b16 %v680
    %v1297 = vunpack.c.l.b16 %v681
    %v1298 = vunpack.c.h.b16 %v681
    %v1299 = vunpack.c.l.b16 %v682
    %v1300 = vunpack.c.h.b16 %v682
    %v1301 = vunpack.c.l.b16 %v683
    %v1302 = vunpack.c.h.b16 %v683
    %v1303 = vunpack.c.l.b16 %v684
    %v1304 = vunpack.c.h.b16 %v684
    %v1305 = vunpack.c.l.b16 %v685
    %v1306 = vunpack.c.h.b16 %v685
    %v1307 = vunpack.c.l.b16 %v686
    %v1308 = vunpack.c.h.b16 %v686
    %v1309 = vunpack.c.l.b16 %v687
    %v1310 = vunpack.c.h.b16 %v687
    %v1311 = vunpack.c.l.b16 %v688
    %v1312 = vunpack.c.h.b16 %v688
    %v1313 = vunpack.c.l.b16 %v689
    %v1314 = vunpack.c.h.b16 %v689
    %v1315 = vunpack.c.l.b16 %v690
    %v1316 = vunpack.c.h.b16 %v690
    %v1317 = vunpack.c.l.b16 %v691
    %v1318 = vunpack.c.h.b16 %v691
    %v1319 = vunpack.c.l.b16 %v692
    %v1320 = vunpack.c.h.b16 %v692
    %v1321 = vunpack.c.l.b16 %v693
    %v1322 = vunpack.c.h.b16 %v693
    %v1323 = vunpack.c.l.b16 %v694
    %v1324 = vunpack.c.h.b16 %v694
    %v1325 = vunpack.c.l.b16 %v695
    %v1326 = vunpack.c.h.b16 %v695
    %v1327 = vunpack.c.l.b16 %v696
    %v1328 = vunpack.c.h.b16 %v696
    %v1329 = vunpack.c.l.b16 %v697
    %v1330 = vunpack.c.h.b16 %v697
    %v1331 = vunpack.c.l.b16 %v698
    %v1332 = vunpack.c.h.b16 %v698
    %v1333 = vunpack.c.l.b16 %v699
    %v1334 = vunpack.c.h.b16 %v699
    %v1335 = vunpack.c.l.b16 %v700
    %v1336 = vunpack.c.h.b16 %v700
    %v1337 = vunpack.c.l.b16 %v701
    %v1338 = vunpack.c.h.b16 %v701
    %v1339 = vunpack.c.l.b16 %v702
    %v1340 = vunpack.c.h.b16 %v702
    %v1341 = vunpack.c.l.b16 %v703
    %v1342 = vunpack.c.h.b16 %v703
    %v1343 = vunpack.c.l.b16 %v704
    %v1344 = vunpack.c.h.b16 %v704
    %v1345 = vunpack.c.l.b16 %v705
    %v1346 = vunpack.c.h.b16 %v705
    %v1347 = vunpack.c.l.b16 %v706
    %v1348 = vunpack.c.h.b16 %v706
    %v1349 = vunpack.c.l.b16 %v707
    %v1350 = vunpack.c.h.b16 %v707
    %v1351 = vunpack.c.l.b16 %v708
    %v1352 = vunpack.c.h.b16 %v708
    %v1353 = vunpack.c.l.b16 %v709
    %v1354 = vunpack.c.h.b16 %v709
    %v1355 = vunpack.c.l.b16 %v710
    %v1356 = vunpack.c.h.b16 %v710
    %v1357 = vunpack.c.l.b16 %v711
    %v1358 = vunpack.c.h.b16 %v711
    %v1359 = vunpack.c.l.b16 %v712
    %v1360 = vunpack.c.h.b16 %v712
    %v1361 = vunpack.c.l.b16 %v713
    %v1362 = vunpack.c.h.b16 %v713
    %v1363 = vunpack.c.l.b16 %v714
    %v1364 = vunpack.c.h.b16 %v714
    %v1365 = vunpack.c.l.b16 %v715
    %v1366 = vunpack.c.h.b16 %v715
    %v1367 = vunpack.c.l.b16 %v716
    %v1368 = vunpack.c.h.b16 %v716
    %v1369 = vunpack.c.l.b16 %v717
    %v1370 = vunpack.c.h.b16 %v717
    %v1371 = vunpack.c.l.b16 %v718
    %v1372 = vunpack.c.h.b16 %v718
    %v1373 = vunpack.c.l.b16 %v719
    %v1374 = vunpack.c.h.b16 %v719
    %v1375 = vunpack.c.l.b16 %v720
    %v1376 = vunpack.c.h.b16 %v720
    %v1377 = vunpack.c.l.b16 %v721
    %v1378 = vunpack.c.h.b16 %v721
    %v1379 = vunpack.c.l.b16 %v722
    %v1380 = vunpack.c.h.b16 %v722
    %v1381 = vunpack.c.l.b16 %v723
    %v1382 = vunpack.c.h.b16 %v723
    %v1383 = vunpack.c.l.b16 %v724
    %v1384 = vunpack.c.h.b16 %v724
    %v1385 = vunpack.c.l.b16 %v725
    %v1386 = vunpack.c.h.b16 %v725
    %v1387 = vunpack.c.l.b16 %v726
    %v1388 = vunpack.c.h.b16 %v726
    %v1389 = vunpack.c.l.b16 %v727
    %v1390 = vunpack.c.h.b16 %v727
    %v1391 = vunpack.c.l.b16 %v728
    %v1392 = vunpack.c.h.b16 %v728
    %v1393 = vunpack.c.l.b16 %v729
    %v1394 = vunpack.c.h.b16 %v729
    %v1395 = vunpack.c.l.b16 %v730
    %v1396 = vunpack.c.h.b16 %v730
    %v1397 = vunpack.c.l.b16 %v731
    %v1398 = vunpack.c.h.b16 %v731
    %v1399 = vunpack.c.l.b16 %v732
    %v1400 = vunpack.c.h.b16 %v732
    %v1401 = vunpack.c.l.b16 %v733
    %v1402 = vunpack.c.h.b16 %v733
    %v1403 = vunpack.c.l.b16 %v734
    %v1404 = vunpack.c.h.b16 %v734
    %v1405 = vunpack.c.l.b16 %v735
    %v1406 = vunpack.c.h.b16 %v735
    %v1407 = vunpack.c.l.b16 %v736
    %v1408 = vunpack.c.h.b16 %v736
    %v1409 = vunpack.c.l.b16 %v737
    %v1410 = vunpack.c.h.b16 %v737
    %v1411 = vunpack.c.l.b16 %v738
    %v1412 = vunpack.c.h.b16 %v738
    %v1413 = vunpack.c.l.b16 %v739
    %v1414 = vunpack.c.h.b16 %v739
    %v1415 = vunpack.c.l.b16 %v740
    %v1416 = vunpack.c.h.b16 %v740
    %v1417 = vunpack.c.l.b16 %v741
    %v1418 = vunpack.c.h.b16 %v741
    %v1419 = vunpack.c.l.b16 %v742
    %v1420 = vunpack.c.h.b16 %v742
    %v1421 = vunpack.c.l.b16 %v743
    %v1422 = vunpack.c.h.b16 %v743
    %v1423 = vunpack.c.l.b16 %v744
    %v1424 = vunpack.c.h.b16 %v744
    %v1425 = vunpack.c.l.b16 %v745
    %v1426 = vunpack.c.h.b16 %v745
    %v1427 = vunpack.c.l.b16 %v746
    %v1428 = vunpack.c.h.b16 %v746
    %v1429 = vunpack.c.l.b16 %v747
    %v1430 = vunpack.c.h.b16 %v747
    %v1431 = vunpack.c.l.b16 %v748
    %v1432 = vunpack.c.h.b16 %v748
    %v1433 = vunpack.c.l.b16 %v749
    %v1434 = vunpack.c.h.b16 %v749
    %v1435 = vunpack.c.l.b16 %v750
    %v1436 = vunpack.c.h.b16 %v750
    %v1437 = vunpack.c.l.b16 %v751
    %v1438 = vunpack.c.h.b16 %v751
    %v1439 = vunpack.c.l.b16 %v752
    %v1440 = vunpack.c.h.b16 %v752
    %v1441 = vunpack.c.l.b16 %v753
    %v1442 = vunpack.c.h.b16 %v753
    %v1443 = vunpack.c.l.b16 %v754
    %v1444 = vunpack.c.h.b16 %v754
    %v1445 = vunpack.c.l.b16 %v755
    %v1446 = vunpack.c.h.b16 %v755
    %v1447 = vunpack.c.l.b16 %v756
    %v1448 = vunpack.c.h.b16 %v756
    %v1449 = vunpack.c.l.b16 %v757
    %v1450 = vunpack.c.h.b16 %v757
    %v1451 = vunpack.c.l.b16 %v758
    %v1452 = vunpack.c.h.b16 %v758
    %v1453 = vunpack.c.l.b16 %v759
    %v1454 = vunpack.c.h.b16 %v759
    %v1455 = vunpack.c.l.b16 %v760
    %v1456 = vunpack.c.h.b16 %v760
    %v1457 = vunpack.c.l.b16 %v761
    %v1458 = vunpack.c.h.b16 %v761
    %v1459 = vunpack.c.l.b16 %v762
    %v1460 = vunpack.c.h.b16 %v762
    %v1461 = vunpack.c.l.b16 %v763
    %v1462 = vunpack.c.h.b16 %v763
    %v1463 = vunpack.c.l.b16 %v764
    %v1464 = vunpack.c.h.b16 %v764
    %v1465 = vunpack.c.l.b16 %v765
    %v1466 = vunpack.c.h.b16 %v765
    %v1467 = vunpack.c.l.b16 %v766
    %v1468 = vunpack.c.h.b16 %v766
    %v1469 = vunpack.c.l.b16 %v767
    %v1470 = vunpack.c.h.b16 %v767
    %v1471 = vunpack.c.l.b16 %v768
    %v1472 = vunpack.c.h.b16 %v768
    %v1473 = vunpack.c.l.b16 %v769
    %v1474 = vunpack.c.h.b16 %v769
    %v1475 = vunpack.c.l.b16 %v770
    %v1476 = vunpack.c.h.b16 %v770
    %v1477 = vunpack.c.l.b16 %v771
    %v1478 = vunpack.c.h.b16 %v771
    %v1479 = vunpack.c.l.b16 %v772
    %v1480 = vunpack.c.h.b16 %v772
    %v1481 = vunpack.c.l.b16 %v773
    %v1482 = vunpack.c.h.b16 %v773
    %v1483 = vunpack.c.l.b16 %v774
    %v1484 = vunpack.c.h.b16 %v774
    %v1485 = vunpack.c.l.b16 %v775
    %v1486 = vunpack.c.h.b16 %v775
    %v1487 = vunpack.c.l.b16 %v776
    %v1488 = vunpack.c.h.b16 %v776
    %v1489 = vunpack.c.l.b16 %v777
    %v1490 = vunpack.c.h.b16 %v777
    %v1491 = vunpack.c.l.b16 %v778
    %v1492 = vunpack.c.h.b16 %v778
    %v1493 = vunpack.c.l.b16 %v779
    %v1494 = vunpack.c.h.b16 %v779
    %v1495 = vunpack.c.l.b16 %v780
    %v1496 = vunpack.c.h.b16 %v780
    %v1497 = vunpack.c.l.b16 %v781
    %v1498 = vunpack.c.h.b16 %v781
    %v1499 = vunpack.c.l.b16 %v782
    %v1500 = vunpack.c.h.b16 %v782
    %v1501 = vunpack.c.l.b16 %v783
    %v1502 = vunpack.c.h.b16 %v783
    %v1503 = vunpack.c.l.b16 %v784
    %v1504 = vunpack.c.h.b16 %v784
    %v1505 = vunpack.c.l.b16 %v785
    %v1506 = vunpack.c.h.b16 %v785
    %v1507 = vunpack.c.l.b16 %v786
    %v1508 = vunpack.c.h.b16 %v786
    %v1509 = vunpack.c.l.b16 %v787
    %v1510 = vunpack.c.h.b16 %v787
    %v1511 = vunpack.c.l.b16 %v788
    %v1512 = vunpack.c.h.b16 %v788
    %v1513 = vunpack.c.l.b16 %v789
    %v1514 = vunpack.c.h.b16 %v789
    %v1515 = vunpack.c.l.b16 %v790
    %v1516 = vunpack.c.h.b16 %v790
    %v1517 = vunpack.c.l.b16 %v791
    %v1518 = vunpack.c.h.b16 %v791
    %v1519 = vunpack.c.l.b16 %v792
    %v1520 = vunpack.c.h.b16 %v792
    %v1521 = vunpack.c.l.b16 %v793
    %v1522 = vunpack.c.h.b16 %v793
    %v1523 = vunpack.c.l.b16 %v794
    %v1524 = vunpack.c.h.b16 %v794
    %v1525 = vunpack.c.l.b16 %v795
    %v1526 = vunpack.c.h.b16 %v795
    %v1527 = vunpack.c.l.b16 %v796
    %v1528 = vunpack.c.h.b16 %v796
    %v1529 = vunpack.c.l.b16 %v797
    %v1530 = vunpack.c.h.b16 %v797
    %v1531 = vunpack.c.l.b16 %v798
    %v1532 = vunpack.c.h.b16 %v798
    %v1533 = vunpack.c.l.b16 %v799
    %v1534 = vunpack.c.h.b16 %v799
    %v1535 = vunpack.c.l.b16 %v800
    %v1536 = vunpack.c.h.b16 %v800
    %v1537 = vunpack.c.l.b16 %v801
    %v1538 = vunpack.c.h.b16 %v801
    %v1539 = vunpack.c.l.b16 %v802
    %v1540 = vunpack.c.h.b16 %v802
    %v1541 = vunpack.c.l.b16 %v803
    %v1542 = vunpack.c.h.b16 %v803
    %v1543 = vunpack.c.l.b16 %v804
    %v1544 = vunpack.c.h.b16 %v804
    %v1545 = vunpack.c.l.b16 %v805
    %v1546 = vunpack.c.h.b16 %v805
    %v1547 = vunpack.c.l.b16 %v806
    %v1548 = vunpack.c.h.b16 %v806
    %v1549 = vunpack.c.l.b16 %v807
    %v1550 = vunpack.c.h.b16 %v807
    %v1551 = vunpack.c.l.b16 %v808
    %v1552 = vunpack.c.h.b16 %v808
    %v1553 = vunpack.c.l.b16 %v809
    %v1554 = vunpack.c.h.b16 %v809
    %v1555 = vunpack.c.l.b16 %v810
    %v1556 = vunpack.c.h.b16 %v810
    %v1557 = vunpack.c.l.b16 %v811
    %v1558 = vunpack.c.h.b16 %v811
    %v1559 = vunpack.c.l.b16 %v812
    %v1560 = vunpack.c.h.b16 %v812
    %v1561 = vunpack.c.l.b16 %v813
    %v1562 = vunpack.c.h.b16 %v813
    %v1563 = vunpack.c.l.b16 %v814
    %v1564 = vunpack.c.h.b16 %v814
    %v1565 = vunpack.c.l.b16 %v815
    %v1566 = vunpack.c.h.b16 %v815
    %v1567 = vunpack.c.l.b16 %v816
    %v1568 = vunpack.c.h.b16 %v816
    %v1569 = vunpack.c.l.b16 %v817
    %v1570 = vunpack.c.h.b16 %v817
    %v1571 = vunpack.c.l.b16 %v818
    %v1572 = vunpack.c.h.b16 %v818
    %v1573 = vunpack.c.l.b16 %v819
    %v1574 = vunpack.c.h.b16 %v819
    %v1575 = vunpack.c.l.b16 %v820
    %v1576 = vunpack.c.h.b16 %v820
    %v1577 = vunpack.c.l.b16 %v821
    %v1578 = vunpack.c.h.b16 %v821
    %v1579 = vunpack.c.l.b16 %v822
    %v1580 = vunpack.c.h.b16 %v822
    %v1581 = vunpack.c.l.b16 %v823
    %v1582 = vunpack.c.h.b16 %v823
    %v1583 = vunpack.c.l.b16 %v824
    %v1584 = vunpack.c.h.b16 %v824
    %v1585 = vunpack.c.l.b16 %v825
    %v1586 = vunpack.c.h.b16 %v825
    %v1587 = vunpack.c.l.b16 %v826
    %v1588 = vunpack.c.h.b16 %v826
    %v1589 = vunpack.c.l.b16 %v827
    %v1590 = vunpack.c.h.b16 %v827
    %v1591 = vunpack.c.l.b16 %v828
    %v1592 = vunpack.c.h.b16 %v828
    %v1593 = vunpack.c.l.b16 %v829
    %v1594 = vunpack.c.h.b16 %v829
    %v1595 = vunpack.c.l.b16 %v830
    %v1596 = vunpack.c.h.b16 %v830
    %v1597 = vunpack.c.l.b16 %v831
    %v1598 = vunpack.c.h.b16 %v831
    %v1599 = vunpack.c.l.b16 %v832
    %v1600 = vunpack.c.h.b16 %v832
    %v1601 = vunpack.c.l.b16 %v833
    %v1602 = vunpack.c.h.b16 %v833
    %v1603 = vunpack.c.l.b16 %v834
    %v1604 = vunpack.c.h.b16 %v834
    %v1605 = vunpack.c.l.b16 %v835
    %v1606 = vunpack.c.h.b16 %v835
    %v1607 = vunpack.c.l.b16 %v836
    %v1608 = vunpack.c.h.b16 %v836
    %v1609 = vunpack.c.l.b16 %v837
    %v1610 = vunpack.c.h.b16 %v837
    %v1611 = vunpack.c.l.b16 %v838
    %v1612 = vunpack.c.h.b16 %v838
    %v1613 = vunpack.c.l.b16 %v839
    %v1614 = vunpack.c.h.b16 %v839
    %v1615 = vunpack.c.l.b16 %v840
    %v1616 = vunpack.c.h.b16 %v840
    %v1617 = vunpack.c.l.b16 %v841
    %v1618 = vunpack.c.h.b16 %v841
    %v1619 = vunpack.c.l.b16 %v842
    %v1620 = vunpack.c.h.b16 %v842
    %v1621 = vunpack.c.l.b16 %v843
    %v1622 = vunpack.c.h.b16 %v843
    %v1623 = vunpack.c.l.b16 %v844
    %v1624 = vunpack.c.h.b16 %v844
    %v1625 = vunpack.c.l.b16 %v845
    %v1626 = vunpack.c.h.b16 %v845
    %v1627 = vunpack.c.l.b16 %v846
    %v1628 = vunpack.c.h.b16 %v846
    %v1629 = vunpack.c.l.b16 %v847
    %v1630 = vunpack.c.h.b16 %v847
    %v1631 = vunpack.c.l.b16 %v848
    %v1632 = vunpack.c.h.b16 %v848
    %v1633 = vunpack.c.l.b16 %v849
    %v1634 = vunpack.c.h.b16 %v849
    %v1635 = vunpack.c.l.b16 %v850
    %v1636 = vunpack.c.h.b16 %v850
    %v1637 = vunpack.c.l.b16 %v851
    %v1638 = vunpack.c.h.b16 %v851
    %v1639 = vunpack.c.l.b16 %v852
    %v1640 = vunpack.c.h.b16 %v852
    %v1641 = vunpack.c.l.b16 %v853
    %v1642 = vunpack.c.h.b16 %v853
    %v1643 = vpack.c.b16 %v1135, %v1131
    %v1644 = vpack.c.b16 %v1136, %v1132
    %v1645 = vpack.c.b16 %v1137, %v1133
    %v1646 = vpack.c.b16 %v1138, %v1134
    %v1647 = vpack.c.b16 %v1143, %v1139
    %v1648 = vpack.c.b16 %v1144, %v1140
    %v1649 = vpack.c.b16 %v1145, %v1141
    %v1650 = vpack.c.b16 %v1146, %v1142
    %v1651 = vpack.c.b16 %v1151, %v1147
    %v1652 = vpack.c.b16 %v1152, %v1148
    %v1653 = vpack.c.b16 %v1153, %v1149
    %v1654 = vpack.c.b16 %v1154, %v1150
    %v1655 = vpack.c.b16 %v1159, %v1155
    %v1656 = vpack.c.b16 %v1160, %v1156
    %v1657 = vpack.c.b16 %v1161, %v1157
    %v1658 = vpack.c.b16 %v1162, %v1158
    %v1659 = vpack.c.b16 %v1167, %v1163
    %v1660 = vpack.c.b16 %v1168, %v1164
    %v1661 = vpack.c.b16 %v1169, %v1165
    %v1662 = vpack.c.b16 %v1170, %v1166
    %v1663 = vpack.c.b16 %v1175, %v1171
    %v1664 = vpack.c.b16 %v1176, %v1172
    %v1665 = vpack.c.b16 %v1177, %v1173
    %v1666 = vpack.c.b16 %v1178, %v1174
    %v1667 = vpack.c.b16 %v1183, %v1179
    %v1668 = vpack.c.b16 %v1184, %v1180
    %v1669 = vpack.c.b16 %v1185, %v1181
    %v1670 = vpack.c.b16 %v1186, %v1182
    %v1671 = vpack.c.b16 %v1191, %v1187
    %v1672 = vpack.c.b16 %v1192, %v1188
    %v1673 = vpack.c.b16 %v1193, %v1189
    %v1674 = vpack.c.b16 %v1194, %v1190
    %v1675 = vpack.c.b16 %v1199, %v1195
    %v1676 = vpack.c.b16 %v1200, %v1196
    %v1677 = vpack.c.b16 %v1201, %v1197
    %v1678 = vpack.c.b16 %v1202, %v1198
    %v1679 = vpack.c.b16 %v1207, %v1203
    %v1680 = vpack.c.b16 %v1208, %v1204
    %v1681 = vpack.c.b16 %v1209, %v1205
    %v1682 = vpack.c.b16 %v1210, %v1206
    %v1683 = vpack.c.b16 %v1215, %v1211
    %v1684 = vpack.c.b16 %v1216, %v1212
    %v1685 = vpack.c.b16 %v1217, %v1213
    %v1686 = vpack.c.b16 %v1218, %v1214
    %v1687 = vpack.c.b16 %v1223, %v1219
    %v1688 = vpack.c.b16 %v1224, %v1220
    %v1689 = vpack.c.b16 %v1225, %v1221
    %v1690 = vpack.c.b16 %v1226, %v1222
    %v1691 = vpack.c.b16 %v1231, %v1227
    %v1692 = vpack.c.b16 %v1232, %v1228
    %v1693 = vpack.c.b16 %v1233, %v1229
    %v1694 = vpack.c.b16 %v1234, %v1230
    %v1695 = vpack.c.b16 %v1239, %v1235
    %v1696 = vpack.c.b16 %v1240, %v1236
    %v1697 = vpack.c.b16 %v1241, %v1237
    %v1698 = vpack.c.b16 %v1242, %v1238
    %v1699 = vpack.c.b16 %v1247, %v1243
    %v1700 = vpack.c.b16 %v1248, %v1244
    %v1701 = vpack.c.b16 %v1249, %v1245
    %v1702 = vpack.c.b16 %v1250, %v1246
    %v1703 = vpack.c.b16 %v1255, %v1251
    %v1704 = vpack.c.b16 %v1256, %v1252
    %v1705 = vpack.c.b16 %v1257, %v1253
    %v1706 = vpack.c.b16 %v1258, %v1254
    %v1707 = vpack.c.b16 %v1263, %v1259
    %v1708 = vpack.c.b16 %v1264, %v1260
    %v1709 = vpack.c.b16 %v1265, %v1261
    %v1710 = vpack.c.b16 %v1266, %v1262
    %v1711 = vpack.c.b16 %v1271, %v1267
    %v1712 = vpack.c.b16 %v1272, %v1268
    %v1713 = vpack.c.b16 %v1273, %v1269
    %v1714 = vpack.c.b16 %v1274, %v1270
    %v1715 = vpack.c.b16 %v1279, %v1275
    %v1716 = vpack.c.b16 %v1280, %v1276
    %v1717 = vpack.c.b16 %v1281, %v1277
    %v1718 = vpack.c.b16 %v1282, %v1278
    %v1719 = vpack.c.b16 %v1287, %v1283
    %v1720 = vpack.c.b16 %v1288, %v1284
    %v1721 = vpack.c.b16 %v1289, %v1285
    %v1722 = vpack.c.b16 %v1290, %v1286
    %v1723 = vpack.c.b16 %v1295, %v1291
    %v1724 = vpack.c.b16 %v1296, %v1292
    %v1725 = vpack.c.b16 %v1297, %v1293
    %v1726 = vpack.c.b16 %v1298, %v1294
    %v1727 = vpack.c.b16 %v1303, %v1299
    %v1728 = vpack.c.b16 %v1304, %v1300
    %v1729 = vpack.c.b16 %v1305, %v1301
    %v1730 = vpack.c.b16 %v1306, %v1302
    %v1731 = vpack.c.b16 %v1311, %v1307
    %v1732 = vpack.c.b16 %v1312, %v1308
    %v1733 = vpack.c.b16 %v1313, %v1309
    %v1734 = vpack.c.b16 %v1314, %v1310
    %v1735 = vpack.c.b16 %v1319, %v1315
    %v1736 = vpack.c.b16 %v1320, %v1316
    %v1737 = vpack.c.b16 %v1321, %v1317
    %v1738 = vpack.c.b16 %v1322, %v1318
    %v1739 = vpack.c.b16 %v1327, %v1323
    %v1740 = vpack.c.b16 %v1328, %v1324
    %v1741 = vpack.c.b16 %v1329, %v1325
    %v1742 = vpack.c.b16 %v1330, %v1326
    %v1743 = vpack.c.b16 %v1335, %v1331
    %v1744 = vpack.c.b16 %v1336, %v1332
    %v1745 = vpack.c.b16 %v1337, %v1333
    %v1746 = vpack.c.b16 %v1338, %v1334
    %v1747 = vpack.c.b16 %v1343, %v1339
    %v1748 = vpack.c.b16 %v1344, %v1340
    %v1749 = vpack.c.b16 %v1345, %v1341
    %v1750 = vpack.c.b16 %v1346, %v1342
    %v1751 = vpack.c.b16 %v1351, %v1347
    %v1752 = vpack.c.b16 %v1352, %v1348
    %v1753 = vpack.c.b16 %v1353, %v1349
    %v1754 = vpack.c.b16 %v1354, %v1350
    %v1755 = vpack.c.b16 %v1359, %v1355
    %v1756 = vpack.c.b16 %v1360, %v1356
    %v1757 = vpack.c.b16 %v1361, %v1357
    %v1758 = vpack.c.b16 %v1362, %v1358
    %v1759 = vpack.c.b16 %v1367, %v1363
    %v1760 = vpack.c.b16 %v1368, %v1364
    %v1761 = vpack.c.b16 %v1369, %v1365
    %v1762 = vpack.c.b16 %v1370, %v1366
    %v1763 = vpack.c.b16 %v1375, %v1371
    %v1764 = vpack.c.b16 %v1376, %v1372
    %v1765 = vpack.c.b16 %v1377, %v1373
    %v1766 = vpack.c.b16 %v1378, %v1374
    %v1767 = vpack.c.b16 %v1383, %v1379
    %v1768 = vpack.c.b16 %v1384, %v1380
    %v1769 = vpack.c.b16 %v1385, %v1381
    %v1770 = vpack.c.b16 %v1386, %v1382
    %v1771 = vpack.c.b16 %v1391, %v1387
    %v1772 = vpack.c.b16 %v1392, %v1388
    %v1773 = vpack.c.b16 %v1393, %v1389
    %v1774 = vpack.c.b16 %v1394, %v1390
    %v1775 = vpack.c.b16 %v1399, %v1395
    %v1776 = vpack.c.b16 %v1400, %v1396
    %v1777 = vpack.c.b16 %v1401, %v1397
    %v1778 = vpack.c.b16 %v1402, %v1398
    %v1779 = vpack.c.b16 %v1407, %v1403
    %v1780 = vpack.c.b16 %v1408, %v1404
    %v1781 = vpack.c.b16 %v1409, %v1405
    %v1782 = vpack.c.b16 %v1410, %v1406
    %v1783 = vpack.c.b16 %v1415, %v1411
    %v1784 = vpack.c.b16 %v1416, %v1412
    %v1785 = vpack.c.b16 %v1417, %v1413
    %v1786 = vpack.c.b16 %v1418, %v1414
    %v1787 = vpack.c.b16 %v1423, %v1419
    %v1788 = vpack.c.b16 %v1424, %v1420
    %v1789 = vpack.c.b16 %v1425, %v1421
    %v1790 = vpack.c.b16 %v1426, %v1422
    %v1791 = vpack.c.b16 %v1431, %v1427
    %v1792 = vpack.c.b16 %v1432, %v1428
    %v1793 = vpack.c.b16 %v1433, %v1429
    %v1794 = vpack.c.b16 %v1434, %v1430
    %v1795 = vpack.c.b16 %v1439, %v1435
    %v1796 = vpack.c.b16 %v1440, %v1436
    %v1797 = vpack.c.b16 %v1441, %v1437
    %v1798 = vpack.c.b16 %v1442, %v1438
    %v1799 = vpack.c.b16 %v1447, %v1443
    %v1800 = vpack.c.b16 %v1448, %v1444
    %v1801 = vpack.c.b16 %v1449, %v1445
    %v1802 = vpack.c.b16 %v1450, %v1446
    %v1803 = vpack.c.b16 %v1455, %v1451
    %v1804 = vpack.c.b16 %v1456, %v1452
    %v1805 = vpack.c.b16 %v1457, %v1453
    %v1806 = vpack.c.b16 %v1458, %v1454
    %v1807 = vpack.c.b16 %v1463, %v1459
    %v1808 = vpack.c.b16 %v1464, %v1460
    %v1809 = vpack.c.b16 %v1465, %v1461
    %v1810 = vpack.c.b16 %v1466, %v1462
    %v1811 = vpack.c.b16 %v1471, %v1467
    %v1812 = vpack.c.b16 %v1472, %v1468
    %v1813 = vpack.c.b16 %v1473, %v1469
    %v1814 = vpack.c.b16 %v1474, %v1470
    %v1815 = vpack.c.b16 %v1479, %v1475
    %v1816 = vpack.c.b16 %v1480, %v1476
    %v1817 = vpack.c.b16 %v1481, %v1477
    %v1818 = vpack.c.b16 %v1482, %v1478
    %v1819 = vpack.c.b16 %v1487, %v1483
    %v1820 = vpack.c.b16 %v1488, %v1484
    %v1821 = vpack.c.b16 %v1489, %v1485
    %v1822 = vpack.c.b16 %v1490, %v1486
    %v1823 = vpack.c.b16 %v1495, %v1491
    %v1824 = vpack.c.b16 %v1496, %v1492
    %v1825 = vpack.c.b16 %v1497, %v1493
    %v1826 = vpack.c.b16 %v1498, %v1494
    %v1827 = vpack.c.b16 %v1503, %v1499
    %v1828 = vpack.c.b16 %v1504, %v1500
    %v1829 = vpack.c.b16 %v1505, %v1501
    %v1830 = vpack.c.b16 %v1506, %v1502
    %v1831 = vpack.c.b16 %v1511, %v1507
    %v1832 = vpack.c.b16 %v1512, %v1508
    %v1833 = vpack.c.b16 %v1513, %v1509
    %v1834 = vpack.c.b16 %v1514, %v1510
    %v1835 = vpack.c.b16 %v1519, %v1515
    %v1836 = vpack.c.b16 %v1520, %v1516
    %v1837 = vpack.c.b16 %v1521, %v1517
    %v1838 = vpack.c.b16 %v1522, %v1518
    %v1839 = vpack.c.b16 %v1527, %v1523
    %v1840 = vpack.c.b16 %v1528, %v1524
    %v1841 = vpack.c.b16 %v1529, %v1525
    %v1842 = vpack.c.b16 %v1530, %v1526
    %v1843 = vpack.c.b16 %v1535, %v1531
    %v1844 = vpack.c.b16 %v1536, %v1532
    %v1845 = vpack.c.b16 %v1537, %v1533
    %v1846 = vpack.c.b16 %v1538, %v1534
    %v1847 = vpack.c.b16 %v1543, %v1539
    %v1848 = vpack.c.b16 %v1544, %v1540
    %v1849 = vpack.c.b16 %v1545, %v1541
    %v1850 = vpack.c.b16 %v1546, %v1542
    %v1851 = vpack.c.b16 %v1551, %v1547
    %v1852 = vpack.c.b16 %v1552, %v1548
    %v1853 = vpack.c.b16 %v1553, %v1549
    %v1854 = vpack.c.b16 %v1554, %v1550
    %v1855 = vpack.c.b16 %v1559, %v1555
    %v1856 = vpack.c.b16 %v1560, %v1556
    %v1857 = vpack.c.b16 %v1561, %v1557
    %v1858 = vpack.c.b16 %v1562, %v1558
    %v1859 = vpack.c.b16 %v1567, %v1563
    %v1860 = vpack.c.b16 %v1568, %v1564
    %v1861 = vpack.c.b16 %v1569, %v1565
    %v1862 = vpack.c.b16 %v1570, %v1566
    %v1863 = vpack.c.b16 %v1575, %v1571
    %v1864 = vpack.c.b16 %v1576, %v1572
    %v1865 = vpack.c.b16 %v1577, %v1573
    %v1866 = vpack.c.b16 %v1578, %v1574
    %v1867 = vpack.c.b16 %v1583, %v1579
    %v1868 = vpack.c.b16 %v1584, %v1580
    %v1869 = vpack.c.b16 %v1585, %v1581
    %v1870 = vpack.c.b16 %v1586, %v1582
    %v1871 = vpack.c.b16 %v1591, %v1587
    %v1872 = vpack.c.b16 %v1592, %v1588
    %v1873 = vpack.c.b16 %v1593, %v1589
    %v1874 = vpack.c.b16 %v1594, %v1590
    %v1875 = vpack.c.b16 %v1599, %v1595
    %v1876 = vpack.c.b16 %v1600, %v1596
    %v1877 = vpack.c.b16 %v1601, %v1597
    %v1878 = vpack.c.b16 %v1602, %v1598
    %v1879 = vpack.c.b16 %v1607, %v1603
    %v1880 = vpack.c.b16 %v1608, %v1604
    %v1881 = vpack.c.b16 %v1609, %v1605
    %v1882 = vpack.c.b16 %v1610, %v1606
    %v1883 = vpack.c.b16 %v1615, %v1611
    %v1884 = vpack.c.b16 %v1616, %v1612
    %v1885 = vpack.c.b16 %v1617, %v1613
    %v1886 = vpack.c.b16 %v1618, %v1614
    %v1887 = vpack.c.b16 %v1623, %v1619
    %v1888 = vpack.c.b16 %v1624, %v1620
    %v1889 = vpack.c.b16 %v1625, %v1621
    %v1890 = vpack.c.b16 %v1626, %v1622
    %v1891 = vpack.c.b16 %v1631, %v1627
    %v1892 = vpack.c.b16 %v1632, %v1628
    %v1893 = vpack.c.b16 %v1633, %v1629
    %v1894 = vpack.c.b16 %v1634, %v1630
    %v1895 = vpack.c.b16 %v1639, %v1635
    %v1896 = vpack.c.b16 %v1640, %v1636
    %v1897 = vpack.c.b16 %v1641, %v1637
    %v1898 = vpack.c.b16 %v1642, %v1638
    %2155 = vmatprep.subr.bf16.mxu0 %v1672
    %2156 = vmatpush1.bf16.msra.mxu0 %v1671
    %2157 = vmatprep.subr.bf16.mxu0 %v1668
    %2158 = vmatpush1.bf16.msra.mxu0 %v1667
    %2159 = vmatprep.subr.bf16.mxu0 %v1664
    %2160 = vmatpush1.bf16.msra.mxu0 %v1663
    %2161 = vmatprep.subr.bf16.mxu0 %v1660
    %2162 = vmatpush1.bf16.msra.mxu0 %v1659
    %2163 = vmatprep.subr.bf16.mxu0 %v1656
    %2164 = vmatpush1.bf16.msra.mxu0 %v1655
    %2165 = vmatprep.subr.bf16.mxu0 %v1652
    %2166 = vmatpush1.bf16.msra.mxu0 %v1651
    %2167 = vmatprep.subr.bf16.mxu0 %v1648
    %2168 = vmatpush1.bf16.msra.mxu0 %v1647
    %2169 = vmatprep.subr.bf16.mxu0 %v1644
    %2170 = vmatpush1.bf16.msra.mxu0 %v1643
    %2171 = vmatprep.subr.bf16.mxu0 %v1704
    %2172 = vmatpush2.bf16.msra.mxu0 %v1703
    %2173 = vmatprep.subr.bf16.mxu0 %v1700
    %2174 = vmatpush2.bf16.msra.mxu0 %v1699
    %2175 = vmatprep.subr.bf16.mxu0 %v1696
    %2176 = vmatpush2.bf16.msra.mxu0 %v1695
    %2177 = vmatprep.subr.bf16.mxu0 %v1692
    %2178 = vmatpush2.bf16.msra.mxu0 %v1691
    %2179 = vmatprep.subr.bf16.mxu0 %v1688
    %2180 = vmatpush2.bf16.msra.mxu0 %v1687
    %2181 = vmatprep.subr.bf16.mxu0 %v1684
    %2182 = vmatpush2.bf16.msra.mxu0 %v1683
    %2183 = vmatprep.subr.bf16.mxu0 %v1680
    %2184 = vmatpush2.bf16.msra.mxu0 %v1679
    %2185 = vmatprep.subr.bf16.mxu0 %v1676
    %2186 = vmatpush2.bf16.msra.mxu0 %v1675
    %2187 = vmatprep.mubr.bf16.mxu0 %v591
    %2188 = vmatmul.mubr.bf16.gmra.mxu0 %v590
    %v2189 = vpop.f32.mrf.mxu0
    %v2190 = vadd.f32 %v858, %v2189
    %v2191 = vpop.f32.mrf.mxu0
    %v2192 = vadd.f32 %v862, %v2191
    %v2193 = vpop.f32.mrf.mxu0
    %v2194 = vpop.f32.mrf.mxu0
    %2195 = vdwg.mxu0
    %2196 = vmatprep.subr.bf16.mxu0 %v1736
    %2197 = vmatpush1.bf16.msra.mxu0 %v1735
    %2198 = vmatprep.subr.bf16.mxu0 %v1732
    %2199 = vmatpush1.bf16.msra.mxu0 %v1731
    %2200 = vmatprep.subr.bf16.mxu0 %v1728
    %2201 = vmatpush1.bf16.msra.mxu0 %v1727
    %2202 = vmatprep.subr.bf16.mxu0 %v1724
    %2203 = vmatpush1.bf16.msra.mxu0 %v1723
    %2204 = vmatprep.subr.bf16.mxu0 %v1720
    %2205 = vmatpush1.bf16.msra.mxu0 %v1719
    %2206 = vmatprep.subr.bf16.mxu0 %v1716
    %2207 = vmatpush1.bf16.msra.mxu0 %v1715
    %2208 = vmatprep.subr.bf16.mxu0 %v1712
    %2209 = vmatpush1.bf16.msra.mxu0 %v1711
    %2210 = vmatprep.subr.bf16.mxu0 %v1708
    %2211 = vmatpush1.bf16.msra.mxu0 %v1707
    %2212 = vmatprep.subr.bf16.mxu0 %v1768
    %2213 = vmatpush2.bf16.msra.mxu0 %v1767
    %2214 = vmatprep.subr.bf16.mxu0 %v1764
    %2215 = vmatpush2.bf16.msra.mxu0 %v1763
    %2216 = vmatprep.subr.bf16.mxu0 %v1760
    %2217 = vmatpush2.bf16.msra.mxu0 %v1759
    %2218 = vmatprep.subr.bf16.mxu0 %v1756
    %2219 = vmatpush2.bf16.msra.mxu0 %v1755
    %2220 = vmatprep.subr.bf16.mxu0 %v1752
    %2221 = vmatpush2.bf16.msra.mxu0 %v1751
    %2222 = vmatprep.subr.bf16.mxu0 %v1748
    %2223 = vmatpush2.bf16.msra.mxu0 %v1747
    %2224 = vmatprep.subr.bf16.mxu0 %v1744
    %2225 = vmatpush2.bf16.msra.mxu0 %v1743
    %2226 = vmatprep.subr.bf16.mxu0 %v1740
    %2227 = vmatpush2.bf16.msra.mxu0 %v1739
    %2228 = vmatprep.mubr.bf16.mxu0 %v593
    %2229 = vmatmul.mubr.bf16.gmra.mxu0 %v592
    %v2230 = vpop.f32.mrf.mxu0
    %v2231 = vadd.f32 %v2190, %v2230
    %v2232 = vpop.f32.mrf.mxu0
    %v2233 = vadd.f32 %v2192, %v2232
    %v2234 = vpop.f32.mrf.mxu0
    %v2235 = vpop.f32.mrf.mxu0
    %2236 = vdwg.mxu0
    %2237 = vmatprep.subr.bf16.mxu0 %v1800
    %2238 = vmatpush1.bf16.msra.mxu0 %v1799
    %2239 = vmatprep.subr.bf16.mxu0 %v1796
    %2240 = vmatpush1.bf16.msra.mxu0 %v1795
    %2241 = vmatprep.subr.bf16.mxu0 %v1792
    %2242 = vmatpush1.bf16.msra.mxu0 %v1791
    %2243 = vmatprep.subr.bf16.mxu0 %v1788
    %2244 = vmatpush1.bf16.msra.mxu0 %v1787
    %2245 = vmatprep.subr.bf16.mxu0 %v1784
    %2246 = vmatpush1.bf16.msra.mxu0 %v1783
    %2247 = vmatprep.subr.bf16.mxu0 %v1780
    %2248 = vmatpush1.bf16.msra.mxu0 %v1779
    %2249 = vmatprep.subr.bf16.mxu0 %v1776
    %2250 = vmatpush1.bf16.msra.mxu0 %v1775
    %2251 = vmatprep.subr.bf16.mxu0 %v1772
    %2252 = vmatpush1.bf16.msra.mxu0 %v1771
    %2253 = vmatprep.subr.bf16.mxu0 %v1832
    %2254 = vmatpush2.bf16.msra.mxu0 %v1831
    %2255 = vmatprep.subr.bf16.mxu0 %v1828
    %2256 = vmatpush2.bf16.msra.mxu0 %v1827
    %2257 = vmatprep.subr.bf16.mxu0 %v1824
    %2258 = vmatpush2.bf16.msra.mxu0 %v1823
    %2259 = vmatprep.subr.bf16.mxu0 %v1820
    %2260 = vmatpush2.bf16.msra.mxu0 %v1819
    %2261 = vmatprep.subr.bf16.mxu0 %v1816
    %2262 = vmatpush2.bf16.msra.mxu0 %v1815
    %2263 = vmatprep.subr.bf16.mxu0 %v1812
    %2264 = vmatpush2.bf16.msra.mxu0 %v1811
    %2265 = vmatprep.subr.bf16.mxu0 %v1808
    %2266 = vmatpush2.bf16.msra.mxu0 %v1807
    %2267 = vmatprep.subr.bf16.mxu0 %v1804
    %2268 = vmatpush2.bf16.msra.mxu0 %v1803
    %2269 = vmatprep.mubr.bf16.mxu0 %v595
    %2270 = vmatmul.mubr.bf16.gmra.mxu0 %v594
    %v2271 = vpop.f32.mrf.mxu0
    %v2272 = vadd.f32 %v2231, %v2271
    %v2273 = vpop.f32.mrf.mxu0
    %v2274 = vadd.f32 %v2233, %v2273
    %v2275 = vpop.f32.mrf.mxu0
    %v2276 = vpop.f32.mrf.mxu0
    %2277 = vdwg.mxu0
    %2278 = vmatprep.subr.bf16.mxu0 %v1864
    %2279 = vmatpush1.bf16.msra.mxu0 %v1863
    %2280 = vmatprep.subr.bf16.mxu0 %v1860
    %2281 = vmatpush1.bf16.msra.mxu0 %v1859
    %2282 = vmatprep.subr.bf16.mxu0 %v1856
    %2283 = vmatpush1.bf16.msra.mxu0 %v1855
    %2284 = vmatprep.subr.bf16.mxu0 %v1852
    %2285 = vmatpush1.bf16.msra.mxu0 %v1851
    %2286 = vmatprep.subr.bf16.mxu0 %v1848
    %2287 = vmatpush1.bf16.msra.mxu0 %v1847
    %2288 = vmatprep.subr.bf16.mxu0 %v1844
    %2289 = vmatpush1.bf16.msra.mxu0 %v1843
    %2290 = vmatprep.subr.bf16.mxu0 %v1840
    %2291 = vmatpush1.bf16.msra.mxu0 %v1839
    %2292 = vmatprep.subr.bf16.mxu0 %v1836
    %2293 = vmatpush1.bf16.msra.mxu0 %v1835
    %2294 = vmatprep.subr.bf16.mxu0 %v1896
    %2295 = vmatpush2.bf16.msra.mxu0 %v1895
    %2296 = vmatprep.subr.bf16.mxu0 %v1892
    %2297 = vmatpush2.bf16.msra.mxu0 %v1891
    %2298 = vmatprep.subr.bf16.mxu0 %v1888
    %2299 = vmatpush2.bf16.msra.mxu0 %v1887
    %2300 = vmatprep.subr.bf16.mxu0 %v1884
    %2301 = vmatpush2.bf16.msra.mxu0 %v1883
    %2302 = vmatprep.subr.bf16.mxu0 %v1880
    %2303 = vmatpush2.bf16.msra.mxu0 %v1879
    %2304 = vmatprep.subr.bf16.mxu0 %v1876
    %2305 = vmatpush2.bf16.msra.mxu0 %v1875
    %2306 = vmatprep.subr.bf16.mxu0 %v1872
    %2307 = vmatpush2.bf16.msra.mxu0 %v1871
    %2308 = vmatprep.subr.bf16.mxu0 %v1868
    %2309 = vmatpush2.bf16.msra.mxu0 %v1867
    %2310 = vmatprep.mubr.bf16.mxu0 %v597
    %2311 = vmatmul.mubr.bf16.gmra.mxu0 %v596
    %v2312 = vpop.f32.mrf.mxu0
    %v2313 = vadd.f32 %v2272, %v2312
    %v2314 = vpop.f32.mrf.mxu0
    %v2315 = vadd.f32 %v2274, %v2314
    %v2316 = vpop.f32.mrf.mxu0
    %v2317 = vpop.f32.mrf.mxu0
    %2318 = vdwg.mxu0
    %2319 = vmatprep.subr.bf16.mxu0 %v1674
    %2320 = vmatpush1.bf16.msra.mxu0 %v1673
    %2321 = vmatprep.subr.bf16.mxu0 %v1670
    %2322 = vmatpush1.bf16.msra.mxu0 %v1669
    %2323 = vmatprep.subr.bf16.mxu0 %v1666
    %2324 = vmatpush1.bf16.msra.mxu0 %v1665
    %2325 = vmatprep.subr.bf16.mxu0 %v1662
    %2326 = vmatpush1.bf16.msra.mxu0 %v1661
    %2327 = vmatprep.subr.bf16.mxu0 %v1658
    %2328 = vmatpush1.bf16.msra.mxu0 %v1657
    %2329 = vmatprep.subr.bf16.mxu0 %v1654
    %2330 = vmatpush1.bf16.msra.mxu0 %v1653
    %2331 = vmatprep.subr.bf16.mxu0 %v1650
    %2332 = vmatpush1.bf16.msra.mxu0 %v1649
    %2333 = vmatprep.subr.bf16.mxu0 %v1646
    %2334 = vmatpush1.bf16.msra.mxu0 %v1645
    %2335 = vmatprep.subr.bf16.mxu0 %v1706
    %2336 = vmatpush2.bf16.msra.mxu0 %v1705
    %2337 = vmatprep.subr.bf16.mxu0 %v1702
    %2338 = vmatpush2.bf16.msra.mxu0 %v1701
    %2339 = vmatprep.subr.bf16.mxu0 %v1698
    %2340 = vmatpush2.bf16.msra.mxu0 %v1697
    %2341 = vmatprep.subr.bf16.mxu0 %v1694
    %2342 = vmatpush2.bf16.msra.mxu0 %v1693
    %2343 = vmatprep.subr.bf16.mxu0 %v1690
    %2344 = vmatpush2.bf16.msra.mxu0 %v1689
    %2345 = vmatprep.subr.bf16.mxu0 %v1686
    %2346 = vmatpush2.bf16.msra.mxu0 %v1685
    %2347 = vmatprep.subr.bf16.mxu0 %v1682
    %2348 = vmatpush2.bf16.msra.mxu0 %v1681
    %2349 = vmatprep.subr.bf16.mxu0 %v1678
    %2350 = vmatpush2.bf16.msra.mxu0 %v1677
    %2351 = vmatprep.mubr.bf16.mxu0 %v591
    %2352 = vmatmul.mubr.bf16.gmra.mxu0 %v590
    %v2353 = vpop.f32.mrf.mxu0
    %v2354 = vadd.f32 %v866, %v2353
    %v2355 = vpop.f32.mrf.mxu0
    %v2356 = vadd.f32 %v870, %v2355
    %v2357 = vpop.f32.mrf.mxu0
    %v2358 = vpop.f32.mrf.mxu0
    %2359 = vdwg.mxu0
    %2360 = vmatprep.subr.bf16.mxu0 %v1738
    %2361 = vmatpush1.bf16.msra.mxu0 %v1737
    %2362 = vmatprep.subr.bf16.mxu0 %v1734
    %2363 = vmatpush1.bf16.msra.mxu0 %v1733
    %2364 = vmatprep.subr.bf16.mxu0 %v1730
    %2365 = vmatpush1.bf16.msra.mxu0 %v1729
    %2366 = vmatprep.subr.bf16.mxu0 %v1726
    %2367 = vmatpush1.bf16.msra.mxu0 %v1725
    %2368 = vmatprep.subr.bf16.mxu0 %v1722
    %2369 = vmatpush1.bf16.msra.mxu0 %v1721
    %2370 = vmatprep.subr.bf16.mxu0 %v1718
    %2371 = vmatpush1.bf16.msra.mxu0 %v1717
    %2372 = vmatprep.subr.bf16.mxu0 %v1714
    %2373 = vmatpush1.bf16.msra.mxu0 %v1713
    %2374 = vmatprep.subr.bf16.mxu0 %v1710
    %2375 = vmatpush1.bf16.msra.mxu0 %v1709
    %2376 = vmatprep.subr.bf16.mxu0 %v1770
    %2377 = vmatpush2.bf16.msra.mxu0 %v1769
    %2378 = vmatprep.subr.bf16.mxu0 %v1766
    %2379 = vmatpush2.bf16.msra.mxu0 %v1765
    %2380 = vmatprep.subr.bf16.mxu0 %v1762
    %2381 = vmatpush2.bf16.msra.mxu0 %v1761
    %2382 = vmatprep.subr.bf16.mxu0 %v1758
    %2383 = vmatpush2.bf16.msra.mxu0 %v1757
    %2384 = vmatprep.subr.bf16.mxu0 %v1754
    %2385 = vmatpush2.bf16.msra.mxu0 %v1753
    %2386 = vmatprep.subr.bf16.mxu0 %v1750
    %2387 = vmatpush2.bf16.msra.mxu0 %v1749
    %2388 = vmatprep.subr.bf16.mxu0 %v1746
    %2389 = vmatpush2.bf16.msra.mxu0 %v1745
    %2390 = vmatprep.subr.bf16.mxu0 %v1742
    %2391 = vmatpush2.bf16.msra.mxu0 %v1741
    %2392 = vmatprep.mubr.bf16.mxu0 %v593
    %2393 = vmatmul.mubr.bf16.gmra.mxu0 %v592
    %v2394 = vpop.f32.mrf.mxu0
    %v2395 = vadd.f32 %v2354, %v2394
    %v2396 = vpop.f32.mrf.mxu0
    %v2397 = vadd.f32 %v2356, %v2396
    %v2398 = vpop.f32.mrf.mxu0
    %v2399 = vpop.f32.mrf.mxu0
    %2400 = vdwg.mxu0
    %2401 = vmatprep.subr.bf16.mxu0 %v1802
    %2402 = vmatpush1.bf16.msra.mxu0 %v1801
    %2403 = vmatprep.subr.bf16.mxu0 %v1798
    %2404 = vmatpush1.bf16.msra.mxu0 %v1797
    %2405 = vmatprep.subr.bf16.mxu0 %v1794
    %2406 = vmatpush1.bf16.msra.mxu0 %v1793
    %2407 = vmatprep.subr.bf16.mxu0 %v1790
    %2408 = vmatpush1.bf16.msra.mxu0 %v1789
    %2409 = vmatprep.subr.bf16.mxu0 %v1786
    %2410 = vmatpush1.bf16.msra.mxu0 %v1785
    %2411 = vmatprep.subr.bf16.mxu0 %v1782
    %2412 = vmatpush1.bf16.msra.mxu0 %v1781
    %2413 = vmatprep.subr.bf16.mxu0 %v1778
    %2414 = vmatpush1.bf16.msra.mxu0 %v1777
    %2415 = vmatprep.subr.bf16.mxu0 %v1774
    %2416 = vmatpush1.bf16.msra.mxu0 %v1773
    %2417 = vmatprep.subr.bf16.mxu0 %v1834
    %2418 = vmatpush2.bf16.msra.mxu0 %v1833
    %2419 = vmatprep.subr.bf16.mxu0 %v1830
    %2420 = vmatpush2.bf16.msra.mxu0 %v1829
    %2421 = vmatprep.subr.bf16.mxu0 %v1826
    %2422 = vmatpush2.bf16.msra.mxu0 %v1825
    %2423 = vmatprep.subr.bf16.mxu0 %v1822
    %2424 = vmatpush2.bf16.msra.mxu0 %v1821
    %2425 = vmatprep.subr.bf16.mxu0 %v1818
    %2426 = vmatpush2.bf16.msra.mxu0 %v1817
    %2427 = vmatprep.subr.bf16.mxu0 %v1814
    %2428 = vmatpush2.bf16.msra.mxu0 %v1813
    %2429 = vmatprep.subr.bf16.mxu0 %v1810
    %2430 = vmatpush2.bf16.msra.mxu0 %v1809
    %2431 = vmatprep.subr.bf16.mxu0 %v1806
    %2432 = vmatpush2.bf16.msra.mxu0 %v1805
    %2433 = vmatprep.mubr.bf16.mxu0 %v595
    %2434 = vmatmul.mubr.bf16.gmra.mxu0 %v594
    %v2435 = vpop.f32.mrf.mxu0
    %v2436 = vadd.f32 %v2395, %v2435
    %v2437 = vpop.f32.mrf.mxu0
    %v2438 = vadd.f32 %v2397, %v2437
    %v2439 = vpop.f32.mrf.mxu0
    %v2440 = vpop.f32.mrf.mxu0
    %2441 = vdwg.mxu0
    %2442 = vmatprep.subr.bf16.mxu0 %v1866
    %2443 = vmatpush1.bf16.msra.mxu0 %v1865
    %2444 = vmatprep.subr.bf16.mxu0 %v1862
    %2445 = vmatpush1.bf16.msra.mxu0 %v1861
    %2446 = vmatprep.subr.bf16.mxu0 %v1858
    %2447 = vmatpush1.bf16.msra.mxu0 %v1857
    %2448 = vmatprep.subr.bf16.mxu0 %v1854
    %2449 = vmatpush1.bf16.msra.mxu0 %v1853
    %2450 = vmatprep.subr.bf16.mxu0 %v1850
    %2451 = vmatpush1.bf16.msra.mxu0 %v1849
    %2452 = vmatprep.subr.bf16.mxu0 %v1846
    %2453 = vmatpush1.bf16.msra.mxu0 %v1845
    %2454 = vmatprep.subr.bf16.mxu0 %v1842
    %2455 = vmatpush1.bf16.msra.mxu0 %v1841
    %2456 = vmatprep.subr.bf16.mxu0 %v1838
    %2457 = vmatpush1.bf16.msra.mxu0 %v1837
    %2458 = vmatprep.subr.bf16.mxu0 %v1898
    %2459 = vmatpush2.bf16.msra.mxu0 %v1897
    %2460 = vmatprep.subr.bf16.mxu0 %v1894
    %2461 = vmatpush2.bf16.msra.mxu0 %v1893
    %2462 = vmatprep.subr.bf16.mxu0 %v1890
    %2463 = vmatpush2.bf16.msra.mxu0 %v1889
    %2464 = vmatprep.subr.bf16.mxu0 %v1886
    %2465 = vmatpush2.bf16.msra.mxu0 %v1885
    %2466 = vmatprep.subr.bf16.mxu0 %v1882
    %2467 = vmatpush2.bf16.msra.mxu0 %v1881
    %2468 = vmatprep.subr.bf16.mxu0 %v1878
    %2469 = vmatpush2.bf16.msra.mxu0 %v1877
    %2470 = vmatprep.subr.bf16.mxu0 %v1874
    %2471 = vmatpush2.bf16.msra.mxu0 %v1873
    %2472 = vmatprep.subr.bf16.mxu0 %v1870
    %2473 = vmatpush2.bf16.msra.mxu0 %v1869
    %2474 = vmatprep.mubr.bf16.mxu0 %v597
    %2475 = vmatmul.mubr.bf16.gmra.mxu0 %v596
    %v2476 = vpop.f32.mrf.mxu0
    %v2477 = vadd.f32 %v2436, %v2476
    %v2478 = vpop.f32.mrf.mxu0
    %v2479 = vadd.f32 %v2438, %v2478
    %v2480 = vpop.f32.mrf.mxu0
    %v2481 = vpop.f32.mrf.mxu0
    %2482 = vdwg.mxu0
    %v2483 = vmul.f32 %v2313, 0.5
    %v2484 = vmul.f32 %v2315, 0.5
    %v2485 = vmul.f32 %v2477, 0.5
    %v2486 = vmul.f32 %v2479, 0.5
    %v2487 = vmul.f32 %v2313, 0.70710677
    %v2488 = vmul.f32 %v2315, 0.70710677
    %v2489 = vmul.f32 %v2477, 0.70710677
    %v2490 = vmul.f32 %v2479, 0.70710677
    %v2491 = verf.f32.pop %v2487
    %v2492 = verf.f32.pop %v2488
    %v2493 = verf.f32.pop %v2489
    %v2494 = verf.f32.pop %v2490
    %v2495 = vadd.f32 %v2491, 1.0
    %v2496 = vadd.f32 %v2492, 1.0
    %v2497 = vadd.f32 %v2493, 1.0
    %v2498 = vadd.f32 %v2494, 1.0
    %v2499 = vmul.f32 %v2483, %v2495
    %v2500 = vmul.f32 %v2484, %v2496
    %v2501 = vmul.f32 %v2485, %v2497
    %v2502 = vmul.f32 %v2486, %v2498
    %v2503 = vld [vmem:[%s1 + $0xc] sm:$0x3]
    %v2504 = vpack.c.bf16 %v2499, %v2499
    %v2505 = vpack.c.bf16 %v2500, %v2500
    %v2506 = vpack.c.bf16 %v2501, %v2501
    %v2507 = vpack.c.bf16 %v2502, %v2502
    %v2508 = vld [vmem:[%s4] sm:$0xff]
    %v2509 = vld [vmem:[%s4 + $0x8] sm:$0xff]
    %v2510 = vld [vmem:[%s4 + $0x10] sm:$0xff]
    %v2511 = vld [vmem:[%s4 + $0x18] sm:$0xff]
    %v2512 = vld [vmem:[%s4 + $0x20] sm:$0xff]
    %v2513 = vld [vmem:[%s4 + $0x28] sm:$0xff]
    %v2514 = vld [vmem:[%s4 + $0x30] sm:$0xff]
    %v2515 = vld [vmem:[%s4 + $0x38] sm:$0xff]
    %v2516 = vld [vmem:[%s4 + $0x40] sm:$0xff]
    %v2517 = vld [vmem:[%s4 + $0x48] sm:$0xff]
    %v2518 = vld [vmem:[%s4 + $0x50] sm:$0xff]
    %v2519 = vld [vmem:[%s4 + $0x58] sm:$0xff]
    %v2520 = vld [vmem:[%s4 + $0x60] sm:$0xff]
    %v2521 = vld [vmem:[%s4 + $0x68] sm:$0xff]
    %v2522 = vld [vmem:[%s4 + $0x70] sm:$0xff]
    %v2523 = vld [vmem:[%s4 + $0x78] sm:$0xff]
    %v2524 = vld [vmem:[%s4 + $0x80] sm:$0xff]
    %v2525 = vld [vmem:[%s4 + $0x88] sm:$0xff]
    %v2526 = vld [vmem:[%s4 + $0x90] sm:$0xff]
    %v2527 = vld [vmem:[%s4 + $0x98] sm:$0xff]
    %v2528 = vld [vmem:[%s4 + $0xa0] sm:$0xff]
    %v2529 = vld [vmem:[%s4 + $0xa8] sm:$0xff]
    %v2530 = vld [vmem:[%s4 + $0xb0] sm:$0xff]
    %v2531 = vld [vmem:[%s4 + $0xb8] sm:$0xff]
    %v2532 = vld [vmem:[%s4 + $0xc0] sm:$0xff]
    %v2533 = vld [vmem:[%s4 + $0xc8] sm:$0xff]
    %v2534 = vld [vmem:[%s4 + $0xd0] sm:$0xff]
    %v2535 = vld [vmem:[%s4 + $0xd8] sm:$0xff]
    %v2536 = vld [vmem:[%s4 + $0xe0] sm:$0xff]
    %v2537 = vld [vmem:[%s4 + $0xe8] sm:$0xff]
    %v2538 = vld [vmem:[%s4 + $0xf0] sm:$0xff]
    %v2539 = vld [vmem:[%s4 + $0xf8] sm:$0xff]
    %v2540 = vld [vmem:[%s4 + $0x100] sm:$0xff]
    %v2541 = vld [vmem:[%s4 + $0x108] sm:$0xff]
    %v2542 = vld [vmem:[%s4 + $0x110] sm:$0xff]
    %v2543 = vld [vmem:[%s4 + $0x118] sm:$0xff]
    %v2544 = vld [vmem:[%s4 + $0x120] sm:$0xff]
    %v2545 = vld [vmem:[%s4 + $0x128] sm:$0xff]
    %v2546 = vld [vmem:[%s4 + $0x130] sm:$0xff]
    %v2547 = vld [vmem:[%s4 + $0x138] sm:$0xff]
    %v2548 = vld [vmem:[%s4 + $0x140] sm:$0xff]
    %v2549 = vld [vmem:[%s4 + $0x148] sm:$0xff]
    %v2550 = vld [vmem:[%s4 + $0x150] sm:$0xff]
    %v2551 = vld [vmem:[%s4 + $0x158] sm:$0xff]
    %v2552 = vld [vmem:[%s4 + $0x160] sm:$0xff]
    %v2553 = vld [vmem:[%s4 + $0x168] sm:$0xff]
    %v2554 = vld [vmem:[%s4 + $0x170] sm:$0xff]
    %v2555 = vld [vmem:[%s4 + $0x178] sm:$0xff]
    %v2556 = vld [vmem:[%s4 + $0x180] sm:$0xff]
    %v2557 = vld [vmem:[%s4 + $0x188] sm:$0xff]
    %v2558 = vld [vmem:[%s4 + $0x190] sm:$0xff]
    %v2559 = vld [vmem:[%s4 + $0x198] sm:$0xff]
    %v2560 = vld [vmem:[%s4 + $0x1a0] sm:$0xff]
    %v2561 = vld [vmem:[%s4 + $0x1a8] sm:$0xff]
    %v2562 = vld [vmem:[%s4 + $0x1b0] sm:$0xff]
    %v2563 = vld [vmem:[%s4 + $0x1b8] sm:$0xff]
    %v2564 = vld [vmem:[%s4 + $0x1c0] sm:$0xff]
    %v2565 = vld [vmem:[%s4 + $0x1c8] sm:$0xff]
    %v2566 = vld [vmem:[%s4 + $0x1d0] sm:$0xff]
    %v2567 = vld [vmem:[%s4 + $0x1d8] sm:$0xff]
    %v2568 = vld [vmem:[%s4 + $0x1e0] sm:$0xff]
    %v2569 = vld [vmem:[%s4 + $0x1e8] sm:$0xff]
    %v2570 = vld [vmem:[%s4 + $0x1f0] sm:$0xff]
    %v2571 = vld [vmem:[%s4 + $0x1f8] sm:$0xff]
    %v2573 = vlaneseq
    %v2574 = vshrl.u32 %v2573, 7
    %v2575 = vsub.s32 0, %v2574
    %v2576 = vrot.slane %v2503, %v2575
    %v2577 = vlaneseq
    %v2578 = vshrl.u32 %v2577, 7
    %v2579 = vsub.s32 1, %v2578
    %v2580 = vrot.slane %v2503, %v2579
    %v2647 = vunpack.c.l.b16 %v2508
    %v2648 = vunpack.c.h.b16 %v2508
    %v2649 = vunpack.c.l.b16 %v2509
    %v2650 = vunpack.c.h.b16 %v2509
    %v2651 = vunpack.c.l.b16 %v2510
    %v2652 = vunpack.c.h.b16 %v2510
    %v2653 = vunpack.c.l.b16 %v2511
    %v2654 = vunpack.c.h.b16 %v2511
    %v2655 = vunpack.c.l.b16 %v2512
    %v2656 = vunpack.c.h.b16 %v2512
    %v2657 = vunpack.c.l.b16 %v2513
    %v2658 = vunpack.c.h.b16 %v2513
    %v2659 = vunpack.c.l.b16 %v2514
    %v2660 = vunpack.c.h.b16 %v2514
    %v2661 = vunpack.c.l.b16 %v2515
    %v2662 = vunpack.c.h.b16 %v2515
    %v2663 = vunpack.c.l.b16 %v2516
    %v2664 = vunpack.c.h.b16 %v2516
    %v2665 = vunpack.c.l.b16 %v2517
    %v2666 = vunpack.c.h.b16 %v2517
    %v2667 = vunpack.c.l.b16 %v2518
    %v2668 = vunpack.c.h.b16 %v2518
    %v2669 = vunpack.c.l.b16 %v2519
    %v2670 = vunpack.c.h.b16 %v2519
    %v2671 = vunpack.c.l.b16 %v2520
    %v2672 = vunpack.c.h.b16 %v2520
    %v2673 = vunpack.c.l.b16 %v2521
    %v2674 = vunpack.c.h.b16 %v2521
    %v2675 = vunpack.c.l.b16 %v2522
    %v2676 = vunpack.c.h.b16 %v2522
    %v2677 = vunpack.c.l.b16 %v2523
    %v2678 = vunpack.c.h.b16 %v2523
    %v2679 = vunpack.c.l.b16 %v2524
    %v2680 = vunpack.c.h.b16 %v2524
    %v2681 = vunpack.c.l.b16 %v2525
    %v2682 = vunpack.c.h.b16 %v2525
    %v2683 = vunpack.c.l.b16 %v2526
    %v2684 = vunpack.c.h.b16 %v2526
    %v2685 = vunpack.c.l.b16 %v2527
    %v2686 = vunpack.c.h.b16 %v2527
    %v2687 = vunpack.c.l.b16 %v2528
    %v2688 = vunpack.c.h.b16 %v2528
    %v2689 = vunpack.c.l.b16 %v2529
    %v2690 = vunpack.c.h.b16 %v2529
    %v2691 = vunpack.c.l.b16 %v2530
    %v2692 = vunpack.c.h.b16 %v2530
    %v2693 = vunpack.c.l.b16 %v2531
    %v2694 = vunpack.c.h.b16 %v2531
    %v2695 = vunpack.c.l.b16 %v2532
    %v2696 = vunpack.c.h.b16 %v2532
    %v2697 = vunpack.c.l.b16 %v2533
    %v2698 = vunpack.c.h.b16 %v2533
    %v2699 = vunpack.c.l.b16 %v2534
    %v2700 = vunpack.c.h.b16 %v2534
    %v2701 = vunpack.c.l.b16 %v2535
    %v2702 = vunpack.c.h.b16 %v2535
    %v2703 = vunpack.c.l.b16 %v2536
    %v2704 = vunpack.c.h.b16 %v2536
    %v2705 = vunpack.c.l.b16 %v2537
    %v2706 = vunpack.c.h.b16 %v2537
    %v2707 = vunpack.c.l.b16 %v2538
    %v2708 = vunpack.c.h.b16 %v2538
    %v2709 = vunpack.c.l.b16 %v2539
    %v2710 = vunpack.c.h.b16 %v2539
    %v2711 = vunpack.c.l.b16 %v2540
    %v2712 = vunpack.c.h.b16 %v2540
    %v2713 = vunpack.c.l.b16 %v2541
    %v2714 = vunpack.c.h.b16 %v2541
    %v2715 = vunpack.c.l.b16 %v2542
    %v2716 = vunpack.c.h.b16 %v2542
    %v2717 = vunpack.c.l.b16 %v2543
    %v2718 = vunpack.c.h.b16 %v2543
    %v2719 = vunpack.c.l.b16 %v2544
    %v2720 = vunpack.c.h.b16 %v2544
    %v2721 = vunpack.c.l.b16 %v2545
    %v2722 = vunpack.c.h.b16 %v2545
    %v2723 = vunpack.c.l.b16 %v2546
    %v2724 = vunpack.c.h.b16 %v2546
    %v2725 = vunpack.c.l.b16 %v2547
    %v2726 = vunpack.c.h.b16 %v2547
    %v2727 = vunpack.c.l.b16 %v2548
    %v2728 = vunpack.c.h.b16 %v2548
    %v2729 = vunpack.c.l.b16 %v2549
    %v2730 = vunpack.c.h.b16 %v2549
    %v2731 = vunpack.c.l.b16 %v2550
    %v2732 = vunpack.c.h.b16 %v2550
    %v2733 = vunpack.c.l.b16 %v2551
    %v2734 = vunpack.c.h.b16 %v2551
    %v2735 = vunpack.c.l.b16 %v2552
    %v2736 = vunpack.c.h.b16 %v2552
    %v2737 = vunpack.c.l.b16 %v2553
    %v2738 = vunpack.c.h.b16 %v2553
    %v2739 = vunpack.c.l.b16 %v2554
    %v2740 = vunpack.c.h.b16 %v2554
    %v2741 = vunpack.c.l.b16 %v2555
    %v2742 = vunpack.c.h.b16 %v2555
    %v2743 = vunpack.c.l.b16 %v2556
    %v2744 = vunpack.c.h.b16 %v2556
    %v2745 = vunpack.c.l.b16 %v2557
    %v2746 = vunpack.c.h.b16 %v2557
    %v2747 = vunpack.c.l.b16 %v2558
    %v2748 = vunpack.c.h.b16 %v2558
    %v2749 = vunpack.c.l.b16 %v2559
    %v2750 = vunpack.c.h.b16 %v2559
    %v2751 = vunpack.c.l.b16 %v2560
    %v2752 = vunpack.c.h.b16 %v2560
    %v2753 = vunpack.c.l.b16 %v2561
    %v2754 = vunpack.c.h.b16 %v2561
    %v2755 = vunpack.c.l.b16 %v2562
    %v2756 = vunpack.c.h.b16 %v2562
    %v2757 = vunpack.c.l.b16 %v2563
    %v2758 = vunpack.c.h.b16 %v2563
    %v2759 = vunpack.c.l.b16 %v2564
    %v2760 = vunpack.c.h.b16 %v2564
    %v2761 = vunpack.c.l.b16 %v2565
    %v2762 = vunpack.c.h.b16 %v2565
    %v2763 = vunpack.c.l.b16 %v2566
    %v2764 = vunpack.c.h.b16 %v2566
    %v2765 = vunpack.c.l.b16 %v2567
    %v2766 = vunpack.c.h.b16 %v2567
    %v2767 = vunpack.c.l.b16 %v2568
    %v2768 = vunpack.c.h.b16 %v2568
    %v2769 = vunpack.c.l.b16 %v2569
    %v2770 = vunpack.c.h.b16 %v2569
    %v2771 = vunpack.c.l.b16 %v2570
    %v2772 = vunpack.c.h.b16 %v2570
    %v2773 = vunpack.c.l.b16 %v2571
    %v2774 = vunpack.c.h.b16 %v2571
    %v2775 = vpack.c.b16 %v2649, %v2647
    %v2776 = vpack.c.b16 %v2650, %v2648
    %v2777 = vpack.c.b16 %v2653, %v2651
    %v2778 = vpack.c.b16 %v2654, %v2652
    %v2779 = vpack.c.b16 %v2657, %v2655
    %v2780 = vpack.c.b16 %v2658, %v2656
    %v2781 = vpack.c.b16 %v2661, %v2659
    %v2782 = vpack.c.b16 %v2662, %v2660
    %v2783 = vpack.c.b16 %v2665, %v2663
    %v2784 = vpack.c.b16 %v2666, %v2664
    %v2785 = vpack.c.b16 %v2669, %v2667
    %v2786 = vpack.c.b16 %v2670, %v2668
    %v2787 = vpack.c.b16 %v2673, %v2671
    %v2788 = vpack.c.b16 %v2674, %v2672
    %v2789 = vpack.c.b16 %v2677, %v2675
    %v2790 = vpack.c.b16 %v2678, %v2676
    %v2791 = vpack.c.b16 %v2681, %v2679
    %v2792 = vpack.c.b16 %v2682, %v2680
    %v2793 = vpack.c.b16 %v2685, %v2683
    %v2794 = vpack.c.b16 %v2686, %v2684
    %v2795 = vpack.c.b16 %v2689, %v2687
    %v2796 = vpack.c.b16 %v2690, %v2688
    %v2797 = vpack.c.b16 %v2693, %v2691
    %v2798 = vpack.c.b16 %v2694, %v2692
    %v2799 = vpack.c.b16 %v2697, %v2695
    %v2800 = vpack.c.b16 %v2698, %v2696
    %v2801 = vpack.c.b16 %v2701, %v2699
    %v2802 = vpack.c.b16 %v2702, %v2700
    %v2803 = vpack.c.b16 %v2705, %v2703
    %v2804 = vpack.c.b16 %v2706, %v2704
    %v2805 = vpack.c.b16 %v2709, %v2707
    %v2806 = vpack.c.b16 %v2710, %v2708
    %v2807 = vpack.c.b16 %v2713, %v2711
    %v2808 = vpack.c.b16 %v2714, %v2712
    %v2809 = vpack.c.b16 %v2717, %v2715
    %v2810 = vpack.c.b16 %v2718, %v2716
    %v2811 = vpack.c.b16 %v2721, %v2719
    %v2812 = vpack.c.b16 %v2722, %v2720
    %v2813 = vpack.c.b16 %v2725, %v2723
    %v2814 = vpack.c.b16 %v2726, %v2724
    %v2815 = vpack.c.b16 %v2729, %v2727
    %v2816 = vpack.c.b16 %v2730, %v2728
    %v2817 = vpack.c.b16 %v2733, %v2731
    %v2818 = vpack.c.b16 %v2734, %v2732
    %v2819 = vpack.c.b16 %v2737, %v2735
    %v2820 = vpack.c.b16 %v2738, %v2736
    %v2821 = vpack.c.b16 %v2741, %v2739
    %v2822 = vpack.c.b16 %v2742, %v2740
    %v2823 = vpack.c.b16 %v2745, %v2743
    %v2824 = vpack.c.b16 %v2746, %v2744
    %v2825 = vpack.c.b16 %v2749, %v2747
    %v2826 = vpack.c.b16 %v2750, %v2748
    %v2827 = vpack.c.b16 %v2753, %v2751
    %v2828 = vpack.c.b16 %v2754, %v2752
    %v2829 = vpack.c.b16 %v2757, %v2755
    %v2830 = vpack.c.b16 %v2758, %v2756
    %v2831 = vpack.c.b16 %v2761, %v2759
    %v2832 = vpack.c.b16 %v2762, %v2760
    %v2833 = vpack.c.b16 %v2765, %v2763
    %v2834 = vpack.c.b16 %v2766, %v2764
    %v2835 = vpack.c.b16 %v2769, %v2767
    %v2836 = vpack.c.b16 %v2770, %v2768
    %v2837 = vpack.c.b16 %v2773, %v2771
    %v2838 = vpack.c.b16 %v2774, %v2772
    %2903 = vmatprep.subr.bf16.mxu0 %v2790
    %2904 = vmatpush1.bf16.msra.mxu0 %v2789
    %2905 = vmatprep.subr.bf16.mxu0 %v2788
    %2906 = vmatpush1.bf16.msra.mxu0 %v2787
    %2907 = vmatprep.subr.bf16.mxu0 %v2786
    %2908 = vmatpush1.bf16.msra.mxu0 %v2785
    %2909 = vmatprep.subr.bf16.mxu0 %v2784
    %2910 = vmatpush1.bf16.msra.mxu0 %v2783
    %2911 = vmatprep.subr.bf16.mxu0 %v2782
    %2912 = vmatpush1.bf16.msra.mxu0 %v2781
    %2913 = vmatprep.subr.bf16.mxu0 %v2780
    %2914 = vmatpush1.bf16.msra.mxu0 %v2779
    %2915 = vmatprep.subr.bf16.mxu0 %v2778
    %2916 = vmatpush1.bf16.msra.mxu0 %v2777
    %2917 = vmatprep.subr.bf16.mxu0 %v2776
    %2918 = vmatpush1.bf16.msra.mxu0 %v2775
    %2919 = vmatprep.subr.bf16.mxu0 %v2806
    %2920 = vmatpush2.bf16.msra.mxu0 %v2805
    %2921 = vmatprep.subr.bf16.mxu0 %v2804
    %2922 = vmatpush2.bf16.msra.mxu0 %v2803
    %2923 = vmatprep.subr.bf16.mxu0 %v2802
    %2924 = vmatpush2.bf16.msra.mxu0 %v2801
    %2925 = vmatprep.subr.bf16.mxu0 %v2800
    %2926 = vmatpush2.bf16.msra.mxu0 %v2799
    %2927 = vmatprep.subr.bf16.mxu0 %v2798
    %2928 = vmatpush2.bf16.msra.mxu0 %v2797
    %2929 = vmatprep.subr.bf16.mxu0 %v2796
    %2930 = vmatpush2.bf16.msra.mxu0 %v2795
    %2931 = vmatprep.subr.bf16.mxu0 %v2794
    %2932 = vmatpush2.bf16.msra.mxu0 %v2793
    %2933 = vmatprep.subr.bf16.mxu0 %v2792
    %2934 = vmatpush2.bf16.msra.mxu0 %v2791
    %2935 = vmatprep.mubr.bf16.mxu0 %v2505
    %2936 = vmatmul.mubr.bf16.gmra.mxu0 %v2504
    %v2937 = vpop.f32.mrf.mxu0
    %v2938 = vadd.f32 %v2576, %v2937
    %v2939 = vpop.f32.mrf.mxu0
    %v2940 = vadd.f32 %v2580, %v2939
    %v2941 = vpop.f32.mrf.mxu0
    %v2942 = vpop.f32.mrf.mxu0
    %2943 = vdwg.mxu0
    %2944 = vmatprep.subr.bf16.mxu0 %v2822
    %2945 = vmatpush1.bf16.msra.mxu0 %v2821
    %2946 = vmatprep.subr.bf16.mxu0 %v2820
    %2947 = vmatpush1.bf16.msra.mxu0 %v2819
    %2948 = vmatprep.subr.bf16.mxu0 %v2818
    %2949 = vmatpush1.bf16.msra.mxu0 %v2817
    %2950 = vmatprep.subr.bf16.mxu0 %v2816
    %2951 = vmatpush1.bf16.msra.mxu0 %v2815
    %2952 = vmatprep.subr.bf16.mxu0 %v2814
    %2953 = vmatpush1.bf16.msra.mxu0 %v2813
    %2954 = vmatprep.subr.bf16.mxu0 %v2812
    %2955 = vmatpush1.bf16.msra.mxu0 %v2811
    %2956 = vmatprep.subr.bf16.mxu0 %v2810
    %2957 = vmatpush1.bf16.msra.mxu0 %v2809
    %2958 = vmatprep.subr.bf16.mxu0 %v2808
    %2959 = vmatpush1.bf16.msra.mxu0 %v2807
    %2960 = vmatprep.subr.bf16.mxu0 %v2838
    %2961 = vmatpush2.bf16.msra.mxu0 %v2837
    %2962 = vmatprep.subr.bf16.mxu0 %v2836
    %2963 = vmatpush2.bf16.msra.mxu0 %v2835
    %2964 = vmatprep.subr.bf16.mxu0 %v2834
    %2965 = vmatpush2.bf16.msra.mxu0 %v2833
    %2966 = vmatprep.subr.bf16.mxu0 %v2832
    %2967 = vmatpush2.bf16.msra.mxu0 %v2831
    %2968 = vmatprep.subr.bf16.mxu0 %v2830
    %2969 = vmatpush2.bf16.msra.mxu0 %v2829
    %2970 = vmatprep.subr.bf16.mxu0 %v2828
    %2971 = vmatpush2.bf16.msra.mxu0 %v2827
    %2972 = vmatprep.subr.bf16.mxu0 %v2826
    %2973 = vmatpush2.bf16.msra.mxu0 %v2825
    %2974 = vmatprep.subr.bf16.mxu0 %v2824
    %2975 = vmatpush2.bf16.msra.mxu0 %v2823
    %2976 = vmatprep.mubr.bf16.mxu0 %v2507
    %2977 = vmatmul.mubr.bf16.gmra.mxu0 %v2506
    %v2978 = vpop.f32.mrf.mxu0
    %v2979 = vadd.f32 %v2938, %v2978
    %v2980 = vpop.f32.mrf.mxu0
    %v2981 = vadd.f32 %v2940, %v2980
    %v2982 = vpop.f32.mrf.mxu0
    %v2983 = vpop.f32.mrf.mxu0
    %2984 = vdwg.mxu0
    %v2985 = vmul.f32 %v2979, 0.5
    %v2986 = vmul.f32 %v2981, 0.5
    %v2987 = vmul.f32 %v2979, 0.70710677
    %v2988 = vmul.f32 %v2981, 0.70710677
    %v2989 = verf.f32.pop %v2987
    %v2990 = verf.f32.pop %v2988
    %v2991 = vadd.f32 %v2989, 1.0
    %v2992 = vadd.f32 %v2990, 1.0
    %v2993 = vmul.f32 %v2985, %v2991
    %v2994 = vmul.f32 %v2986, %v2992
    %v2995 = vld [vmem:[%s1 + $0xe] sm:$0x3]
    %v2996 = vpack.c.bf16 %v2993, %v2993
    %v2997 = vpack.c.bf16 %v2994, %v2994
    %v2998 = vld [vmem:[#allocation7] sm:$0xff]
    %v2999 = vld [vmem:[#allocation7 + $0x8] sm:$0xff]
    %v3000 = vld [vmem:[#allocation7 + $0x10] sm:$0xff]
    %v3001 = vld [vmem:[#allocation7 + $0x18] sm:$0xff]
    %v3002 = vld [vmem:[#allocation7 + $0x20] sm:$0xff]
    %v3003 = vld [vmem:[#allocation7 + $0x28] sm:$0xff]
    %v3004 = vld [vmem:[#allocation7 + $0x30] sm:$0xff]
    %v3005 = vld [vmem:[#allocation7 + $0x38] sm:$0xff]
    %v3006 = vld [vmem:[#allocation7 + $0x40] sm:$0xff]
    %v3007 = vld [vmem:[#allocation7 + $0x48] sm:$0xff]
    %v3008 = vld [vmem:[#allocation7 + $0x50] sm:$0xff]
    %v3009 = vld [vmem:[#allocation7 + $0x58] sm:$0xff]
    %v3010 = vld [vmem:[#allocation7 + $0x60] sm:$0xff]
    %v3011 = vld [vmem:[#allocation7 + $0x68] sm:$0xff]
    %v3012 = vld [vmem:[#allocation7 + $0x70] sm:$0xff]
    %v3013 = vld [vmem:[#allocation7 + $0x78] sm:$0xff]
    %v3014 = vld [vmem:[#allocation7 + $0x80] sm:$0xff]
    %v3015 = vld [vmem:[#allocation7 + $0x88] sm:$0xff]
    %v3016 = vld [vmem:[#allocation7 + $0x90] sm:$0xff]
    %v3017 = vld [vmem:[#allocation7 + $0x98] sm:$0xff]
    %v3018 = vld [vmem:[#allocation7 + $0xa0] sm:$0xff]
    %v3019 = vld [vmem:[#allocation7 + $0xa8] sm:$0xff]
    %v3020 = vld [vmem:[#allocation7 + $0xb0] sm:$0xff]
    %v3021 = vld [vmem:[#allocation7 + $0xb8] sm:$0xff]
    %v3022 = vld [vmem:[#allocation7 + $0xc0] sm:$0xff]
    %v3023 = vld [vmem:[#allocation7 + $0xc8] sm:$0xff]
    %v3024 = vld [vmem:[#allocation7 + $0xd0] sm:$0xff]
    %v3025 = vld [vmem:[#allocation7 + $0xd8] sm:$0xff]
    %v3026 = vld [vmem:[#allocation7 + $0xe0] sm:$0xff]
    %v3027 = vld [vmem:[#allocation7 + $0xe8] sm:$0xff]
    %v3028 = vld [vmem:[#allocation7 + $0xf0] sm:$0xff]
    %v3029 = vld [vmem:[#allocation7 + $0xf8] sm:$0xff]
    %v3031 = vlaneseq
    %v3032 = vshrl.u32 %v3031, 7
    %v3033 = vsub.s32 0, %v3032
    %v3034 = vrot.slane %v2995, %v3033
    %v3035 = vlaneseq
    %v3036 = vshrl.u32 %v3035, 7
    %v3037 = vsub.s32 1, %v3036
    %v3038 = vrot.slane %v2995, %v3037
    %v3073 = vunpack.c.l.b16 %v2998
    %v3074 = vunpack.c.h.b16 %v2998
    %v3075 = vunpack.c.l.b16 %v2999
    %v3076 = vunpack.c.h.b16 %v2999
    %v3077 = vunpack.c.l.b16 %v3000
    %v3078 = vunpack.c.h.b16 %v3000
    %v3079 = vunpack.c.l.b16 %v3001
    %v3080 = vunpack.c.h.b16 %v3001
    %v3081 = vunpack.c.l.b16 %v3002
    %v3082 = vunpack.c.h.b16 %v3002
    %v3083 = vunpack.c.l.b16 %v3003
    %v3084 = vunpack.c.h.b16 %v3003
    %v3085 = vunpack.c.l.b16 %v3004
    %v3086 = vunpack.c.h.b16 %v3004
    %v3087 = vunpack.c.l.b16 %v3005
    %v3088 = vunpack.c.h.b16 %v3005
    %v3089 = vunpack.c.l.b16 %v3006
    %v3090 = vunpack.c.h.b16 %v3006
    %v3091 = vunpack.c.l.b16 %v3007
    %v3092 = vunpack.c.h.b16 %v3007
    %v3093 = vunpack.c.l.b16 %v3008
    %v3094 = vunpack.c.h.b16 %v3008
    %v3095 = vunpack.c.l.b16 %v3009
    %v3096 = vunpack.c.h.b16 %v3009
    %v3097 = vunpack.c.l.b16 %v3010
    %v3098 = vunpack.c.h.b16 %v3010
    %v3099 = vunpack.c.l.b16 %v3011
    %v3100 = vunpack.c.h.b16 %v3011
    %v3101 = vunpack.c.l.b16 %v3012
    %v3102 = vunpack.c.h.b16 %v3012
    %v3103 = vunpack.c.l.b16 %v3013
    %v3104 = vunpack.c.h.b16 %v3013
    %v3105 = vunpack.c.l.b16 %v3014
    %v3106 = vunpack.c.h.b16 %v3014
    %v3107 = vunpack.c.l.b16 %v3015
    %v3108 = vunpack.c.h.b16 %v3015
    %v3109 = vunpack.c.l.b16 %v3016
    %v3110 = vunpack.c.h.b16 %v3016
    %v3111 = vunpack.c.l.b16 %v3017
    %v3112 = vunpack.c.h.b16 %v3017
    %v3113 = vunpack.c.l.b16 %v3018
    %v3114 = vunpack.c.h.b16 %v3018
    %v3115 = vunpack.c.l.b16 %v3019
    %v3116 = vunpack.c.h.b16 %v3019
    %v3117 = vunpack.c.l.b16 %v3020
    %v3118 = vunpack.c.h.b16 %v3020
    %v3119 = vunpack.c.l.b16 %v3021
    %v3120 = vunpack.c.h.b16 %v3021
    %v3121 = vunpack.c.l.b16 %v3022
    %v3122 = vunpack.c.h.b16 %v3022
    %v3123 = vunpack.c.l.b16 %v3023
    %v3124 = vunpack.c.h.b16 %v3023
    %v3125 = vunpack.c.l.b16 %v3024
    %v3126 = vunpack.c.h.b16 %v3024
    %v3127 = vunpack.c.l.b16 %v3025
    %v3128 = vunpack.c.h.b16 %v3025
    %v3129 = vunpack.c.l.b16 %v3026
    %v3130 = vunpack.c.h.b16 %v3026
    %v3131 = vunpack.c.l.b16 %v3027
    %v3132 = vunpack.c.h.b16 %v3027
    %v3133 = vunpack.c.l.b16 %v3028
    %v3134 = vunpack.c.h.b16 %v3028
    %v3135 = vunpack.c.l.b16 %v3029
    %v3136 = vunpack.c.h.b16 %v3029
    %v3137 = vpack.c.b16 %v3075, %v3073
    %v3138 = vpack.c.b16 %v3076, %v3074
    %v3139 = vpack.c.b16 %v3079, %v3077
    %v3140 = vpack.c.b16 %v3080, %v3078
    %v3141 = vpack.c.b16 %v3083, %v3081
    %v3142 = vpack.c.b16 %v3084, %v3082
    %v3143 = vpack.c.b16 %v3087, %v3085
    %v3144 = vpack.c.b16 %v3088, %v3086
    %v3145 = vpack.c.b16 %v3091, %v3089
    %v3146 = vpack.c.b16 %v3092, %v3090
    %v3147 = vpack.c.b16 %v3095, %v3093
    %v3148 = vpack.c.b16 %v3096, %v3094
    %v3149 = vpack.c.b16 %v3099, %v3097
    %v3150 = vpack.c.b16 %v3100, %v3098
    %v3151 = vpack.c.b16 %v3103, %v3101
    %v3152 = vpack.c.b16 %v3104, %v3102
    %v3153 = vpack.c.b16 %v3107, %v3105
    %v3154 = vpack.c.b16 %v3108, %v3106
    %v3155 = vpack.c.b16 %v3111, %v3109
    %v3156 = vpack.c.b16 %v3112, %v3110
    %v3157 = vpack.c.b16 %v3115, %v3113
    %v3158 = vpack.c.b16 %v3116, %v3114
    %v3159 = vpack.c.b16 %v3119, %v3117
    %v3160 = vpack.c.b16 %v3120, %v3118
    %v3161 = vpack.c.b16 %v3123, %v3121
    %v3162 = vpack.c.b16 %v3124, %v3122
    %v3163 = vpack.c.b16 %v3127, %v3125
    %v3164 = vpack.c.b16 %v3128, %v3126
    %v3165 = vpack.c.b16 %v3131, %v3129
    %v3166 = vpack.c.b16 %v3132, %v3130
    %v3167 = vpack.c.b16 %v3135, %v3133
    %v3168 = vpack.c.b16 %v3136, %v3134
    %3201 = vmatprep.subr.bf16.mxu0 %v3152
    %3202 = vmatpush1.bf16.msra.mxu0 %v3151
    %3203 = vmatprep.subr.bf16.mxu0 %v3150
    %3204 = vmatpush1.bf16.msra.mxu0 %v3149
    %3205 = vmatprep.subr.bf16.mxu0 %v3148
    %3206 = vmatpush1.bf16.msra.mxu0 %v3147
    %3207 = vmatprep.subr.bf16.mxu0 %v3146
    %3208 = vmatpush1.bf16.msra.mxu0 %v3145
    %3209 = vmatprep.subr.bf16.mxu0 %v3144
    %3210 = vmatpush1.bf16.msra.mxu0 %v3143
    %3211 = vmatprep.subr.bf16.mxu0 %v3142
    %3212 = vmatpush1.bf16.msra.mxu0 %v3141
    %3213 = vmatprep.subr.bf16.mxu0 %v3140
    %3214 = vmatpush1.bf16.msra.mxu0 %v3139
    %3215 = vmatprep.subr.bf16.mxu0 %v3138
    %3216 = vmatpush1.bf16.msra.mxu0 %v3137
    %3217 = vmatprep.subr.bf16.mxu0 %v3168
    %3218 = vmatpush2.bf16.msra.mxu0 %v3167
    %3219 = vmatprep.subr.bf16.mxu0 %v3166
    %3220 = vmatpush2.bf16.msra.mxu0 %v3165
    %3221 = vmatprep.subr.bf16.mxu0 %v3164
    %3222 = vmatpush2.bf16.msra.mxu0 %v3163
    %3223 = vmatprep.subr.bf16.mxu0 %v3162
    %3224 = vmatpush2.bf16.msra.mxu0 %v3161
    %3225 = vmatprep.subr.bf16.mxu0 %v3160
    %3226 = vmatpush2.bf16.msra.mxu0 %v3159
    %3227 = vmatprep.subr.bf16.mxu0 %v3158
    %3228 = vmatpush2.bf16.msra.mxu0 %v3157
    %3229 = vmatprep.subr.bf16.mxu0 %v3156
    %3230 = vmatpush2.bf16.msra.mxu0 %v3155
    %3231 = vmatprep.subr.bf16.mxu0 %v3154
    %3232 = vmatpush2.bf16.msra.mxu0 %v3153
    %3233 = vmatprep.mubr.bf16.mxu0 %v2997
    %3234 = vmatmul.mubr.bf16.gmra.mxu0 %v2996
    %v3235 = vpop.f32.mrf.mxu0
    %v3236 = vadd.f32 %v3034, %v3235
    %v3237 = vpop.f32.mrf.mxu0
    %v3238 = vadd.f32 %v3038, %v3237
    %v3239 = vpop.f32.mrf.mxu0
    %v3240 = vpop.f32.mrf.mxu0
    %3241 = vdwg.mxu0
    %v3242 = vadd.f32 %v3236, %v3238
    %3243 = vadd.xlane.f32.xlu0 %v3242
    %v3244 = vpop.xlane.xlu0 %3243
    %v3245 = vrcp.pop 256.0
    %v3246 = vmul.f32 %v3244, %v3245
    %v3247 = vsub.f32 %v3236, %v3246
    %v3248 = vsub.f32 %v3238, %v3246
    %v3249 = vmul.f32 %v3247, %v3247
    %v3250 = vmul.f32 %v3248, %v3248
    %v3251 = vadd.f32 %v3249, %v3250
    %3252 = vadd.xlane.f32.xlu0 %v3251
    %v3253 = vpop.xlane.xlu0 %3252
    %v3254 = vmul.f32 %v3253, %v3245
    %v3255 = vadd.f32 %v3254, 1e-05
    %v3256 = vrsqrt.pop %v3255
    %v3257 = vmul.f32 %v3247, %v3256
    %v3258 = vmul.f32 %v3248, %v3256
    %v3259 = vld [vmem:[%s1 + $0x10] sm:$0x3]
    %v3261 = vlaneseq
    %v3262 = vshrl.u32 %v3261, 7
    %v3263 = vsub.s32 0, %v3262
    %v3264 = vrot.slane %v3259, %v3263
    %v3265 = vlaneseq
    %v3266 = vshrl.u32 %v3265, 7
    %v3267 = vsub.s32 1, %v3266
    %v3268 = vrot.slane %v3259, %v3267
    %v3271 = vmul.f32 %v3257, %v3264
    %v3272 = vmul.f32 %v3258, %v3268
    %v3273 = vld [vmem:[%s1 + $0x12] sm:$0x3]
    %v3275 = vlaneseq
    %v3276 = vshrl.u32 %v3275, 7
    %v3277 = vsub.s32 0, %v3276
    %v3278 = vrot.slane %v3273, %v3277
    %v3279 = vlaneseq
    %v3280 = vshrl.u32 %v3279, 7
    %v3281 = vsub.s32 1, %v3280
    %v3282 = vrot.slane %v3273, %v3281
    %v3285 = vadd.f32 %v3271, %v3278
    %v3286 = vadd.f32 %v3272, %v3282
    %vm3287 = vcmp.ge.f32.partialorder %v3285, 0.0
    %vm3288 = vcmp.ge.f32.partialorder %v3286, 0.0
    %v3289 = vmul.f32 %v3285, 0.01
    %v3290 = vmul.f32 %v3286, 0.01
    %v3291 = vsel %vm3287, %v3285, %v3289
    %v3292 = vsel %vm3288, %v3286, %v3290
    %v3293 = vld [vmem:[%s1 + $0x14] sm:$0x3]
    %v3294 = vpack.c.bf16 %v3291, %v3291
    %v3295 = vpack.c.bf16 %v3292, %v3292
    %v3296 = vld [vmem:[#allocation8] sm:$0xff]
    %v3297 = vld [vmem:[#allocation8 + $0x8] sm:$0xff]
    %v3298 = vld [vmem:[#allocation8 + $0x10] sm:$0xff]
    %v3299 = vld [vmem:[#allocation8 + $0x18] sm:$0xff]
    %v3300 = vld [vmem:[#allocation8 + $0x20] sm:$0xff]
    %v3301 = vld [vmem:[#allocation8 + $0x28] sm:$0xff]
    %v3302 = vld [vmem:[#allocation8 + $0x30] sm:$0xff]
    %v3303 = vld [vmem:[#allocation8 + $0x38] sm:$0xff]
    %v3304 = vld [vmem:[#allocation8 + $0x40] sm:$0xff]
    %v3305 = vld [vmem:[#allocation8 + $0x48] sm:$0xff]
    %v3306 = vld [vmem:[#allocation8 + $0x50] sm:$0xff]
    %v3307 = vld [vmem:[#allocation8 + $0x58] sm:$0xff]
    %v3308 = vld [vmem:[#allocation8 + $0x60] sm:$0xff]
    %v3309 = vld [vmem:[#allocation8 + $0x68] sm:$0xff]
    %v3310 = vld [vmem:[#allocation8 + $0x70] sm:$0xff]
    %v3311 = vld [vmem:[#allocation8 + $0x78] sm:$0xff]
    %v3312 = vld [vmem:[#allocation8 + $0x80] sm:$0xff]
    %v3313 = vld [vmem:[#allocation8 + $0x88] sm:$0xff]
    %v3314 = vld [vmem:[#allocation8 + $0x90] sm:$0xff]
    %v3315 = vld [vmem:[#allocation8 + $0x98] sm:$0xff]
    %v3316 = vld [vmem:[#allocation8 + $0xa0] sm:$0xff]
    %v3317 = vld [vmem:[#allocation8 + $0xa8] sm:$0xff]
    %v3318 = vld [vmem:[#allocation8 + $0xb0] sm:$0xff]
    %v3319 = vld [vmem:[#allocation8 + $0xb8] sm:$0xff]
    %v3320 = vld [vmem:[#allocation8 + $0xc0] sm:$0xff]
    %v3321 = vld [vmem:[#allocation8 + $0xc8] sm:$0xff]
    %v3322 = vld [vmem:[#allocation8 + $0xd0] sm:$0xff]
    %v3323 = vld [vmem:[#allocation8 + $0xd8] sm:$0xff]
    %v3324 = vld [vmem:[#allocation8 + $0xe0] sm:$0xff]
    %v3325 = vld [vmem:[#allocation8 + $0xe8] sm:$0xff]
    %v3326 = vld [vmem:[#allocation8 + $0xf0] sm:$0xff]
    %v3327 = vld [vmem:[#allocation8 + $0xf8] sm:$0xff]
    %v3329 = vlaneseq
    %v3330 = vshrl.u32 %v3329, 7
    %v3331 = vsub.s32 0, %v3330
    %v3332 = vrot.slane %v3293, %v3331
    %v3333 = vlaneseq
    %v3334 = vshrl.u32 %v3333, 7
    %v3335 = vsub.s32 1, %v3334
    %v3336 = vrot.slane %v3293, %v3335
    %v3371 = vunpack.c.l.b16 %v3296
    %v3372 = vunpack.c.h.b16 %v3296
    %v3373 = vunpack.c.l.b16 %v3297
    %v3374 = vunpack.c.h.b16 %v3297
    %v3375 = vunpack.c.l.b16 %v3298
    %v3376 = vunpack.c.h.b16 %v3298
    %v3377 = vunpack.c.l.b16 %v3299
    %v3378 = vunpack.c.h.b16 %v3299
    %v3379 = vunpack.c.l.b16 %v3300
    %v3380 = vunpack.c.h.b16 %v3300
    %v3381 = vunpack.c.l.b16 %v3301
    %v3382 = vunpack.c.h.b16 %v3301
    %v3383 = vunpack.c.l.b16 %v3302
    %v3384 = vunpack.c.h.b16 %v3302
    %v3385 = vunpack.c.l.b16 %v3303
    %v3386 = vunpack.c.h.b16 %v3303
    %v3387 = vunpack.c.l.b16 %v3304
    %v3388 = vunpack.c.h.b16 %v3304
    %v3389 = vunpack.c.l.b16 %v3305
    %v3390 = vunpack.c.h.b16 %v3305
    %v3391 = vunpack.c.l.b16 %v3306
    %v3392 = vunpack.c.h.b16 %v3306
    %v3393 = vunpack.c.l.b16 %v3307
    %v3394 = vunpack.c.h.b16 %v3307
    %v3395 = vunpack.c.l.b16 %v3308
    %v3396 = vunpack.c.h.b16 %v3308
    %v3397 = vunpack.c.l.b16 %v3309
    %v3398 = vunpack.c.h.b16 %v3309
    %v3399 = vunpack.c.l.b16 %v3310
    %v3400 = vunpack.c.h.b16 %v3310
    %v3401 = vunpack.c.l.b16 %v3311
    %v3402 = vunpack.c.h.b16 %v3311
    %v3403 = vunpack.c.l.b16 %v3312
    %v3404 = vunpack.c.h.b16 %v3312
    %v3405 = vunpack.c.l.b16 %v3313
    %v3406 = vunpack.c.h.b16 %v3313
    %v3407 = vunpack.c.l.b16 %v3314
    %v3408 = vunpack.c.h.b16 %v3314
    %v3409 = vunpack.c.l.b16 %v3315
    %v3410 = vunpack.c.h.b16 %v3315
    %v3411 = vunpack.c.l.b16 %v3316
    %v3412 = vunpack.c.h.b16 %v3316
    %v3413 = vunpack.c.l.b16 %v3317
    %v3414 = vunpack.c.h.b16 %v3317
    %v3415 = vunpack.c.l.b16 %v3318
    %v3416 = vunpack.c.h.b16 %v3318
    %v3417 = vunpack.c.l.b16 %v3319
    %v3418 = vunpack.c.h.b16 %v3319
    %v3419 = vunpack.c.l.b16 %v3320
    %v3420 = vunpack.c.h.b16 %v3320
    %v3421 = vunpack.c.l.b16 %v3321
    %v3422 = vunpack.c.h.b16 %v3321
    %v3423 = vunpack.c.l.b16 %v3322
    %v3424 = vunpack.c.h.b16 %v3322
    %v3425 = vunpack.c.l.b16 %v3323
    %v3426 = vunpack.c.h.b16 %v3323
    %v3427 = vunpack.c.l.b16 %v3324
    %v3428 = vunpack.c.h.b16 %v3324
    %v3429 = vunpack.c.l.b16 %v3325
    %v3430 = vunpack.c.h.b16 %v3325
    %v3431 = vunpack.c.l.b16 %v3326
    %v3432 = vunpack.c.h.b16 %v3326
    %v3433 = vunpack.c.l.b16 %v3327
    %v3434 = vunpack.c.h.b16 %v3327
    %v3435 = vpack.c.b16 %v3373, %v3371
    %v3436 = vpack.c.b16 %v3374, %v3372
    %v3437 = vpack.c.b16 %v3377, %v3375
    %v3438 = vpack.c.b16 %v3378, %v3376
    %v3439 = vpack.c.b16 %v3381, %v3379
    %v3440 = vpack.c.b16 %v3382, %v3380
    %v3441 = vpack.c.b16 %v3385, %v3383
    %v3442 = vpack.c.b16 %v3386, %v3384
    %v3443 = vpack.c.b16 %v3389, %v3387
    %v3444 = vpack.c.b16 %v3390, %v3388
    %v3445 = vpack.c.b16 %v3393, %v3391
    %v3446 = vpack.c.b16 %v3394, %v3392
    %v3447 = vpack.c.b16 %v3397, %v3395
    %v3448 = vpack.c.b16 %v3398, %v3396
    %v3449 = vpack.c.b16 %v3401, %v3399
    %v3450 = vpack.c.b16 %v3402, %v3400
    %v3451 = vpack.c.b16 %v3405, %v3403
    %v3452 = vpack.c.b16 %v3406, %v3404
    %v3453 = vpack.c.b16 %v3409, %v3407
    %v3454 = vpack.c.b16 %v3410, %v3408
    %v3455 = vpack.c.b16 %v3413, %v3411
    %v3456 = vpack.c.b16 %v3414, %v3412
    %v3457 = vpack.c.b16 %v3417, %v3415
    %v3458 = vpack.c.b16 %v3418, %v3416
    %v3459 = vpack.c.b16 %v3421, %v3419
    %v3460 = vpack.c.b16 %v3422, %v3420
    %v3461 = vpack.c.b16 %v3425, %v3423
    %v3462 = vpack.c.b16 %v3426, %v3424
    %v3463 = vpack.c.b16 %v3429, %v3427
    %v3464 = vpack.c.b16 %v3430, %v3428
    %v3465 = vpack.c.b16 %v3433, %v3431
    %v3466 = vpack.c.b16 %v3434, %v3432
    %3499 = vmatprep.subr.bf16.mxu0 %v3450
    %3500 = vmatpush1.bf16.msra.mxu0 %v3449
    %3501 = vmatprep.subr.bf16.mxu0 %v3448
    %3502 = vmatpush1.bf16.msra.mxu0 %v3447
    %3503 = vmatprep.subr.bf16.mxu0 %v3446
    %3504 = vmatpush1.bf16.msra.mxu0 %v3445
    %3505 = vmatprep.subr.bf16.mxu0 %v3444
    %3506 = vmatpush1.bf16.msra.mxu0 %v3443
    %3507 = vmatprep.subr.bf16.mxu0 %v3442
    %3508 = vmatpush1.bf16.msra.mxu0 %v3441
    %3509 = vmatprep.subr.bf16.mxu0 %v3440
    %3510 = vmatpush1.bf16.msra.mxu0 %v3439
    %3511 = vmatprep.subr.bf16.mxu0 %v3438
    %3512 = vmatpush1.bf16.msra.mxu0 %v3437
    %3513 = vmatprep.subr.bf16.mxu0 %v3436
    %3514 = vmatpush1.bf16.msra.mxu0 %v3435
    %3515 = vmatprep.subr.bf16.mxu0 %v3466
    %3516 = vmatpush2.bf16.msra.mxu0 %v3465
    %3517 = vmatprep.subr.bf16.mxu0 %v3464
    %3518 = vmatpush2.bf16.msra.mxu0 %v3463
    %3519 = vmatprep.subr.bf16.mxu0 %v3462
    %3520 = vmatpush2.bf16.msra.mxu0 %v3461
    %3521 = vmatprep.subr.bf16.mxu0 %v3460
    %3522 = vmatpush2.bf16.msra.mxu0 %v3459
    %3523 = vmatprep.subr.bf16.mxu0 %v3458
    %3524 = vmatpush2.bf16.msra.mxu0 %v3457
    %3525 = vmatprep.subr.bf16.mxu0 %v3456
    %3526 = vmatpush2.bf16.msra.mxu0 %v3455
    %3527 = vmatprep.subr.bf16.mxu0 %v3454
    %3528 = vmatpush2.bf16.msra.mxu0 %v3453
    %3529 = vmatprep.subr.bf16.mxu0 %v3452
    %3530 = vmatpush2.bf16.msra.mxu0 %v3451
    %3531 = vmatprep.mubr.bf16.mxu0 %v3295
    %3532 = vmatmul.mubr.bf16.gmra.mxu0 %v3294
    %v3533 = vpop.f32.mrf.mxu0
    %v3534 = vadd.f32 %v3332, %v3533
    %v3535 = vpop.f32.mrf.mxu0
    %v3536 = vadd.f32 %v3336, %v3535
    %v3537 = vpop.f32.mrf.mxu0
    %v3538 = vpop.f32.mrf.mxu0
    %3539 = vdwg.mxu0
    %v3540 = vadd.f32 %v2993, %v3534
    %v3541 = vadd.f32 %v2994, %v3536
    %v3542 = vld [vmem:[%s1 + $0x16] sm:$0x1]
    %v3543 = vpack.c.bf16 %v3540, %v3540
    %v3544 = vpack.c.bf16 %v3541, %v3541
    %v3545 = vld [vmem:[#allocation10] sm:$0xf]
    %v3546 = vld [vmem:[#allocation10 + $0x4] sm:$0xf]
    %v3547 = vld [vmem:[#allocation10 + $0x8] sm:$0xf]
    %v3548 = vld [vmem:[#allocation10 + $0xc] sm:$0xf]
    %v3549 = vld [vmem:[#allocation10 + $0x10] sm:$0xf]
    %v3550 = vld [vmem:[#allocation10 + $0x14] sm:$0xf]
    %v3551 = vld [vmem:[#allocation10 + $0x18] sm:$0xf]
    %v3552 = vld [vmem:[#allocation10 + $0x1c] sm:$0xf]
    %v3553 = vld [vmem:[#allocation10 + $0x20] sm:$0xf]
    %v3554 = vld [vmem:[#allocation10 + $0x24] sm:$0xf]
    %v3555 = vld [vmem:[#allocation10 + $0x28] sm:$0xf]
    %v3556 = vld [vmem:[#allocation10 + $0x2c] sm:$0xf]
    %v3557 = vld [vmem:[#allocation10 + $0x30] sm:$0xf]
    %v3558 = vld [vmem:[#allocation10 + $0x34] sm:$0xf]
    %v3559 = vld [vmem:[#allocation10 + $0x38] sm:$0xf]
    %v3560 = vld [vmem:[#allocation10 + $0x3c] sm:$0xf]
    %v3561 = vld [vmem:[#allocation10 + $0x40] sm:$0xf]
    %v3562 = vld [vmem:[#allocation10 + $0x44] sm:$0xf]
    %v3563 = vld [vmem:[#allocation10 + $0x48] sm:$0xf]
    %v3564 = vld [vmem:[#allocation10 + $0x4c] sm:$0xf]
    %v3565 = vld [vmem:[#allocation10 + $0x50] sm:$0xf]
    %v3566 = vld [vmem:[#allocation10 + $0x54] sm:$0xf]
    %v3567 = vld [vmem:[#allocation10 + $0x58] sm:$0xf]
    %v3568 = vld [vmem:[#allocation10 + $0x5c] sm:$0xf]
    %v3569 = vld [vmem:[#allocation10 + $0x60] sm:$0xf]
    %v3570 = vld [vmem:[#allocation10 + $0x64] sm:$0xf]
    %v3571 = vld [vmem:[#allocation10 + $0x68] sm:$0xf]
    %v3572 = vld [vmem:[#allocation10 + $0x6c] sm:$0xf]
    %v3573 = vld [vmem:[#allocation10 + $0x70] sm:$0xf]
    %v3574 = vld [vmem:[#allocation10 + $0x74] sm:$0xf]
    %v3575 = vld [vmem:[#allocation10 + $0x78] sm:$0xf]
    %v3576 = vld [vmem:[#allocation10 + $0x7c] sm:$0xf]
    %v3578 = vlaneseq
    %v3579 = vshrl.u32 %v3578, 7
    %v3580 = vsub.s32 0, %v3579
    %v3581 = vrot.slane %v3542, %v3580
    %v3615 = vunpack.c.l.b16 %v3545
    %v3616 = vunpack.c.l.b16 %v3546
    %v3617 = vunpack.c.l.b16 %v3547
    %v3618 = vunpack.c.l.b16 %v3548
    %v3619 = vunpack.c.l.b16 %v3549
    %v3620 = vunpack.c.l.b16 %v3550
    %v3621 = vunpack.c.l.b16 %v3551
    %v3622 = vunpack.c.l.b16 %v3552
    %v3623 = vunpack.c.l.b16 %v3553
    %v3624 = vunpack.c.l.b16 %v3554
    %v3625 = vunpack.c.l.b16 %v3555
    %v3626 = vunpack.c.l.b16 %v3556
    %v3627 = vunpack.c.l.b16 %v3557
    %v3628 = vunpack.c.l.b16 %v3558
    %v3629 = vunpack.c.l.b16 %v3559
    %v3630 = vunpack.c.l.b16 %v3560
    %v3631 = vunpack.c.l.b16 %v3561
    %v3632 = vunpack.c.l.b16 %v3562
    %v3633 = vunpack.c.l.b16 %v3563
    %v3634 = vunpack.c.l.b16 %v3564
    %v3635 = vunpack.c.l.b16 %v3565
    %v3636 = vunpack.c.l.b16 %v3566
    %v3637 = vunpack.c.l.b16 %v3567
    %v3638 = vunpack.c.l.b16 %v3568
    %v3639 = vunpack.c.l.b16 %v3569
    %v3640 = vunpack.c.l.b16 %v3570
    %v3641 = vunpack.c.l.b16 %v3571
    %v3642 = vunpack.c.l.b16 %v3572
    %v3643 = vunpack.c.l.b16 %v3573
    %v3644 = vunpack.c.l.b16 %v3574
    %v3645 = vunpack.c.l.b16 %v3575
    %v3646 = vunpack.c.l.b16 %v3576
    %v3647 = vpack.c.b16 %v3616, %v3615
    %v3648 = vpack.c.b16 %v3618, %v3617
    %v3649 = vpack.c.b16 %v3620, %v3619
    %v3650 = vpack.c.b16 %v3622, %v3621
    %v3651 = vpack.c.b16 %v3624, %v3623
    %v3652 = vpack.c.b16 %v3626, %v3625
    %v3653 = vpack.c.b16 %v3628, %v3627
    %v3654 = vpack.c.b16 %v3630, %v3629
    %v3655 = vpack.c.b16 %v3632, %v3631
    %v3656 = vpack.c.b16 %v3634, %v3633
    %v3657 = vpack.c.b16 %v3636, %v3635
    %v3658 = vpack.c.b16 %v3638, %v3637
    %v3659 = vpack.c.b16 %v3640, %v3639
    %v3660 = vpack.c.b16 %v3642, %v3641
    %v3661 = vpack.c.b16 %v3644, %v3643
    %v3662 = vpack.c.b16 %v3646, %v3645
    %3679 = vmatprep.subr.bf16.mxu0 0
    %3680 = vmatpush1.bf16.msra.mxu0 %v3654
    %3681 = vmatprep.subr.bf16.mxu0 0
    %3682 = vmatpush1.bf16.msra.mxu0 %v3653
    %3683 = vmatprep.subr.bf16.mxu0 0
    %3684 = vmatpush1.bf16.msra.mxu0 %v3652
    %3685 = vmatprep.subr.bf16.mxu0 0
    %3686 = vmatpush1.bf16.msra.mxu0 %v3651
    %3687 = vmatprep.subr.bf16.mxu0 0
    %3688 = vmatpush1.bf16.msra.mxu0 %v3650
    %3689 = vmatprep.subr.bf16.mxu0 0
    %3690 = vmatpush1.bf16.msra.mxu0 %v3649
    %3691 = vmatprep.subr.bf16.mxu0 0
    %3692 = vmatpush1.bf16.msra.mxu0 %v3648
    %3693 = vmatprep.subr.bf16.mxu0 0
    %3694 = vmatpush1.bf16.msra.mxu0 %v3647
    %3695 = vmatprep.subr.bf16.mxu0 0
    %3696 = vmatpush2.bf16.msra.mxu0 %v3662
    %3697 = vmatprep.subr.bf16.mxu0 0
    %3698 = vmatpush2.bf16.msra.mxu0 %v3661
    %3699 = vmatprep.subr.bf16.mxu0 0
    %3700 = vmatpush2.bf16.msra.mxu0 %v3660
    %3701 = vmatprep.subr.bf16.mxu0 0
    %3702 = vmatpush2.bf16.msra.mxu0 %v3659
    %3703 = vmatprep.subr.bf16.mxu0 0
    %3704 = vmatpush2.bf16.msra.mxu0 %v3658
    %3705 = vmatprep.subr.bf16.mxu0 0
    %3706 = vmatpush2.bf16.msra.mxu0 %v3657
    %3707 = vmatprep.subr.bf16.mxu0 0
    %3708 = vmatpush2.bf16.msra.mxu0 %v3656
    %3709 = vmatprep.subr.bf16.mxu0 0
    %3710 = vmatpush2.bf16.msra.mxu0 %v3655
    %3711 = vmatprep.mubr.bf16.mxu0 %v3544
    %3712 = vmatmul.mubr.bf16.gmra.mxu0 %v3543
    %v3713 = vpop.f32.mrf.mxu0
    %v3714 = vadd.f32 %v3581, %v3713
    %v3715 = vpop.f32.mrf.mxu0
    %v3716 = vpop.f32.mrf.mxu0
    %v3717 = vpop.f32.mrf.mxu0
    %3718 = vdwg.mxu0
    %v3719 = vmul.f32 %v3714, 0.5
    %v3720 = vmul.f32 %v3714, 0.70710677
    %v3721 = verf.f32.pop %v3720
    %v3722 = vadd.f32 %v3721, 1.0
    %v3723 = vmul.f32 %v3719, %v3722
    %v3724 = vld [vmem:[%s1 + $0x17] sm:$0x1]
    %v3725 = vpack.c.bf16 %v3723, %v3723
    %v3726 = vld [vmem:[%s8] sm:$0xf]
    %v3727 = vld [vmem:[%s8 + $0x4] sm:$0xf]
    %v3728 = vld [vmem:[%s8 + $0x8] sm:$0xf]
    %v3729 = vld [vmem:[%s8 + $0xc] sm:$0xf]
    %v3730 = vld [vmem:[%s8 + $0x10] sm:$0xf]
    %v3731 = vld [vmem:[%s8 + $0x14] sm:$0xf]
    %v3732 = vld [vmem:[%s8 + $0x18] sm:$0xf]
    %v3733 = vld [vmem:[%s8 + $0x1c] sm:$0xf]
    %v3734 = vld [vmem:[%s8 + $0x20] sm:$0xf]
    %v3735 = vld [vmem:[%s8 + $0x24] sm:$0xf]
    %v3736 = vld [vmem:[%s8 + $0x28] sm:$0xf]
    %v3737 = vld [vmem:[%s8 + $0x2c] sm:$0xf]
    %v3738 = vld [vmem:[%s8 + $0x30] sm:$0xf]
    %v3739 = vld [vmem:[%s8 + $0x34] sm:$0xf]
    %v3740 = vld [vmem:[%s8 + $0x38] sm:$0xf]
    %v3741 = vld [vmem:[%s8 + $0x3c] sm:$0xf]
    %v3743 = vlaneseq
    %v3744 = vshrl.u32 %v3743, 7
    %v3745 = vsub.s32 0, %v3744
    %v3746 = vrot.slane %v3724, %v3745
    %v3764 = vunpack.c.l.b16 %v3726
    %v3765 = vunpack.c.l.b16 %v3727
    %v3766 = vunpack.c.l.b16 %v3728
    %v3767 = vunpack.c.l.b16 %v3729
    %v3768 = vunpack.c.l.b16 %v3730
    %v3769 = vunpack.c.l.b16 %v3731
    %v3770 = vunpack.c.l.b16 %v3732
    %v3771 = vunpack.c.l.b16 %v3733
    %v3772 = vunpack.c.l.b16 %v3734
    %v3773 = vunpack.c.l.b16 %v3735
    %v3774 = vunpack.c.l.b16 %v3736
    %v3775 = vunpack.c.l.b16 %v3737
    %v3776 = vunpack.c.l.b16 %v3738
    %v3777 = vunpack.c.l.b16 %v3739
    %v3778 = vunpack.c.l.b16 %v3740
    %v3779 = vunpack.c.l.b16 %v3741
    %v3780 = vpack.c.b16 %v3765, %v3764
    %v3781 = vpack.c.b16 %v3767, %v3766
    %v3782 = vpack.c.b16 %v3769, %v3768
    %v3783 = vpack.c.b16 %v3771, %v3770
    %v3784 = vpack.c.b16 %v3773, %v3772
    %v3785 = vpack.c.b16 %v3775, %v3774
    %v3786 = vpack.c.b16 %v3777, %v3776
    %v3787 = vpack.c.b16 %v3779, %v3778
    %3796 = vmatprep.subr.bf16.mxu0 0
    %3797 = vmatpush1.bf16.msra.mxu0 %v3787
    %3798 = vmatprep.subr.bf16.mxu0 0
    %3799 = vmatpush1.bf16.msra.mxu0 %v3786
    %3800 = vmatprep.subr.bf16.mxu0 0
    %3801 = vmatpush1.bf16.msra.mxu0 %v3785
    %3802 = vmatprep.subr.bf16.mxu0 0
    %3803 = vmatpush1.bf16.msra.mxu0 %v3784
    %3804 = vmatprep.subr.bf16.mxu0 0
    %3805 = vmatpush1.bf16.msra.mxu0 %v3783
    %3806 = vmatprep.subr.bf16.mxu0 0
    %3807 = vmatpush1.bf16.msra.mxu0 %v3782
    %3808 = vmatprep.subr.bf16.mxu0 0
    %3809 = vmatpush1.bf16.msra.mxu0 %v3781
    %3810 = vmatprep.subr.bf16.mxu0 0
    %3811 = vmatpush1.bf16.msra.mxu0 %v3780
    %3812 = vmatprep.subr.bf16.mxu0 0
    %3813 = vmatpush2.bf16.msra.mxu0 0
    %3814 = vmatprep.subr.bf16.mxu0 0
    %3815 = vmatpush2.bf16.msra.mxu0 0
    %3816 = vmatprep.subr.bf16.mxu0 0
    %3817 = vmatpush2.bf16.msra.mxu0 0
    %3818 = vmatprep.subr.bf16.mxu0 0
    %3819 = vmatpush2.bf16.msra.mxu0 0
    %3820 = vmatprep.subr.bf16.mxu0 0
    %3821 = vmatpush2.bf16.msra.mxu0 0
    %3822 = vmatprep.subr.bf16.mxu0 0
    %3823 = vmatpush2.bf16.msra.mxu0 0
    %3824 = vmatprep.subr.bf16.mxu0 0
    %3825 = vmatpush2.bf16.msra.mxu0 0
    %3826 = vmatprep.subr.bf16.mxu0 0
    %3827 = vmatpush2.bf16.msra.mxu0 0
    %3828 = vmatprep.mubr.bf16.mxu0 0
    %3829 = vmatmul.mubr.bf16.gmra.mxu0 %v3725
    %v3830 = vpop.f32.mrf.mxu0
    %v3831 = vadd.f32 %v3746, %v3830
    %v3832 = vpop.f32.mrf.mxu0
    %v3833 = vpop.f32.mrf.mxu0
    %v3834 = vpop.f32.mrf.mxu0
    %3835 = vdwg.mxu0
    %v3836 = vld [vmem:[%s1 + $0x18] sm:$0x1]
    %v3837 = vpack.c.bf16 %v3831, %v3831
    %v3838 = vld [vmem:[%s9] sm:$0xf]
    %v3839 = vld [vmem:[%s9 + $0x4] sm:$0xf]
    %v3840 = vld [vmem:[%s9 + $0x8] sm:$0xf]
    %v3841 = vld [vmem:[%s9 + $0xc] sm:$0xf]
    %v3842 = vld [vmem:[%s9 + $0x10] sm:$0xf]
    %v3843 = vld [vmem:[%s9 + $0x14] sm:$0xf]
    %v3844 = vld [vmem:[%s9 + $0x18] sm:$0xf]
    %v3845 = vld [vmem:[%s9 + $0x1c] sm:$0xf]
    %v3847 = vlaneseq
    %v3848 = vshrl.u32 %v3847, 7
    %v3849 = vsub.s32 0, %v3848
    %v3850 = vrot.slane %v3836, %v3849
    %v3860 = vunpack.c.l.b16 %v3838
    %v3861 = vunpack.c.l.b16 %v3839
    %v3862 = vunpack.c.l.b16 %v3840
    %v3863 = vunpack.c.l.b16 %v3841
    %v3864 = vunpack.c.l.b16 %v3842
    %v3865 = vunpack.c.l.b16 %v3843
    %v3866 = vunpack.c.l.b16 %v3844
    %v3867 = vunpack.c.l.b16 %v3845
    %v3868 = vpack.c.b16 %v3861, %v3860
    %v3869 = vpack.c.b16 %v3863, %v3862
    %v3870 = vpack.c.b16 %v3865, %v3864
    %v3871 = vpack.c.b16 %v3867, %v3866
    %vm3876 = vcmask 523264
    %v3878 = vsel %vm3876, %v3837, 0
    %3880 = vmatprep.subr.bf16.mxu0 0
    %3881 = vmatpush1.bf16.msra.mxu0 0
    %3882 = vmatprep.subr.bf16.mxu0 0
    %3883 = vmatpush1.bf16.msra.mxu0 0
    %3884 = vmatprep.subr.bf16.mxu0 0
    %3885 = vmatpush1.bf16.msra.mxu0 0
    %3886 = vmatprep.subr.bf16.mxu0 0
    %3887 = vmatpush1.bf16.msra.mxu0 0
    %3888 = vmatprep.subr.bf16.mxu0 0
    %3889 = vmatpush1.bf16.msra.mxu0 %v3871
    %3890 = vmatprep.subr.bf16.mxu0 0
    %3891 = vmatpush1.bf16.msra.mxu0 %v3870
    %3892 = vmatprep.subr.bf16.mxu0 0
    %3893 = vmatpush1.bf16.msra.mxu0 %v3869
    %3894 = vmatprep.subr.bf16.mxu0 0
    %3895 = vmatpush1.bf16.msra.mxu0 %v3868
    %3896 = vmatprep.subr.bf16.mxu0 0
    %3897 = vmatpush2.bf16.msra.mxu0 0
    %3898 = vmatprep.subr.bf16.mxu0 0
    %3899 = vmatpush2.bf16.msra.mxu0 0
    %3900 = vmatprep.subr.bf16.mxu0 0
    %3901 = vmatpush2.bf16.msra.mxu0 0
    %3902 = vmatprep.subr.bf16.mxu0 0
    %3903 = vmatpush2.bf16.msra.mxu0 0
    %3904 = vmatprep.subr.bf16.mxu0 0
    %3905 = vmatpush2.bf16.msra.mxu0 0
    %3906 = vmatprep.subr.bf16.mxu0 0
    %3907 = vmatpush2.bf16.msra.mxu0 0
    %3908 = vmatprep.subr.bf16.mxu0 0
    %3909 = vmatpush2.bf16.msra.mxu0 0
    %3910 = vmatprep.subr.bf16.mxu0 0
    %3911 = vmatpush2.bf16.msra.mxu0 0
    %3912 = vmatprep.mubr.bf16.mxu0 0
    %3913 = vmatmul.mubr.bf16.gmra.mxu0 %v3878
    %v3914 = vpop.f32.mrf.mxu0
    %v3915 = vadd.f32 %v3850, %v3914
    %v3916 = vpop.f32.mrf.mxu0
    %v3917 = vpop.f32.mrf.mxu0
    %v3918 = vpop.f32.mrf.mxu0
    %3919 = vdwg.mxu0
    %v3920 = vsel %vm3876, %v3915, 0.0
    %3921 = vadd.xlane.f32.xlu0 %v3920
    %v3922 = vpop.xlane.xlu0 %3921
    %v3923 = vrcp.pop 64.0
    %v3924 = vmul.f32 %v3922, %v3923
    %v3925 = vsub.f32 %v3915, %v3924
    %v3926 = vmul.f32 %v3925, %v3925
    %v3927 = vsel %vm3876, %v3926, 0.0
    %3928 = vadd.xlane.f32.xlu0 %v3927
    %v3929 = vpop.xlane.xlu0 %3928
    %v3930 = vmul.f32 %v3929, %v3923
    %v3931 = vadd.f32 %v3930, 1e-05
    %v3932 = vrsqrt.pop %v3931
    %v3933 = vmul.f32 %v3925, %v3932
    %v3934 = vld [vmem:[%s1 + $0x19] sm:$0x1]
    %v3936 = vlaneseq
    %v3937 = vshrl.u32 %v3936, 7
    %v3938 = vsub.s32 0, %v3937
    %v3939 = vrot.slane %v3934, %v3938
    %v3941 = vmul.f32 %v3933, %v3939
    %v3942 = vld [vmem:[%s1 + $0x1a] sm:$0x1]
    %v3944 = vlaneseq
    %v3945 = vshrl.u32 %v3944, 7
    %v3946 = vsub.s32 0, %v3945
    %v3947 = vrot.slane %v3942, %v3946
    %v3949 = vadd.f32 %v3941, %v3947
    %vm3950 = vcmp.ge.f32.partialorder %v3949, 0.0
    %v3951 = vmul.f32 %v3949, 0.01
    %v3952 = vsel %vm3950, %v3949, %v3951
    %v3953 = vld [vmem:[%s1 + $0x1b] sm:$0x1]
    %v3954 = vpack.c.bf16 %v3952, %v3952
    %v3955 = vld [vmem:[#allocation11] sm:$0xf]
    %v3956 = vld [vmem:[#allocation11 + $0x4] sm:$0xf]
    %v3957 = vld [vmem:[#allocation11 + $0x8] sm:$0xf]
    %v3958 = vld [vmem:[#allocation11 + $0xc] sm:$0xf]
    %v3959 = vld [vmem:[#allocation11 + $0x10] sm:$0xf]
    %v3960 = vld [vmem:[#allocation11 + $0x14] sm:$0xf]
    %v3961 = vld [vmem:[#allocation11 + $0x18] sm:$0xf]
    %v3962 = vld [vmem:[#allocation11 + $0x1c] sm:$0xf]
    %v3964 = vlaneseq
    %v3965 = vshrl.u32 %v3964, 7
    %v3966 = vsub.s32 0, %v3965
    %v3967 = vrot.slane %v3953, %v3966
    %v3977 = vunpack.c.l.b16 %v3955
    %v3978 = vunpack.c.l.b16 %v3956
    %v3979 = vunpack.c.l.b16 %v3957
    %v3980 = vunpack.c.l.b16 %v3958
    %v3981 = vunpack.c.l.b16 %v3959
    %v3982 = vunpack.c.l.b16 %v3960
    %v3983 = vunpack.c.l.b16 %v3961
    %v3984 = vunpack.c.l.b16 %v3962
    %v3985 = vpack.c.b16 %v3978, %v3977
    %v3986 = vpack.c.b16 %v3980, %v3979
    %v3987 = vpack.c.b16 %v3982, %v3981
    %v3988 = vpack.c.b16 %v3984, %v3983
    %v3994 = vsel %vm3876, %v3954, 0
    %3996 = vmatprep.subr.bf16.mxu0 0
    %3997 = vmatpush1.bf16.msra.mxu0 0
    %3998 = vmatprep.subr.bf16.mxu0 0
    %3999 = vmatpush1.bf16.msra.mxu0 0
    %4000 = vmatprep.subr.bf16.mxu0 0
    %4001 = vmatpush1.bf16.msra.mxu0 0
    %4002 = vmatprep.subr.bf16.mxu0 0
    %4003 = vmatpush1.bf16.msra.mxu0 0
    %4004 = vmatprep.subr.bf16.mxu0 0
    %4005 = vmatpush1.bf16.msra.mxu0 %v3988
    %4006 = vmatprep.subr.bf16.mxu0 0
    %4007 = vmatpush1.bf16.msra.mxu0 %v3987
    %4008 = vmatprep.subr.bf16.mxu0 0
    %4009 = vmatpush1.bf16.msra.mxu0 %v3986
    %4010 = vmatprep.subr.bf16.mxu0 0
    %4011 = vmatpush1.bf16.msra.mxu0 %v3985
    %4012 = vmatprep.subr.bf16.mxu0 0
    %4013 = vmatpush2.bf16.msra.mxu0 0
    %4014 = vmatprep.subr.bf16.mxu0 0
    %4015 = vmatpush2.bf16.msra.mxu0 0
    %4016 = vmatprep.subr.bf16.mxu0 0
    %4017 = vmatpush2.bf16.msra.mxu0 0
    %4018 = vmatprep.subr.bf16.mxu0 0
    %4019 = vmatpush2.bf16.msra.mxu0 0
    %4020 = vmatprep.subr.bf16.mxu0 0
    %4021 = vmatpush2.bf16.msra.mxu0 0
    %4022 = vmatprep.subr.bf16.mxu0 0
    %4023 = vmatpush2.bf16.msra.mxu0 0
    %4024 = vmatprep.subr.bf16.mxu0 0
    %4025 = vmatpush2.bf16.msra.mxu0 0
    %4026 = vmatprep.subr.bf16.mxu0 0
    %4027 = vmatpush2.bf16.msra.mxu0 0
    %4028 = vmatprep.mubr.bf16.mxu0 0
    %4029 = vmatmul.mubr.bf16.gmra.mxu0 %v3994
    %v4030 = vpop.f32.mrf.mxu0
    %v4031 = vadd.f32 %v3967, %v4030
    %v4032 = vpop.f32.mrf.mxu0
    %v4033 = vpop.f32.mrf.mxu0
    %v4034 = vpop.f32.mrf.mxu0
    %4035 = vdwg.mxu0
    %v4036 = vadd.f32 %v3831, %v4031
    %v4037 = vld [vmem:[%s1 + $0x1c] sm:$0x1]
    %v4038 = vpack.c.bf16 %v4036, %v4036
    %v4039 = vld [vmem:[#allocation13] sm:$0xf]
    %v4040 = vld [vmem:[#allocation13 + $0x4] sm:$0xf]
    %v4041 = vld [vmem:[#allocation13 + $0x8] sm:$0xf]
    %v4042 = vld [vmem:[#allocation13 + $0xc] sm:$0xf]
    %v4043 = vld [vmem:[#allocation13 + $0x10] sm:$0xf]
    %v4044 = vld [vmem:[#allocation13 + $0x14] sm:$0xf]
    %v4045 = vld [vmem:[#allocation13 + $0x18] sm:$0xf]
    %v4046 = vld [vmem:[#allocation13 + $0x1c] sm:$0xf]
    %v4048 = vlaneseq
    %v4049 = vshrl.u32 %v4048, 7
    %v4050 = vsub.s32 0, %v4049
    %v4051 = vrot.slane %v4037, %v4050
    %v4061 = vunpack.c.l.b16 %v4039
    %v4062 = vunpack.c.l.b16 %v4040
    %v4063 = vunpack.c.l.b16 %v4041
    %v4064 = vunpack.c.l.b16 %v4042
    %v4065 = vunpack.c.l.b16 %v4043
    %v4066 = vunpack.c.l.b16 %v4044
    %v4067 = vunpack.c.l.b16 %v4045
    %v4068 = vunpack.c.l.b16 %v4046
    %v4069 = vpack.c.b16 %v4062, %v4061
    %v4070 = vpack.c.b16 %v4064, %v4063
    %v4071 = vpack.c.b16 %v4066, %v4065
    %v4072 = vpack.c.b16 %v4068, %v4067
    %v4078 = vsel %vm3876, %v4038, 0
    %4080 = vmatprep.subr.bf16.mxu0 0
    %4081 = vmatpush1.bf16.msra.mxu0 0
    %4082 = vmatprep.subr.bf16.mxu0 0
    %4083 = vmatpush1.bf16.msra.mxu0 0
    %4084 = vmatprep.subr.bf16.mxu0 0
    %4085 = vmatpush1.bf16.msra.mxu0 0
    %4086 = vmatprep.subr.bf16.mxu0 0
    %4087 = vmatpush1.bf16.msra.mxu0 0
    %4088 = vmatprep.subr.bf16.mxu0 0
    %4089 = vmatpush1.bf16.msra.mxu0 %v4072
    %4090 = vmatprep.subr.bf16.mxu0 0
    %4091 = vmatpush1.bf16.msra.mxu0 %v4071
    %4092 = vmatprep.subr.bf16.mxu0 0
    %4093 = vmatpush1.bf16.msra.mxu0 %v4070
    %4094 = vmatprep.subr.bf16.mxu0 0
    %4095 = vmatpush1.bf16.msra.mxu0 %v4069
    %4096 = vmatprep.subr.bf16.mxu0 0
    %4097 = vmatpush2.bf16.msra.mxu0 0
    %4098 = vmatprep.subr.bf16.mxu0 0
    %4099 = vmatpush2.bf16.msra.mxu0 0
    %4100 = vmatprep.subr.bf16.mxu0 0
    %4101 = vmatpush2.bf16.msra.mxu0 0
    %4102 = vmatprep.subr.bf16.mxu0 0
    %4103 = vmatpush2.bf16.msra.mxu0 0
    %4104 = vmatprep.subr.bf16.mxu0 0
    %4105 = vmatpush2.bf16.msra.mxu0 0
    %4106 = vmatprep.subr.bf16.mxu0 0
    %4107 = vmatpush2.bf16.msra.mxu0 0
    %4108 = vmatprep.subr.bf16.mxu0 0
    %4109 = vmatpush2.bf16.msra.mxu0 0
    %4110 = vmatprep.subr.bf16.mxu0 0
    %4111 = vmatpush2.bf16.msra.mxu0 0
    %4112 = vmatprep.mubr.bf16.mxu0 0
    %4113 = vmatmul.mubr.bf16.gmra.mxu0 %v4078
    %v4114 = vpop.f32.mrf.mxu0
    %v4115 = vadd.f32 %v4051, %v4114
    %v4116 = vpop.f32.mrf.mxu0
    %v4117 = vpop.f32.mrf.mxu0
    %v4118 = vpop.f32.mrf.mxu0
    %4119 = vdwg.mxu0
    %v4120 = vmul.f32 %v4115, 0.5
    %v4121 = vmul.f32 %v4115, 0.70710677
    %v4122 = verf.f32.pop %v4121
    %v4123 = vadd.f32 %v4122, 1.0
    %v4124 = vmul.f32 %v4120, %v4123
    %v4125 = vld [vmem:[%s1 + $0x1d] sm:$0x3]
    %v4126 = vpack.c.bf16 %v4124, %v4124
    %v4127 = vld [vmem:[#allocation14] sm:$0xff]
    %v4128 = vld [vmem:[#allocation14 + $0x8] sm:$0xff]
    %v4129 = vld [vmem:[#allocation14 + $0x10] sm:$0xff]
    %v4130 = vld [vmem:[#allocation14 + $0x18] sm:$0xff]
    %v4131 = vld [vmem:[#allocation14 + $0x20] sm:$0xff]
    %v4132 = vld [vmem:[#allocation14 + $0x28] sm:$0xff]
    %v4133 = vld [vmem:[#allocation14 + $0x30] sm:$0xff]
    %v4134 = vld [vmem:[#allocation14 + $0x38] sm:$0xff]
    %v4135 = vld [vmem:[#allocation14 + $0x40] sm:$0xff]
    %v4136 = vld [vmem:[#allocation14 + $0x48] sm:$0xff]
    %v4137 = vld [vmem:[#allocation14 + $0x50] sm:$0xff]
    %v4138 = vld [vmem:[#allocation14 + $0x58] sm:$0xff]
    %v4139 = vld [vmem:[#allocation14 + $0x60] sm:$0xff]
    %v4140 = vld [vmem:[#allocation14 + $0x68] sm:$0xff]
    %v4141 = vld [vmem:[#allocation14 + $0x70] sm:$0xff]
    %v4142 = vld [vmem:[#allocation14 + $0x78] sm:$0xff]
    %v4144 = vlaneseq
    %v4145 = vshrl.u32 %v4144, 7
    %v4146 = vsub.s32 0, %v4145
    %v4147 = vrot.slane %v4125, %v4146
    %v4148 = vlaneseq
    %v4149 = vshrl.u32 %v4148, 7
    %v4150 = vsub.s32 1, %v4149
    %v4151 = vrot.slane %v4125, %v4150
    %v4170 = vunpack.c.l.b16 %v4127
    %v4171 = vunpack.c.h.b16 %v4127
    %v4172 = vunpack.c.l.b16 %v4128
    %v4173 = vunpack.c.h.b16 %v4128
    %v4174 = vunpack.c.l.b16 %v4129
    %v4175 = vunpack.c.h.b16 %v4129
    %v4176 = vunpack.c.l.b16 %v4130
    %v4177 = vunpack.c.h.b16 %v4130
    %v4178 = vunpack.c.l.b16 %v4131
    %v4179 = vunpack.c.h.b16 %v4131
    %v4180 = vunpack.c.l.b16 %v4132
    %v4181 = vunpack.c.h.b16 %v4132
    %v4182 = vunpack.c.l.b16 %v4133
    %v4183 = vunpack.c.h.b16 %v4133
    %v4184 = vunpack.c.l.b16 %v4134
    %v4185 = vunpack.c.h.b16 %v4134
    %v4186 = vunpack.c.l.b16 %v4135
    %v4187 = vunpack.c.h.b16 %v4135
    %v4188 = vunpack.c.l.b16 %v4136
    %v4189 = vunpack.c.h.b16 %v4136
    %v4190 = vunpack.c.l.b16 %v4137
    %v4191 = vunpack.c.h.b16 %v4137
    %v4192 = vunpack.c.l.b16 %v4138
    %v4193 = vunpack.c.h.b16 %v4138
    %v4194 = vunpack.c.l.b16 %v4139
    %v4195 = vunpack.c.h.b16 %v4139
    %v4196 = vunpack.c.l.b16 %v4140
    %v4197 = vunpack.c.h.b16 %v4140
    %v4198 = vunpack.c.l.b16 %v4141
    %v4199 = vunpack.c.h.b16 %v4141
    %v4200 = vunpack.c.l.b16 %v4142
    %v4201 = vunpack.c.h.b16 %v4142
    %v4202 = vpack.c.b16 %v4172, %v4170
    %v4203 = vpack.c.b16 %v4173, %v4171
    %v4204 = vpack.c.b16 %v4176, %v4174
    %v4205 = vpack.c.b16 %v4177, %v4175
    %v4206 = vpack.c.b16 %v4180, %v4178
    %v4207 = vpack.c.b16 %v4181, %v4179
    %v4208 = vpack.c.b16 %v4184, %v4182
    %v4209 = vpack.c.b16 %v4185, %v4183
    %v4210 = vpack.c.b16 %v4188, %v4186
    %v4211 = vpack.c.b16 %v4189, %v4187
    %v4212 = vpack.c.b16 %v4192, %v4190
    %v4213 = vpack.c.b16 %v4193, %v4191
    %v4214 = vpack.c.b16 %v4196, %v4194
    %v4215 = vpack.c.b16 %v4197, %v4195
    %v4216 = vpack.c.b16 %v4200, %v4198
    %v4217 = vpack.c.b16 %v4201, %v4199
    %4234 = vmatprep.subr.bf16.mxu0 %v4217
    %4235 = vmatpush1.bf16.msra.mxu0 %v4216
    %4236 = vmatprep.subr.bf16.mxu0 %v4215
    %4237 = vmatpush1.bf16.msra.mxu0 %v4214
    %4238 = vmatprep.subr.bf16.mxu0 %v4213
    %4239 = vmatpush1.bf16.msra.mxu0 %v4212
    %4240 = vmatprep.subr.bf16.mxu0 %v4211
    %4241 = vmatpush1.bf16.msra.mxu0 %v4210
    %4242 = vmatprep.subr.bf16.mxu0 %v4209
    %4243 = vmatpush1.bf16.msra.mxu0 %v4208
    %4244 = vmatprep.subr.bf16.mxu0 %v4207
    %4245 = vmatpush1.bf16.msra.mxu0 %v4206
    %4246 = vmatprep.subr.bf16.mxu0 %v4205
    %4247 = vmatpush1.bf16.msra.mxu0 %v4204
    %4248 = vmatprep.subr.bf16.mxu0 %v4203
    %4249 = vmatpush1.bf16.msra.mxu0 %v4202
    %4250 = vmatprep.subr.bf16.mxu0 0
    %4251 = vmatpush2.bf16.msra.mxu0 0
    %4252 = vmatprep.subr.bf16.mxu0 0
    %4253 = vmatpush2.bf16.msra.mxu0 0
    %4254 = vmatprep.subr.bf16.mxu0 0
    %4255 = vmatpush2.bf16.msra.mxu0 0
    %4256 = vmatprep.subr.bf16.mxu0 0
    %4257 = vmatpush2.bf16.msra.mxu0 0
    %4258 = vmatprep.subr.bf16.mxu0 0
    %4259 = vmatpush2.bf16.msra.mxu0 0
    %4260 = vmatprep.subr.bf16.mxu0 0
    %4261 = vmatpush2.bf16.msra.mxu0 0
    %4262 = vmatprep.subr.bf16.mxu0 0
    %4263 = vmatpush2.bf16.msra.mxu0 0
    %4264 = vmatprep.subr.bf16.mxu0 0
    %4265 = vmatpush2.bf16.msra.mxu0 0
    %4266 = vmatprep.mubr.bf16.mxu0 0
    %4267 = vmatmul.mubr.bf16.gmra.mxu0 %v4126
    %v4268 = vpop.f32.mrf.mxu0
    %v4269 = vadd.f32 %v4147, %v4268
    %v4270 = vpop.f32.mrf.mxu0
    %v4271 = vadd.f32 %v4151, %v4270
    %v4272 = vpop.f32.mrf.mxu0
    %v4273 = vpop.f32.mrf.mxu0
    %4274 = vdwg.mxu0
    %v4275 = vmul.f32 %v4269, 0.5
    %v4276 = vmul.f32 %v4271, 0.5
    %v4277 = vmul.f32 %v4269, 0.70710677
    %v4278 = vmul.f32 %v4271, 0.70710677
    %v4279 = verf.f32.pop %v4277
    %v4280 = verf.f32.pop %v4278
    %v4281 = vadd.f32 %v4279, 1.0
    %v4282 = vadd.f32 %v4280, 1.0
    %v4283 = vmul.f32 %v4275, %v4281
    %v4284 = vmul.f32 %v4276, %v4282
    %v4285 = vld [vmem:[%s1 + $0x1f] sm:$0xf]
    %v4286 = vpack.c.bf16 %v4283, %v4283
    %v4287 = vpack.c.bf16 %v4284, %v4284
    %v4288 = vld [vmem:[#allocation16] sm:$0xff]
    %v4289 = vld [vmem:[#allocation16 + $0x8] sm:$0xff]
    %v4290 = vld [vmem:[#allocation16 + $0x10] sm:$0xff]
    %v4291 = vld [vmem:[#allocation16 + $0x18] sm:$0xff]
    %v4292 = vld [vmem:[#allocation16 + $0x20] sm:$0xff]
    %v4293 = vld [vmem:[#allocation16 + $0x28] sm:$0xff]
    %v4294 = vld [vmem:[#allocation16 + $0x30] sm:$0xff]
    %v4295 = vld [vmem:[#allocation16 + $0x38] sm:$0xff]
    %v4296 = vld [vmem:[#allocation16 + $0x40] sm:$0xff]
    %v4297 = vld [vmem:[#allocation16 + $0x48] sm:$0xff]
    %v4298 = vld [vmem:[#allocation16 + $0x50] sm:$0xff]
    %v4299 = vld [vmem:[#allocation16 + $0x58] sm:$0xff]
    %v4300 = vld [vmem:[#allocation16 + $0x60] sm:$0xff]
    %v4301 = vld [vmem:[#allocation16 + $0x68] sm:$0xff]
    %v4302 = vld [vmem:[#allocation16 + $0x70] sm:$0xff]
    %v4303 = vld [vmem:[#allocation16 + $0x78] sm:$0xff]
    %v4304 = vld [vmem:[#allocation16 + $0x80] sm:$0xff]
    %v4305 = vld [vmem:[#allocation16 + $0x88] sm:$0xff]
    %v4306 = vld [vmem:[#allocation16 + $0x90] sm:$0xff]
    %v4307 = vld [vmem:[#allocation16 + $0x98] sm:$0xff]
    %v4308 = vld [vmem:[#allocation16 + $0xa0] sm:$0xff]
    %v4309 = vld [vmem:[#allocation16 + $0xa8] sm:$0xff]
    %v4310 = vld [vmem:[#allocation16 + $0xb0] sm:$0xff]
    %v4311 = vld [vmem:[#allocation16 + $0xb8] sm:$0xff]
    %v4312 = vld [vmem:[#allocation16 + $0xc0] sm:$0xff]
    %v4313 = vld [vmem:[#allocation16 + $0xc8] sm:$0xff]
    %v4314 = vld [vmem:[#allocation16 + $0xd0] sm:$0xff]
    %v4315 = vld [vmem:[#allocation16 + $0xd8] sm:$0xff]
    %v4316 = vld [vmem:[#allocation16 + $0xe0] sm:$0xff]
    %v4317 = vld [vmem:[#allocation16 + $0xe8] sm:$0xff]
    %v4318 = vld [vmem:[#allocation16 + $0xf0] sm:$0xff]
    %v4319 = vld [vmem:[#allocation16 + $0xf8] sm:$0xff]
    %v4320 = vld [vmem:[#allocation16 + $0x100] sm:$0xff]
    %v4321 = vld [vmem:[#allocation16 + $0x108] sm:$0xff]
    %v4322 = vld [vmem:[#allocation16 + $0x110] sm:$0xff]
    %v4323 = vld [vmem:[#allocation16 + $0x118] sm:$0xff]
    %v4324 = vld [vmem:[#allocation16 + $0x120] sm:$0xff]
    %v4325 = vld [vmem:[#allocation16 + $0x128] sm:$0xff]
    %v4326 = vld [vmem:[#allocation16 + $0x130] sm:$0xff]
    %v4327 = vld [vmem:[#allocation16 + $0x138] sm:$0xff]
    %v4328 = vld [vmem:[#allocation16 + $0x140] sm:$0xff]
    %v4329 = vld [vmem:[#allocation16 + $0x148] sm:$0xff]
    %v4330 = vld [vmem:[#allocation16 + $0x150] sm:$0xff]
    %v4331 = vld [vmem:[#allocation16 + $0x158] sm:$0xff]
    %v4332 = vld [vmem:[#allocation16 + $0x160] sm:$0xff]
    %v4333 = vld [vmem:[#allocation16 + $0x168] sm:$0xff]
    %v4334 = vld [vmem:[#allocation16 + $0x170] sm:$0xff]
    %v4335 = vld [vmem:[#allocation16 + $0x178] sm:$0xff]
    %v4336 = vld [vmem:[#allocation16 + $0x180] sm:$0xff]
    %v4337 = vld [vmem:[#allocation16 + $0x188] sm:$0xff]
    %v4338 = vld [vmem:[#allocation16 + $0x190] sm:$0xff]
    %v4339 = vld [vmem:[#allocation16 + $0x198] sm:$0xff]
    %v4340 = vld [vmem:[#allocation16 + $0x1a0] sm:$0xff]
    %v4341 = vld [vmem:[#allocation16 + $0x1a8] sm:$0xff]
    %v4342 = vld [vmem:[#allocation16 + $0x1b0] sm:$0xff]
    %v4343 = vld [vmem:[#allocation16 + $0x1b8] sm:$0xff]
    %v4344 = vld [vmem:[#allocation16 + $0x1c0] sm:$0xff]
    %v4345 = vld [vmem:[#allocation16 + $0x1c8] sm:$0xff]
    %v4346 = vld [vmem:[#allocation16 + $0x1d0] sm:$0xff]
    %v4347 = vld [vmem:[#allocation16 + $0x1d8] sm:$0xff]
    %v4348 = vld [vmem:[#allocation16 + $0x1e0] sm:$0xff]
    %v4349 = vld [vmem:[#allocation16 + $0x1e8] sm:$0xff]
    %v4350 = vld [vmem:[#allocation16 + $0x1f0] sm:$0xff]
    %v4351 = vld [vmem:[#allocation16 + $0x1f8] sm:$0xff]
    %v4353 = vlaneseq
    %v4354 = vshrl.u32 %v4353, 7
    %v4355 = vsub.s32 0, %v4354
    %v4356 = vrot.slane %v4285, %v4355
    %v4357 = vlaneseq
    %v4358 = vshrl.u32 %v4357, 7
    %v4359 = vsub.s32 1, %v4358
    %v4360 = vrot.slane %v4285, %v4359
    %v4361 = vlaneseq
    %v4362 = vshrl.u32 %v4361, 7
    %v4363 = vsub.s32 2, %v4362
    %v4364 = vrot.slane %v4285, %v4363
    %v4365 = vlaneseq
    %v4366 = vshrl.u32 %v4365, 7
    %v4367 = vsub.s32 3, %v4366
    %v4368 = vrot.slane %v4285, %v4367
    %v4437 = vunpack.c.l.b16 %v4288
    %v4438 = vunpack.c.h.b16 %v4288
    %v4439 = vunpack.c.l.b16 %v4289
    %v4440 = vunpack.c.h.b16 %v4289
    %v4441 = vunpack.c.l.b16 %v4290
    %v4442 = vunpack.c.h.b16 %v4290
    %v4443 = vunpack.c.l.b16 %v4291
    %v4444 = vunpack.c.h.b16 %v4291
    %v4445 = vunpack.c.l.b16 %v4292
    %v4446 = vunpack.c.h.b16 %v4292
    %v4447 = vunpack.c.l.b16 %v4293
    %v4448 = vunpack.c.h.b16 %v4293
    %v4449 = vunpack.c.l.b16 %v4294
    %v4450 = vunpack.c.h.b16 %v4294
    %v4451 = vunpack.c.l.b16 %v4295
    %v4452 = vunpack.c.h.b16 %v4295
    %v4453 = vunpack.c.l.b16 %v4296
    %v4454 = vunpack.c.h.b16 %v4296
    %v4455 = vunpack.c.l.b16 %v4297
    %v4456 = vunpack.c.h.b16 %v4297
    %v4457 = vunpack.c.l.b16 %v4298
    %v4458 = vunpack.c.h.b16 %v4298
    %v4459 = vunpack.c.l.b16 %v4299
    %v4460 = vunpack.c.h.b16 %v4299
    %v4461 = vunpack.c.l.b16 %v4300
    %v4462 = vunpack.c.h.b16 %v4300
    %v4463 = vunpack.c.l.b16 %v4301
    %v4464 = vunpack.c.h.b16 %v4301
    %v4465 = vunpack.c.l.b16 %v4302
    %v4466 = vunpack.c.h.b16 %v4302
    %v4467 = vunpack.c.l.b16 %v4303
    %v4468 = vunpack.c.h.b16 %v4303
    %v4469 = vunpack.c.l.b16 %v4304
    %v4470 = vunpack.c.h.b16 %v4304
    %v4471 = vunpack.c.l.b16 %v4305
    %v4472 = vunpack.c.h.b16 %v4305
    %v4473 = vunpack.c.l.b16 %v4306
    %v4474 = vunpack.c.h.b16 %v4306
    %v4475 = vunpack.c.l.b16 %v4307
    %v4476 = vunpack.c.h.b16 %v4307
    %v4477 = vunpack.c.l.b16 %v4308
    %v4478 = vunpack.c.h.b16 %v4308
    %v4479 = vunpack.c.l.b16 %v4309
    %v4480 = vunpack.c.h.b16 %v4309
    %v4481 = vunpack.c.l.b16 %v4310
    %v4482 = vunpack.c.h.b16 %v4310
    %v4483 = vunpack.c.l.b16 %v4311
    %v4484 = vunpack.c.h.b16 %v4311
    %v4485 = vunpack.c.l.b16 %v4312
    %v4486 = vunpack.c.h.b16 %v4312
    %v4487 = vunpack.c.l.b16 %v4313
    %v4488 = vunpack.c.h.b16 %v4313
    %v4489 = vunpack.c.l.b16 %v4314
    %v4490 = vunpack.c.h.b16 %v4314
    %v4491 = vunpack.c.l.b16 %v4315
    %v4492 = vunpack.c.h.b16 %v4315
    %v4493 = vunpack.c.l.b16 %v4316
    %v4494 = vunpack.c.h.b16 %v4316
    %v4495 = vunpack.c.l.b16 %v4317
    %v4496 = vunpack.c.h.b16 %v4317
    %v4497 = vunpack.c.l.b16 %v4318
    %v4498 = vunpack.c.h.b16 %v4318
    %v4499 = vunpack.c.l.b16 %v4319
    %v4500 = vunpack.c.h.b16 %v4319
    %v4501 = vunpack.c.l.b16 %v4320
    %v4502 = vunpack.c.h.b16 %v4320
    %v4503 = vunpack.c.l.b16 %v4321
    %v4504 = vunpack.c.h.b16 %v4321
    %v4505 = vunpack.c.l.b16 %v4322
    %v4506 = vunpack.c.h.b16 %v4322
    %v4507 = vunpack.c.l.b16 %v4323
    %v4508 = vunpack.c.h.b16 %v4323
    %v4509 = vunpack.c.l.b16 %v4324
    %v4510 = vunpack.c.h.b16 %v4324
    %v4511 = vunpack.c.l.b16 %v4325
    %v4512 = vunpack.c.h.b16 %v4325
    %v4513 = vunpack.c.l.b16 %v4326
    %v4514 = vunpack.c.h.b16 %v4326
    %v4515 = vunpack.c.l.b16 %v4327
    %v4516 = vunpack.c.h.b16 %v4327
    %v4517 = vunpack.c.l.b16 %v4328
    %v4518 = vunpack.c.h.b16 %v4328
    %v4519 = vunpack.c.l.b16 %v4329
    %v4520 = vunpack.c.h.b16 %v4329
    %v4521 = vunpack.c.l.b16 %v4330
    %v4522 = vunpack.c.h.b16 %v4330
    %v4523 = vunpack.c.l.b16 %v4331
    %v4524 = vunpack.c.h.b16 %v4331
    %v4525 = vunpack.c.l.b16 %v4332
    %v4526 = vunpack.c.h.b16 %v4332
    %v4527 = vunpack.c.l.b16 %v4333
    %v4528 = vunpack.c.h.b16 %v4333
    %v4529 = vunpack.c.l.b16 %v4334
    %v4530 = vunpack.c.h.b16 %v4334
    %v4531 = vunpack.c.l.b16 %v4335
    %v4532 = vunpack.c.h.b16 %v4335
    %v4533 = vunpack.c.l.b16 %v4336
    %v4534 = vunpack.c.h.b16 %v4336
    %v4535 = vunpack.c.l.b16 %v4337
    %v4536 = vunpack.c.h.b16 %v4337
    %v4537 = vunpack.c.l.b16 %v4338
    %v4538 = vunpack.c.h.b16 %v4338
    %v4539 = vunpack.c.l.b16 %v4339
    %v4540 = vunpack.c.h.b16 %v4339
    %v4541 = vunpack.c.l.b16 %v4340
    %v4542 = vunpack.c.h.b16 %v4340
    %v4543 = vunpack.c.l.b16 %v4341
    %v4544 = vunpack.c.h.b16 %v4341
    %v4545 = vunpack.c.l.b16 %v4342
    %v4546 = vunpack.c.h.b16 %v4342
    %v4547 = vunpack.c.l.b16 %v4343
    %v4548 = vunpack.c.h.b16 %v4343
    %v4549 = vunpack.c.l.b16 %v4344
    %v4550 = vunpack.c.h.b16 %v4344
    %v4551 = vunpack.c.l.b16 %v4345
    %v4552 = vunpack.c.h.b16 %v4345
    %v4553 = vunpack.c.l.b16 %v4346
    %v4554 = vunpack.c.h.b16 %v4346
    %v4555 = vunpack.c.l.b16 %v4347
    %v4556 = vunpack.c.h.b16 %v4347
    %v4557 = vunpack.c.l.b16 %v4348
    %v4558 = vunpack.c.h.b16 %v4348
    %v4559 = vunpack.c.l.b16 %v4349
    %v4560 = vunpack.c.h.b16 %v4349
    %v4561 = vunpack.c.l.b16 %v4350
    %v4562 = vunpack.c.h.b16 %v4350
    %v4563 = vunpack.c.l.b16 %v4351
    %v4564 = vunpack.c.h.b16 %v4351
    %v4565 = vpack.c.b16 %v4441, %v4437
    %v4566 = vpack.c.b16 %v4442, %v4438
    %v4567 = vpack.c.b16 %v4443, %v4439
    %v4568 = vpack.c.b16 %v4444, %v4440
    %v4569 = vpack.c.b16 %v4449, %v4445
    %v4570 = vpack.c.b16 %v4450, %v4446
    %v4571 = vpack.c.b16 %v4451, %v4447
    %v4572 = vpack.c.b16 %v4452, %v4448
    %v4573 = vpack.c.b16 %v4457, %v4453
    %v4574 = vpack.c.b16 %v4458, %v4454
    %v4575 = vpack.c.b16 %v4459, %v4455
    %v4576 = vpack.c.b16 %v4460, %v4456
    %v4577 = vpack.c.b16 %v4465, %v4461
    %v4578 = vpack.c.b16 %v4466, %v4462
    %v4579 = vpack.c.b16 %v4467, %v4463
    %v4580 = vpack.c.b16 %v4468, %v4464
    %v4581 = vpack.c.b16 %v4473, %v4469
    %v4582 = vpack.c.b16 %v4474, %v4470
    %v4583 = vpack.c.b16 %v4475, %v4471
    %v4584 = vpack.c.b16 %v4476, %v4472
    %v4585 = vpack.c.b16 %v4481, %v4477
    %v4586 = vpack.c.b16 %v4482, %v4478
    %v4587 = vpack.c.b16 %v4483, %v4479
    %v4588 = vpack.c.b16 %v4484, %v4480
    %v4589 = vpack.c.b16 %v4489, %v4485
    %v4590 = vpack.c.b16 %v4490, %v4486
    %v4591 = vpack.c.b16 %v4491, %v4487
    %v4592 = vpack.c.b16 %v4492, %v4488
    %v4593 = vpack.c.b16 %v4497, %v4493
    %v4594 = vpack.c.b16 %v4498, %v4494
    %v4595 = vpack.c.b16 %v4499, %v4495
    %v4596 = vpack.c.b16 %v4500, %v4496
    %v4597 = vpack.c.b16 %v4505, %v4501
    %v4598 = vpack.c.b16 %v4506, %v4502
    %v4599 = vpack.c.b16 %v4507, %v4503
    %v4600 = vpack.c.b16 %v4508, %v4504
    %v4601 = vpack.c.b16 %v4513, %v4509
    %v4602 = vpack.c.b16 %v4514, %v4510
    %v4603 = vpack.c.b16 %v4515, %v4511
    %v4604 = vpack.c.b16 %v4516, %v4512
    %v4605 = vpack.c.b16 %v4521, %v4517
    %v4606 = vpack.c.b16 %v4522, %v4518
    %v4607 = vpack.c.b16 %v4523, %v4519
    %v4608 = vpack.c.b16 %v4524, %v4520
    %v4609 = vpack.c.b16 %v4529, %v4525
    %v4610 = vpack.c.b16 %v4530, %v4526
    %v4611 = vpack.c.b16 %v4531, %v4527
    %v4612 = vpack.c.b16 %v4532, %v4528
    %v4613 = vpack.c.b16 %v4537, %v4533
    %v4614 = vpack.c.b16 %v4538, %v4534
    %v4615 = vpack.c.b16 %v4539, %v4535
    %v4616 = vpack.c.b16 %v4540, %v4536
    %v4617 = vpack.c.b16 %v4545, %v4541
    %v4618 = vpack.c.b16 %v4546, %v4542
    %v4619 = vpack.c.b16 %v4547, %v4543
    %v4620 = vpack.c.b16 %v4548, %v4544
    %v4621 = vpack.c.b16 %v4553, %v4549
    %v4622 = vpack.c.b16 %v4554, %v4550
    %v4623 = vpack.c.b16 %v4555, %v4551
    %v4624 = vpack.c.b16 %v4556, %v4552
    %v4625 = vpack.c.b16 %v4561, %v4557
    %v4626 = vpack.c.b16 %v4562, %v4558
    %v4627 = vpack.c.b16 %v4563, %v4559
    %v4628 = vpack.c.b16 %v4564, %v4560
    %4693 = vmatprep.subr.bf16.mxu0 %v4594
    %4694 = vmatpush1.bf16.msra.mxu0 %v4593
    %4695 = vmatprep.subr.bf16.mxu0 %v4590
    %4696 = vmatpush1.bf16.msra.mxu0 %v4589
    %4697 = vmatprep.subr.bf16.mxu0 %v4586
    %4698 = vmatpush1.bf16.msra.mxu0 %v4585
    %4699 = vmatprep.subr.bf16.mxu0 %v4582
    %4700 = vmatpush1.bf16.msra.mxu0 %v4581
    %4701 = vmatprep.subr.bf16.mxu0 %v4578
    %4702 = vmatpush1.bf16.msra.mxu0 %v4577
    %4703 = vmatprep.subr.bf16.mxu0 %v4574
    %4704 = vmatpush1.bf16.msra.mxu0 %v4573
    %4705 = vmatprep.subr.bf16.mxu0 %v4570
    %4706 = vmatpush1.bf16.msra.mxu0 %v4569
    %4707 = vmatprep.subr.bf16.mxu0 %v4566
    %4708 = vmatpush1.bf16.msra.mxu0 %v4565
    %4709 = vmatprep.subr.bf16.mxu0 %v4626
    %4710 = vmatpush2.bf16.msra.mxu0 %v4625
    %4711 = vmatprep.subr.bf16.mxu0 %v4622
    %4712 = vmatpush2.bf16.msra.mxu0 %v4621
    %4713 = vmatprep.subr.bf16.mxu0 %v4618
    %4714 = vmatpush2.bf16.msra.mxu0 %v4617
    %4715 = vmatprep.subr.bf16.mxu0 %v4614
    %4716 = vmatpush2.bf16.msra.mxu0 %v4613
    %4717 = vmatprep.subr.bf16.mxu0 %v4610
    %4718 = vmatpush2.bf16.msra.mxu0 %v4609
    %4719 = vmatprep.subr.bf16.mxu0 %v4606
    %4720 = vmatpush2.bf16.msra.mxu0 %v4605
    %4721 = vmatprep.subr.bf16.mxu0 %v4602
    %4722 = vmatpush2.bf16.msra.mxu0 %v4601
    %4723 = vmatprep.subr.bf16.mxu0 %v4598
    %4724 = vmatpush2.bf16.msra.mxu0 %v4597
    %4725 = vmatprep.mubr.bf16.mxu0 %v4287
    %4726 = vmatmul.mubr.bf16.gmra.mxu0 %v4286
    %v4727 = vpop.f32.mrf.mxu0
    %v4728 = vadd.f32 %v4356, %v4727
    %v4729 = vpop.f32.mrf.mxu0
    %v4730 = vadd.f32 %v4360, %v4729
    %v4731 = vpop.f32.mrf.mxu0
    %v4732 = vpop.f32.mrf.mxu0
    %4733 = vdwg.mxu0
    %4734 = vmatprep.subr.bf16.mxu0 %v4596
    %4735 = vmatpush1.bf16.msra.mxu0 %v4595
    %4736 = vmatprep.subr.bf16.mxu0 %v4592
    %4737 = vmatpush1.bf16.msra.mxu0 %v4591
    %4738 = vmatprep.subr.bf16.mxu0 %v4588
    %4739 = vmatpush1.bf16.msra.mxu0 %v4587
    %4740 = vmatprep.subr.bf16.mxu0 %v4584
    %4741 = vmatpush1.bf16.msra.mxu0 %v4583
    %4742 = vmatprep.subr.bf16.mxu0 %v4580
    %4743 = vmatpush1.bf16.msra.mxu0 %v4579
    %4744 = vmatprep.subr.bf16.mxu0 %v4576
    %4745 = vmatpush1.bf16.msra.mxu0 %v4575
    %4746 = vmatprep.subr.bf16.mxu0 %v4572
    %4747 = vmatpush1.bf16.msra.mxu0 %v4571
    %4748 = vmatprep.subr.bf16.mxu0 %v4568
    %4749 = vmatpush1.bf16.msra.mxu0 %v4567
    %4750 = vmatprep.subr.bf16.mxu0 %v4628
    %4751 = vmatpush2.bf16.msra.mxu0 %v4627
    %4752 = vmatprep.subr.bf16.mxu0 %v4624
    %4753 = vmatpush2.bf16.msra.mxu0 %v4623
    %4754 = vmatprep.subr.bf16.mxu0 %v4620
    %4755 = vmatpush2.bf16.msra.mxu0 %v4619
    %4756 = vmatprep.subr.bf16.mxu0 %v4616
    %4757 = vmatpush2.bf16.msra.mxu0 %v4615
    %4758 = vmatprep.subr.bf16.mxu0 %v4612
    %4759 = vmatpush2.bf16.msra.mxu0 %v4611
    %4760 = vmatprep.subr.bf16.mxu0 %v4608
    %4761 = vmatpush2.bf16.msra.mxu0 %v4607
    %4762 = vmatprep.subr.bf16.mxu0 %v4604
    %4763 = vmatpush2.bf16.msra.mxu0 %v4603
    %4764 = vmatprep.subr.bf16.mxu0 %v4600
    %4765 = vmatpush2.bf16.msra.mxu0 %v4599
    %4766 = vmatprep.mubr.bf16.mxu0 %v4287
    %4767 = vmatmul.mubr.bf16.gmra.mxu0 %v4286
    %v4768 = vpop.f32.mrf.mxu0
    %v4769 = vadd.f32 %v4364, %v4768
    %v4770 = vpop.f32.mrf.mxu0
    %v4771 = vadd.f32 %v4368, %v4770
    %v4772 = vpop.f32.mrf.mxu0
    %v4773 = vpop.f32.mrf.mxu0
    %4774 = vdwg.mxu0
    %v4775 = vmul.f32 %v4728, 0.5
    %v4776 = vmul.f32 %v4730, 0.5
    %v4777 = vmul.f32 %v4769, 0.5
    %v4778 = vmul.f32 %v4771, 0.5
    %v4779 = vmul.f32 %v4728, 0.70710677
    %v4780 = vmul.f32 %v4730, 0.70710677
    %v4781 = vmul.f32 %v4769, 0.70710677
    %v4782 = vmul.f32 %v4771, 0.70710677
    %v4783 = verf.f32.pop %v4779
    %v4784 = verf.f32.pop %v4780
    %v4785 = verf.f32.pop %v4781
    %v4786 = verf.f32.pop %v4782
    %v4787 = vadd.f32 %v4783, 1.0
    %v4788 = vadd.f32 %v4784, 1.0
    %v4789 = vadd.f32 %v4785, 1.0
    %v4790 = vadd.f32 %v4786, 1.0
    %v4791 = vmul.f32 %v4775, %v4787
    %v4792 = vmul.f32 %v4776, %v4788
    %v4793 = vmul.f32 %v4777, %v4789
    %v4794 = vmul.f32 %v4778, %v4790
    %v4795 = vld [vmem:[%s1 + $0x23] sm:$0xf]
    %v4796 = vpack.c.bf16 %v4791, %v4791
    %v4797 = vpack.c.bf16 %v4792, %v4792
    %v4798 = vpack.c.bf16 %v4793, %v4793
    %v4799 = vpack.c.bf16 %v4794, %v4794
    %v4800 = vld [vmem:[#allocation17] sm:$0xff]
    %v4801 = vld [vmem:[#allocation17 + $0x8] sm:$0xff]
    %v4802 = vld [vmem:[#allocation17 + $0x10] sm:$0xff]
    %v4803 = vld [vmem:[#allocation17 + $0x18] sm:$0xff]
    %v4804 = vld [vmem:[#allocation17 + $0x20] sm:$0xff]
    %v4805 = vld [vmem:[#allocation17 + $0x28] sm:$0xff]
    %v4806 = vld [vmem:[#allocation17 + $0x30] sm:$0xff]
    %v4807 = vld [vmem:[#allocation17 + $0x38] sm:$0xff]
    %v4808 = vld [vmem:[#allocation17 + $0x40] sm:$0xff]
    %v4809 = vld [vmem:[#allocation17 + $0x48] sm:$0xff]
    %v4810 = vld [vmem:[#allocation17 + $0x50] sm:$0xff]
    %v4811 = vld [vmem:[#allocation17 + $0x58] sm:$0xff]
    %v4812 = vld [vmem:[#allocation17 + $0x60] sm:$0xff]
    %v4813 = vld [vmem:[#allocation17 + $0x68] sm:$0xff]
    %v4814 = vld [vmem:[#allocation17 + $0x70] sm:$0xff]
    %v4815 = vld [vmem:[#allocation17 + $0x78] sm:$0xff]
    %v4816 = vld [vmem:[#allocation17 + $0x80] sm:$0xff]
    %v4817 = vld [vmem:[#allocation17 + $0x88] sm:$0xff]
    %v4818 = vld [vmem:[#allocation17 + $0x90] sm:$0xff]
    %v4819 = vld [vmem:[#allocation17 + $0x98] sm:$0xff]
    %v4820 = vld [vmem:[#allocation17 + $0xa0] sm:$0xff]
    %v4821 = vld [vmem:[#allocation17 + $0xa8] sm:$0xff]
    %v4822 = vld [vmem:[#allocation17 + $0xb0] sm:$0xff]
    %v4823 = vld [vmem:[#allocation17 + $0xb8] sm:$0xff]
    %v4824 = vld [vmem:[#allocation17 + $0xc0] sm:$0xff]
    %v4825 = vld [vmem:[#allocation17 + $0xc8] sm:$0xff]
    %v4826 = vld [vmem:[#allocation17 + $0xd0] sm:$0xff]
    %v4827 = vld [vmem:[#allocation17 + $0xd8] sm:$0xff]
    %v4828 = vld [vmem:[#allocation17 + $0xe0] sm:$0xff]
    %v4829 = vld [vmem:[#allocation17 + $0xe8] sm:$0xff]
    %v4830 = vld [vmem:[#allocation17 + $0xf0] sm:$0xff]
    %v4831 = vld [vmem:[#allocation17 + $0xf8] sm:$0xff]
    %v4832 = vld [vmem:[#allocation17 + $0x100] sm:$0xff]
    %v4833 = vld [vmem:[#allocation17 + $0x108] sm:$0xff]
    %v4834 = vld [vmem:[#allocation17 + $0x110] sm:$0xff]
    %v4835 = vld [vmem:[#allocation17 + $0x118] sm:$0xff]
    %v4836 = vld [vmem:[#allocation17 + $0x120] sm:$0xff]
    %v4837 = vld [vmem:[#allocation17 + $0x128] sm:$0xff]
    %v4838 = vld [vmem:[#allocation17 + $0x130] sm:$0xff]
    %v4839 = vld [vmem:[#allocation17 + $0x138] sm:$0xff]
    %v4840 = vld [vmem:[#allocation17 + $0x140] sm:$0xff]
    %v4841 = vld [vmem:[#allocation17 + $0x148] sm:$0xff]
    %v4842 = vld [vmem:[#allocation17 + $0x150] sm:$0xff]
    %v4843 = vld [vmem:[#allocation17 + $0x158] sm:$0xff]
    %v4844 = vld [vmem:[#allocation17 + $0x160] sm:$0xff]
    %v4845 = vld [vmem:[#allocation17 + $0x168] sm:$0xff]
    %v4846 = vld [vmem:[#allocation17 + $0x170] sm:$0xff]
    %v4847 = vld [vmem:[#allocation17 + $0x178] sm:$0xff]
    %v4848 = vld [vmem:[#allocation17 + $0x180] sm:$0xff]
    %v4849 = vld [vmem:[#allocation17 + $0x188] sm:$0xff]
    %v4850 = vld [vmem:[#allocation17 + $0x190] sm:$0xff]
    %v4851 = vld [vmem:[#allocation17 + $0x198] sm:$0xff]
    %v4852 = vld [vmem:[#allocation17 + $0x1a0] sm:$0xff]
    %v4853 = vld [vmem:[#allocation17 + $0x1a8] sm:$0xff]
    %v4854 = vld [vmem:[#allocation17 + $0x1b0] sm:$0xff]
    %v4855 = vld [vmem:[#allocation17 + $0x1b8] sm:$0xff]
    %v4856 = vld [vmem:[#allocation17 + $0x1c0] sm:$0xff]
    %v4857 = vld [vmem:[#allocation17 + $0x1c8] sm:$0xff]
    %v4858 = vld [vmem:[#allocation17 + $0x1d0] sm:$0xff]
    %v4859 = vld [vmem:[#allocation17 + $0x1d8] sm:$0xff]
    %v4860 = vld [vmem:[#allocation17 + $0x1e0] sm:$0xff]
    %v4861 = vld [vmem:[#allocation17 + $0x1e8] sm:$0xff]
    %v4862 = vld [vmem:[#allocation17 + $0x1f0] sm:$0xff]
    %v4863 = vld [vmem:[#allocation17 + $0x1f8] sm:$0xff]
    %v4864 = vld [vmem:[#allocation17 + $0x200] sm:$0xff]
    %v4865 = vld [vmem:[#allocation17 + $0x208] sm:$0xff]
    %v4866 = vld [vmem:[#allocation17 + $0x210] sm:$0xff]
    %v4867 = vld [vmem:[#allocation17 + $0x218] sm:$0xff]
    %v4868 = vld [vmem:[#allocation17 + $0x220] sm:$0xff]
    %v4869 = vld [vmem:[#allocation17 + $0x228] sm:$0xff]
    %v4870 = vld [vmem:[#allocation17 + $0x230] sm:$0xff]
    %v4871 = vld [vmem:[#allocation17 + $0x238] sm:$0xff]
    %v4872 = vld [vmem:[#allocation17 + $0x240] sm:$0xff]
    %v4873 = vld [vmem:[#allocation17 + $0x248] sm:$0xff]
    %v4874 = vld [vmem:[#allocation17 + $0x250] sm:$0xff]
    %v4875 = vld [vmem:[#allocation17 + $0x258] sm:$0xff]
    %v4876 = vld [vmem:[#allocation17 + $0x260] sm:$0xff]
    %v4877 = vld [vmem:[#allocation17 + $0x268] sm:$0xff]
    %v4878 = vld [vmem:[#allocation17 + $0x270] sm:$0xff]
    %v4879 = vld [vmem:[#allocation17 + $0x278] sm:$0xff]
    %v4880 = vld [vmem:[#allocation17 + $0x280] sm:$0xff]
    %v4881 = vld [vmem:[#allocation17 + $0x288] sm:$0xff]
    %v4882 = vld [vmem:[#allocation17 + $0x290] sm:$0xff]
    %v4883 = vld [vmem:[#allocation17 + $0x298] sm:$0xff]
    %v4884 = vld [vmem:[#allocation17 + $0x2a0] sm:$0xff]
    %v4885 = vld [vmem:[#allocation17 + $0x2a8] sm:$0xff]
    %v4886 = vld [vmem:[#allocation17 + $0x2b0] sm:$0xff]
    %v4887 = vld [vmem:[#allocation17 + $0x2b8] sm:$0xff]
    %v4888 = vld [vmem:[#allocation17 + $0x2c0] sm:$0xff]
    %v4889 = vld [vmem:[#allocation17 + $0x2c8] sm:$0xff]
    %v4890 = vld [vmem:[#allocation17 + $0x2d0] sm:$0xff]
    %v4891 = vld [vmem:[#allocation17 + $0x2d8] sm:$0xff]
    %v4892 = vld [vmem:[#allocation17 + $0x2e0] sm:$0xff]
    %v4893 = vld [vmem:[#allocation17 + $0x2e8] sm:$0xff]
    %v4894 = vld [vmem:[#allocation17 + $0x2f0] sm:$0xff]
    %v4895 = vld [vmem:[#allocation17 + $0x2f8] sm:$0xff]
    %v4896 = vld [vmem:[#allocation17 + $0x300] sm:$0xff]
    %v4897 = vld [vmem:[#allocation17 + $0x308] sm:$0xff]
    %v4898 = vld [vmem:[#allocation17 + $0x310] sm:$0xff]
    %v4899 = vld [vmem:[#allocation17 + $0x318] sm:$0xff]
    %v4900 = vld [vmem:[#allocation17 + $0x320] sm:$0xff]
    %v4901 = vld [vmem:[#allocation17 + $0x328] sm:$0xff]
    %v4902 = vld [vmem:[#allocation17 + $0x330] sm:$0xff]
    %v4903 = vld [vmem:[#allocation17 + $0x338] sm:$0xff]
    %v4904 = vld [vmem:[#allocation17 + $0x340] sm:$0xff]
    %v4905 = vld [vmem:[#allocation17 + $0x348] sm:$0xff]
    %v4906 = vld [vmem:[#allocation17 + $0x350] sm:$0xff]
    %v4907 = vld [vmem:[#allocation17 + $0x358] sm:$0xff]
    %v4908 = vld [vmem:[#allocation17 + $0x360] sm:$0xff]
    %v4909 = vld [vmem:[#allocation17 + $0x368] sm:$0xff]
    %v4910 = vld [vmem:[#allocation17 + $0x370] sm:$0xff]
    %v4911 = vld [vmem:[#allocation17 + $0x378] sm:$0xff]
    %v4912 = vld [vmem:[#allocation17 + $0x380] sm:$0xff]
    %v4913 = vld [vmem:[#allocation17 + $0x388] sm:$0xff]
    %v4914 = vld [vmem:[#allocation17 + $0x390] sm:$0xff]
    %v4915 = vld [vmem:[#allocation17 + $0x398] sm:$0xff]
    %v4916 = vld [vmem:[#allocation17 + $0x3a0] sm:$0xff]
    %v4917 = vld [vmem:[#allocation17 + $0x3a8] sm:$0xff]
    %v4918 = vld [vmem:[#allocation17 + $0x3b0] sm:$0xff]
    %v4919 = vld [vmem:[#allocation17 + $0x3b8] sm:$0xff]
    %v4920 = vld [vmem:[#allocation17 + $0x3c0] sm:$0xff]
    %v4921 = vld [vmem:[#allocation17 + $0x3c8] sm:$0xff]
    %v4922 = vld [vmem:[#allocation17 + $0x3d0] sm:$0xff]
    %v4923 = vld [vmem:[#allocation17 + $0x3d8] sm:$0xff]
    %v4924 = vld [vmem:[#allocation17 + $0x3e0] sm:$0xff]
    %v4925 = vld [vmem:[#allocation17 + $0x3e8] sm:$0xff]
    %v4926 = vld [vmem:[#allocation17 + $0x3f0] sm:$0xff]
    %v4927 = vld [vmem:[#allocation17 + $0x3f8] sm:$0xff]
    %v4929 = vlaneseq
    %v4930 = vshrl.u32 %v4929, 7
    %v4931 = vsub.s32 0, %v4930
    %v4932 = vrot.slane %v4795, %v4931
    %v4933 = vlaneseq
    %v4934 = vshrl.u32 %v4933, 7
    %v4935 = vsub.s32 1, %v4934
    %v4936 = vrot.slane %v4795, %v4935
    %v4937 = vlaneseq
    %v4938 = vshrl.u32 %v4937, 7
    %v4939 = vsub.s32 2, %v4938
    %v4940 = vrot.slane %v4795, %v4939
    %v4941 = vlaneseq
    %v4942 = vshrl.u32 %v4941, 7
    %v4943 = vsub.s32 3, %v4942
    %v4944 = vrot.slane %v4795, %v4943
    %v5077 = vunpack.c.l.b16 %v4800
    %v5078 = vunpack.c.h.b16 %v4800
    %v5079 = vunpack.c.l.b16 %v4801
    %v5080 = vunpack.c.h.b16 %v4801
    %v5081 = vunpack.c.l.b16 %v4802
    %v5082 = vunpack.c.h.b16 %v4802
    %v5083 = vunpack.c.l.b16 %v4803
    %v5084 = vunpack.c.h.b16 %v4803
    %v5085 = vunpack.c.l.b16 %v4804
    %v5086 = vunpack.c.h.b16 %v4804
    %v5087 = vunpack.c.l.b16 %v4805
    %v5088 = vunpack.c.h.b16 %v4805
    %v5089 = vunpack.c.l.b16 %v4806
    %v5090 = vunpack.c.h.b16 %v4806
    %v5091 = vunpack.c.l.b16 %v4807
    %v5092 = vunpack.c.h.b16 %v4807
    %v5093 = vunpack.c.l.b16 %v4808
    %v5094 = vunpack.c.h.b16 %v4808
    %v5095 = vunpack.c.l.b16 %v4809
    %v5096 = vunpack.c.h.b16 %v4809
    %v5097 = vunpack.c.l.b16 %v4810
    %v5098 = vunpack.c.h.b16 %v4810
    %v5099 = vunpack.c.l.b16 %v4811
    %v5100 = vunpack.c.h.b16 %v4811
    %v5101 = vunpack.c.l.b16 %v4812
    %v5102 = vunpack.c.h.b16 %v4812
    %v5103 = vunpack.c.l.b16 %v4813
    %v5104 = vunpack.c.h.b16 %v4813
    %v5105 = vunpack.c.l.b16 %v4814
    %v5106 = vunpack.c.h.b16 %v4814
    %v5107 = vunpack.c.l.b16 %v4815
    %v5108 = vunpack.c.h.b16 %v4815
    %v5109 = vunpack.c.l.b16 %v4816
    %v5110 = vunpack.c.h.b16 %v4816
    %v5111 = vunpack.c.l.b16 %v4817
    %v5112 = vunpack.c.h.b16 %v4817
    %v5113 = vunpack.c.l.b16 %v4818
    %v5114 = vunpack.c.h.b16 %v4818
    %v5115 = vunpack.c.l.b16 %v4819
    %v5116 = vunpack.c.h.b16 %v4819
    %v5117 = vunpack.c.l.b16 %v4820
    %v5118 = vunpack.c.h.b16 %v4820
    %v5119 = vunpack.c.l.b16 %v4821
    %v5120 = vunpack.c.h.b16 %v4821
    %v5121 = vunpack.c.l.b16 %v4822
    %v5122 = vunpack.c.h.b16 %v4822
    %v5123 = vunpack.c.l.b16 %v4823
    %v5124 = vunpack.c.h.b16 %v4823
    %v5125 = vunpack.c.l.b16 %v4824
    %v5126 = vunpack.c.h.b16 %v4824
    %v5127 = vunpack.c.l.b16 %v4825
    %v5128 = vunpack.c.h.b16 %v4825
    %v5129 = vunpack.c.l.b16 %v4826
    %v5130 = vunpack.c.h.b16 %v4826
    %v5131 = vunpack.c.l.b16 %v4827
    %v5132 = vunpack.c.h.b16 %v4827
    %v5133 = vunpack.c.l.b16 %v4828
    %v5134 = vunpack.c.h.b16 %v4828
    %v5135 = vunpack.c.l.b16 %v4829
    %v5136 = vunpack.c.h.b16 %v4829
    %v5137 = vunpack.c.l.b16 %v4830
    %v5138 = vunpack.c.h.b16 %v4830
    %v5139 = vunpack.c.l.b16 %v4831
    %v5140 = vunpack.c.h.b16 %v4831
    %v5141 = vunpack.c.l.b16 %v4832
    %v5142 = vunpack.c.h.b16 %v4832
    %v5143 = vunpack.c.l.b16 %v4833
    %v5144 = vunpack.c.h.b16 %v4833
    %v5145 = vunpack.c.l.b16 %v4834
    %v5146 = vunpack.c.h.b16 %v4834
    %v5147 = vunpack.c.l.b16 %v4835
    %v5148 = vunpack.c.h.b16 %v4835
    %v5149 = vunpack.c.l.b16 %v4836
    %v5150 = vunpack.c.h.b16 %v4836
    %v5151 = vunpack.c.l.b16 %v4837
    %v5152 = vunpack.c.h.b16 %v4837
    %v5153 = vunpack.c.l.b16 %v4838
    %v5154 = vunpack.c.h.b16 %v4838
    %v5155 = vunpack.c.l.b16 %v4839
    %v5156 = vunpack.c.h.b16 %v4839
    %v5157 = vunpack.c.l.b16 %v4840
    %v5158 = vunpack.c.h.b16 %v4840
    %v5159 = vunpack.c.l.b16 %v4841
    %v5160 = vunpack.c.h.b16 %v4841
    %v5161 = vunpack.c.l.b16 %v4842
    %v5162 = vunpack.c.h.b16 %v4842
    %v5163 = vunpack.c.l.b16 %v4843
    %v5164 = vunpack.c.h.b16 %v4843
    %v5165 = vunpack.c.l.b16 %v4844
    %v5166 = vunpack.c.h.b16 %v4844
    %v5167 = vunpack.c.l.b16 %v4845
    %v5168 = vunpack.c.h.b16 %v4845
    %v5169 = vunpack.c.l.b16 %v4846
    %v5170 = vunpack.c.h.b16 %v4846
    %v5171 = vunpack.c.l.b16 %v4847
    %v5172 = vunpack.c.h.b16 %v4847
    %v5173 = vunpack.c.l.b16 %v4848
    %v5174 = vunpack.c.h.b16 %v4848
    %v5175 = vunpack.c.l.b16 %v4849
    %v5176 = vunpack.c.h.b16 %v4849
    %v5177 = vunpack.c.l.b16 %v4850
    %v5178 = vunpack.c.h.b16 %v4850
    %v5179 = vunpack.c.l.b16 %v4851
    %v5180 = vunpack.c.h.b16 %v4851
    %v5181 = vunpack.c.l.b16 %v4852
    %v5182 = vunpack.c.h.b16 %v4852
    %v5183 = vunpack.c.l.b16 %v4853
    %v5184 = vunpack.c.h.b16 %v4853
    %v5185 = vunpack.c.l.b16 %v4854
    %v5186 = vunpack.c.h.b16 %v4854
    %v5187 = vunpack.c.l.b16 %v4855
    %v5188 = vunpack.c.h.b16 %v4855
    %v5189 = vunpack.c.l.b16 %v4856
    %v5190 = vunpack.c.h.b16 %v4856
    %v5191 = vunpack.c.l.b16 %v4857
    %v5192 = vunpack.c.h.b16 %v4857
    %v5193 = vunpack.c.l.b16 %v4858
    %v5194 = vunpack.c.h.b16 %v4858
    %v5195 = vunpack.c.l.b16 %v4859
    %v5196 = vunpack.c.h.b16 %v4859
    %v5197 = vunpack.c.l.b16 %v4860
    %v5198 = vunpack.c.h.b16 %v4860
    %v5199 = vunpack.c.l.b16 %v4861
    %v5200 = vunpack.c.h.b16 %v4861
    %v5201 = vunpack.c.l.b16 %v4862
    %v5202 = vunpack.c.h.b16 %v4862
    %v5203 = vunpack.c.l.b16 %v4863
    %v5204 = vunpack.c.h.b16 %v4863
    %v5205 = vunpack.c.l.b16 %v4864
    %v5206 = vunpack.c.h.b16 %v4864
    %v5207 = vunpack.c.l.b16 %v4865
    %v5208 = vunpack.c.h.b16 %v4865
    %v5209 = vunpack.c.l.b16 %v4866
    %v5210 = vunpack.c.h.b16 %v4866
    %v5211 = vunpack.c.l.b16 %v4867
    %v5212 = vunpack.c.h.b16 %v4867
    %v5213 = vunpack.c.l.b16 %v4868
    %v5214 = vunpack.c.h.b16 %v4868
    %v5215 = vunpack.c.l.b16 %v4869
    %v5216 = vunpack.c.h.b16 %v4869
    %v5217 = vunpack.c.l.b16 %v4870
    %v5218 = vunpack.c.h.b16 %v4870
    %v5219 = vunpack.c.l.b16 %v4871
    %v5220 = vunpack.c.h.b16 %v4871
    %v5221 = vunpack.c.l.b16 %v4872
    %v5222 = vunpack.c.h.b16 %v4872
    %v5223 = vunpack.c.l.b16 %v4873
    %v5224 = vunpack.c.h.b16 %v4873
    %v5225 = vunpack.c.l.b16 %v4874
    %v5226 = vunpack.c.h.b16 %v4874
    %v5227 = vunpack.c.l.b16 %v4875
    %v5228 = vunpack.c.h.b16 %v4875
    %v5229 = vunpack.c.l.b16 %v4876
    %v5230 = vunpack.c.h.b16 %v4876
    %v5231 = vunpack.c.l.b16 %v4877
    %v5232 = vunpack.c.h.b16 %v4877
    %v5233 = vunpack.c.l.b16 %v4878
    %v5234 = vunpack.c.h.b16 %v4878
    %v5235 = vunpack.c.l.b16 %v4879
    %v5236 = vunpack.c.h.b16 %v4879
    %v5237 = vunpack.c.l.b16 %v4880
    %v5238 = vunpack.c.h.b16 %v4880
    %v5239 = vunpack.c.l.b16 %v4881
    %v5240 = vunpack.c.h.b16 %v4881
    %v5241 = vunpack.c.l.b16 %v4882
    %v5242 = vunpack.c.h.b16 %v4882
    %v5243 = vunpack.c.l.b16 %v4883
    %v5244 = vunpack.c.h.b16 %v4883
    %v5245 = vunpack.c.l.b16 %v4884
    %v5246 = vunpack.c.h.b16 %v4884
    %v5247 = vunpack.c.l.b16 %v4885
    %v5248 = vunpack.c.h.b16 %v4885
    %v5249 = vunpack.c.l.b16 %v4886
    %v5250 = vunpack.c.h.b16 %v4886
    %v5251 = vunpack.c.l.b16 %v4887
    %v5252 = vunpack.c.h.b16 %v4887
    %v5253 = vunpack.c.l.b16 %v4888
    %v5254 = vunpack.c.h.b16 %v4888
    %v5255 = vunpack.c.l.b16 %v4889
    %v5256 = vunpack.c.h.b16 %v4889
    %v5257 = vunpack.c.l.b16 %v4890
    %v5258 = vunpack.c.h.b16 %v4890
    %v5259 = vunpack.c.l.b16 %v4891
    %v5260 = vunpack.c.h.b16 %v4891
    %v5261 = vunpack.c.l.b16 %v4892
    %v5262 = vunpack.c.h.b16 %v4892
    %v5263 = vunpack.c.l.b16 %v4893
    %v5264 = vunpack.c.h.b16 %v4893
    %v5265 = vunpack.c.l.b16 %v4894
    %v5266 = vunpack.c.h.b16 %v4894
    %v5267 = vunpack.c.l.b16 %v4895
    %v5268 = vunpack.c.h.b16 %v4895
    %v5269 = vunpack.c.l.b16 %v4896
    %v5270 = vunpack.c.h.b16 %v4896
    %v5271 = vunpack.c.l.b16 %v4897
    %v5272 = vunpack.c.h.b16 %v4897
    %v5273 = vunpack.c.l.b16 %v4898
    %v5274 = vunpack.c.h.b16 %v4898
    %v5275 = vunpack.c.l.b16 %v4899
    %v5276 = vunpack.c.h.b16 %v4899
    %v5277 = vunpack.c.l.b16 %v4900
    %v5278 = vunpack.c.h.b16 %v4900
    %v5279 = vunpack.c.l.b16 %v4901
    %v5280 = vunpack.c.h.b16 %v4901
    %v5281 = vunpack.c.l.b16 %v4902
    %v5282 = vunpack.c.h.b16 %v4902
    %v5283 = vunpack.c.l.b16 %v4903
    %v5284 = vunpack.c.h.b16 %v4903
    %v5285 = vunpack.c.l.b16 %v4904
    %v5286 = vunpack.c.h.b16 %v4904
    %v5287 = vunpack.c.l.b16 %v4905
    %v5288 = vunpack.c.h.b16 %v4905
    %v5289 = vunpack.c.l.b16 %v4906
    %v5290 = vunpack.c.h.b16 %v4906
    %v5291 = vunpack.c.l.b16 %v4907
    %v5292 = vunpack.c.h.b16 %v4907
    %v5293 = vunpack.c.l.b16 %v4908
    %v5294 = vunpack.c.h.b16 %v4908
    %v5295 = vunpack.c.l.b16 %v4909
    %v5296 = vunpack.c.h.b16 %v4909
    %v5297 = vunpack.c.l.b16 %v4910
    %v5298 = vunpack.c.h.b16 %v4910
    %v5299 = vunpack.c.l.b16 %v4911
    %v5300 = vunpack.c.h.b16 %v4911
    %v5301 = vunpack.c.l.b16 %v4912
    %v5302 = vunpack.c.h.b16 %v4912
    %v5303 = vunpack.c.l.b16 %v4913
    %v5304 = vunpack.c.h.b16 %v4913
    %v5305 = vunpack.c.l.b16 %v4914
    %v5306 = vunpack.c.h.b16 %v4914
    %v5307 = vunpack.c.l.b16 %v4915
    %v5308 = vunpack.c.h.b16 %v4915
    %v5309 = vunpack.c.l.b16 %v4916
    %v5310 = vunpack.c.h.b16 %v4916
    %v5311 = vunpack.c.l.b16 %v4917
    %v5312 = vunpack.c.h.b16 %v4917
    %v5313 = vunpack.c.l.b16 %v4918
    %v5314 = vunpack.c.h.b16 %v4918
    %v5315 = vunpack.c.l.b16 %v4919
    %v5316 = vunpack.c.h.b16 %v4919
    %v5317 = vunpack.c.l.b16 %v4920
    %v5318 = vunpack.c.h.b16 %v4920
    %v5319 = vunpack.c.l.b16 %v4921
    %v5320 = vunpack.c.h.b16 %v4921
    %v5321 = vunpack.c.l.b16 %v4922
    %v5322 = vunpack.c.h.b16 %v4922
    %v5323 = vunpack.c.l.b16 %v4923
    %v5324 = vunpack.c.h.b16 %v4923
    %v5325 = vunpack.c.l.b16 %v4924
    %v5326 = vunpack.c.h.b16 %v4924
    %v5327 = vunpack.c.l.b16 %v4925
    %v5328 = vunpack.c.h.b16 %v4925
    %v5329 = vunpack.c.l.b16 %v4926
    %v5330 = vunpack.c.h.b16 %v4926
    %v5331 = vunpack.c.l.b16 %v4927
    %v5332 = vunpack.c.h.b16 %v4927
    %v5333 = vpack.c.b16 %v5081, %v5077
    %v5334 = vpack.c.b16 %v5082, %v5078
    %v5335 = vpack.c.b16 %v5083, %v5079
    %v5336 = vpack.c.b16 %v5084, %v5080
    %v5337 = vpack.c.b16 %v5089, %v5085
    %v5338 = vpack.c.b16 %v5090, %v5086
    %v5339 = vpack.c.b16 %v5091, %v5087
    %v5340 = vpack.c.b16 %v5092, %v5088
    %v5341 = vpack.c.b16 %v5097, %v5093
    %v5342 = vpack.c.b16 %v5098, %v5094
    %v5343 = vpack.c.b16 %v5099, %v5095
    %v5344 = vpack.c.b16 %v5100, %v5096
    %v5345 = vpack.c.b16 %v5105, %v5101
    %v5346 = vpack.c.b16 %v5106, %v5102
    %v5347 = vpack.c.b16 %v5107, %v5103
    %v5348 = vpack.c.b16 %v5108, %v5104
    %v5349 = vpack.c.b16 %v5113, %v5109
    %v5350 = vpack.c.b16 %v5114, %v5110
    %v5351 = vpack.c.b16 %v5115, %v5111
    %v5352 = vpack.c.b16 %v5116, %v5112
    %v5353 = vpack.c.b16 %v5121, %v5117
    %v5354 = vpack.c.b16 %v5122, %v5118
    %v5355 = vpack.c.b16 %v5123, %v5119
    %v5356 = vpack.c.b16 %v5124, %v5120
    %v5357 = vpack.c.b16 %v5129, %v5125
    %v5358 = vpack.c.b16 %v5130, %v5126
    %v5359 = vpack.c.b16 %v5131, %v5127
    %v5360 = vpack.c.b16 %v5132, %v5128
    %v5361 = vpack.c.b16 %v5137, %v5133
    %v5362 = vpack.c.b16 %v5138, %v5134
    %v5363 = vpack.c.b16 %v5139, %v5135
    %v5364 = vpack.c.b16 %v5140, %v5136
    %v5365 = vpack.c.b16 %v5145, %v5141
    %v5366 = vpack.c.b16 %v5146, %v5142
    %v5367 = vpack.c.b16 %v5147, %v5143
    %v5368 = vpack.c.b16 %v5148, %v5144
    %v5369 = vpack.c.b16 %v5153, %v5149
    %v5370 = vpack.c.b16 %v5154, %v5150
    %v5371 = vpack.c.b16 %v5155, %v5151
    %v5372 = vpack.c.b16 %v5156, %v5152
    %v5373 = vpack.c.b16 %v5161, %v5157
    %v5374 = vpack.c.b16 %v5162, %v5158
    %v5375 = vpack.c.b16 %v5163, %v5159
    %v5376 = vpack.c.b16 %v5164, %v5160
    %v5377 = vpack.c.b16 %v5169, %v5165
    %v5378 = vpack.c.b16 %v5170, %v5166
    %v5379 = vpack.c.b16 %v5171, %v5167
    %v5380 = vpack.c.b16 %v5172, %v5168
    %v5381 = vpack.c.b16 %v5177, %v5173
    %v5382 = vpack.c.b16 %v5178, %v5174
    %v5383 = vpack.c.b16 %v5179, %v5175
    %v5384 = vpack.c.b16 %v5180, %v5176
    %v5385 = vpack.c.b16 %v5185, %v5181
    %v5386 = vpack.c.b16 %v5186, %v5182
    %v5387 = vpack.c.b16 %v5187, %v5183
    %v5388 = vpack.c.b16 %v5188, %v5184
    %v5389 = vpack.c.b16 %v5193, %v5189
    %v5390 = vpack.c.b16 %v5194, %v5190
    %v5391 = vpack.c.b16 %v5195, %v5191
    %v5392 = vpack.c.b16 %v5196, %v5192
    %v5393 = vpack.c.b16 %v5201, %v5197
    %v5394 = vpack.c.b16 %v5202, %v5198
    %v5395 = vpack.c.b16 %v5203, %v5199
    %v5396 = vpack.c.b16 %v5204, %v5200
    %v5397 = vpack.c.b16 %v5209, %v5205
    %v5398 = vpack.c.b16 %v5210, %v5206
    %v5399 = vpack.c.b16 %v5211, %v5207
    %v5400 = vpack.c.b16 %v5212, %v5208
    %v5401 = vpack.c.b16 %v5217, %v5213
    %v5402 = vpack.c.b16 %v5218, %v5214
    %v5403 = vpack.c.b16 %v5219, %v5215
    %v5404 = vpack.c.b16 %v5220, %v5216
    %v5405 = vpack.c.b16 %v5225, %v5221
    %v5406 = vpack.c.b16 %v5226, %v5222
    %v5407 = vpack.c.b16 %v5227, %v5223
    %v5408 = vpack.c.b16 %v5228, %v5224
    %v5409 = vpack.c.b16 %v5233, %v5229
    %v5410 = vpack.c.b16 %v5234, %v5230
    %v5411 = vpack.c.b16 %v5235, %v5231
    %v5412 = vpack.c.b16 %v5236, %v5232
    %v5413 = vpack.c.b16 %v5241, %v5237
    %v5414 = vpack.c.b16 %v5242, %v5238
    %v5415 = vpack.c.b16 %v5243, %v5239
    %v5416 = vpack.c.b16 %v5244, %v5240
    %v5417 = vpack.c.b16 %v5249, %v5245
    %v5418 = vpack.c.b16 %v5250, %v5246
    %v5419 = vpack.c.b16 %v5251, %v5247
    %v5420 = vpack.c.b16 %v5252, %v5248
    %v5421 = vpack.c.b16 %v5257, %v5253
    %v5422 = vpack.c.b16 %v5258, %v5254
    %v5423 = vpack.c.b16 %v5259, %v5255
    %v5424 = vpack.c.b16 %v5260, %v5256
    %v5425 = vpack.c.b16 %v5265, %v5261
    %v5426 = vpack.c.b16 %v5266, %v5262
    %v5427 = vpack.c.b16 %v5267, %v5263
    %v5428 = vpack.c.b16 %v5268, %v5264
    %v5429 = vpack.c.b16 %v5273, %v5269
    %v5430 = vpack.c.b16 %v5274, %v5270
    %v5431 = vpack.c.b16 %v5275, %v5271
    %v5432 = vpack.c.b16 %v5276, %v5272
    %v5433 = vpack.c.b16 %v5281, %v5277
    %v5434 = vpack.c.b16 %v5282, %v5278
    %v5435 = vpack.c.b16 %v5283, %v5279
    %v5436 = vpack.c.b16 %v5284, %v5280
    %v5437 = vpack.c.b16 %v5289, %v5285
    %v5438 = vpack.c.b16 %v5290, %v5286
    %v5439 = vpack.c.b16 %v5291, %v5287
    %v5440 = vpack.c.b16 %v5292, %v5288
    %v5441 = vpack.c.b16 %v5297, %v5293
    %v5442 = vpack.c.b16 %v5298, %v5294
    %v5443 = vpack.c.b16 %v5299, %v5295
    %v5444 = vpack.c.b16 %v5300, %v5296
    %v5445 = vpack.c.b16 %v5305, %v5301
    %v5446 = vpack.c.b16 %v5306, %v5302
    %v5447 = vpack.c.b16 %v5307, %v5303
    %v5448 = vpack.c.b16 %v5308, %v5304
    %v5449 = vpack.c.b16 %v5313, %v5309
    %v5450 = vpack.c.b16 %v5314, %v5310
    %v5451 = vpack.c.b16 %v5315, %v5311
    %v5452 = vpack.c.b16 %v5316, %v5312
    %v5453 = vpack.c.b16 %v5321, %v5317
    %v5454 = vpack.c.b16 %v5322, %v5318
    %v5455 = vpack.c.b16 %v5323, %v5319
    %v5456 = vpack.c.b16 %v5324, %v5320
    %v5457 = vpack.c.b16 %v5329, %v5325
    %v5458 = vpack.c.b16 %v5330, %v5326
    %v5459 = vpack.c.b16 %v5331, %v5327
    %v5460 = vpack.c.b16 %v5332, %v5328
    %5589 = vmatprep.subr.bf16.mxu0 %v5362
    %5590 = vmatpush1.bf16.msra.mxu0 %v5361
    %5591 = vmatprep.subr.bf16.mxu0 %v5358
    %5592 = vmatpush1.bf16.msra.mxu0 %v5357
    %5593 = vmatprep.subr.bf16.mxu0 %v5354
    %5594 = vmatpush1.bf16.msra.mxu0 %v5353
    %5595 = vmatprep.subr.bf16.mxu0 %v5350
    %5596 = vmatpush1.bf16.msra.mxu0 %v5349
    %5597 = vmatprep.subr.bf16.mxu0 %v5346
    %5598 = vmatpush1.bf16.msra.mxu0 %v5345
    %5599 = vmatprep.subr.bf16.mxu0 %v5342
    %5600 = vmatpush1.bf16.msra.mxu0 %v5341
    %5601 = vmatprep.subr.bf16.mxu0 %v5338
    %5602 = vmatpush1.bf16.msra.mxu0 %v5337
    %5603 = vmatprep.subr.bf16.mxu0 %v5334
    %5604 = vmatpush1.bf16.msra.mxu0 %v5333
    %5605 = vmatprep.subr.bf16.mxu0 %v5394
    %5606 = vmatpush2.bf16.msra.mxu0 %v5393
    %5607 = vmatprep.subr.bf16.mxu0 %v5390
    %5608 = vmatpush2.bf16.msra.mxu0 %v5389
    %5609 = vmatprep.subr.bf16.mxu0 %v5386
    %5610 = vmatpush2.bf16.msra.mxu0 %v5385
    %5611 = vmatprep.subr.bf16.mxu0 %v5382
    %5612 = vmatpush2.bf16.msra.mxu0 %v5381
    %5613 = vmatprep.subr.bf16.mxu0 %v5378
    %5614 = vmatpush2.bf16.msra.mxu0 %v5377
    %5615 = vmatprep.subr.bf16.mxu0 %v5374
    %5616 = vmatpush2.bf16.msra.mxu0 %v5373
    %5617 = vmatprep.subr.bf16.mxu0 %v5370
    %5618 = vmatpush2.bf16.msra.mxu0 %v5369
    %5619 = vmatprep.subr.bf16.mxu0 %v5366
    %5620 = vmatpush2.bf16.msra.mxu0 %v5365
    %5621 = vmatprep.mubr.bf16.mxu0 %v4797
    %5622 = vmatmul.mubr.bf16.gmra.mxu0 %v4796
    %v5623 = vpop.f32.mrf.mxu0
    %v5624 = vadd.f32 %v4932, %v5623
    %v5625 = vpop.f32.mrf.mxu0
    %v5626 = vadd.f32 %v4936, %v5625
    %v5627 = vpop.f32.mrf.mxu0
    %v5628 = vpop.f32.mrf.mxu0
    %5629 = vdwg.mxu0
    %5630 = vmatprep.subr.bf16.mxu0 %v5426
    %5631 = vmatpush1.bf16.msra.mxu0 %v5425
    %5632 = vmatprep.subr.bf16.mxu0 %v5422
    %5633 = vmatpush1.bf16.msra.mxu0 %v5421
    %5634 = vmatprep.subr.bf16.mxu0 %v5418
    %5635 = vmatpush1.bf16.msra.mxu0 %v5417
    %5636 = vmatprep.subr.bf16.mxu0 %v5414
    %5637 = vmatpush1.bf16.msra.mxu0 %v5413
    %5638 = vmatprep.subr.bf16.mxu0 %v5410
    %5639 = vmatpush1.bf16.msra.mxu0 %v5409
    %5640 = vmatprep.subr.bf16.mxu0 %v5406
    %5641 = vmatpush1.bf16.msra.mxu0 %v5405
    %5642 = vmatprep.subr.bf16.mxu0 %v5402
    %5643 = vmatpush1.bf16.msra.mxu0 %v5401
    %5644 = vmatprep.subr.bf16.mxu0 %v5398
    %5645 = vmatpush1.bf16.msra.mxu0 %v5397
    %5646 = vmatprep.subr.bf16.mxu0 %v5458
    %5647 = vmatpush2.bf16.msra.mxu0 %v5457
    %5648 = vmatprep.subr.bf16.mxu0 %v5454
    %5649 = vmatpush2.bf16.msra.mxu0 %v5453
    %5650 = vmatprep.subr.bf16.mxu0 %v5450
    %5651 = vmatpush2.bf16.msra.mxu0 %v5449
    %5652 = vmatprep.subr.bf16.mxu0 %v5446
    %5653 = vmatpush2.bf16.msra.mxu0 %v5445
    %5654 = vmatprep.subr.bf16.mxu0 %v5442
    %5655 = vmatpush2.bf16.msra.mxu0 %v5441
    %5656 = vmatprep.subr.bf16.mxu0 %v5438
    %5657 = vmatpush2.bf16.msra.mxu0 %v5437
    %5658 = vmatprep.subr.bf16.mxu0 %v5434
    %5659 = vmatpush2.bf16.msra.mxu0 %v5433
    %5660 = vmatprep.subr.bf16.mxu0 %v5430
    %5661 = vmatpush2.bf16.msra.mxu0 %v5429
    %5662 = vmatprep.mubr.bf16.mxu0 %v4799
    %5663 = vmatmul.mubr.bf16.gmra.mxu0 %v4798
    %v5664 = vpop.f32.mrf.mxu0
    %v5665 = vadd.f32 %v5624, %v5664
    %v5666 = vpop.f32.mrf.mxu0
    %v5667 = vadd.f32 %v5626, %v5666
    %v5668 = vpop.f32.mrf.mxu0
    %v5669 = vpop.f32.mrf.mxu0
    %5670 = vdwg.mxu0
    %5671 = vmatprep.subr.bf16.mxu0 %v5364
    %5672 = vmatpush1.bf16.msra.mxu0 %v5363
    %5673 = vmatprep.subr.bf16.mxu0 %v5360
    %5674 = vmatpush1.bf16.msra.mxu0 %v5359
    %5675 = vmatprep.subr.bf16.mxu0 %v5356
    %5676 = vmatpush1.bf16.msra.mxu0 %v5355
    %5677 = vmatprep.subr.bf16.mxu0 %v5352
    %5678 = vmatpush1.bf16.msra.mxu0 %v5351
    %5679 = vmatprep.subr.bf16.mxu0 %v5348
    %5680 = vmatpush1.bf16.msra.mxu0 %v5347
    %5681 = vmatprep.subr.bf16.mxu0 %v5344
    %5682 = vmatpush1.bf16.msra.mxu0 %v5343
    %5683 = vmatprep.subr.bf16.mxu0 %v5340
    %5684 = vmatpush1.bf16.msra.mxu0 %v5339
    %5685 = vmatprep.subr.bf16.mxu0 %v5336
    %5686 = vmatpush1.bf16.msra.mxu0 %v5335
    %5687 = vmatprep.subr.bf16.mxu0 %v5396
    %5688 = vmatpush2.bf16.msra.mxu0 %v5395
    %5689 = vmatprep.subr.bf16.mxu0 %v5392
    %5690 = vmatpush2.bf16.msra.mxu0 %v5391
    %5691 = vmatprep.subr.bf16.mxu0 %v5388
    %5692 = vmatpush2.bf16.msra.mxu0 %v5387
    %5693 = vmatprep.subr.bf16.mxu0 %v5384
    %5694 = vmatpush2.bf16.msra.mxu0 %v5383
    %5695 = vmatprep.subr.bf16.mxu0 %v5380
    %5696 = vmatpush2.bf16.msra.mxu0 %v5379
    %5697 = vmatprep.subr.bf16.mxu0 %v5376
    %5698 = vmatpush2.bf16.msra.mxu0 %v5375
    %5699 = vmatprep.subr.bf16.mxu0 %v5372
    %5700 = vmatpush2.bf16.msra.mxu0 %v5371
    %5701 = vmatprep.subr.bf16.mxu0 %v5368
    %5702 = vmatpush2.bf16.msra.mxu0 %v5367
    %5703 = vmatprep.mubr.bf16.mxu0 %v4797
    %5704 = vmatmul.mubr.bf16.gmra.mxu0 %v4796
    %v5705 = vpop.f32.mrf.mxu0
    %v5706 = vadd.f32 %v4940, %v5705
    %v5707 = vpop.f32.mrf.mxu0
    %v5708 = vadd.f32 %v4944, %v5707
    %v5709 = vpop.f32.mrf.mxu0
    %v5710 = vpop.f32.mrf.mxu0
    %5711 = vdwg.mxu0
    %5712 = vmatprep.subr.bf16.mxu0 %v5428
    %5713 = vmatpush1.bf16.msra.mxu0 %v5427
    %5714 = vmatprep.subr.bf16.mxu0 %v5424
    %5715 = vmatpush1.bf16.msra.mxu0 %v5423
    %5716 = vmatprep.subr.bf16.mxu0 %v5420
    %5717 = vmatpush1.bf16.msra.mxu0 %v5419
    %5718 = vmatprep.subr.bf16.mxu0 %v5416
    %5719 = vmatpush1.bf16.msra.mxu0 %v5415
    %5720 = vmatprep.subr.bf16.mxu0 %v5412
    %5721 = vmatpush1.bf16.msra.mxu0 %v5411
    %5722 = vmatprep.subr.bf16.mxu0 %v5408
    %5723 = vmatpush1.bf16.msra.mxu0 %v5407
    %5724 = vmatprep.subr.bf16.mxu0 %v5404
    %5725 = vmatpush1.bf16.msra.mxu0 %v5403
    %5726 = vmatprep.subr.bf16.mxu0 %v5400
    %5727 = vmatpush1.bf16.msra.mxu0 %v5399
    %5728 = vmatprep.subr.bf16.mxu0 %v5460
    %5729 = vmatpush2.bf16.msra.mxu0 %v5459
    %5730 = vmatprep.subr.bf16.mxu0 %v5456
    %5731 = vmatpush2.bf16.msra.mxu0 %v5455
    %5732 = vmatprep.subr.bf16.mxu0 %v5452
    %5733 = vmatpush2.bf16.msra.mxu0 %v5451
    %5734 = vmatprep.subr.bf16.mxu0 %v5448
    %5735 = vmatpush2.bf16.msra.mxu0 %v5447
    %5736 = vmatprep.subr.bf16.mxu0 %v5444
    %5737 = vmatpush2.bf16.msra.mxu0 %v5443
    %5738 = vmatprep.subr.bf16.mxu0 %v5440
    %5739 = vmatpush2.bf16.msra.mxu0 %v5439
    %5740 = vmatprep.subr.bf16.mxu0 %v5436
    %5741 = vmatpush2.bf16.msra.mxu0 %v5435
    %5742 = vmatprep.subr.bf16.mxu0 %v5432
    %5743 = vmatpush2.bf16.msra.mxu0 %v5431
    %5744 = vmatprep.mubr.bf16.mxu0 %v4799
    %5745 = vmatmul.mubr.bf16.gmra.mxu0 %v4798
    %v5746 = vpop.f32.mrf.mxu0
    %v5747 = vadd.f32 %v5706, %v5746
    %v5748 = vpop.f32.mrf.mxu0
    %v5749 = vadd.f32 %v5708, %v5748
    %v5750 = vpop.f32.mrf.mxu0
    %v5751 = vpop.f32.mrf.mxu0
    %5752 = vdwg.mxu0
    %v5753 = vadd.f32 %v5665, %v5667
    %v5754 = vadd.f32 %v5753, %v5747
    %v5755 = vadd.f32 %v5754, %v5749
    %5756 = vadd.xlane.f32.xlu0 %v5755
    %v5757 = vpop.xlane.xlu0 %5756
    %v5758 = vrcp.pop 512.0
    %v5759 = vmul.f32 %v5757, %v5758
    %v5760 = vsub.f32 %v5665, %v5759
    %v5761 = vsub.f32 %v5667, %v5759
    %v5762 = vsub.f32 %v5747, %v5759
    %v5763 = vsub.f32 %v5749, %v5759
    %v5764 = vmul.f32 %v5760, %v5760
    %v5765 = vmul.f32 %v5761, %v5761
    %v5766 = vmul.f32 %v5762, %v5762
    %v5767 = vmul.f32 %v5763, %v5763
    %v5768 = vadd.f32 %v5764, %v5765
    %v5769 = vadd.f32 %v5768, %v5766
    %v5770 = vadd.f32 %v5769, %v5767
    %5771 = vadd.xlane.f32.xlu0 %v5770
    %v5772 = vpop.xlane.xlu0 %5771
    %v5773 = vmul.f32 %v5772, %v5758
    %v5774 = vadd.f32 %v5773, 1e-05
    %v5775 = vrsqrt.pop %v5774
    %v5776 = vmul.f32 %v5760, %v5775
    %v5777 = vmul.f32 %v5761, %v5775
    %v5778 = vmul.f32 %v5762, %v5775
    %v5779 = vmul.f32 %v5763, %v5775
    %v5780 = vld [vmem:[%s1 + $0x27] sm:$0xf]
    %v5782 = vlaneseq
    %v5783 = vshrl.u32 %v5782, 7
    %v5784 = vsub.s32 0, %v5783
    %v5785 = vrot.slane %v5780, %v5784
    %v5786 = vlaneseq
    %v5787 = vshrl.u32 %v5786, 7
    %v5788 = vsub.s32 1, %v5787
    %v5789 = vrot.slane %v5780, %v5788
    %v5790 = vlaneseq
    %v5791 = vshrl.u32 %v5790, 7
    %v5792 = vsub.s32 2, %v5791
    %v5793 = vrot.slane %v5780, %v5792
    %v5794 = vlaneseq
    %v5795 = vshrl.u32 %v5794, 7
    %v5796 = vsub.s32 3, %v5795
    %v5797 = vrot.slane %v5780, %v5796
    %v5802 = vmul.f32 %v5776, %v5785
    %v5803 = vmul.f32 %v5777, %v5789
    %v5804 = vmul.f32 %v5778, %v5793
    %v5805 = vmul.f32 %v5779, %v5797
    %v5806 = vld [vmem:[%s1 + $0x2b] sm:$0xf]
    %v5808 = vlaneseq
    %v5809 = vshrl.u32 %v5808, 7
    %v5810 = vsub.s32 0, %v5809
    %v5811 = vrot.slane %v5806, %v5810
    %v5812 = vlaneseq
    %v5813 = vshrl.u32 %v5812, 7
    %v5814 = vsub.s32 1, %v5813
    %v5815 = vrot.slane %v5806, %v5814
    %v5816 = vlaneseq
    %v5817 = vshrl.u32 %v5816, 7
    %v5818 = vsub.s32 2, %v5817
    %v5819 = vrot.slane %v5806, %v5818
    %v5820 = vlaneseq
    %v5821 = vshrl.u32 %v5820, 7
    %v5822 = vsub.s32 3, %v5821
    %v5823 = vrot.slane %v5806, %v5822
    %v5828 = vadd.f32 %v5802, %v5811
    %v5829 = vadd.f32 %v5803, %v5815
    %v5830 = vadd.f32 %v5804, %v5819
    %v5831 = vadd.f32 %v5805, %v5823
    %vm5832 = vcmp.ge.f32.partialorder %v5828, 0.0
    %vm5833 = vcmp.ge.f32.partialorder %v5829, 0.0
    %vm5834 = vcmp.ge.f32.partialorder %v5830, 0.0
    %vm5835 = vcmp.ge.f32.partialorder %v5831, 0.0
    %v5836 = vmul.f32 %v5828, 0.01
    %v5837 = vmul.f32 %v5829, 0.01
    %v5838 = vmul.f32 %v5830, 0.01
    %v5839 = vmul.f32 %v5831, 0.01
    %v5840 = vsel %vm5832, %v5828, %v5836
    %v5841 = vsel %vm5833, %v5829, %v5837
    %v5842 = vsel %vm5834, %v5830, %v5838
    %v5843 = vsel %vm5835, %v5831, %v5839
    %v5844 = vld [vmem:[%s1 + $0x2f] sm:$0xf]
    %v5845 = vpack.c.bf16 %v5840, %v5840
    %v5846 = vpack.c.bf16 %v5841, %v5841
    %v5847 = vpack.c.bf16 %v5842, %v5842
    %v5848 = vpack.c.bf16 %v5843, %v5843
    %v5849 = vld [vmem:[#allocation19] sm:$0xff]
    %v5850 = vld [vmem:[#allocation19 + $0x8] sm:$0xff]
    %v5851 = vld [vmem:[#allocation19 + $0x10] sm:$0xff]
    %v5852 = vld [vmem:[#allocation19 + $0x18] sm:$0xff]
    %v5853 = vld [vmem:[#allocation19 + $0x20] sm:$0xff]
    %v5854 = vld [vmem:[#allocation19 + $0x28] sm:$0xff]
    %v5855 = vld [vmem:[#allocation19 + $0x30] sm:$0xff]
    %v5856 = vld [vmem:[#allocation19 + $0x38] sm:$0xff]
    %v5857 = vld [vmem:[#allocation19 + $0x40] sm:$0xff]
    %v5858 = vld [vmem:[#allocation19 + $0x48] sm:$0xff]
    %v5859 = vld [vmem:[#allocation19 + $0x50] sm:$0xff]
    %v5860 = vld [vmem:[#allocation19 + $0x58] sm:$0xff]
    %v5861 = vld [vmem:[#allocation19 + $0x60] sm:$0xff]
    %v5862 = vld [vmem:[#allocation19 + $0x68] sm:$0xff]
    %v5863 = vld [vmem:[#allocation19 + $0x70] sm:$0xff]
    %v5864 = vld [vmem:[#allocation19 + $0x78] sm:$0xff]
    %v5865 = vld [vmem:[#allocation19 + $0x80] sm:$0xff]
    %v5866 = vld [vmem:[#allocation19 + $0x88] sm:$0xff]
    %v5867 = vld [vmem:[#allocation19 + $0x90] sm:$0xff]
    %v5868 = vld [vmem:[#allocation19 + $0x98] sm:$0xff]
    %v5869 = vld [vmem:[#allocation19 + $0xa0] sm:$0xff]
    %v5870 = vld [vmem:[#allocation19 + $0xa8] sm:$0xff]
    %v5871 = vld [vmem:[#allocation19 + $0xb0] sm:$0xff]
    %v5872 = vld [vmem:[#allocation19 + $0xb8] sm:$0xff]
    %v5873 = vld [vmem:[#allocation19 + $0xc0] sm:$0xff]
    %v5874 = vld [vmem:[#allocation19 + $0xc8] sm:$0xff]
    %v5875 = vld [vmem:[#allocation19 + $0xd0] sm:$0xff]
    %v5876 = vld [vmem:[#allocation19 + $0xd8] sm:$0xff]
    %v5877 = vld [vmem:[#allocation19 + $0xe0] sm:$0xff]
    %v5878 = vld [vmem:[#allocation19 + $0xe8] sm:$0xff]
    %v5879 = vld [vmem:[#allocation19 + $0xf0] sm:$0xff]
    %v5880 = vld [vmem:[#allocation19 + $0xf8] sm:$0xff]
    %v5881 = vld [vmem:[#allocation19 + $0x100] sm:$0xff]
    %v5882 = vld [vmem:[#allocation19 + $0x108] sm:$0xff]
    %v5883 = vld [vmem:[#allocation19 + $0x110] sm:$0xff]
    %v5884 = vld [vmem:[#allocation19 + $0x118] sm:$0xff]
    %v5885 = vld [vmem:[#allocation19 + $0x120] sm:$0xff]
    %v5886 = vld [vmem:[#allocation19 + $0x128] sm:$0xff]
    %v5887 = vld [vmem:[#allocation19 + $0x130] sm:$0xff]
    %v5888 = vld [vmem:[#allocation19 + $0x138] sm:$0xff]
    %v5889 = vld [vmem:[#allocation19 + $0x140] sm:$0xff]
    %v5890 = vld [vmem:[#allocation19 + $0x148] sm:$0xff]
    %v5891 = vld [vmem:[#allocation19 + $0x150] sm:$0xff]
    %v5892 = vld [vmem:[#allocation19 + $0x158] sm:$0xff]
    %v5893 = vld [vmem:[#allocation19 + $0x160] sm:$0xff]
    %v5894 = vld [vmem:[#allocation19 + $0x168] sm:$0xff]
    %v5895 = vld [vmem:[#allocation19 + $0x170] sm:$0xff]
    %v5896 = vld [vmem:[#allocation19 + $0x178] sm:$0xff]
    %v5897 = vld [vmem:[#allocation19 + $0x180] sm:$0xff]
    %v5898 = vld [vmem:[#allocation19 + $0x188] sm:$0xff]
    %v5899 = vld [vmem:[#allocation19 + $0x190] sm:$0xff]
    %v5900 = vld [vmem:[#allocation19 + $0x198] sm:$0xff]
    %v5901 = vld [vmem:[#allocation19 + $0x1a0] sm:$0xff]
    %v5902 = vld [vmem:[#allocation19 + $0x1a8] sm:$0xff]
    %v5903 = vld [vmem:[#allocation19 + $0x1b0] sm:$0xff]
    %v5904 = vld [vmem:[#allocation19 + $0x1b8] sm:$0xff]
    %v5905 = vld [vmem:[#allocation19 + $0x1c0] sm:$0xff]
    %v5906 = vld [vmem:[#allocation19 + $0x1c8] sm:$0xff]
    %v5907 = vld [vmem:[#allocation19 + $0x1d0] sm:$0xff]
    %v5908 = vld [vmem:[#allocation19 + $0x1d8] sm:$0xff]
    %v5909 = vld [vmem:[#allocation19 + $0x1e0] sm:$0xff]
    %v5910 = vld [vmem:[#allocation19 + $0x1e8] sm:$0xff]
    %v5911 = vld [vmem:[#allocation19 + $0x1f0] sm:$0xff]
    %v5912 = vld [vmem:[#allocation19 + $0x1f8] sm:$0xff]
    %v5913 = vld [vmem:[#allocation19 + $0x200] sm:$0xff]
    %v5914 = vld [vmem:[#allocation19 + $0x208] sm:$0xff]
    %v5915 = vld [vmem:[#allocation19 + $0x210] sm:$0xff]
    %v5916 = vld [vmem:[#allocation19 + $0x218] sm:$0xff]
    %v5917 = vld [vmem:[#allocation19 + $0x220] sm:$0xff]
    %v5918 = vld [vmem:[#allocation19 + $0x228] sm:$0xff]
    %v5919 = vld [vmem:[#allocation19 + $0x230] sm:$0xff]
    %v5920 = vld [vmem:[#allocation19 + $0x238] sm:$0xff]
    %v5921 = vld [vmem:[#allocation19 + $0x240] sm:$0xff]
    %v5922 = vld [vmem:[#allocation19 + $0x248] sm:$0xff]
    %v5923 = vld [vmem:[#allocation19 + $0x250] sm:$0xff]
    %v5924 = vld [vmem:[#allocation19 + $0x258] sm:$0xff]
    %v5925 = vld [vmem:[#allocation19 + $0x260] sm:$0xff]
    %v5926 = vld [vmem:[#allocation19 + $0x268] sm:$0xff]
    %v5927 = vld [vmem:[#allocation19 + $0x270] sm:$0xff]
    %v5928 = vld [vmem:[#allocation19 + $0x278] sm:$0xff]
    %v5929 = vld [vmem:[#allocation19 + $0x280] sm:$0xff]
    %v5930 = vld [vmem:[#allocation19 + $0x288] sm:$0xff]
    %v5931 = vld [vmem:[#allocation19 + $0x290] sm:$0xff]
    %v5932 = vld [vmem:[#allocation19 + $0x298] sm:$0xff]
    %v5933 = vld [vmem:[#allocation19 + $0x2a0] sm:$0xff]
    %v5934 = vld [vmem:[#allocation19 + $0x2a8] sm:$0xff]
    %v5935 = vld [vmem:[#allocation19 + $0x2b0] sm:$0xff]
    %v5936 = vld [vmem:[#allocation19 + $0x2b8] sm:$0xff]
    %v5937 = vld [vmem:[#allocation19 + $0x2c0] sm:$0xff]
    %v5938 = vld [vmem:[#allocation19 + $0x2c8] sm:$0xff]
    %v5939 = vld [vmem:[#allocation19 + $0x2d0] sm:$0xff]
    %v5940 = vld [vmem:[#allocation19 + $0x2d8] sm:$0xff]
    %v5941 = vld [vmem:[#allocation19 + $0x2e0] sm:$0xff]
    %v5942 = vld [vmem:[#allocation19 + $0x2e8] sm:$0xff]
    %v5943 = vld [vmem:[#allocation19 + $0x2f0] sm:$0xff]
    %v5944 = vld [vmem:[#allocation19 + $0x2f8] sm:$0xff]
    %v5945 = vld [vmem:[#allocation19 + $0x300] sm:$0xff]
    %v5946 = vld [vmem:[#allocation19 + $0x308] sm:$0xff]
    %v5947 = vld [vmem:[#allocation19 + $0x310] sm:$0xff]
    %v5948 = vld [vmem:[#allocation19 + $0x318] sm:$0xff]
    %v5949 = vld [vmem:[#allocation19 + $0x320] sm:$0xff]
    %v5950 = vld [vmem:[#allocation19 + $0x328] sm:$0xff]
    %v5951 = vld [vmem:[#allocation19 + $0x330] sm:$0xff]
    %v5952 = vld [vmem:[#allocation19 + $0x338] sm:$0xff]
    %v5953 = vld [vmem:[#allocation19 + $0x340] sm:$0xff]
    %v5954 = vld [vmem:[#allocation19 + $0x348] sm:$0xff]
    %v5955 = vld [vmem:[#allocation19 + $0x350] sm:$0xff]
    %v5956 = vld [vmem:[#allocation19 + $0x358] sm:$0xff]
    %v5957 = vld [vmem:[#allocation19 + $0x360] sm:$0xff]
    %v5958 = vld [vmem:[#allocation19 + $0x368] sm:$0xff]
    %v5959 = vld [vmem:[#allocation19 + $0x370] sm:$0xff]
    %v5960 = vld [vmem:[#allocation19 + $0x378] sm:$0xff]
    %v5961 = vld [vmem:[#allocation19 + $0x380] sm:$0xff]
    %v5962 = vld [vmem:[#allocation19 + $0x388] sm:$0xff]
    %v5963 = vld [vmem:[#allocation19 + $0x390] sm:$0xff]
    %v5964 = vld [vmem:[#allocation19 + $0x398] sm:$0xff]
    %v5965 = vld [vmem:[#allocation19 + $0x3a0] sm:$0xff]
    %v5966 = vld [vmem:[#allocation19 + $0x3a8] sm:$0xff]
    %v5967 = vld [vmem:[#allocation19 + $0x3b0] sm:$0xff]
    %v5968 = vld [vmem:[#allocation19 + $0x3b8] sm:$0xff]
    %v5969 = vld [vmem:[#allocation19 + $0x3c0] sm:$0xff]
    %v5970 = vld [vmem:[#allocation19 + $0x3c8] sm:$0xff]
    %v5971 = vld [vmem:[#allocation19 + $0x3d0] sm:$0xff]
    %v5972 = vld [vmem:[#allocation19 + $0x3d8] sm:$0xff]
    %v5973 = vld [vmem:[#allocation19 + $0x3e0] sm:$0xff]
    %v5974 = vld [vmem:[#allocation19 + $0x3e8] sm:$0xff]
    %v5975 = vld [vmem:[#allocation19 + $0x3f0] sm:$0xff]
    %v5976 = vld [vmem:[#allocation19 + $0x3f8] sm:$0xff]
    %v5978 = vlaneseq
    %v5979 = vshrl.u32 %v5978, 7
    %v5980 = vsub.s32 0, %v5979
    %v5981 = vrot.slane %v5844, %v5980
    %v5982 = vlaneseq
    %v5983 = vshrl.u32 %v5982, 7
    %v5984 = vsub.s32 1, %v5983
    %v5985 = vrot.slane %v5844, %v5984
    %v5986 = vlaneseq
    %v5987 = vshrl.u32 %v5986, 7
    %v5988 = vsub.s32 2, %v5987
    %v5989 = vrot.slane %v5844, %v5988
    %v5990 = vlaneseq
    %v5991 = vshrl.u32 %v5990, 7
    %v5992 = vsub.s32 3, %v5991
    %v5993 = vrot.slane %v5844, %v5992
    %v6126 = vunpack.c.l.b16 %v5849
    %v6127 = vunpack.c.h.b16 %v5849
    %v6128 = vunpack.c.l.b16 %v5850
    %v6129 = vunpack.c.h.b16 %v5850
    %v6130 = vunpack.c.l.b16 %v5851
    %v6131 = vunpack.c.h.b16 %v5851
    %v6132 = vunpack.c.l.b16 %v5852
    %v6133 = vunpack.c.h.b16 %v5852
    %v6134 = vunpack.c.l.b16 %v5853
    %v6135 = vunpack.c.h.b16 %v5853
    %v6136 = vunpack.c.l.b16 %v5854
    %v6137 = vunpack.c.h.b16 %v5854
    %v6138 = vunpack.c.l.b16 %v5855
    %v6139 = vunpack.c.h.b16 %v5855
    %v6140 = vunpack.c.l.b16 %v5856
    %v6141 = vunpack.c.h.b16 %v5856
    %v6142 = vunpack.c.l.b16 %v5857
    %v6143 = vunpack.c.h.b16 %v5857
    %v6144 = vunpack.c.l.b16 %v5858
    %v6145 = vunpack.c.h.b16 %v5858
    %v6146 = vunpack.c.l.b16 %v5859
    %v6147 = vunpack.c.h.b16 %v5859
    %v6148 = vunpack.c.l.b16 %v5860
    %v6149 = vunpack.c.h.b16 %v5860
    %v6150 = vunpack.c.l.b16 %v5861
    %v6151 = vunpack.c.h.b16 %v5861
    %v6152 = vunpack.c.l.b16 %v5862
    %v6153 = vunpack.c.h.b16 %v5862
    %v6154 = vunpack.c.l.b16 %v5863
    %v6155 = vunpack.c.h.b16 %v5863
    %v6156 = vunpack.c.l.b16 %v5864
    %v6157 = vunpack.c.h.b16 %v5864
    %v6158 = vunpack.c.l.b16 %v5865
    %v6159 = vunpack.c.h.b16 %v5865
    %v6160 = vunpack.c.l.b16 %v5866
    %v6161 = vunpack.c.h.b16 %v5866
    %v6162 = vunpack.c.l.b16 %v5867
    %v6163 = vunpack.c.h.b16 %v5867
    %v6164 = vunpack.c.l.b16 %v5868
    %v6165 = vunpack.c.h.b16 %v5868
    %v6166 = vunpack.c.l.b16 %v5869
    %v6167 = vunpack.c.h.b16 %v5869
    %v6168 = vunpack.c.l.b16 %v5870
    %v6169 = vunpack.c.h.b16 %v5870
    %v6170 = vunpack.c.l.b16 %v5871
    %v6171 = vunpack.c.h.b16 %v5871
    %v6172 = vunpack.c.l.b16 %v5872
    %v6173 = vunpack.c.h.b16 %v5872
    %v6174 = vunpack.c.l.b16 %v5873
    %v6175 = vunpack.c.h.b16 %v5873
    %v6176 = vunpack.c.l.b16 %v5874
    %v6177 = vunpack.c.h.b16 %v5874
    %v6178 = vunpack.c.l.b16 %v5875
    %v6179 = vunpack.c.h.b16 %v5875
    %v6180 = vunpack.c.l.b16 %v5876
    %v6181 = vunpack.c.h.b16 %v5876
    %v6182 = vunpack.c.l.b16 %v5877
    %v6183 = vunpack.c.h.b16 %v5877
    %v6184 = vunpack.c.l.b16 %v5878
    %v6185 = vunpack.c.h.b16 %v5878
    %v6186 = vunpack.c.l.b16 %v5879
    %v6187 = vunpack.c.h.b16 %v5879
    %v6188 = vunpack.c.l.b16 %v5880
    %v6189 = vunpack.c.h.b16 %v5880
    %v6190 = vunpack.c.l.b16 %v5881
    %v6191 = vunpack.c.h.b16 %v5881
    %v6192 = vunpack.c.l.b16 %v5882
    %v6193 = vunpack.c.h.b16 %v5882
    %v6194 = vunpack.c.l.b16 %v5883
    %v6195 = vunpack.c.h.b16 %v5883
    %v6196 = vunpack.c.l.b16 %v5884
    %v6197 = vunpack.c.h.b16 %v5884
    %v6198 = vunpack.c.l.b16 %v5885
    %v6199 = vunpack.c.h.b16 %v5885
    %v6200 = vunpack.c.l.b16 %v5886
    %v6201 = vunpack.c.h.b16 %v5886
    %v6202 = vunpack.c.l.b16 %v5887
    %v6203 = vunpack.c.h.b16 %v5887
    %v6204 = vunpack.c.l.b16 %v5888
    %v6205 = vunpack.c.h.b16 %v5888
    %v6206 = vunpack.c.l.b16 %v5889
    %v6207 = vunpack.c.h.b16 %v5889
    %v6208 = vunpack.c.l.b16 %v5890
    %v6209 = vunpack.c.h.b16 %v5890
    %v6210 = vunpack.c.l.b16 %v5891
    %v6211 = vunpack.c.h.b16 %v5891
    %v6212 = vunpack.c.l.b16 %v5892
    %v6213 = vunpack.c.h.b16 %v5892
    %v6214 = vunpack.c.l.b16 %v5893
    %v6215 = vunpack.c.h.b16 %v5893
    %v6216 = vunpack.c.l.b16 %v5894
    %v6217 = vunpack.c.h.b16 %v5894
    %v6218 = vunpack.c.l.b16 %v5895
    %v6219 = vunpack.c.h.b16 %v5895
    %v6220 = vunpack.c.l.b16 %v5896
    %v6221 = vunpack.c.h.b16 %v5896
    %v6222 = vunpack.c.l.b16 %v5897
    %v6223 = vunpack.c.h.b16 %v5897
    %v6224 = vunpack.c.l.b16 %v5898
    %v6225 = vunpack.c.h.b16 %v5898
    %v6226 = vunpack.c.l.b16 %v5899
    %v6227 = vunpack.c.h.b16 %v5899
    %v6228 = vunpack.c.l.b16 %v5900
    %v6229 = vunpack.c.h.b16 %v5900
    %v6230 = vunpack.c.l.b16 %v5901
    %v6231 = vunpack.c.h.b16 %v5901
    %v6232 = vunpack.c.l.b16 %v5902
    %v6233 = vunpack.c.h.b16 %v5902
    %v6234 = vunpack.c.l.b16 %v5903
    %v6235 = vunpack.c.h.b16 %v5903
    %v6236 = vunpack.c.l.b16 %v5904
    %v6237 = vunpack.c.h.b16 %v5904
    %v6238 = vunpack.c.l.b16 %v5905
    %v6239 = vunpack.c.h.b16 %v5905
    %v6240 = vunpack.c.l.b16 %v5906
    %v6241 = vunpack.c.h.b16 %v5906
    %v6242 = vunpack.c.l.b16 %v5907
    %v6243 = vunpack.c.h.b16 %v5907
    %v6244 = vunpack.c.l.b16 %v5908
    %v6245 = vunpack.c.h.b16 %v5908
    %v6246 = vunpack.c.l.b16 %v5909
    %v6247 = vunpack.c.h.b16 %v5909
    %v6248 = vunpack.c.l.b16 %v5910
    %v6249 = vunpack.c.h.b16 %v5910
    %v6250 = vunpack.c.l.b16 %v5911
    %v6251 = vunpack.c.h.b16 %v5911
    %v6252 = vunpack.c.l.b16 %v5912
    %v6253 = vunpack.c.h.b16 %v5912
    %v6254 = vunpack.c.l.b16 %v5913
    %v6255 = vunpack.c.h.b16 %v5913
    %v6256 = vunpack.c.l.b16 %v5914
    %v6257 = vunpack.c.h.b16 %v5914
    %v6258 = vunpack.c.l.b16 %v5915
    %v6259 = vunpack.c.h.b16 %v5915
    %v6260 = vunpack.c.l.b16 %v5916
    %v6261 = vunpack.c.h.b16 %v5916
    %v6262 = vunpack.c.l.b16 %v5917
    %v6263 = vunpack.c.h.b16 %v5917
    %v6264 = vunpack.c.l.b16 %v5918
    %v6265 = vunpack.c.h.b16 %v5918
    %v6266 = vunpack.c.l.b16 %v5919
    %v6267 = vunpack.c.h.b16 %v5919
    %v6268 = vunpack.c.l.b16 %v5920
    %v6269 = vunpack.c.h.b16 %v5920
    %v6270 = vunpack.c.l.b16 %v5921
    %v6271 = vunpack.c.h.b16 %v5921
    %v6272 = vunpack.c.l.b16 %v5922
    %v6273 = vunpack.c.h.b16 %v5922
    %v6274 = vunpack.c.l.b16 %v5923
    %v6275 = vunpack.c.h.b16 %v5923
    %v6276 = vunpack.c.l.b16 %v5924
    %v6277 = vunpack.c.h.b16 %v5924
    %v6278 = vunpack.c.l.b16 %v5925
    %v6279 = vunpack.c.h.b16 %v5925
    %v6280 = vunpack.c.l.b16 %v5926
    %v6281 = vunpack.c.h.b16 %v5926
    %v6282 = vunpack.c.l.b16 %v5927
    %v6283 = vunpack.c.h.b16 %v5927
    %v6284 = vunpack.c.l.b16 %v5928
    %v6285 = vunpack.c.h.b16 %v5928
    %v6286 = vunpack.c.l.b16 %v5929
    %v6287 = vunpack.c.h.b16 %v5929
    %v6288 = vunpack.c.l.b16 %v5930
    %v6289 = vunpack.c.h.b16 %v5930
    %v6290 = vunpack.c.l.b16 %v5931
    %v6291 = vunpack.c.h.b16 %v5931
    %v6292 = vunpack.c.l.b16 %v5932
    %v6293 = vunpack.c.h.b16 %v5932
    %v6294 = vunpack.c.l.b16 %v5933
    %v6295 = vunpack.c.h.b16 %v5933
    %v6296 = vunpack.c.l.b16 %v5934
    %v6297 = vunpack.c.h.b16 %v5934
    %v6298 = vunpack.c.l.b16 %v5935
    %v6299 = vunpack.c.h.b16 %v5935
    %v6300 = vunpack.c.l.b16 %v5936
    %v6301 = vunpack.c.h.b16 %v5936
    %v6302 = vunpack.c.l.b16 %v5937
    %v6303 = vunpack.c.h.b16 %v5937
    %v6304 = vunpack.c.l.b16 %v5938
    %v6305 = vunpack.c.h.b16 %v5938
    %v6306 = vunpack.c.l.b16 %v5939
    %v6307 = vunpack.c.h.b16 %v5939
    %v6308 = vunpack.c.l.b16 %v5940
    %v6309 = vunpack.c.h.b16 %v5940
    %v6310 = vunpack.c.l.b16 %v5941
    %v6311 = vunpack.c.h.b16 %v5941
    %v6312 = vunpack.c.l.b16 %v5942
    %v6313 = vunpack.c.h.b16 %v5942
    %v6314 = vunpack.c.l.b16 %v5943
    %v6315 = vunpack.c.h.b16 %v5943
    %v6316 = vunpack.c.l.b16 %v5944
    %v6317 = vunpack.c.h.b16 %v5944
    %v6318 = vunpack.c.l.b16 %v5945
    %v6319 = vunpack.c.h.b16 %v5945
    %v6320 = vunpack.c.l.b16 %v5946
    %v6321 = vunpack.c.h.b16 %v5946
    %v6322 = vunpack.c.l.b16 %v5947
    %v6323 = vunpack.c.h.b16 %v5947
    %v6324 = vunpack.c.l.b16 %v5948
    %v6325 = vunpack.c.h.b16 %v5948
    %v6326 = vunpack.c.l.b16 %v5949
    %v6327 = vunpack.c.h.b16 %v5949
    %v6328 = vunpack.c.l.b16 %v5950
    %v6329 = vunpack.c.h.b16 %v5950
    %v6330 = vunpack.c.l.b16 %v5951
    %v6331 = vunpack.c.h.b16 %v5951
    %v6332 = vunpack.c.l.b16 %v5952
    %v6333 = vunpack.c.h.b16 %v5952
    %v6334 = vunpack.c.l.b16 %v5953
    %v6335 = vunpack.c.h.b16 %v5953
    %v6336 = vunpack.c.l.b16 %v5954
    %v6337 = vunpack.c.h.b16 %v5954
    %v6338 = vunpack.c.l.b16 %v5955
    %v6339 = vunpack.c.h.b16 %v5955
    %v6340 = vunpack.c.l.b16 %v5956
    %v6341 = vunpack.c.h.b16 %v5956
    %v6342 = vunpack.c.l.b16 %v5957
    %v6343 = vunpack.c.h.b16 %v5957
    %v6344 = vunpack.c.l.b16 %v5958
    %v6345 = vunpack.c.h.b16 %v5958
    %v6346 = vunpack.c.l.b16 %v5959
    %v6347 = vunpack.c.h.b16 %v5959
    %v6348 = vunpack.c.l.b16 %v5960
    %v6349 = vunpack.c.h.b16 %v5960
    %v6350 = vunpack.c.l.b16 %v5961
    %v6351 = vunpack.c.h.b16 %v5961
    %v6352 = vunpack.c.l.b16 %v5962
    %v6353 = vunpack.c.h.b16 %v5962
    %v6354 = vunpack.c.l.b16 %v5963
    %v6355 = vunpack.c.h.b16 %v5963
    %v6356 = vunpack.c.l.b16 %v5964
    %v6357 = vunpack.c.h.b16 %v5964
    %v6358 = vunpack.c.l.b16 %v5965
    %v6359 = vunpack.c.h.b16 %v5965
    %v6360 = vunpack.c.l.b16 %v5966
    %v6361 = vunpack.c.h.b16 %v5966
    %v6362 = vunpack.c.l.b16 %v5967
    %v6363 = vunpack.c.h.b16 %v5967
    %v6364 = vunpack.c.l.b16 %v5968
    %v6365 = vunpack.c.h.b16 %v5968
    %v6366 = vunpack.c.l.b16 %v5969
    %v6367 = vunpack.c.h.b16 %v5969
    %v6368 = vunpack.c.l.b16 %v5970
    %v6369 = vunpack.c.h.b16 %v5970
    %v6370 = vunpack.c.l.b16 %v5971
    %v6371 = vunpack.c.h.b16 %v5971
    %v6372 = vunpack.c.l.b16 %v5972
    %v6373 = vunpack.c.h.b16 %v5972
    %v6374 = vunpack.c.l.b16 %v5973
    %v6375 = vunpack.c.h.b16 %v5973
    %v6376 = vunpack.c.l.b16 %v5974
    %v6377 = vunpack.c.h.b16 %v5974
    %v6378 = vunpack.c.l.b16 %v5975
    %v6379 = vunpack.c.h.b16 %v5975
    %v6380 = vunpack.c.l.b16 %v5976
    %v6381 = vunpack.c.h.b16 %v5976
    %v6382 = vpack.c.b16 %v6130, %v6126
    %v6383 = vpack.c.b16 %v6131, %v6127
    %v6384 = vpack.c.b16 %v6132, %v6128
    %v6385 = vpack.c.b16 %v6133, %v6129
    %v6386 = vpack.c.b16 %v6138, %v6134
    %v6387 = vpack.c.b16 %v6139, %v6135
    %v6388 = vpack.c.b16 %v6140, %v6136
    %v6389 = vpack.c.b16 %v6141, %v6137
    %v6390 = vpack.c.b16 %v6146, %v6142
    %v6391 = vpack.c.b16 %v6147, %v6143
    %v6392 = vpack.c.b16 %v6148, %v6144
    %v6393 = vpack.c.b16 %v6149, %v6145
    %v6394 = vpack.c.b16 %v6154, %v6150
    %v6395 = vpack.c.b16 %v6155, %v6151
    %v6396 = vpack.c.b16 %v6156, %v6152
    %v6397 = vpack.c.b16 %v6157, %v6153
    %v6398 = vpack.c.b16 %v6162, %v6158
    %v6399 = vpack.c.b16 %v6163, %v6159
    %v6400 = vpack.c.b16 %v6164, %v6160
    %v6401 = vpack.c.b16 %v6165, %v6161
    %v6402 = vpack.c.b16 %v6170, %v6166
    %v6403 = vpack.c.b16 %v6171, %v6167
    %v6404 = vpack.c.b16 %v6172, %v6168
    %v6405 = vpack.c.b16 %v6173, %v6169
    %v6406 = vpack.c.b16 %v6178, %v6174
    %v6407 = vpack.c.b16 %v6179, %v6175
    %v6408 = vpack.c.b16 %v6180, %v6176
    %v6409 = vpack.c.b16 %v6181, %v6177
    %v6410 = vpack.c.b16 %v6186, %v6182
    %v6411 = vpack.c.b16 %v6187, %v6183
    %v6412 = vpack.c.b16 %v6188, %v6184
    %v6413 = vpack.c.b16 %v6189, %v6185
    %v6414 = vpack.c.b16 %v6194, %v6190
    %v6415 = vpack.c.b16 %v6195, %v6191
    %v6416 = vpack.c.b16 %v6196, %v6192
    %v6417 = vpack.c.b16 %v6197, %v6193
    %v6418 = vpack.c.b16 %v6202, %v6198
    %v6419 = vpack.c.b16 %v6203, %v6199
    %v6420 = vpack.c.b16 %v6204, %v6200
    %v6421 = vpack.c.b16 %v6205, %v6201
    %v6422 = vpack.c.b16 %v6210, %v6206
    %v6423 = vpack.c.b16 %v6211, %v6207
    %v6424 = vpack.c.b16 %v6212, %v6208
    %v6425 = vpack.c.b16 %v6213, %v6209
    %v6426 = vpack.c.b16 %v6218, %v6214
    %v6427 = vpack.c.b16 %v6219, %v6215
    %v6428 = vpack.c.b16 %v6220, %v6216
    %v6429 = vpack.c.b16 %v6221, %v6217
    %v6430 = vpack.c.b16 %v6226, %v6222
    %v6431 = vpack.c.b16 %v6227, %v6223
    %v6432 = vpack.c.b16 %v6228, %v6224
    %v6433 = vpack.c.b16 %v6229, %v6225
    %v6434 = vpack.c.b16 %v6234, %v6230
    %v6435 = vpack.c.b16 %v6235, %v6231
    %v6436 = vpack.c.b16 %v6236, %v6232
    %v6437 = vpack.c.b16 %v6237, %v6233
    %v6438 = vpack.c.b16 %v6242, %v6238
    %v6439 = vpack.c.b16 %v6243, %v6239
    %v6440 = vpack.c.b16 %v6244, %v6240
    %v6441 = vpack.c.b16 %v6245, %v6241
    %v6442 = vpack.c.b16 %v6250, %v6246
    %v6443 = vpack.c.b16 %v6251, %v6247
    %v6444 = vpack.c.b16 %v6252, %v6248
    %v6445 = vpack.c.b16 %v6253, %v6249
    %v6446 = vpack.c.b16 %v6258, %v6254
    %v6447 = vpack.c.b16 %v6259, %v6255
    %v6448 = vpack.c.b16 %v6260, %v6256
    %v6449 = vpack.c.b16 %v6261, %v6257
    %v6450 = vpack.c.b16 %v6266, %v6262
    %v6451 = vpack.c.b16 %v6267, %v6263
    %v6452 = vpack.c.b16 %v6268, %v6264
    %v6453 = vpack.c.b16 %v6269, %v6265
    %v6454 = vpack.c.b16 %v6274, %v6270
    %v6455 = vpack.c.b16 %v6275, %v6271
    %v6456 = vpack.c.b16 %v6276, %v6272
    %v6457 = vpack.c.b16 %v6277, %v6273
    %v6458 = vpack.c.b16 %v6282, %v6278
    %v6459 = vpack.c.b16 %v6283, %v6279
    %v6460 = vpack.c.b16 %v6284, %v6280
    %v6461 = vpack.c.b16 %v6285, %v6281
    %v6462 = vpack.c.b16 %v6290, %v6286
    %v6463 = vpack.c.b16 %v6291, %v6287
    %v6464 = vpack.c.b16 %v6292, %v6288
    %v6465 = vpack.c.b16 %v6293, %v6289
    %v6466 = vpack.c.b16 %v6298, %v6294
    %v6467 = vpack.c.b16 %v6299, %v6295
    %v6468 = vpack.c.b16 %v6300, %v6296
    %v6469 = vpack.c.b16 %v6301, %v6297
    %v6470 = vpack.c.b16 %v6306, %v6302
    %v6471 = vpack.c.b16 %v6307, %v6303
    %v6472 = vpack.c.b16 %v6308, %v6304
    %v6473 = vpack.c.b16 %v6309, %v6305
    %v6474 = vpack.c.b16 %v6314, %v6310
    %v6475 = vpack.c.b16 %v6315, %v6311
    %v6476 = vpack.c.b16 %v6316, %v6312
    %v6477 = vpack.c.b16 %v6317, %v6313
    %v6478 = vpack.c.b16 %v6322, %v6318
    %v6479 = vpack.c.b16 %v6323, %v6319
    %v6480 = vpack.c.b16 %v6324, %v6320
    %v6481 = vpack.c.b16 %v6325, %v6321
    %v6482 = vpack.c.b16 %v6330, %v6326
    %v6483 = vpack.c.b16 %v6331, %v6327
    %v6484 = vpack.c.b16 %v6332, %v6328
    %v6485 = vpack.c.b16 %v6333, %v6329
    %v6486 = vpack.c.b16 %v6338, %v6334
    %v6487 = vpack.c.b16 %v6339, %v6335
    %v6488 = vpack.c.b16 %v6340, %v6336
    %v6489 = vpack.c.b16 %v6341, %v6337
    %v6490 = vpack.c.b16 %v6346, %v6342
    %v6491 = vpack.c.b16 %v6347, %v6343
    %v6492 = vpack.c.b16 %v6348, %v6344
    %v6493 = vpack.c.b16 %v6349, %v6345
    %v6494 = vpack.c.b16 %v6354, %v6350
    %v6495 = vpack.c.b16 %v6355, %v6351
    %v6496 = vpack.c.b16 %v6356, %v6352
    %v6497 = vpack.c.b16 %v6357, %v6353
    %v6498 = vpack.c.b16 %v6362, %v6358
    %v6499 = vpack.c.b16 %v6363, %v6359
    %v6500 = vpack.c.b16 %v6364, %v6360
    %v6501 = vpack.c.b16 %v6365, %v6361
    %v6502 = vpack.c.b16 %v6370, %v6366
    %v6503 = vpack.c.b16 %v6371, %v6367
    %v6504 = vpack.c.b16 %v6372, %v6368
    %v6505 = vpack.c.b16 %v6373, %v6369
    %v6506 = vpack.c.b16 %v6378, %v6374
    %v6507 = vpack.c.b16 %v6379, %v6375
    %v6508 = vpack.c.b16 %v6380, %v6376
    %v6509 = vpack.c.b16 %v6381, %v6377
    %6638 = vmatprep.subr.bf16.mxu0 %v6411
    %6639 = vmatpush1.bf16.msra.mxu0 %v6410
    %6640 = vmatprep.subr.bf16.mxu0 %v6407
    %6641 = vmatpush1.bf16.msra.mxu0 %v6406
    %6642 = vmatprep.subr.bf16.mxu0 %v6403
    %6643 = vmatpush1.bf16.msra.mxu0 %v6402
    %6644 = vmatprep.subr.bf16.mxu0 %v6399
    %6645 = vmatpush1.bf16.msra.mxu0 %v6398
    %6646 = vmatprep.subr.bf16.mxu0 %v6395
    %6647 = vmatpush1.bf16.msra.mxu0 %v6394
    %6648 = vmatprep.subr.bf16.mxu0 %v6391
    %6649 = vmatpush1.bf16.msra.mxu0 %v6390
    %6650 = vmatprep.subr.bf16.mxu0 %v6387
    %6651 = vmatpush1.bf16.msra.mxu0 %v6386
    %6652 = vmatprep.subr.bf16.mxu0 %v6383
    %6653 = vmatpush1.bf16.msra.mxu0 %v6382
    %6654 = vmatprep.subr.bf16.mxu0 %v6443
    %6655 = vmatpush2.bf16.msra.mxu0 %v6442
    %6656 = vmatprep.subr.bf16.mxu0 %v6439
    %6657 = vmatpush2.bf16.msra.mxu0 %v6438
    %6658 = vmatprep.subr.bf16.mxu0 %v6435
    %6659 = vmatpush2.bf16.msra.mxu0 %v6434
    %6660 = vmatprep.subr.bf16.mxu0 %v6431
    %6661 = vmatpush2.bf16.msra.mxu0 %v6430
    %6662 = vmatprep.subr.bf16.mxu0 %v6427
    %6663 = vmatpush2.bf16.msra.mxu0 %v6426
    %6664 = vmatprep.subr.bf16.mxu0 %v6423
    %6665 = vmatpush2.bf16.msra.mxu0 %v6422
    %6666 = vmatprep.subr.bf16.mxu0 %v6419
    %6667 = vmatpush2.bf16.msra.mxu0 %v6418
    %6668 = vmatprep.subr.bf16.mxu0 %v6415
    %6669 = vmatpush2.bf16.msra.mxu0 %v6414
    %6670 = vmatprep.mubr.bf16.mxu0 %v5846
    %6671 = vmatmul.mubr.bf16.gmra.mxu0 %v5845
    %v6672 = vpop.f32.mrf.mxu0
    %v6673 = vadd.f32 %v5981, %v6672
    %v6674 = vpop.f32.mrf.mxu0
    %v6675 = vadd.f32 %v5985, %v6674
    %v6676 = vpop.f32.mrf.mxu0
    %v6677 = vpop.f32.mrf.mxu0
    %6678 = vdwg.mxu0
    %6679 = vmatprep.subr.bf16.mxu0 %v6475
    %6680 = vmatpush1.bf16.msra.mxu0 %v6474
    %6681 = vmatprep.subr.bf16.mxu0 %v6471
    %6682 = vmatpush1.bf16.msra.mxu0 %v6470
    %6683 = vmatprep.subr.bf16.mxu0 %v6467
    %6684 = vmatpush1.bf16.msra.mxu0 %v6466
    %6685 = vmatprep.subr.bf16.mxu0 %v6463
    %6686 = vmatpush1.bf16.msra.mxu0 %v6462
    %6687 = vmatprep.subr.bf16.mxu0 %v6459
    %6688 = vmatpush1.bf16.msra.mxu0 %v6458
    %6689 = vmatprep.subr.bf16.mxu0 %v6455
    %6690 = vmatpush1.bf16.msra.mxu0 %v6454
    %6691 = vmatprep.subr.bf16.mxu0 %v6451
    %6692 = vmatpush1.bf16.msra.mxu0 %v6450
    %6693 = vmatprep.subr.bf16.mxu0 %v6447
    %6694 = vmatpush1.bf16.msra.mxu0 %v6446
    %6695 = vmatprep.subr.bf16.mxu0 %v6507
    %6696 = vmatpush2.bf16.msra.mxu0 %v6506
    %6697 = vmatprep.subr.bf16.mxu0 %v6503
    %6698 = vmatpush2.bf16.msra.mxu0 %v6502
    %6699 = vmatprep.subr.bf16.mxu0 %v6499
    %6700 = vmatpush2.bf16.msra.mxu0 %v6498
    %6701 = vmatprep.subr.bf16.mxu0 %v6495
    %6702 = vmatpush2.bf16.msra.mxu0 %v6494
    %6703 = vmatprep.subr.bf16.mxu0 %v6491
    %6704 = vmatpush2.bf16.msra.mxu0 %v6490
    %6705 = vmatprep.subr.bf16.mxu0 %v6487
    %6706 = vmatpush2.bf16.msra.mxu0 %v6486
    %6707 = vmatprep.subr.bf16.mxu0 %v6483
    %6708 = vmatpush2.bf16.msra.mxu0 %v6482
    %6709 = vmatprep.subr.bf16.mxu0 %v6479
    %6710 = vmatpush2.bf16.msra.mxu0 %v6478
    %6711 = vmatprep.mubr.bf16.mxu0 %v5848
    %6712 = vmatmul.mubr.bf16.gmra.mxu0 %v5847
    %v6713 = vpop.f32.mrf.mxu0
    %v6714 = vadd.f32 %v6673, %v6713
    %v6715 = vpop.f32.mrf.mxu0
    %v6716 = vadd.f32 %v6675, %v6715
    %v6717 = vpop.f32.mrf.mxu0
    %v6718 = vpop.f32.mrf.mxu0
    %6719 = vdwg.mxu0
    %6720 = vmatprep.subr.bf16.mxu0 %v6413
    %6721 = vmatpush1.bf16.msra.mxu0 %v6412
    %6722 = vmatprep.subr.bf16.mxu0 %v6409
    %6723 = vmatpush1.bf16.msra.mxu0 %v6408
    %6724 = vmatprep.subr.bf16.mxu0 %v6405
    %6725 = vmatpush1.bf16.msra.mxu0 %v6404
    %6726 = vmatprep.subr.bf16.mxu0 %v6401
    %6727 = vmatpush1.bf16.msra.mxu0 %v6400
    %6728 = vmatprep.subr.bf16.mxu0 %v6397
    %6729 = vmatpush1.bf16.msra.mxu0 %v6396
    %6730 = vmatprep.subr.bf16.mxu0 %v6393
    %6731 = vmatpush1.bf16.msra.mxu0 %v6392
    %6732 = vmatprep.subr.bf16.mxu0 %v6389
    %6733 = vmatpush1.bf16.msra.mxu0 %v6388
    %6734 = vmatprep.subr.bf16.mxu0 %v6385
    %6735 = vmatpush1.bf16.msra.mxu0 %v6384
    %6736 = vmatprep.subr.bf16.mxu0 %v6445
    %6737 = vmatpush2.bf16.msra.mxu0 %v6444
    %6738 = vmatprep.subr.bf16.mxu0 %v6441
    %6739 = vmatpush2.bf16.msra.mxu0 %v6440
    %6740 = vmatprep.subr.bf16.mxu0 %v6437
    %6741 = vmatpush2.bf16.msra.mxu0 %v6436
    %6742 = vmatprep.subr.bf16.mxu0 %v6433
    %6743 = vmatpush2.bf16.msra.mxu0 %v6432
    %6744 = vmatprep.subr.bf16.mxu0 %v6429
    %6745 = vmatpush2.bf16.msra.mxu0 %v6428
    %6746 = vmatprep.subr.bf16.mxu0 %v6425
    %6747 = vmatpush2.bf16.msra.mxu0 %v6424
    %6748 = vmatprep.subr.bf16.mxu0 %v6421
    %6749 = vmatpush2.bf16.msra.mxu0 %v6420
    %6750 = vmatprep.subr.bf16.mxu0 %v6417
    %6751 = vmatpush2.bf16.msra.mxu0 %v6416
    %6752 = vmatprep.mubr.bf16.mxu0 %v5846
    %6753 = vmatmul.mubr.bf16.gmra.mxu0 %v5845
    %v6754 = vpop.f32.mrf.mxu0
    %v6755 = vadd.f32 %v5989, %v6754
    %v6756 = vpop.f32.mrf.mxu0
    %v6757 = vadd.f32 %v5993, %v6756
    %v6758 = vpop.f32.mrf.mxu0
    %v6759 = vpop.f32.mrf.mxu0
    %6760 = vdwg.mxu0
    %6761 = vmatprep.subr.bf16.mxu0 %v6477
    %6762 = vmatpush1.bf16.msra.mxu0 %v6476
    %6763 = vmatprep.subr.bf16.mxu0 %v6473
    %6764 = vmatpush1.bf16.msra.mxu0 %v6472
    %6765 = vmatprep.subr.bf16.mxu0 %v6469
    %6766 = vmatpush1.bf16.msra.mxu0 %v6468
    %6767 = vmatprep.subr.bf16.mxu0 %v6465
    %6768 = vmatpush1.bf16.msra.mxu0 %v6464
    %6769 = vmatprep.subr.bf16.mxu0 %v6461
    %6770 = vmatpush1.bf16.msra.mxu0 %v6460
    %6771 = vmatprep.subr.bf16.mxu0 %v6457
    %6772 = vmatpush1.bf16.msra.mxu0 %v6456
    %6773 = vmatprep.subr.bf16.mxu0 %v6453
    %6774 = vmatpush1.bf16.msra.mxu0 %v6452
    %6775 = vmatprep.subr.bf16.mxu0 %v6449
    %6776 = vmatpush1.bf16.msra.mxu0 %v6448
    %6777 = vmatprep.subr.bf16.mxu0 %v6509
    %6778 = vmatpush2.bf16.msra.mxu0 %v6508
    %6779 = vmatprep.subr.bf16.mxu0 %v6505
    %6780 = vmatpush2.bf16.msra.mxu0 %v6504
    %6781 = vmatprep.subr.bf16.mxu0 %v6501
    %6782 = vmatpush2.bf16.msra.mxu0 %v6500
    %6783 = vmatprep.subr.bf16.mxu0 %v6497
    %6784 = vmatpush2.bf16.msra.mxu0 %v6496
    %6785 = vmatprep.subr.bf16.mxu0 %v6493
    %6786 = vmatpush2.bf16.msra.mxu0 %v6492
    %6787 = vmatprep.subr.bf16.mxu0 %v6489
    %6788 = vmatpush2.bf16.msra.mxu0 %v6488
    %6789 = vmatprep.subr.bf16.mxu0 %v6485
    %6790 = vmatpush2.bf16.msra.mxu0 %v6484
    %6791 = vmatprep.subr.bf16.mxu0 %v6481
    %6792 = vmatpush2.bf16.msra.mxu0 %v6480
    %6793 = vmatprep.mubr.bf16.mxu0 %v5848
    %6794 = vmatmul.mubr.bf16.gmra.mxu0 %v5847
    %v6795 = vpop.f32.mrf.mxu0
    %v6796 = vadd.f32 %v6755, %v6795
    %v6797 = vpop.f32.mrf.mxu0
    %v6798 = vadd.f32 %v6757, %v6797
    %v6799 = vpop.f32.mrf.mxu0
    %v6800 = vpop.f32.mrf.mxu0
    %6801 = vdwg.mxu0
    %v6802 = vadd.f32 %v4791, %v6714
    %v6803 = vadd.f32 %v4792, %v6716
    %v6804 = vadd.f32 %v4793, %v6796
    %v6805 = vadd.f32 %v4794, %v6798
    %v6806 = vld [vmem:[%s1 + $0x33] sm:$0xff]
    %v6807 = vpack.c.bf16 %v6802, %v6802
    %v6808 = vpack.c.bf16 %v6803, %v6803
    %v6809 = vpack.c.bf16 %v6804, %v6804
    %v6810 = vpack.c.bf16 %v6805, %v6805
    %v6811 = vld [vmem:[#allocation20] sm:$0xff]
    %v6812 = vld [vmem:[#allocation20 + $0x8] sm:$0xff]
    %v6813 = vld [vmem:[#allocation20 + $0x10] sm:$0xff]
    %v6814 = vld [vmem:[#allocation20 + $0x18] sm:$0xff]
    %v6815 = vld [vmem:[#allocation20 + $0x20] sm:$0xff]
    %v6816 = vld [vmem:[#allocation20 + $0x28] sm:$0xff]
    %v6817 = vld [vmem:[#allocation20 + $0x30] sm:$0xff]
    %v6818 = vld [vmem:[#allocation20 + $0x38] sm:$0xff]
    %v6819 = vld [vmem:[#allocation20 + $0x40] sm:$0xff]
    %v6820 = vld [vmem:[#allocation20 + $0x48] sm:$0xff]
    %v6821 = vld [vmem:[#allocation20 + $0x50] sm:$0xff]
    %v6822 = vld [vmem:[#allocation20 + $0x58] sm:$0xff]
    %v6823 = vld [vmem:[#allocation20 + $0x60] sm:$0xff]
    %v6824 = vld [vmem:[#allocation20 + $0x68] sm:$0xff]
    %v6825 = vld [vmem:[#allocation20 + $0x70] sm:$0xff]
    %v6826 = vld [vmem:[#allocation20 + $0x78] sm:$0xff]
    %v6827 = vld [vmem:[#allocation20 + $0x80] sm:$0xff]
    %v6828 = vld [vmem:[#allocation20 + $0x88] sm:$0xff]
    %v6829 = vld [vmem:[#allocation20 + $0x90] sm:$0xff]
    %v6830 = vld [vmem:[#allocation20 + $0x98] sm:$0xff]
    %v6831 = vld [vmem:[#allocation20 + $0xa0] sm:$0xff]
    %v6832 = vld [vmem:[#allocation20 + $0xa8] sm:$0xff]
    %v6833 = vld [vmem:[#allocation20 + $0xb0] sm:$0xff]
    %v6834 = vld [vmem:[#allocation20 + $0xb8] sm:$0xff]
    %v6835 = vld [vmem:[#allocation20 + $0xc0] sm:$0xff]
    %v6836 = vld [vmem:[#allocation20 + $0xc8] sm:$0xff]
    %v6837 = vld [vmem:[#allocation20 + $0xd0] sm:$0xff]
    %v6838 = vld [vmem:[#allocation20 + $0xd8] sm:$0xff]
    %v6839 = vld [vmem:[#allocation20 + $0xe0] sm:$0xff]
    %v6840 = vld [vmem:[#allocation20 + $0xe8] sm:$0xff]
    %v6841 = vld [vmem:[#allocation20 + $0xf0] sm:$0xff]
    %v6842 = vld [vmem:[#allocation20 + $0xf8] sm:$0xff]
    %v6843 = vld [vmem:[#allocation20 + $0x100] sm:$0xff]
    %v6844 = vld [vmem:[#allocation20 + $0x108] sm:$0xff]
    %v6845 = vld [vmem:[#allocation20 + $0x110] sm:$0xff]
    %v6846 = vld [vmem:[#allocation20 + $0x118] sm:$0xff]
    %v6847 = vld [vmem:[#allocation20 + $0x120] sm:$0xff]
    %v6848 = vld [vmem:[#allocation20 + $0x128] sm:$0xff]
    %v6849 = vld [vmem:[#allocation20 + $0x130] sm:$0xff]
    %v6850 = vld [vmem:[#allocation20 + $0x138] sm:$0xff]
    %v6851 = vld [vmem:[#allocation20 + $0x140] sm:$0xff]
    %v6852 = vld [vmem:[#allocation20 + $0x148] sm:$0xff]
    %v6853 = vld [vmem:[#allocation20 + $0x150] sm:$0xff]
    %v6854 = vld [vmem:[#allocation20 + $0x158] sm:$0xff]
    %v6855 = vld [vmem:[#allocation20 + $0x160] sm:$0xff]
    %v6856 = vld [vmem:[#allocation20 + $0x168] sm:$0xff]
    %v6857 = vld [vmem:[#allocation20 + $0x170] sm:$0xff]
    %v6858 = vld [vmem:[#allocation20 + $0x178] sm:$0xff]
    %v6859 = vld [vmem:[#allocation20 + $0x180] sm:$0xff]
    %v6860 = vld [vmem:[#allocation20 + $0x188] sm:$0xff]
    %v6861 = vld [vmem:[#allocation20 + $0x190] sm:$0xff]
    %v6862 = vld [vmem:[#allocation20 + $0x198] sm:$0xff]
    %v6863 = vld [vmem:[#allocation20 + $0x1a0] sm:$0xff]
    %v6864 = vld [vmem:[#allocation20 + $0x1a8] sm:$0xff]
    %v6865 = vld [vmem:[#allocation20 + $0x1b0] sm:$0xff]
    %v6866 = vld [vmem:[#allocation20 + $0x1b8] sm:$0xff]
    %v6867 = vld [vmem:[#allocation20 + $0x1c0] sm:$0xff]
    %v6868 = vld [vmem:[#allocation20 + $0x1c8] sm:$0xff]
    %v6869 = vld [vmem:[#allocation20 + $0x1d0] sm:$0xff]
    %v6870 = vld [vmem:[#allocation20 + $0x1d8] sm:$0xff]
    %v6871 = vld [vmem:[#allocation20 + $0x1e0] sm:$0xff]
    %v6872 = vld [vmem:[#allocation20 + $0x1e8] sm:$0xff]
    %v6873 = vld [vmem:[#allocation20 + $0x1f0] sm:$0xff]
    %v6874 = vld [vmem:[#allocation20 + $0x1f8] sm:$0xff]
    %v6875 = vld [vmem:[#allocation20 + $0x200] sm:$0xff]
    %v6876 = vld [vmem:[#allocation20 + $0x208] sm:$0xff]
    %v6877 = vld [vmem:[#allocation20 + $0x210] sm:$0xff]
    %v6878 = vld [vmem:[#allocation20 + $0x218] sm:$0xff]
    %v6879 = vld [vmem:[#allocation20 + $0x220] sm:$0xff]
    %v6880 = vld [vmem:[#allocation20 + $0x228] sm:$0xff]
    %v6881 = vld [vmem:[#allocation20 + $0x230] sm:$0xff]
    %v6882 = vld [vmem:[#allocation20 + $0x238] sm:$0xff]
    %v6883 = vld [vmem:[#allocation20 + $0x240] sm:$0xff]
    %v6884 = vld [vmem:[#allocation20 + $0x248] sm:$0xff]
    %v6885 = vld [vmem:[#allocation20 + $0x250] sm:$0xff]
    %v6886 = vld [vmem:[#allocation20 + $0x258] sm:$0xff]
    %v6887 = vld [vmem:[#allocation20 + $0x260] sm:$0xff]
    %v6888 = vld [vmem:[#allocation20 + $0x268] sm:$0xff]
    %v6889 = vld [vmem:[#allocation20 + $0x270] sm:$0xff]
    %v6890 = vld [vmem:[#allocation20 + $0x278] sm:$0xff]
    %v6891 = vld [vmem:[#allocation20 + $0x280] sm:$0xff]
    %v6892 = vld [vmem:[#allocation20 + $0x288] sm:$0xff]
    %v6893 = vld [vmem:[#allocation20 + $0x290] sm:$0xff]
    %v6894 = vld [vmem:[#allocation20 + $0x298] sm:$0xff]
    %v6895 = vld [vmem:[#allocation20 + $0x2a0] sm:$0xff]
    %v6896 = vld [vmem:[#allocation20 + $0x2a8] sm:$0xff]
    %v6897 = vld [vmem:[#allocation20 + $0x2b0] sm:$0xff]
    %v6898 = vld [vmem:[#allocation20 + $0x2b8] sm:$0xff]
    %v6899 = vld [vmem:[#allocation20 + $0x2c0] sm:$0xff]
    %v6900 = vld [vmem:[#allocation20 + $0x2c8] sm:$0xff]
    %v6901 = vld [vmem:[#allocation20 + $0x2d0] sm:$0xff]
    %v6902 = vld [vmem:[#allocation20 + $0x2d8] sm:$0xff]
    %v6903 = vld [vmem:[#allocation20 + $0x2e0] sm:$0xff]
    %v6904 = vld [vmem:[#allocation20 + $0x2e8] sm:$0xff]
    %v6905 = vld [vmem:[#allocation20 + $0x2f0] sm:$0xff]
    %v6906 = vld [vmem:[#allocation20 + $0x2f8] sm:$0xff]
    %v6907 = vld [vmem:[#allocation20 + $0x300] sm:$0xff]
    %v6908 = vld [vmem:[#allocation20 + $0x308] sm:$0xff]
    %v6909 = vld [vmem:[#allocation20 + $0x310] sm:$0xff]
    %v6910 = vld [vmem:[#allocation20 + $0x318] sm:$0xff]
    %v6911 = vld [vmem:[#allocation20 + $0x320] sm:$0xff]
    %v6912 = vld [vmem:[#allocation20 + $0x328] sm:$0xff]
    %v6913 = vld [vmem:[#allocation20 + $0x330] sm:$0xff]
    %v6914 = vld [vmem:[#allocation20 + $0x338] sm:$0xff]
    %v6915 = vld [vmem:[#allocation20 + $0x340] sm:$0xff]
    %v6916 = vld [vmem:[#allocation20 + $0x348] sm:$0xff]
    %v6917 = vld [vmem:[#allocation20 + $0x350] sm:$0xff]
    %v6918 = vld [vmem:[#allocation20 + $0x358] sm:$0xff]
    %v6919 = vld [vmem:[#allocation20 + $0x360] sm:$0xff]
    %v6920 = vld [vmem:[#allocation20 + $0x368] sm:$0xff]
    %v6921 = vld [vmem:[#allocation20 + $0x370] sm:$0xff]
    %v6922 = vld [vmem:[#allocation20 + $0x378] sm:$0xff]
    %v6923 = vld [vmem:[#allocation20 + $0x380] sm:$0xff]
    %v6924 = vld [vmem:[#allocation20 + $0x388] sm:$0xff]
    %v6925 = vld [vmem:[#allocation20 + $0x390] sm:$0xff]
    %v6926 = vld [vmem:[#allocation20 + $0x398] sm:$0xff]
    %v6927 = vld [vmem:[#allocation20 + $0x3a0] sm:$0xff]
    %v6928 = vld [vmem:[#allocation20 + $0x3a8] sm:$0xff]
    %v6929 = vld [vmem:[#allocation20 + $0x3b0] sm:$0xff]
    %v6930 = vld [vmem:[#allocation20 + $0x3b8] sm:$0xff]
    %v6931 = vld [vmem:[#allocation20 + $0x3c0] sm:$0xff]
    %v6932 = vld [vmem:[#allocation20 + $0x3c8] sm:$0xff]
    %v6933 = vld [vmem:[#allocation20 + $0x3d0] sm:$0xff]
    %v6934 = vld [vmem:[#allocation20 + $0x3d8] sm:$0xff]
    %v6935 = vld [vmem:[#allocation20 + $0x3e0] sm:$0xff]
    %v6936 = vld [vmem:[#allocation20 + $0x3e8] sm:$0xff]
    %v6937 = vld [vmem:[#allocation20 + $0x3f0] sm:$0xff]
    %v6938 = vld [vmem:[#allocation20 + $0x3f8] sm:$0xff]
    %v6939 = vld [vmem:[#allocation20 + $0x400] sm:$0xff]
    %v6940 = vld [vmem:[#allocation20 + $0x408] sm:$0xff]
    %v6941 = vld [vmem:[#allocation20 + $0x410] sm:$0xff]
    %v6942 = vld [vmem:[#allocation20 + $0x418] sm:$0xff]
    %v6943 = vld [vmem:[#allocation20 + $0x420] sm:$0xff]
    %v6944 = vld [vmem:[#allocation20 + $0x428] sm:$0xff]
    %v6945 = vld [vmem:[#allocation20 + $0x430] sm:$0xff]
    %v6946 = vld [vmem:[#allocation20 + $0x438] sm:$0xff]
    %v6947 = vld [vmem:[#allocation20 + $0x440] sm:$0xff]
    %v6948 = vld [vmem:[#allocation20 + $0x448] sm:$0xff]
    %v6949 = vld [vmem:[#allocation20 + $0x450] sm:$0xff]
    %v6950 = vld [vmem:[#allocation20 + $0x458] sm:$0xff]
    %v6951 = vld [vmem:[#allocation20 + $0x460] sm:$0xff]
    %v6952 = vld [vmem:[#allocation20 + $0x468] sm:$0xff]
    %v6953 = vld [vmem:[#allocation20 + $0x470] sm:$0xff]
    %v6954 = vld [vmem:[#allocation20 + $0x478] sm:$0xff]
    %v6955 = vld [vmem:[#allocation20 + $0x480] sm:$0xff]
    %v6956 = vld [vmem:[#allocation20 + $0x488] sm:$0xff]
    %v6957 = vld [vmem:[#allocation20 + $0x490] sm:$0xff]
    %v6958 = vld [vmem:[#allocation20 + $0x498] sm:$0xff]
    %v6959 = vld [vmem:[#allocation20 + $0x4a0] sm:$0xff]
    %v6960 = vld [vmem:[#allocation20 + $0x4a8] sm:$0xff]
    %v6961 = vld [vmem:[#allocation20 + $0x4b0] sm:$0xff]
    %v6962 = vld [vmem:[#allocation20 + $0x4b8] sm:$0xff]
    %v6963 = vld [vmem:[#allocation20 + $0x4c0] sm:$0xff]
    %v6964 = vld [vmem:[#allocation20 + $0x4c8] sm:$0xff]
    %v6965 = vld [vmem:[#allocation20 + $0x4d0] sm:$0xff]
    %v6966 = vld [vmem:[#allocation20 + $0x4d8] sm:$0xff]
    %v6967 = vld [vmem:[#allocation20 + $0x4e0] sm:$0xff]
    %v6968 = vld [vmem:[#allocation20 + $0x4e8] sm:$0xff]
    %v6969 = vld [vmem:[#allocation20 + $0x4f0] sm:$0xff]
    %v6970 = vld [vmem:[#allocation20 + $0x4f8] sm:$0xff]
    %v6971 = vld [vmem:[#allocation20 + $0x500] sm:$0xff]
    %v6972 = vld [vmem:[#allocation20 + $0x508] sm:$0xff]
    %v6973 = vld [vmem:[#allocation20 + $0x510] sm:$0xff]
    %v6974 = vld [vmem:[#allocation20 + $0x518] sm:$0xff]
    %v6975 = vld [vmem:[#allocation20 + $0x520] sm:$0xff]
    %v6976 = vld [vmem:[#allocation20 + $0x528] sm:$0xff]
    %v6977 = vld [vmem:[#allocation20 + $0x530] sm:$0xff]
    %v6978 = vld [vmem:[#allocation20 + $0x538] sm:$0xff]
    %v6979 = vld [vmem:[#allocation20 + $0x540] sm:$0xff]
    %v6980 = vld [vmem:[#allocation20 + $0x548] sm:$0xff]
    %v6981 = vld [vmem:[#allocation20 + $0x550] sm:$0xff]
    %v6982 = vld [vmem:[#allocation20 + $0x558] sm:$0xff]
    %v6983 = vld [vmem:[#allocation20 + $0x560] sm:$0xff]
    %v6984 = vld [vmem:[#allocation20 + $0x568] sm:$0xff]
    %v6985 = vld [vmem:[#allocation20 + $0x570] sm:$0xff]
    %v6986 = vld [vmem:[#allocation20 + $0x578] sm:$0xff]
    %v6987 = vld [vmem:[#allocation20 + $0x580] sm:$0xff]
    %v6988 = vld [vmem:[#allocation20 + $0x588] sm:$0xff]
    %v6989 = vld [vmem:[#allocation20 + $0x590] sm:$0xff]
    %v6990 = vld [vmem:[#allocation20 + $0x598] sm:$0xff]
    %v6991 = vld [vmem:[#allocation20 + $0x5a0] sm:$0xff]
    %v6992 = vld [vmem:[#allocation20 + $0x5a8] sm:$0xff]
    %v6993 = vld [vmem:[#allocation20 + $0x5b0] sm:$0xff]
    %v6994 = vld [vmem:[#allocation20 + $0x5b8] sm:$0xff]
    %v6995 = vld [vmem:[#allocation20 + $0x5c0] sm:$0xff]
    %v6996 = vld [vmem:[#allocation20 + $0x5c8] sm:$0xff]
    %v6997 = vld [vmem:[#allocation20 + $0x5d0] sm:$0xff]
    %v6998 = vld [vmem:[#allocation20 + $0x5d8] sm:$0xff]
    %v6999 = vld [vmem:[#allocation20 + $0x5e0] sm:$0xff]
    %v7000 = vld [vmem:[#allocation20 + $0x5e8] sm:$0xff]
    %v7001 = vld [vmem:[#allocation20 + $0x5f0] sm:$0xff]
    %v7002 = vld [vmem:[#allocation20 + $0x5f8] sm:$0xff]
    %v7003 = vld [vmem:[#allocation20 + $0x600] sm:$0xff]
    %v7004 = vld [vmem:[#allocation20 + $0x608] sm:$0xff]
    %v7005 = vld [vmem:[#allocation20 + $0x610] sm:$0xff]
    %v7006 = vld [vmem:[#allocation20 + $0x618] sm:$0xff]
    %v7007 = vld [vmem:[#allocation20 + $0x620] sm:$0xff]
    %v7008 = vld [vmem:[#allocation20 + $0x628] sm:$0xff]
    %v7009 = vld [vmem:[#allocation20 + $0x630] sm:$0xff]
    %v7010 = vld [vmem:[#allocation20 + $0x638] sm:$0xff]
    %v7011 = vld [vmem:[#allocation20 + $0x640] sm:$0xff]
    %v7012 = vld [vmem:[#allocation20 + $0x648] sm:$0xff]
    %v7013 = vld [vmem:[#allocation20 + $0x650] sm:$0xff]
    %v7014 = vld [vmem:[#allocation20 + $0x658] sm:$0xff]
    %v7015 = vld [vmem:[#allocation20 + $0x660] sm:$0xff]
    %v7016 = vld [vmem:[#allocation20 + $0x668] sm:$0xff]
    %v7017 = vld [vmem:[#allocation20 + $0x670] sm:$0xff]
    %v7018 = vld [vmem:[#allocation20 + $0x678] sm:$0xff]
    %v7019 = vld [vmem:[#allocation20 + $0x680] sm:$0xff]
    %v7020 = vld [vmem:[#allocation20 + $0x688] sm:$0xff]
    %v7021 = vld [vmem:[#allocation20 + $0x690] sm:$0xff]
    %v7022 = vld [vmem:[#allocation20 + $0x698] sm:$0xff]
    %v7023 = vld [vmem:[#allocation20 + $0x6a0] sm:$0xff]
    %v7024 = vld [vmem:[#allocation20 + $0x6a8] sm:$0xff]
    %v7025 = vld [vmem:[#allocation20 + $0x6b0] sm:$0xff]
    %v7026 = vld [vmem:[#allocation20 + $0x6b8] sm:$0xff]
    %v7027 = vld [vmem:[#allocation20 + $0x6c0] sm:$0xff]
    %v7028 = vld [vmem:[#allocation20 + $0x6c8] sm:$0xff]
    %v7029 = vld [vmem:[#allocation20 + $0x6d0] sm:$0xff]
    %v7030 = vld [vmem:[#allocation20 + $0x6d8] sm:$0xff]
    %v7031 = vld [vmem:[#allocation20 + $0x6e0] sm:$0xff]
    %v7032 = vld [vmem:[#allocation20 + $0x6e8] sm:$0xff]
    %v7033 = vld [vmem:[#allocation20 + $0x6f0] sm:$0xff]
    %v7034 = vld [vmem:[#allocation20 + $0x6f8] sm:$0xff]
    %v7035 = vld [vmem:[#allocation20 + $0x700] sm:$0xff]
    %v7036 = vld [vmem:[#allocation20 + $0x708] sm:$0xff]
    %v7037 = vld [vmem:[#allocation20 + $0x710] sm:$0xff]
    %v7038 = vld [vmem:[#allocation20 + $0x718] sm:$0xff]
    %v7039 = vld [vmem:[#allocation20 + $0x720] sm:$0xff]
    %v7040 = vld [vmem:[#allocation20 + $0x728] sm:$0xff]
    %v7041 = vld [vmem:[#allocation20 + $0x730] sm:$0xff]
    %v7042 = vld [vmem:[#allocation20 + $0x738] sm:$0xff]
    %v7043 = vld [vmem:[#allocation20 + $0x740] sm:$0xff]
    %v7044 = vld [vmem:[#allocation20 + $0x748] sm:$0xff]
    %v7045 = vld [vmem:[#allocation20 + $0x750] sm:$0xff]
    %v7046 = vld [vmem:[#allocation20 + $0x758] sm:$0xff]
    %v7047 = vld [vmem:[#allocation20 + $0x760] sm:$0xff]
    %v7048 = vld [vmem:[#allocation20 + $0x768] sm:$0xff]
    %v7049 = vld [vmem:[#allocation20 + $0x770] sm:$0xff]
    %v7050 = vld [vmem:[#allocation20 + $0x778] sm:$0xff]
    %v7051 = vld [vmem:[#allocation20 + $0x780] sm:$0xff]
    %v7052 = vld [vmem:[#allocation20 + $0x788] sm:$0xff]
    %v7053 = vld [vmem:[#allocation20 + $0x790] sm:$0xff]
    %v7054 = vld [vmem:[#allocation20 + $0x798] sm:$0xff]
    %v7055 = vld [vmem:[#allocation20 + $0x7a0] sm:$0xff]
    %v7056 = vld [vmem:[#allocation20 + $0x7a8] sm:$0xff]
    %v7057 = vld [vmem:[#allocation20 + $0x7b0] sm:$0xff]
    %v7058 = vld [vmem:[#allocation20 + $0x7b8] sm:$0xff]
    %v7059 = vld [vmem:[#allocation20 + $0x7c0] sm:$0xff]
    %v7060 = vld [vmem:[#allocation20 + $0x7c8] sm:$0xff]
    %v7061 = vld [vmem:[#allocation20 + $0x7d0] sm:$0xff]
    %v7062 = vld [vmem:[#allocation20 + $0x7d8] sm:$0xff]
    %v7063 = vld [vmem:[#allocation20 + $0x7e0] sm:$0xff]
    %v7064 = vld [vmem:[#allocation20 + $0x7e8] sm:$0xff]
    %v7065 = vld [vmem:[#allocation20 + $0x7f0] sm:$0xff]
    %v7066 = vld [vmem:[#allocation20 + $0x7f8] sm:$0xff]
    %v7068 = vlaneseq
    %v7069 = vshrl.u32 %v7068, 7
    %v7070 = vsub.s32 0, %v7069
    %v7071 = vrot.slane %v6806, %v7070
    %v7072 = vlaneseq
    %v7073 = vshrl.u32 %v7072, 7
    %v7074 = vsub.s32 1, %v7073
    %v7075 = vrot.slane %v6806, %v7074
    %v7076 = vlaneseq
    %v7077 = vshrl.u32 %v7076, 7
    %v7078 = vsub.s32 2, %v7077
    %v7079 = vrot.slane %v6806, %v7078
    %v7080 = vlaneseq
    %v7081 = vshrl.u32 %v7080, 7
    %v7082 = vsub.s32 3, %v7081
    %v7083 = vrot.slane %v6806, %v7082
    %v7084 = vlaneseq
    %v7085 = vshrl.u32 %v7084, 7
    %v7086 = vsub.s32 4, %v7085
    %v7087 = vrot.slane %v6806, %v7086
    %v7088 = vlaneseq
    %v7089 = vshrl.u32 %v7088, 7
    %v7090 = vsub.s32 5, %v7089
    %v7091 = vrot.slane %v6806, %v7090
    %v7092 = vlaneseq
    %v7093 = vshrl.u32 %v7092, 7
    %v7094 = vsub.s32 6, %v7093
    %v7095 = vrot.slane %v6806, %v7094
    %v7096 = vlaneseq
    %v7097 = vshrl.u32 %v7096, 7
    %v7098 = vsub.s32 7, %v7097
    %v7099 = vrot.slane %v6806, %v7098
    %v7364 = vunpack.c.l.b16 %v6811
    %v7365 = vunpack.c.h.b16 %v6811
    %v7366 = vunpack.c.l.b16 %v6812
    %v7367 = vunpack.c.h.b16 %v6812
    %v7368 = vunpack.c.l.b16 %v6813
    %v7369 = vunpack.c.h.b16 %v6813
    %v7370 = vunpack.c.l.b16 %v6814
    %v7371 = vunpack.c.h.b16 %v6814
    %v7372 = vunpack.c.l.b16 %v6815
    %v7373 = vunpack.c.h.b16 %v6815
    %v7374 = vunpack.c.l.b16 %v6816
    %v7375 = vunpack.c.h.b16 %v6816
    %v7376 = vunpack.c.l.b16 %v6817
    %v7377 = vunpack.c.h.b16 %v6817
    %v7378 = vunpack.c.l.b16 %v6818
    %v7379 = vunpack.c.h.b16 %v6818
    %v7380 = vunpack.c.l.b16 %v6819
    %v7381 = vunpack.c.h.b16 %v6819
    %v7382 = vunpack.c.l.b16 %v6820
    %v7383 = vunpack.c.h.b16 %v6820
    %v7384 = vunpack.c.l.b16 %v6821
    %v7385 = vunpack.c.h.b16 %v6821
    %v7386 = vunpack.c.l.b16 %v6822
    %v7387 = vunpack.c.h.b16 %v6822
    %v7388 = vunpack.c.l.b16 %v6823
    %v7389 = vunpack.c.h.b16 %v6823
    %v7390 = vunpack.c.l.b16 %v6824
    %v7391 = vunpack.c.h.b16 %v6824
    %v7392 = vunpack.c.l.b16 %v6825
    %v7393 = vunpack.c.h.b16 %v6825
    %v7394 = vunpack.c.l.b16 %v6826
    %v7395 = vunpack.c.h.b16 %v6826
    %v7396 = vunpack.c.l.b16 %v6827
    %v7397 = vunpack.c.h.b16 %v6827
    %v7398 = vunpack.c.l.b16 %v6828
    %v7399 = vunpack.c.h.b16 %v6828
    %v7400 = vunpack.c.l.b16 %v6829
    %v7401 = vunpack.c.h.b16 %v6829
    %v7402 = vunpack.c.l.b16 %v6830
    %v7403 = vunpack.c.h.b16 %v6830
    %v7404 = vunpack.c.l.b16 %v6831
    %v7405 = vunpack.c.h.b16 %v6831
    %v7406 = vunpack.c.l.b16 %v6832
    %v7407 = vunpack.c.h.b16 %v6832
    %v7408 = vunpack.c.l.b16 %v6833
    %v7409 = vunpack.c.h.b16 %v6833
    %v7410 = vunpack.c.l.b16 %v6834
    %v7411 = vunpack.c.h.b16 %v6834
    %v7412 = vunpack.c.l.b16 %v6835
    %v7413 = vunpack.c.h.b16 %v6835
    %v7414 = vunpack.c.l.b16 %v6836
    %v7415 = vunpack.c.h.b16 %v6836
    %v7416 = vunpack.c.l.b16 %v6837
    %v7417 = vunpack.c.h.b16 %v6837
    %v7418 = vunpack.c.l.b16 %v6838
    %v7419 = vunpack.c.h.b16 %v6838
    %v7420 = vunpack.c.l.b16 %v6839
    %v7421 = vunpack.c.h.b16 %v6839
    %v7422 = vunpack.c.l.b16 %v6840
    %v7423 = vunpack.c.h.b16 %v6840
    %v7424 = vunpack.c.l.b16 %v6841
    %v7425 = vunpack.c.h.b16 %v6841
    %v7426 = vunpack.c.l.b16 %v6842
    %v7427 = vunpack.c.h.b16 %v6842
    %v7428 = vunpack.c.l.b16 %v6843
    %v7429 = vunpack.c.h.b16 %v6843
    %v7430 = vunpack.c.l.b16 %v6844
    %v7431 = vunpack.c.h.b16 %v6844
    %v7432 = vunpack.c.l.b16 %v6845
    %v7433 = vunpack.c.h.b16 %v6845
    %v7434 = vunpack.c.l.b16 %v6846
    %v7435 = vunpack.c.h.b16 %v6846
    %v7436 = vunpack.c.l.b16 %v6847
    %v7437 = vunpack.c.h.b16 %v6847
    %v7438 = vunpack.c.l.b16 %v6848
    %v7439 = vunpack.c.h.b16 %v6848
    %v7440 = vunpack.c.l.b16 %v6849
    %v7441 = vunpack.c.h.b16 %v6849
    %v7442 = vunpack.c.l.b16 %v6850
    %v7443 = vunpack.c.h.b16 %v6850
    %v7444 = vunpack.c.l.b16 %v6851
    %v7445 = vunpack.c.h.b16 %v6851
    %v7446 = vunpack.c.l.b16 %v6852
    %v7447 = vunpack.c.h.b16 %v6852
    %v7448 = vunpack.c.l.b16 %v6853
    %v7449 = vunpack.c.h.b16 %v6853
    %v7450 = vunpack.c.l.b16 %v6854
    %v7451 = vunpack.c.h.b16 %v6854
    %v7452 = vunpack.c.l.b16 %v6855
    %v7453 = vunpack.c.h.b16 %v6855
    %v7454 = vunpack.c.l.b16 %v6856
    %v7455 = vunpack.c.h.b16 %v6856
    %v7456 = vunpack.c.l.b16 %v6857
    %v7457 = vunpack.c.h.b16 %v6857
    %v7458 = vunpack.c.l.b16 %v6858
    %v7459 = vunpack.c.h.b16 %v6858
    %v7460 = vunpack.c.l.b16 %v6859
    %v7461 = vunpack.c.h.b16 %v6859
    %v7462 = vunpack.c.l.b16 %v6860
    %v7463 = vunpack.c.h.b16 %v6860
    %v7464 = vunpack.c.l.b16 %v6861
    %v7465 = vunpack.c.h.b16 %v6861
    %v7466 = vunpack.c.l.b16 %v6862
    %v7467 = vunpack.c.h.b16 %v6862
    %v7468 = vunpack.c.l.b16 %v6863
    %v7469 = vunpack.c.h.b16 %v6863
    %v7470 = vunpack.c.l.b16 %v6864
    %v7471 = vunpack.c.h.b16 %v6864
    %v7472 = vunpack.c.l.b16 %v6865
    %v7473 = vunpack.c.h.b16 %v6865
    %v7474 = vunpack.c.l.b16 %v6866
    %v7475 = vunpack.c.h.b16 %v6866
    %v7476 = vunpack.c.l.b16 %v6867
    %v7477 = vunpack.c.h.b16 %v6867
    %v7478 = vunpack.c.l.b16 %v6868
    %v7479 = vunpack.c.h.b16 %v6868
    %v7480 = vunpack.c.l.b16 %v6869
    %v7481 = vunpack.c.h.b16 %v6869
    %v7482 = vunpack.c.l.b16 %v6870
    %v7483 = vunpack.c.h.b16 %v6870
    %v7484 = vunpack.c.l.b16 %v6871
    %v7485 = vunpack.c.h.b16 %v6871
    %v7486 = vunpack.c.l.b16 %v6872
    %v7487 = vunpack.c.h.b16 %v6872
    %v7488 = vunpack.c.l.b16 %v6873
    %v7489 = vunpack.c.h.b16 %v6873
    %v7490 = vunpack.c.l.b16 %v6874
    %v7491 = vunpack.c.h.b16 %v6874
    %v7492 = vunpack.c.l.b16 %v6875
    %v7493 = vunpack.c.h.b16 %v6875
    %v7494 = vunpack.c.l.b16 %v6876
    %v7495 = vunpack.c.h.b16 %v6876
    %v7496 = vunpack.c.l.b16 %v6877
    %v7497 = vunpack.c.h.b16 %v6877
    %v7498 = vunpack.c.l.b16 %v6878
    %v7499 = vunpack.c.h.b16 %v6878
    %v7500 = vunpack.c.l.b16 %v6879
    %v7501 = vunpack.c.h.b16 %v6879
    %v7502 = vunpack.c.l.b16 %v6880
    %v7503 = vunpack.c.h.b16 %v6880
    %v7504 = vunpack.c.l.b16 %v6881
    %v7505 = vunpack.c.h.b16 %v6881
    %v7506 = vunpack.c.l.b16 %v6882
    %v7507 = vunpack.c.h.b16 %v6882
    %v7508 = vunpack.c.l.b16 %v6883
    %v7509 = vunpack.c.h.b16 %v6883
    %v7510 = vunpack.c.l.b16 %v6884
    %v7511 = vunpack.c.h.b16 %v6884
    %v7512 = vunpack.c.l.b16 %v6885
    %v7513 = vunpack.c.h.b16 %v6885
    %v7514 = vunpack.c.l.b16 %v6886
    %v7515 = vunpack.c.h.b16 %v6886
    %v7516 = vunpack.c.l.b16 %v6887
    %v7517 = vunpack.c.h.b16 %v6887
    %v7518 = vunpack.c.l.b16 %v6888
    %v7519 = vunpack.c.h.b16 %v6888
    %v7520 = vunpack.c.l.b16 %v6889
    %v7521 = vunpack.c.h.b16 %v6889
    %v7522 = vunpack.c.l.b16 %v6890
    %v7523 = vunpack.c.h.b16 %v6890
    %v7524 = vunpack.c.l.b16 %v6891
    %v7525 = vunpack.c.h.b16 %v6891
    %v7526 = vunpack.c.l.b16 %v6892
    %v7527 = vunpack.c.h.b16 %v6892
    %v7528 = vunpack.c.l.b16 %v6893
    %v7529 = vunpack.c.h.b16 %v6893
    %v7530 = vunpack.c.l.b16 %v6894
    %v7531 = vunpack.c.h.b16 %v6894
    %v7532 = vunpack.c.l.b16 %v6895
    %v7533 = vunpack.c.h.b16 %v6895
    %v7534 = vunpack.c.l.b16 %v6896
    %v7535 = vunpack.c.h.b16 %v6896
    %v7536 = vunpack.c.l.b16 %v6897
    %v7537 = vunpack.c.h.b16 %v6897
    %v7538 = vunpack.c.l.b16 %v6898
    %v7539 = vunpack.c.h.b16 %v6898
    %v7540 = vunpack.c.l.b16 %v6899
    %v7541 = vunpack.c.h.b16 %v6899
    %v7542 = vunpack.c.l.b16 %v6900
    %v7543 = vunpack.c.h.b16 %v6900
    %v7544 = vunpack.c.l.b16 %v6901
    %v7545 = vunpack.c.h.b16 %v6901
    %v7546 = vunpack.c.l.b16 %v6902
    %v7547 = vunpack.c.h.b16 %v6902
    %v7548 = vunpack.c.l.b16 %v6903
    %v7549 = vunpack.c.h.b16 %v6903
    %v7550 = vunpack.c.l.b16 %v6904
    %v7551 = vunpack.c.h.b16 %v6904
    %v7552 = vunpack.c.l.b16 %v6905
    %v7553 = vunpack.c.h.b16 %v6905
    %v7554 = vunpack.c.l.b16 %v6906
    %v7555 = vunpack.c.h.b16 %v6906
    %v7556 = vunpack.c.l.b16 %v6907
    %v7557 = vunpack.c.h.b16 %v6907
    %v7558 = vunpack.c.l.b16 %v6908
    %v7559 = vunpack.c.h.b16 %v6908
    %v7560 = vunpack.c.l.b16 %v6909
    %v7561 = vunpack.c.h.b16 %v6909
    %v7562 = vunpack.c.l.b16 %v6910
    %v7563 = vunpack.c.h.b16 %v6910
    %v7564 = vunpack.c.l.b16 %v6911
    %v7565 = vunpack.c.h.b16 %v6911
    %v7566 = vunpack.c.l.b16 %v6912
    %v7567 = vunpack.c.h.b16 %v6912
    %v7568 = vunpack.c.l.b16 %v6913
    %v7569 = vunpack.c.h.b16 %v6913
    %v7570 = vunpack.c.l.b16 %v6914
    %v7571 = vunpack.c.h.b16 %v6914
    %v7572 = vunpack.c.l.b16 %v6915
    %v7573 = vunpack.c.h.b16 %v6915
    %v7574 = vunpack.c.l.b16 %v6916
    %v7575 = vunpack.c.h.b16 %v6916
    %v7576 = vunpack.c.l.b16 %v6917
    %v7577 = vunpack.c.h.b16 %v6917
    %v7578 = vunpack.c.l.b16 %v6918
    %v7579 = vunpack.c.h.b16 %v6918
    %v7580 = vunpack.c.l.b16 %v6919
    %v7581 = vunpack.c.h.b16 %v6919
    %v7582 = vunpack.c.l.b16 %v6920
    %v7583 = vunpack.c.h.b16 %v6920
    %v7584 = vunpack.c.l.b16 %v6921
    %v7585 = vunpack.c.h.b16 %v6921
    %v7586 = vunpack.c.l.b16 %v6922
    %v7587 = vunpack.c.h.b16 %v6922
    %v7588 = vunpack.c.l.b16 %v6923
    %v7589 = vunpack.c.h.b16 %v6923
    %v7590 = vunpack.c.l.b16 %v6924
    %v7591 = vunpack.c.h.b16 %v6924
    %v7592 = vunpack.c.l.b16 %v6925
    %v7593 = vunpack.c.h.b16 %v6925
    %v7594 = vunpack.c.l.b16 %v6926
    %v7595 = vunpack.c.h.b16 %v6926
    %v7596 = vunpack.c.l.b16 %v6927
    %v7597 = vunpack.c.h.b16 %v6927
    %v7598 = vunpack.c.l.b16 %v6928
    %v7599 = vunpack.c.h.b16 %v6928
    %v7600 = vunpack.c.l.b16 %v6929
    %v7601 = vunpack.c.h.b16 %v6929
    %v7602 = vunpack.c.l.b16 %v6930
    %v7603 = vunpack.c.h.b16 %v6930
    %v7604 = vunpack.c.l.b16 %v6931
    %v7605 = vunpack.c.h.b16 %v6931
    %v7606 = vunpack.c.l.b16 %v6932
    %v7607 = vunpack.c.h.b16 %v6932
    %v7608 = vunpack.c.l.b16 %v6933
    %v7609 = vunpack.c.h.b16 %v6933
    %v7610 = vunpack.c.l.b16 %v6934
    %v7611 = vunpack.c.h.b16 %v6934
    %v7612 = vunpack.c.l.b16 %v6935
    %v7613 = vunpack.c.h.b16 %v6935
    %v7614 = vunpack.c.l.b16 %v6936
    %v7615 = vunpack.c.h.b16 %v6936
    %v7616 = vunpack.c.l.b16 %v6937
    %v7617 = vunpack.c.h.b16 %v6937
    %v7618 = vunpack.c.l.b16 %v6938
    %v7619 = vunpack.c.h.b16 %v6938
    %v7620 = vunpack.c.l.b16 %v6939
    %v7621 = vunpack.c.h.b16 %v6939
    %v7622 = vunpack.c.l.b16 %v6940
    %v7623 = vunpack.c.h.b16 %v6940
    %v7624 = vunpack.c.l.b16 %v6941
    %v7625 = vunpack.c.h.b16 %v6941
    %v7626 = vunpack.c.l.b16 %v6942
    %v7627 = vunpack.c.h.b16 %v6942
    %v7628 = vunpack.c.l.b16 %v6943
    %v7629 = vunpack.c.h.b16 %v6943
    %v7630 = vunpack.c.l.b16 %v6944
    %v7631 = vunpack.c.h.b16 %v6944
    %v7632 = vunpack.c.l.b16 %v6945
    %v7633 = vunpack.c.h.b16 %v6945
    %v7634 = vunpack.c.l.b16 %v6946
    %v7635 = vunpack.c.h.b16 %v6946
    %v7636 = vunpack.c.l.b16 %v6947
    %v7637 = vunpack.c.h.b16 %v6947
    %v7638 = vunpack.c.l.b16 %v6948
    %v7639 = vunpack.c.h.b16 %v6948
    %v7640 = vunpack.c.l.b16 %v6949
    %v7641 = vunpack.c.h.b16 %v6949
    %v7642 = vunpack.c.l.b16 %v6950
    %v7643 = vunpack.c.h.b16 %v6950
    %v7644 = vunpack.c.l.b16 %v6951
    %v7645 = vunpack.c.h.b16 %v6951
    %v7646 = vunpack.c.l.b16 %v6952
    %v7647 = vunpack.c.h.b16 %v6952
    %v7648 = vunpack.c.l.b16 %v6953
    %v7649 = vunpack.c.h.b16 %v6953
    %v7650 = vunpack.c.l.b16 %v6954
    %v7651 = vunpack.c.h.b16 %v6954
    %v7652 = vunpack.c.l.b16 %v6955
    %v7653 = vunpack.c.h.b16 %v6955
    %v7654 = vunpack.c.l.b16 %v6956
    %v7655 = vunpack.c.h.b16 %v6956
    %v7656 = vunpack.c.l.b16 %v6957
    %v7657 = vunpack.c.h.b16 %v6957
    %v7658 = vunpack.c.l.b16 %v6958
    %v7659 = vunpack.c.h.b16 %v6958
    %v7660 = vunpack.c.l.b16 %v6959
    %v7661 = vunpack.c.h.b16 %v6959
    %v7662 = vunpack.c.l.b16 %v6960
    %v7663 = vunpack.c.h.b16 %v6960
    %v7664 = vunpack.c.l.b16 %v6961
    %v7665 = vunpack.c.h.b16 %v6961
    %v7666 = vunpack.c.l.b16 %v6962
    %v7667 = vunpack.c.h.b16 %v6962
    %v7668 = vunpack.c.l.b16 %v6963
    %v7669 = vunpack.c.h.b16 %v6963
    %v7670 = vunpack.c.l.b16 %v6964
    %v7671 = vunpack.c.h.b16 %v6964
    %v7672 = vunpack.c.l.b16 %v6965
    %v7673 = vunpack.c.h.b16 %v6965
    %v7674 = vunpack.c.l.b16 %v6966
    %v7675 = vunpack.c.h.b16 %v6966
    %v7676 = vunpack.c.l.b16 %v6967
    %v7677 = vunpack.c.h.b16 %v6967
    %v7678 = vunpack.c.l.b16 %v6968
    %v7679 = vunpack.c.h.b16 %v6968
    %v7680 = vunpack.c.l.b16 %v6969
    %v7681 = vunpack.c.h.b16 %v6969
    %v7682 = vunpack.c.l.b16 %v6970
    %v7683 = vunpack.c.h.b16 %v6970
    %v7684 = vunpack.c.l.b16 %v6971
    %v7685 = vunpack.c.h.b16 %v6971
    %v7686 = vunpack.c.l.b16 %v6972
    %v7687 = vunpack.c.h.b16 %v6972
    %v7688 = vunpack.c.l.b16 %v6973
    %v7689 = vunpack.c.h.b16 %v6973
    %v7690 = vunpack.c.l.b16 %v6974
    %v7691 = vunpack.c.h.b16 %v6974
    %v7692 = vunpack.c.l.b16 %v6975
    %v7693 = vunpack.c.h.b16 %v6975
    %v7694 = vunpack.c.l.b16 %v6976
    %v7695 = vunpack.c.h.b16 %v6976
    %v7696 = vunpack.c.l.b16 %v6977
    %v7697 = vunpack.c.h.b16 %v6977
    %v7698 = vunpack.c.l.b16 %v6978
    %v7699 = vunpack.c.h.b16 %v6978
    %v7700 = vunpack.c.l.b16 %v6979
    %v7701 = vunpack.c.h.b16 %v6979
    %v7702 = vunpack.c.l.b16 %v6980
    %v7703 = vunpack.c.h.b16 %v6980
    %v7704 = vunpack.c.l.b16 %v6981
    %v7705 = vunpack.c.h.b16 %v6981
    %v7706 = vunpack.c.l.b16 %v6982
    %v7707 = vunpack.c.h.b16 %v6982
    %v7708 = vunpack.c.l.b16 %v6983
    %v7709 = vunpack.c.h.b16 %v6983
    %v7710 = vunpack.c.l.b16 %v6984
    %v7711 = vunpack.c.h.b16 %v6984
    %v7712 = vunpack.c.l.b16 %v6985
    %v7713 = vunpack.c.h.b16 %v6985
    %v7714 = vunpack.c.l.b16 %v6986
    %v7715 = vunpack.c.h.b16 %v6986
    %v7716 = vunpack.c.l.b16 %v6987
    %v7717 = vunpack.c.h.b16 %v6987
    %v7718 = vunpack.c.l.b16 %v6988
    %v7719 = vunpack.c.h.b16 %v6988
    %v7720 = vunpack.c.l.b16 %v6989
    %v7721 = vunpack.c.h.b16 %v6989
    %v7722 = vunpack.c.l.b16 %v6990
    %v7723 = vunpack.c.h.b16 %v6990
    %v7724 = vunpack.c.l.b16 %v6991
    %v7725 = vunpack.c.h.b16 %v6991
    %v7726 = vunpack.c.l.b16 %v6992
    %v7727 = vunpack.c.h.b16 %v6992
    %v7728 = vunpack.c.l.b16 %v6993
    %v7729 = vunpack.c.h.b16 %v6993
    %v7730 = vunpack.c.l.b16 %v6994
    %v7731 = vunpack.c.h.b16 %v6994
    %v7732 = vunpack.c.l.b16 %v6995
    %v7733 = vunpack.c.h.b16 %v6995
    %v7734 = vunpack.c.l.b16 %v6996
    %v7735 = vunpack.c.h.b16 %v6996
    %v7736 = vunpack.c.l.b16 %v6997
    %v7737 = vunpack.c.h.b16 %v6997
    %v7738 = vunpack.c.l.b16 %v6998
    %v7739 = vunpack.c.h.b16 %v6998
    %v7740 = vunpack.c.l.b16 %v6999
    %v7741 = vunpack.c.h.b16 %v6999
    %v7742 = vunpack.c.l.b16 %v7000
    %v7743 = vunpack.c.h.b16 %v7000
    %v7744 = vunpack.c.l.b16 %v7001
    %v7745 = vunpack.c.h.b16 %v7001
    %v7746 = vunpack.c.l.b16 %v7002
    %v7747 = vunpack.c.h.b16 %v7002
    %v7748 = vunpack.c.l.b16 %v7003
    %v7749 = vunpack.c.h.b16 %v7003
    %v7750 = vunpack.c.l.b16 %v7004
    %v7751 = vunpack.c.h.b16 %v7004
    %v7752 = vunpack.c.l.b16 %v7005
    %v7753 = vunpack.c.h.b16 %v7005
    %v7754 = vunpack.c.l.b16 %v7006
    %v7755 = vunpack.c.h.b16 %v7006
    %v7756 = vunpack.c.l.b16 %v7007
    %v7757 = vunpack.c.h.b16 %v7007
    %v7758 = vunpack.c.l.b16 %v7008
    %v7759 = vunpack.c.h.b16 %v7008
    %v7760 = vunpack.c.l.b16 %v7009
    %v7761 = vunpack.c.h.b16 %v7009
    %v7762 = vunpack.c.l.b16 %v7010
    %v7763 = vunpack.c.h.b16 %v7010
    %v7764 = vunpack.c.l.b16 %v7011
    %v7765 = vunpack.c.h.b16 %v7011
    %v7766 = vunpack.c.l.b16 %v7012
    %v7767 = vunpack.c.h.b16 %v7012
    %v7768 = vunpack.c.l.b16 %v7013
    %v7769 = vunpack.c.h.b16 %v7013
    %v7770 = vunpack.c.l.b16 %v7014
    %v7771 = vunpack.c.h.b16 %v7014
    %v7772 = vunpack.c.l.b16 %v7015
    %v7773 = vunpack.c.h.b16 %v7015
    %v7774 = vunpack.c.l.b16 %v7016
    %v7775 = vunpack.c.h.b16 %v7016
    %v7776 = vunpack.c.l.b16 %v7017
    %v7777 = vunpack.c.h.b16 %v7017
    %v7778 = vunpack.c.l.b16 %v7018
    %v7779 = vunpack.c.h.b16 %v7018
    %v7780 = vunpack.c.l.b16 %v7019
    %v7781 = vunpack.c.h.b16 %v7019
    %v7782 = vunpack.c.l.b16 %v7020
    %v7783 = vunpack.c.h.b16 %v7020
    %v7784 = vunpack.c.l.b16 %v7021
    %v7785 = vunpack.c.h.b16 %v7021
    %v7786 = vunpack.c.l.b16 %v7022
    %v7787 = vunpack.c.h.b16 %v7022
    %v7788 = vunpack.c.l.b16 %v7023
    %v7789 = vunpack.c.h.b16 %v7023
    %v7790 = vunpack.c.l.b16 %v7024
    %v7791 = vunpack.c.h.b16 %v7024
    %v7792 = vunpack.c.l.b16 %v7025
    %v7793 = vunpack.c.h.b16 %v7025
    %v7794 = vunpack.c.l.b16 %v7026
    %v7795 = vunpack.c.h.b16 %v7026
    %v7796 = vunpack.c.l.b16 %v7027
    %v7797 = vunpack.c.h.b16 %v7027
    %v7798 = vunpack.c.l.b16 %v7028
    %v7799 = vunpack.c.h.b16 %v7028
    %v7800 = vunpack.c.l.b16 %v7029
    %v7801 = vunpack.c.h.b16 %v7029
    %v7802 = vunpack.c.l.b16 %v7030
    %v7803 = vunpack.c.h.b16 %v7030
    %v7804 = vunpack.c.l.b16 %v7031
    %v7805 = vunpack.c.h.b16 %v7031
    %v7806 = vunpack.c.l.b16 %v7032
    %v7807 = vunpack.c.h.b16 %v7032
    %v7808 = vunpack.c.l.b16 %v7033
    %v7809 = vunpack.c.h.b16 %v7033
    %v7810 = vunpack.c.l.b16 %v7034
    %v7811 = vunpack.c.h.b16 %v7034
    %v7812 = vunpack.c.l.b16 %v7035
    %v7813 = vunpack.c.h.b16 %v7035
    %v7814 = vunpack.c.l.b16 %v7036
    %v7815 = vunpack.c.h.b16 %v7036
    %v7816 = vunpack.c.l.b16 %v7037
    %v7817 = vunpack.c.h.b16 %v7037
    %v7818 = vunpack.c.l.b16 %v7038
    %v7819 = vunpack.c.h.b16 %v7038
    %v7820 = vunpack.c.l.b16 %v7039
    %v7821 = vunpack.c.h.b16 %v7039
    %v7822 = vunpack.c.l.b16 %v7040
    %v7823 = vunpack.c.h.b16 %v7040
    %v7824 = vunpack.c.l.b16 %v7041
    %v7825 = vunpack.c.h.b16 %v7041
    %v7826 = vunpack.c.l.b16 %v7042
    %v7827 = vunpack.c.h.b16 %v7042
    %v7828 = vunpack.c.l.b16 %v7043
    %v7829 = vunpack.c.h.b16 %v7043
    %v7830 = vunpack.c.l.b16 %v7044
    %v7831 = vunpack.c.h.b16 %v7044
    %v7832 = vunpack.c.l.b16 %v7045
    %v7833 = vunpack.c.h.b16 %v7045
    %v7834 = vunpack.c.l.b16 %v7046
    %v7835 = vunpack.c.h.b16 %v7046
    %v7836 = vunpack.c.l.b16 %v7047
    %v7837 = vunpack.c.h.b16 %v7047
    %v7838 = vunpack.c.l.b16 %v7048
    %v7839 = vunpack.c.h.b16 %v7048
    %v7840 = vunpack.c.l.b16 %v7049
    %v7841 = vunpack.c.h.b16 %v7049
    %v7842 = vunpack.c.l.b16 %v7050
    %v7843 = vunpack.c.h.b16 %v7050
    %v7844 = vunpack.c.l.b16 %v7051
    %v7845 = vunpack.c.h.b16 %v7051
    %v7846 = vunpack.c.l.b16 %v7052
    %v7847 = vunpack.c.h.b16 %v7052
    %v7848 = vunpack.c.l.b16 %v7053
    %v7849 = vunpack.c.h.b16 %v7053
    %v7850 = vunpack.c.l.b16 %v7054
    %v7851 = vunpack.c.h.b16 %v7054
    %v7852 = vunpack.c.l.b16 %v7055
    %v7853 = vunpack.c.h.b16 %v7055
    %v7854 = vunpack.c.l.b16 %v7056
    %v7855 = vunpack.c.h.b16 %v7056
    %v7856 = vunpack.c.l.b16 %v7057
    %v7857 = vunpack.c.h.b16 %v7057
    %v7858 = vunpack.c.l.b16 %v7058
    %v7859 = vunpack.c.h.b16 %v7058
    %v7860 = vunpack.c.l.b16 %v7059
    %v7861 = vunpack.c.h.b16 %v7059
    %v7862 = vunpack.c.l.b16 %v7060
    %v7863 = vunpack.c.h.b16 %v7060
    %v7864 = vunpack.c.l.b16 %v7061
    %v7865 = vunpack.c.h.b16 %v7061
    %v7866 = vunpack.c.l.b16 %v7062
    %v7867 = vunpack.c.h.b16 %v7062
    %v7868 = vunpack.c.l.b16 %v7063
    %v7869 = vunpack.c.h.b16 %v7063
    %v7870 = vunpack.c.l.b16 %v7064
    %v7871 = vunpack.c.h.b16 %v7064
    %v7872 = vunpack.c.l.b16 %v7065
    %v7873 = vunpack.c.h.b16 %v7065
    %v7874 = vunpack.c.l.b16 %v7066
    %v7875 = vunpack.c.h.b16 %v7066
    %v7876 = vpack.c.b16 %v7372, %v7364
    %v7877 = vpack.c.b16 %v7373, %v7365
    %v7878 = vpack.c.b16 %v7374, %v7366
    %v7879 = vpack.c.b16 %v7375, %v7367
    %v7880 = vpack.c.b16 %v7376, %v7368
    %v7881 = vpack.c.b16 %v7377, %v7369
    %v7882 = vpack.c.b16 %v7378, %v7370
    %v7883 = vpack.c.b16 %v7379, %v7371
    %v7884 = vpack.c.b16 %v7388, %v7380
    %v7885 = vpack.c.b16 %v7389, %v7381
    %v7886 = vpack.c.b16 %v7390, %v7382
    %v7887 = vpack.c.b16 %v7391, %v7383
    %v7888 = vpack.c.b16 %v7392, %v7384
    %v7889 = vpack.c.b16 %v7393, %v7385
    %v7890 = vpack.c.b16 %v7394, %v7386
    %v7891 = vpack.c.b16 %v7395, %v7387
    %v7892 = vpack.c.b16 %v7404, %v7396
    %v7893 = vpack.c.b16 %v7405, %v7397
    %v7894 = vpack.c.b16 %v7406, %v7398
    %v7895 = vpack.c.b16 %v7407, %v7399
    %v7896 = vpack.c.b16 %v7408, %v7400
    %v7897 = vpack.c.b16 %v7409, %v7401
    %v7898 = vpack.c.b16 %v7410, %v7402
    %v7899 = vpack.c.b16 %v7411, %v7403
    %v7900 = vpack.c.b16 %v7420, %v7412
    %v7901 = vpack.c.b16 %v7421, %v7413
    %v7902 = vpack.c.b16 %v7422, %v7414
    %v7903 = vpack.c.b16 %v7423, %v7415
    %v7904 = vpack.c.b16 %v7424, %v7416
    %v7905 = vpack.c.b16 %v7425, %v7417
    %v7906 = vpack.c.b16 %v7426, %v7418
    %v7907 = vpack.c.b16 %v7427, %v7419
    %v7908 = vpack.c.b16 %v7436, %v7428
    %v7909 = vpack.c.b16 %v7437, %v7429
    %v7910 = vpack.c.b16 %v7438, %v7430
    %v7911 = vpack.c.b16 %v7439, %v7431
    %v7912 = vpack.c.b16 %v7440, %v7432
    %v7913 = vpack.c.b16 %v7441, %v7433
    %v7914 = vpack.c.b16 %v7442, %v7434
    %v7915 = vpack.c.b16 %v7443, %v7435
    %v7916 = vpack.c.b16 %v7452, %v7444
    %v7917 = vpack.c.b16 %v7453, %v7445
    %v7918 = vpack.c.b16 %v7454, %v7446
    %v7919 = vpack.c.b16 %v7455, %v7447
    %v7920 = vpack.c.b16 %v7456, %v7448
    %v7921 = vpack.c.b16 %v7457, %v7449
    %v7922 = vpack.c.b16 %v7458, %v7450
    %v7923 = vpack.c.b16 %v7459, %v7451
    %v7924 = vpack.c.b16 %v7468, %v7460
    %v7925 = vpack.c.b16 %v7469, %v7461
    %v7926 = vpack.c.b16 %v7470, %v7462
    %v7927 = vpack.c.b16 %v7471, %v7463
    %v7928 = vpack.c.b16 %v7472, %v7464
    %v7929 = vpack.c.b16 %v7473, %v7465
    %v7930 = vpack.c.b16 %v7474, %v7466
    %v7931 = vpack.c.b16 %v7475, %v7467
    %v7932 = vpack.c.b16 %v7484, %v7476
    %v7933 = vpack.c.b16 %v7485, %v7477
    %v7934 = vpack.c.b16 %v7486, %v7478
    %v7935 = vpack.c.b16 %v7487, %v7479
    %v7936 = vpack.c.b16 %v7488, %v7480
    %v7937 = vpack.c.b16 %v7489, %v7481
    %v7938 = vpack.c.b16 %v7490, %v7482
    %v7939 = vpack.c.b16 %v7491, %v7483
    %v7940 = vpack.c.b16 %v7500, %v7492
    %v7941 = vpack.c.b16 %v7501, %v7493
    %v7942 = vpack.c.b16 %v7502, %v7494
    %v7943 = vpack.c.b16 %v7503, %v7495
    %v7944 = vpack.c.b16 %v7504, %v7496
    %v7945 = vpack.c.b16 %v7505, %v7497
    %v7946 = vpack.c.b16 %v7506, %v7498
    %v7947 = vpack.c.b16 %v7507, %v7499
    %v7948 = vpack.c.b16 %v7516, %v7508
    %v7949 = vpack.c.b16 %v7517, %v7509
    %v7950 = vpack.c.b16 %v7518, %v7510
    %v7951 = vpack.c.b16 %v7519, %v7511
    %v7952 = vpack.c.b16 %v7520, %v7512
    %v7953 = vpack.c.b16 %v7521, %v7513
    %v7954 = vpack.c.b16 %v7522, %v7514
    %v7955 = vpack.c.b16 %v7523, %v7515
    %v7956 = vpack.c.b16 %v7532, %v7524
    %v7957 = vpack.c.b16 %v7533, %v7525
    %v7958 = vpack.c.b16 %v7534, %v7526
    %v7959 = vpack.c.b16 %v7535, %v7527
    %v7960 = vpack.c.b16 %v7536, %v7528
    %v7961 = vpack.c.b16 %v7537, %v7529
    %v7962 = vpack.c.b16 %v7538, %v7530
    %v7963 = vpack.c.b16 %v7539, %v7531
    %v7964 = vpack.c.b16 %v7548, %v7540
    %v7965 = vpack.c.b16 %v7549, %v7541
    %v7966 = vpack.c.b16 %v7550, %v7542
    %v7967 = vpack.c.b16 %v7551, %v7543
    %v7968 = vpack.c.b16 %v7552, %v7544
    %v7969 = vpack.c.b16 %v7553, %v7545
    %v7970 = vpack.c.b16 %v7554, %v7546
    %v7971 = vpack.c.b16 %v7555, %v7547
    %v7972 = vpack.c.b16 %v7564, %v7556
    %v7973 = vpack.c.b16 %v7565, %v7557
    %v7974 = vpack.c.b16 %v7566, %v7558
    %v7975 = vpack.c.b16 %v7567, %v7559
    %v7976 = vpack.c.b16 %v7568, %v7560
    %v7977 = vpack.c.b16 %v7569, %v7561
    %v7978 = vpack.c.b16 %v7570, %v7562
    %v7979 = vpack.c.b16 %v7571, %v7563
    %v7980 = vpack.c.b16 %v7580, %v7572
    %v7981 = vpack.c.b16 %v7581, %v7573
    %v7982 = vpack.c.b16 %v7582, %v7574
    %v7983 = vpack.c.b16 %v7583, %v7575
    %v7984 = vpack.c.b16 %v7584, %v7576
    %v7985 = vpack.c.b16 %v7585, %v7577
    %v7986 = vpack.c.b16 %v7586, %v7578
    %v7987 = vpack.c.b16 %v7587, %v7579
    %v7988 = vpack.c.b16 %v7596, %v7588
    %v7989 = vpack.c.b16 %v7597, %v7589
    %v7990 = vpack.c.b16 %v7598, %v7590
    %v7991 = vpack.c.b16 %v7599, %v7591
    %v7992 = vpack.c.b16 %v7600, %v7592
    %v7993 = vpack.c.b16 %v7601, %v7593
    %v7994 = vpack.c.b16 %v7602, %v7594
    %v7995 = vpack.c.b16 %v7603, %v7595
    %v7996 = vpack.c.b16 %v7612, %v7604
    %v7997 = vpack.c.b16 %v7613, %v7605
    %v7998 = vpack.c.b16 %v7614, %v7606
    %v7999 = vpack.c.b16 %v7615, %v7607
    %v8000 = vpack.c.b16 %v7616, %v7608
    %v8001 = vpack.c.b16 %v7617, %v7609
    %v8002 = vpack.c.b16 %v7618, %v7610
    %v8003 = vpack.c.b16 %v7619, %v7611
    %v8004 = vpack.c.b16 %v7628, %v7620
    %v8005 = vpack.c.b16 %v7629, %v7621
    %v8006 = vpack.c.b16 %v7630, %v7622
    %v8007 = vpack.c.b16 %v7631, %v7623
    %v8008 = vpack.c.b16 %v7632, %v7624
    %v8009 = vpack.c.b16 %v7633, %v7625
    %v8010 = vpack.c.b16 %v7634, %v7626
    %v8011 = vpack.c.b16 %v7635, %v7627
    %v8012 = vpack.c.b16 %v7644, %v7636
    %v8013 = vpack.c.b16 %v7645, %v7637
    %v8014 = vpack.c.b16 %v7646, %v7638
    %v8015 = vpack.c.b16 %v7647, %v7639
    %v8016 = vpack.c.b16 %v7648, %v7640
    %v8017 = vpack.c.b16 %v7649, %v7641
    %v8018 = vpack.c.b16 %v7650, %v7642
    %v8019 = vpack.c.b16 %v7651, %v7643
    %v8020 = vpack.c.b16 %v7660, %v7652
    %v8021 = vpack.c.b16 %v7661, %v7653
    %v8022 = vpack.c.b16 %v7662, %v7654
    %v8023 = vpack.c.b16 %v7663, %v7655
    %v8024 = vpack.c.b16 %v7664, %v7656
    %v8025 = vpack.c.b16 %v7665, %v7657
    %v8026 = vpack.c.b16 %v7666, %v7658
    %v8027 = vpack.c.b16 %v7667, %v7659
    %v8028 = vpack.c.b16 %v7676, %v7668
    %v8029 = vpack.c.b16 %v7677, %v7669
    %v8030 = vpack.c.b16 %v7678, %v7670
    %v8031 = vpack.c.b16 %v7679, %v7671
    %v8032 = vpack.c.b16 %v7680, %v7672
    %v8033 = vpack.c.b16 %v7681, %v7673
    %v8034 = vpack.c.b16 %v7682, %v7674
    %v8035 = vpack.c.b16 %v7683, %v7675
    %v8036 = vpack.c.b16 %v7692, %v7684
    %v8037 = vpack.c.b16 %v7693, %v7685
    %v8038 = vpack.c.b16 %v7694, %v7686
    %v8039 = vpack.c.b16 %v7695, %v7687
    %v8040 = vpack.c.b16 %v7696, %v7688
    %v8041 = vpack.c.b16 %v7697, %v7689
    %v8042 = vpack.c.b16 %v7698, %v7690
    %v8043 = vpack.c.b16 %v7699, %v7691
    %v8044 = vpack.c.b16 %v7708, %v7700
    %v8045 = vpack.c.b16 %v7709, %v7701
    %v8046 = vpack.c.b16 %v7710, %v7702
    %v8047 = vpack.c.b16 %v7711, %v7703
    %v8048 = vpack.c.b16 %v7712, %v7704
    %v8049 = vpack.c.b16 %v7713, %v7705
    %v8050 = vpack.c.b16 %v7714, %v7706
    %v8051 = vpack.c.b16 %v7715, %v7707
    %v8052 = vpack.c.b16 %v7724, %v7716
    %v8053 = vpack.c.b16 %v7725, %v7717
    %v8054 = vpack.c.b16 %v7726, %v7718
    %v8055 = vpack.c.b16 %v7727, %v7719
    %v8056 = vpack.c.b16 %v7728, %v7720
    %v8057 = vpack.c.b16 %v7729, %v7721
    %v8058 = vpack.c.b16 %v7730, %v7722
    %v8059 = vpack.c.b16 %v7731, %v7723
    %v8060 = vpack.c.b16 %v7740, %v7732
    %v8061 = vpack.c.b16 %v7741, %v7733
    %v8062 = vpack.c.b16 %v7742, %v7734
    %v8063 = vpack.c.b16 %v7743, %v7735
    %v8064 = vpack.c.b16 %v7744, %v7736
    %v8065 = vpack.c.b16 %v7745, %v7737
    %v8066 = vpack.c.b16 %v7746, %v7738
    %v8067 = vpack.c.b16 %v7747, %v7739
    %v8068 = vpack.c.b16 %v7756, %v7748
    %v8069 = vpack.c.b16 %v7757, %v7749
    %v8070 = vpack.c.b16 %v7758, %v7750
    %v8071 = vpack.c.b16 %v7759, %v7751
    %v8072 = vpack.c.b16 %v7760, %v7752
    %v8073 = vpack.c.b16 %v7761, %v7753
    %v8074 = vpack.c.b16 %v7762, %v7754
    %v8075 = vpack.c.b16 %v7763, %v7755
    %v8076 = vpack.c.b16 %v7772, %v7764
    %v8077 = vpack.c.b16 %v7773, %v7765
    %v8078 = vpack.c.b16 %v7774, %v7766
    %v8079 = vpack.c.b16 %v7775, %v7767
    %v8080 = vpack.c.b16 %v7776, %v7768
    %v8081 = vpack.c.b16 %v7777, %v7769
    %v8082 = vpack.c.b16 %v7778, %v7770
    %v8083 = vpack.c.b16 %v7779, %v7771
    %v8084 = vpack.c.b16 %v7788, %v7780
    %v8085 = vpack.c.b16 %v7789, %v7781
    %v8086 = vpack.c.b16 %v7790, %v7782
    %v8087 = vpack.c.b16 %v7791, %v7783
    %v8088 = vpack.c.b16 %v7792, %v7784
    %v8089 = vpack.c.b16 %v7793, %v7785
    %v8090 = vpack.c.b16 %v7794, %v7786
    %v8091 = vpack.c.b16 %v7795, %v7787
    %v8092 = vpack.c.b16 %v7804, %v7796
    %v8093 = vpack.c.b16 %v7805, %v7797
    %v8094 = vpack.c.b16 %v7806, %v7798
    %v8095 = vpack.c.b16 %v7807, %v7799
    %v8096 = vpack.c.b16 %v7808, %v7800
    %v8097 = vpack.c.b16 %v7809, %v7801
    %v8098 = vpack.c.b16 %v7810, %v7802
    %v8099 = vpack.c.b16 %v7811, %v7803
    %v8100 = vpack.c.b16 %v7820, %v7812
    %v8101 = vpack.c.b16 %v7821, %v7813
    %v8102 = vpack.c.b16 %v7822, %v7814
    %v8103 = vpack.c.b16 %v7823, %v7815
    %v8104 = vpack.c.b16 %v7824, %v7816
    %v8105 = vpack.c.b16 %v7825, %v7817
    %v8106 = vpack.c.b16 %v7826, %v7818
    %v8107 = vpack.c.b16 %v7827, %v7819
    %v8108 = vpack.c.b16 %v7836, %v7828
    %v8109 = vpack.c.b16 %v7837, %v7829
    %v8110 = vpack.c.b16 %v7838, %v7830
    %v8111 = vpack.c.b16 %v7839, %v7831
    %v8112 = vpack.c.b16 %v7840, %v7832
    %v8113 = vpack.c.b16 %v7841, %v7833
    %v8114 = vpack.c.b16 %v7842, %v7834
    %v8115 = vpack.c.b16 %v7843, %v7835
    %v8116 = vpack.c.b16 %v7852, %v7844
    %v8117 = vpack.c.b16 %v7853, %v7845
    %v8118 = vpack.c.b16 %v7854, %v7846
    %v8119 = vpack.c.b16 %v7855, %v7847
    %v8120 = vpack.c.b16 %v7856, %v7848
    %v8121 = vpack.c.b16 %v7857, %v7849
    %v8122 = vpack.c.b16 %v7858, %v7850
    %v8123 = vpack.c.b16 %v7859, %v7851
    %v8124 = vpack.c.b16 %v7868, %v7860
    %v8125 = vpack.c.b16 %v7869, %v7861
    %v8126 = vpack.c.b16 %v7870, %v7862
    %v8127 = vpack.c.b16 %v7871, %v7863
    %v8128 = vpack.c.b16 %v7872, %v7864
    %v8129 = vpack.c.b16 %v7873, %v7865
    %v8130 = vpack.c.b16 %v7874, %v7866
    %v8131 = vpack.c.b16 %v7875, %v7867
    %8388 = vmatprep.subr.bf16.mxu0 %v7933
    %8389 = vmatpush1.bf16.msra.mxu0 %v7932
    %8390 = vmatprep.subr.bf16.mxu0 %v7925
    %8391 = vmatpush1.bf16.msra.mxu0 %v7924
    %8392 = vmatprep.subr.bf16.mxu0 %v7917
    %8393 = vmatpush1.bf16.msra.mxu0 %v7916
    %8394 = vmatprep.subr.bf16.mxu0 %v7909
    %8395 = vmatpush1.bf16.msra.mxu0 %v7908
    %8396 = vmatprep.subr.bf16.mxu0 %v7901
    %8397 = vmatpush1.bf16.msra.mxu0 %v7900
    %8398 = vmatprep.subr.bf16.mxu0 %v7893
    %8399 = vmatpush1.bf16.msra.mxu0 %v7892
    %8400 = vmatprep.subr.bf16.mxu0 %v7885
    %8401 = vmatpush1.bf16.msra.mxu0 %v7884
    %8402 = vmatprep.subr.bf16.mxu0 %v7877
    %8403 = vmatpush1.bf16.msra.mxu0 %v7876
    %8404 = vmatprep.subr.bf16.mxu0 %v7997
    %8405 = vmatpush2.bf16.msra.mxu0 %v7996
    %8406 = vmatprep.subr.bf16.mxu0 %v7989
    %8407 = vmatpush2.bf16.msra.mxu0 %v7988
    %8408 = vmatprep.subr.bf16.mxu0 %v7981
    %8409 = vmatpush2.bf16.msra.mxu0 %v7980
    %8410 = vmatprep.subr.bf16.mxu0 %v7973
    %8411 = vmatpush2.bf16.msra.mxu0 %v7972
    %8412 = vmatprep.subr.bf16.mxu0 %v7965
    %8413 = vmatpush2.bf16.msra.mxu0 %v7964
    %8414 = vmatprep.subr.bf16.mxu0 %v7957
    %8415 = vmatpush2.bf16.msra.mxu0 %v7956
    %8416 = vmatprep.subr.bf16.mxu0 %v7949
    %8417 = vmatpush2.bf16.msra.mxu0 %v7948
    %8418 = vmatprep.subr.bf16.mxu0 %v7941
    %8419 = vmatpush2.bf16.msra.mxu0 %v7940
    %8420 = vmatprep.mubr.bf16.mxu0 %v6808
    %8421 = vmatmul.mubr.bf16.gmra.mxu0 %v6807
    %v8422 = vpop.f32.mrf.mxu0
    %v8423 = vadd.f32 %v7071, %v8422
    %v8424 = vpop.f32.mrf.mxu0
    %v8425 = vadd.f32 %v7075, %v8424
    %v8426 = vpop.f32.mrf.mxu0
    %v8427 = vpop.f32.mrf.mxu0
    %8428 = vdwg.mxu0
    %8429 = vmatprep.subr.bf16.mxu0 %v8061
    %8430 = vmatpush1.bf16.msra.mxu0 %v8060
    %8431 = vmatprep.subr.bf16.mxu0 %v8053
    %8432 = vmatpush1.bf16.msra.mxu0 %v8052
    %8433 = vmatprep.subr.bf16.mxu0 %v8045
    %8434 = vmatpush1.bf16.msra.mxu0 %v8044
    %8435 = vmatprep.subr.bf16.mxu0 %v8037
    %8436 = vmatpush1.bf16.msra.mxu0 %v8036
    %8437 = vmatprep.subr.bf16.mxu0 %v8029
    %8438 = vmatpush1.bf16.msra.mxu0 %v8028
    %8439 = vmatprep.subr.bf16.mxu0 %v8021
    %8440 = vmatpush1.bf16.msra.mxu0 %v8020
    %8441 = vmatprep.subr.bf16.mxu0 %v8013
    %8442 = vmatpush1.bf16.msra.mxu0 %v8012
    %8443 = vmatprep.subr.bf16.mxu0 %v8005
    %8444 = vmatpush1.bf16.msra.mxu0 %v8004
    %8445 = vmatprep.subr.bf16.mxu0 %v8125
    %8446 = vmatpush2.bf16.msra.mxu0 %v8124
    %8447 = vmatprep.subr.bf16.mxu0 %v8117
    %8448 = vmatpush2.bf16.msra.mxu0 %v8116
    %8449 = vmatprep.subr.bf16.mxu0 %v8109
    %8450 = vmatpush2.bf16.msra.mxu0 %v8108
    %8451 = vmatprep.subr.bf16.mxu0 %v8101
    %8452 = vmatpush2.bf16.msra.mxu0 %v8100
    %8453 = vmatprep.subr.bf16.mxu0 %v8093
    %8454 = vmatpush2.bf16.msra.mxu0 %v8092
    %8455 = vmatprep.subr.bf16.mxu0 %v8085
    %8456 = vmatpush2.bf16.msra.mxu0 %v8084
    %8457 = vmatprep.subr.bf16.mxu0 %v8077
    %8458 = vmatpush2.bf16.msra.mxu0 %v8076
    %8459 = vmatprep.subr.bf16.mxu0 %v8069
    %8460 = vmatpush2.bf16.msra.mxu0 %v8068
    %8461 = vmatprep.mubr.bf16.mxu0 %v6810
    %8462 = vmatmul.mubr.bf16.gmra.mxu0 %v6809
    %v8463 = vpop.f32.mrf.mxu0
    %v8464 = vadd.f32 %v8423, %v8463
    %v8465 = vpop.f32.mrf.mxu0
    %v8466 = vadd.f32 %v8425, %v8465
    %v8467 = vpop.f32.mrf.mxu0
    %v8468 = vpop.f32.mrf.mxu0
    %8469 = vdwg.mxu0
    %8470 = vmatprep.subr.bf16.mxu0 %v7935
    %8471 = vmatpush1.bf16.msra.mxu0 %v7934
    %8472 = vmatprep.subr.bf16.mxu0 %v7927
    %8473 = vmatpush1.bf16.msra.mxu0 %v7926
    %8474 = vmatprep.subr.bf16.mxu0 %v7919
    %8475 = vmatpush1.bf16.msra.mxu0 %v7918
    %8476 = vmatprep.subr.bf16.mxu0 %v7911
    %8477 = vmatpush1.bf16.msra.mxu0 %v7910
    %8478 = vmatprep.subr.bf16.mxu0 %v7903
    %8479 = vmatpush1.bf16.msra.mxu0 %v7902
    %8480 = vmatprep.subr.bf16.mxu0 %v7895
    %8481 = vmatpush1.bf16.msra.mxu0 %v7894
    %8482 = vmatprep.subr.bf16.mxu0 %v7887
    %8483 = vmatpush1.bf16.msra.mxu0 %v7886
    %8484 = vmatprep.subr.bf16.mxu0 %v7879
    %8485 = vmatpush1.bf16.msra.mxu0 %v7878
    %8486 = vmatprep.subr.bf16.mxu0 %v7999
    %8487 = vmatpush2.bf16.msra.mxu0 %v7998
    %8488 = vmatprep.subr.bf16.mxu0 %v7991
    %8489 = vmatpush2.bf16.msra.mxu0 %v7990
    %8490 = vmatprep.subr.bf16.mxu0 %v7983
    %8491 = vmatpush2.bf16.msra.mxu0 %v7982
    %8492 = vmatprep.subr.bf16.mxu0 %v7975
    %8493 = vmatpush2.bf16.msra.mxu0 %v7974
    %8494 = vmatprep.subr.bf16.mxu0 %v7967
    %8495 = vmatpush2.bf16.msra.mxu0 %v7966
    %8496 = vmatprep.subr.bf16.mxu0 %v7959
    %8497 = vmatpush2.bf16.msra.mxu0 %v7958
    %8498 = vmatprep.subr.bf16.mxu0 %v7951
    %8499 = vmatpush2.bf16.msra.mxu0 %v7950
    %8500 = vmatprep.subr.bf16.mxu0 %v7943
    %8501 = vmatpush2.bf16.msra.mxu0 %v7942
    %8502 = vmatprep.mubr.bf16.mxu0 %v6808
    %8503 = vmatmul.mubr.bf16.gmra.mxu0 %v6807
    %v8504 = vpop.f32.mrf.mxu0
    %v8505 = vadd.f32 %v7079, %v8504
    %v8506 = vpop.f32.mrf.mxu0
    %v8507 = vadd.f32 %v7083, %v8506
    %v8508 = vpop.f32.mrf.mxu0
    %v8509 = vpop.f32.mrf.mxu0
    %8510 = vdwg.mxu0
    %8511 = vmatprep.subr.bf16.mxu0 %v8063
    %8512 = vmatpush1.bf16.msra.mxu0 %v8062
    %8513 = vmatprep.subr.bf16.mxu0 %v8055
    %8514 = vmatpush1.bf16.msra.mxu0 %v8054
    %8515 = vmatprep.subr.bf16.mxu0 %v8047
    %8516 = vmatpush1.bf16.msra.mxu0 %v8046
    %8517 = vmatprep.subr.bf16.mxu0 %v8039
    %8518 = vmatpush1.bf16.msra.mxu0 %v8038
    %8519 = vmatprep.subr.bf16.mxu0 %v8031
    %8520 = vmatpush1.bf16.msra.mxu0 %v8030
    %8521 = vmatprep.subr.bf16.mxu0 %v8023
    %8522 = vmatpush1.bf16.msra.mxu0 %v8022
    %8523 = vmatprep.subr.bf16.mxu0 %v8015
    %8524 = vmatpush1.bf16.msra.mxu0 %v8014
    %8525 = vmatprep.subr.bf16.mxu0 %v8007
    %8526 = vmatpush1.bf16.msra.mxu0 %v8006
    %8527 = vmatprep.subr.bf16.mxu0 %v8127
    %8528 = vmatpush2.bf16.msra.mxu0 %v8126
    %8529 = vmatprep.subr.bf16.mxu0 %v8119
    %8530 = vmatpush2.bf16.msra.mxu0 %v8118
    %8531 = vmatprep.subr.bf16.mxu0 %v8111
    %8532 = vmatpush2.bf16.msra.mxu0 %v8110
    %8533 = vmatprep.subr.bf16.mxu0 %v8103
    %8534 = vmatpush2.bf16.msra.mxu0 %v8102
    %8535 = vmatprep.subr.bf16.mxu0 %v8095
    %8536 = vmatpush2.bf16.msra.mxu0 %v8094
    %8537 = vmatprep.subr.bf16.mxu0 %v8087
    %8538 = vmatpush2.bf16.msra.mxu0 %v8086
    %8539 = vmatprep.subr.bf16.mxu0 %v8079
    %8540 = vmatpush2.bf16.msra.mxu0 %v8078
    %8541 = vmatprep.subr.bf16.mxu0 %v8071
    %8542 = vmatpush2.bf16.msra.mxu0 %v8070
    %8543 = vmatprep.mubr.bf16.mxu0 %v6810
    %8544 = vmatmul.mubr.bf16.gmra.mxu0 %v6809
    %v8545 = vpop.f32.mrf.mxu0
    %v8546 = vadd.f32 %v8505, %v8545
    %v8547 = vpop.f32.mrf.mxu0
    %v8548 = vadd.f32 %v8507, %v8547
    %v8549 = vpop.f32.mrf.mxu0
    %v8550 = vpop.f32.mrf.mxu0
    %8551 = vdwg.mxu0
    %8552 = vmatprep.subr.bf16.mxu0 %v7937
    %8553 = vmatpush1.bf16.msra.mxu0 %v7936
    %8554 = vmatprep.subr.bf16.mxu0 %v7929
    %8555 = vmatpush1.bf16.msra.mxu0 %v7928
    %8556 = vmatprep.subr.bf16.mxu0 %v7921
    %8557 = vmatpush1.bf16.msra.mxu0 %v7920
    %8558 = vmatprep.subr.bf16.mxu0 %v7913
    %8559 = vmatpush1.bf16.msra.mxu0 %v7912
    %8560 = vmatprep.subr.bf16.mxu0 %v7905
    %8561 = vmatpush1.bf16.msra.mxu0 %v7904
    %8562 = vmatprep.subr.bf16.mxu0 %v7897
    %8563 = vmatpush1.bf16.msra.mxu0 %v7896
    %8564 = vmatprep.subr.bf16.mxu0 %v7889
    %8565 = vmatpush1.bf16.msra.mxu0 %v7888
    %8566 = vmatprep.subr.bf16.mxu0 %v7881
    %8567 = vmatpush1.bf16.msra.mxu0 %v7880
    %8568 = vmatprep.subr.bf16.mxu0 %v8001
    %8569 = vmatpush2.bf16.msra.mxu0 %v8000
    %8570 = vmatprep.subr.bf16.mxu0 %v7993
    %8571 = vmatpush2.bf16.msra.mxu0 %v7992
    %8572 = vmatprep.subr.bf16.mxu0 %v7985
    %8573 = vmatpush2.bf16.msra.mxu0 %v7984
    %8574 = vmatprep.subr.bf16.mxu0 %v7977
    %8575 = vmatpush2.bf16.msra.mxu0 %v7976
    %8576 = vmatprep.subr.bf16.mxu0 %v7969
    %8577 = vmatpush2.bf16.msra.mxu0 %v7968
    %8578 = vmatprep.subr.bf16.mxu0 %v7961
    %8579 = vmatpush2.bf16.msra.mxu0 %v7960
    %8580 = vmatprep.subr.bf16.mxu0 %v7953
    %8581 = vmatpush2.bf16.msra.mxu0 %v7952
    %8582 = vmatprep.subr.bf16.mxu0 %v7945
    %8583 = vmatpush2.bf16.msra.mxu0 %v7944
    %8584 = vmatprep.mubr.bf16.mxu0 %v6808
    %8585 = vmatmul.mubr.bf16.gmra.mxu0 %v6807
    %v8586 = vpop.f32.mrf.mxu0
    %v8587 = vadd.f32 %v7087, %v8586
    %v8588 = vpop.f32.mrf.mxu0
    %v8589 = vadd.f32 %v7091, %v8588
    %v8590 = vpop.f32.mrf.mxu0
    %v8591 = vpop.f32.mrf.mxu0
    %8592 = vdwg.mxu0
    %8593 = vmatprep.subr.bf16.mxu0 %v8065
    %8594 = vmatpush1.bf16.msra.mxu0 %v8064
    %8595 = vmatprep.subr.bf16.mxu0 %v8057
    %8596 = vmatpush1.bf16.msra.mxu0 %v8056
    %8597 = vmatprep.subr.bf16.mxu0 %v8049
    %8598 = vmatpush1.bf16.msra.mxu0 %v8048
    %8599 = vmatprep.subr.bf16.mxu0 %v8041
    %8600 = vmatpush1.bf16.msra.mxu0 %v8040
    %8601 = vmatprep.subr.bf16.mxu0 %v8033
    %8602 = vmatpush1.bf16.msra.mxu0 %v8032
    %8603 = vmatprep.subr.bf16.mxu0 %v8025
    %8604 = vmatpush1.bf16.msra.mxu0 %v8024
    %8605 = vmatprep.subr.bf16.mxu0 %v8017
    %8606 = vmatpush1.bf16.msra.mxu0 %v8016
    %8607 = vmatprep.subr.bf16.mxu0 %v8009
    %8608 = vmatpush1.bf16.msra.mxu0 %v8008
    %8609 = vmatprep.subr.bf16.mxu0 %v8129
    %8610 = vmatpush2.bf16.msra.mxu0 %v8128
    %8611 = vmatprep.subr.bf16.mxu0 %v8121
    %8612 = vmatpush2.bf16.msra.mxu0 %v8120
    %8613 = vmatprep.subr.bf16.mxu0 %v8113
    %8614 = vmatpush2.bf16.msra.mxu0 %v8112
    %8615 = vmatprep.subr.bf16.mxu0 %v8105
    %8616 = vmatpush2.bf16.msra.mxu0 %v8104
    %8617 = vmatprep.subr.bf16.mxu0 %v8097
    %8618 = vmatpush2.bf16.msra.mxu0 %v8096
    %8619 = vmatprep.subr.bf16.mxu0 %v8089
    %8620 = vmatpush2.bf16.msra.mxu0 %v8088
    %8621 = vmatprep.subr.bf16.mxu0 %v8081
    %8622 = vmatpush2.bf16.msra.mxu0 %v8080
    %8623 = vmatprep.subr.bf16.mxu0 %v8073
    %8624 = vmatpush2.bf16.msra.mxu0 %v8072
    %8625 = vmatprep.mubr.bf16.mxu0 %v6810
    %8626 = vmatmul.mubr.bf16.gmra.mxu0 %v6809
    %v8627 = vpop.f32.mrf.mxu0
    %v8628 = vadd.f32 %v8587, %v8627
    %v8629 = vpop.f32.mrf.mxu0
    %v8630 = vadd.f32 %v8589, %v8629
    %v8631 = vpop.f32.mrf.mxu0
    %v8632 = vpop.f32.mrf.mxu0
    %8633 = vdwg.mxu0
    %8634 = vmatprep.subr.bf16.mxu0 %v7939
    %8635 = vmatpush1.bf16.msra.mxu0 %v7938
    %8636 = vmatprep.subr.bf16.mxu0 %v7931
    %8637 = vmatpush1.bf16.msra.mxu0 %v7930
    %8638 = vmatprep.subr.bf16.mxu0 %v7923
    %8639 = vmatpush1.bf16.msra.mxu0 %v7922
    %8640 = vmatprep.subr.bf16.mxu0 %v7915
    %8641 = vmatpush1.bf16.msra.mxu0 %v7914
    %8642 = vmatprep.subr.bf16.mxu0 %v7907
    %8643 = vmatpush1.bf16.msra.mxu0 %v7906
    %8644 = vmatprep.subr.bf16.mxu0 %v7899
    %8645 = vmatpush1.bf16.msra.mxu0 %v7898
    %8646 = vmatprep.subr.bf16.mxu0 %v7891
    %8647 = vmatpush1.bf16.msra.mxu0 %v7890
    %8648 = vmatprep.subr.bf16.mxu0 %v7883
    %8649 = vmatpush1.bf16.msra.mxu0 %v7882
    %8650 = vmatprep.subr.bf16.mxu0 %v8003
    %8651 = vmatpush2.bf16.msra.mxu0 %v8002
    %8652 = vmatprep.subr.bf16.mxu0 %v7995
    %8653 = vmatpush2.bf16.msra.mxu0 %v7994
    %8654 = vmatprep.subr.bf16.mxu0 %v7987
    %8655 = vmatpush2.bf16.msra.mxu0 %v7986
    %8656 = vmatprep.subr.bf16.mxu0 %v7979
    %8657 = vmatpush2.bf16.msra.mxu0 %v7978
    %8658 = vmatprep.subr.bf16.mxu0 %v7971
    %8659 = vmatpush2.bf16.msra.mxu0 %v7970
    %8660 = vmatprep.subr.bf16.mxu0 %v7963
    %8661 = vmatpush2.bf16.msra.mxu0 %v7962
    %8662 = vmatprep.subr.bf16.mxu0 %v7955
    %8663 = vmatpush2.bf16.msra.mxu0 %v7954
    %8664 = vmatprep.subr.bf16.mxu0 %v7947
    %8665 = vmatpush2.bf16.msra.mxu0 %v7946
    %8666 = vmatprep.mubr.bf16.mxu0 %v6808
    %8667 = vmatmul.mubr.bf16.gmra.mxu0 %v6807
    %v8668 = vpop.f32.mrf.mxu0
    %v8669 = vadd.f32 %v7095, %v8668
    %v8670 = vpop.f32.mrf.mxu0
    %v8671 = vadd.f32 %v7099, %v8670
    %v8672 = vpop.f32.mrf.mxu0
    %v8673 = vpop.f32.mrf.mxu0
    %8674 = vdwg.mxu0
    %8675 = vmatprep.subr.bf16.mxu0 %v8067
    %8676 = vmatpush1.bf16.msra.mxu0 %v8066
    %8677 = vmatprep.subr.bf16.mxu0 %v8059
    %8678 = vmatpush1.bf16.msra.mxu0 %v8058
    %8679 = vmatprep.subr.bf16.mxu0 %v8051
    %8680 = vmatpush1.bf16.msra.mxu0 %v8050
    %8681 = vmatprep.subr.bf16.mxu0 %v8043
    %8682 = vmatpush1.bf16.msra.mxu0 %v8042
    %8683 = vmatprep.subr.bf16.mxu0 %v8035
    %8684 = vmatpush1.bf16.msra.mxu0 %v8034
    %8685 = vmatprep.subr.bf16.mxu0 %v8027
    %8686 = vmatpush1.bf16.msra.mxu0 %v8026
    %8687 = vmatprep.subr.bf16.mxu0 %v8019
    %8688 = vmatpush1.bf16.msra.mxu0 %v8018
    %8689 = vmatprep.subr.bf16.mxu0 %v8011
    %8690 = vmatpush1.bf16.msra.mxu0 %v8010
    %8691 = vmatprep.subr.bf16.mxu0 %v8131
    %8692 = vmatpush2.bf16.msra.mxu0 %v8130
    %8693 = vmatprep.subr.bf16.mxu0 %v8123
    %8694 = vmatpush2.bf16.msra.mxu0 %v8122
    %8695 = vmatprep.subr.bf16.mxu0 %v8115
    %8696 = vmatpush2.bf16.msra.mxu0 %v8114
    %8697 = vmatprep.subr.bf16.mxu0 %v8107
    %8698 = vmatpush2.bf16.msra.mxu0 %v8106
    %8699 = vmatprep.subr.bf16.mxu0 %v8099
    %8700 = vmatpush2.bf16.msra.mxu0 %v8098
    %8701 = vmatprep.subr.bf16.mxu0 %v8091
    %8702 = vmatpush2.bf16.msra.mxu0 %v8090
    %8703 = vmatprep.subr.bf16.mxu0 %v8083
    %8704 = vmatpush2.bf16.msra.mxu0 %v8082
    %8705 = vmatprep.subr.bf16.mxu0 %v8075
    %8706 = vmatpush2.bf16.msra.mxu0 %v8074
    %8707 = vmatprep.mubr.bf16.mxu0 %v6810
    %8708 = vmatmul.mubr.bf16.gmra.mxu0 %v6809
    %v8709 = vpop.f32.mrf.mxu0
    %v8710 = vadd.f32 %v8669, %v8709
    %v8711 = vpop.f32.mrf.mxu0
    %v8712 = vadd.f32 %v8671, %v8711
    %v8713 = vpop.f32.mrf.mxu0
    %v8714 = vpop.f32.mrf.mxu0
    %8715 = vdwg.mxu0
    %v8716 = vmul.f32 %v8464, 0.5
    %v8717 = vmul.f32 %v8466, 0.5
    %v8718 = vmul.f32 %v8546, 0.5
    %v8719 = vmul.f32 %v8548, 0.5
    %v8720 = vmul.f32 %v8628, 0.5
    %v8721 = vmul.f32 %v8630, 0.5
    %v8722 = vmul.f32 %v8710, 0.5
    %v8723 = vmul.f32 %v8712, 0.5
    %v8724 = vmul.f32 %v8464, 0.70710677
    %v8725 = vmul.f32 %v8466, 0.70710677
    %v8726 = vmul.f32 %v8546, 0.70710677
    %v8727 = vmul.f32 %v8548, 0.70710677
    %v8728 = vmul.f32 %v8628, 0.70710677
    %v8729 = vmul.f32 %v8630, 0.70710677
    %v8730 = vmul.f32 %v8710, 0.70710677
    %v8731 = vmul.f32 %v8712, 0.70710677
    %v8732 = verf.f32.pop %v8724
    %v8733 = verf.f32.pop %v8725
    %v8734 = verf.f32.pop %v8726
    %v8735 = verf.f32.pop %v8727
    %v8736 = verf.f32.pop %v8728
    %v8737 = verf.f32.pop %v8729
    %v8738 = verf.f32.pop %v8730
    %v8739 = verf.f32.pop %v8731
    %v8740 = vadd.f32 %v8732, 1.0
    %v8741 = vadd.f32 %v8733, 1.0
    %v8742 = vadd.f32 %v8734, 1.0
    %v8743 = vadd.f32 %v8735, 1.0
    %v8744 = vadd.f32 %v8736, 1.0
    %v8745 = vadd.f32 %v8737, 1.0
    %v8746 = vadd.f32 %v8738, 1.0
    %v8747 = vadd.f32 %v8739, 1.0
    %v8748 = vmul.f32 %v8716, %v8740
    %v8749 = vmul.f32 %v8717, %v8741
    %v8750 = vmul.f32 %v8718, %v8742
    %v8751 = vmul.f32 %v8719, %v8743
    %v8752 = vmul.f32 %v8720, %v8744
    %v8753 = vmul.f32 %v8721, %v8745
    %v8754 = vmul.f32 %v8722, %v8746
    %v8755 = vmul.f32 %v8723, %v8747
    %v8756 = vld [vmem:[%s1 + $0x3b] sm:$0x1]
    %v8757 = vpack.c.bf16 %v8748, %v8748
    %v8758 = vpack.c.bf16 %v8749, %v8749
    %v8759 = vpack.c.bf16 %v8750, %v8750
    %v8760 = vpack.c.bf16 %v8751, %v8751
    %v8761 = vpack.c.bf16 %v8752, %v8752
    %v8762 = vpack.c.bf16 %v8753, %v8753
    %v8763 = vpack.c.bf16 %v8754, %v8754
    %v8764 = vpack.c.bf16 %v8755, %v8755
    %v8765 = vld [vmem:[%s17] sm:$0xf]
    %v8766 = vld [vmem:[%s17 + $0x4] sm:$0xf]
    %v8767 = vld [vmem:[%s17 + $0x8] sm:$0xf]
    %v8768 = vld [vmem:[%s17 + $0xc] sm:$0xf]
    %v8769 = vld [vmem:[%s17 + $0x10] sm:$0xf]
    %v8770 = vld [vmem:[%s17 + $0x14] sm:$0xf]
    %v8771 = vld [vmem:[%s17 + $0x18] sm:$0xf]
    %v8772 = vld [vmem:[%s17 + $0x1c] sm:$0xf]
    %v8773 = vld [vmem:[%s17 + $0x20] sm:$0xf]
    %v8774 = vld [vmem:[%s17 + $0x24] sm:$0xf]
    %v8775 = vld [vmem:[%s17 + $0x28] sm:$0xf]
    %v8776 = vld [vmem:[%s17 + $0x2c] sm:$0xf]
    %v8777 = vld [vmem:[%s17 + $0x30] sm:$0xf]
    %v8778 = vld [vmem:[%s17 + $0x34] sm:$0xf]
    %v8779 = vld [vmem:[%s17 + $0x38] sm:$0xf]
    %v8780 = vld [vmem:[%s17 + $0x3c] sm:$0xf]
    %v8781 = vld [vmem:[%s17 + $0x40] sm:$0xf]
    %v8782 = vld [vmem:[%s17 + $0x44] sm:$0xf]
    %v8783 = vld [vmem:[%s17 + $0x48] sm:$0xf]
    %v8784 = vld [vmem:[%s17 + $0x4c] sm:$0xf]
    %v8785 = vld [vmem:[%s17 + $0x50] sm:$0xf]
    %v8786 = vld [vmem:[%s17 + $0x54] sm:$0xf]
    %v8787 = vld [vmem:[%s17 + $0x58] sm:$0xf]
    %v8788 = vld [vmem:[%s17 + $0x5c] sm:$0xf]
    %v8789 = vld [vmem:[%s17 + $0x60] sm:$0xf]
    %v8790 = vld [vmem:[%s17 + $0x64] sm:$0xf]
    %v8791 = vld [vmem:[%s17 + $0x68] sm:$0xf]
    %v8792 = vld [vmem:[%s17 + $0x6c] sm:$0xf]
    %v8793 = vld [vmem:[%s17 + $0x70] sm:$0xf]
    %v8794 = vld [vmem:[%s17 + $0x74] sm:$0xf]
    %v8795 = vld [vmem:[%s17 + $0x78] sm:$0xf]
    %v8796 = vld [vmem:[%s17 + $0x7c] sm:$0xf]
    %v8797 = vld [vmem:[%s17 + $0x80] sm:$0xf]
    %v8798 = vld [vmem:[%s17 + $0x84] sm:$0xf]
    %v8799 = vld [vmem:[%s17 + $0x88] sm:$0xf]
    %v8800 = vld [vmem:[%s17 + $0x8c] sm:$0xf]
    %v8801 = vld [vmem:[%s17 + $0x90] sm:$0xf]
    %v8802 = vld [vmem:[%s17 + $0x94] sm:$0xf]
    %v8803 = vld [vmem:[%s17 + $0x98] sm:$0xf]
    %v8804 = vld [vmem:[%s17 + $0x9c] sm:$0xf]
    %v8805 = vld [vmem:[%s17 + $0xa0] sm:$0xf]
    %v8806 = vld [vmem:[%s17 + $0xa4] sm:$0xf]
    %v8807 = vld [vmem:[%s17 + $0xa8] sm:$0xf]
    %v8808 = vld [vmem:[%s17 + $0xac] sm:$0xf]
    %v8809 = vld [vmem:[%s17 + $0xb0] sm:$0xf]
    %v8810 = vld [vmem:[%s17 + $0xb4] sm:$0xf]
    %v8811 = vld [vmem:[%s17 + $0xb8] sm:$0xf]
    %v8812 = vld [vmem:[%s17 + $0xbc] sm:$0xf]
    %v8813 = vld [vmem:[%s17 + $0xc0] sm:$0xf]
    %v8814 = vld [vmem:[%s17 + $0xc4] sm:$0xf]
    %v8815 = vld [vmem:[%s17 + $0xc8] sm:$0xf]
    %v8816 = vld [vmem:[%s17 + $0xcc] sm:$0xf]
    %v8817 = vld [vmem:[%s17 + $0xd0] sm:$0xf]
    %v8818 = vld [vmem:[%s17 + $0xd4] sm:$0xf]
    %v8819 = vld [vmem:[%s17 + $0xd8] sm:$0xf]
    %v8820 = vld [vmem:[%s17 + $0xdc] sm:$0xf]
    %v8821 = vld [vmem:[%s17 + $0xe0] sm:$0xf]
    %v8822 = vld [vmem:[%s17 + $0xe4] sm:$0xf]
    %v8823 = vld [vmem:[%s17 + $0xe8] sm:$0xf]
    %v8824 = vld [vmem:[%s17 + $0xec] sm:$0xf]
    %v8825 = vld [vmem:[%s17 + $0xf0] sm:$0xf]
    %v8826 = vld [vmem:[%s17 + $0xf4] sm:$0xf]
    %v8827 = vld [vmem:[%s17 + $0xf8] sm:$0xf]
    %v8828 = vld [vmem:[%s17 + $0xfc] sm:$0xf]
    %v8829 = vld [vmem:[%s17 + $0x100] sm:$0xf]
    %v8830 = vld [vmem:[%s17 + $0x104] sm:$0xf]
    %v8831 = vld [vmem:[%s17 + $0x108] sm:$0xf]
    %v8832 = vld [vmem:[%s17 + $0x10c] sm:$0xf]
    %v8833 = vld [vmem:[%s17 + $0x110] sm:$0xf]
    %v8834 = vld [vmem:[%s17 + $0x114] sm:$0xf]
    %v8835 = vld [vmem:[%s17 + $0x118] sm:$0xf]
    %v8836 = vld [vmem:[%s17 + $0x11c] sm:$0xf]
    %v8837 = vld [vmem:[%s17 + $0x120] sm:$0xf]
    %v8838 = vld [vmem:[%s17 + $0x124] sm:$0xf]
    %v8839 = vld [vmem:[%s17 + $0x128] sm:$0xf]
    %v8840 = vld [vmem:[%s17 + $0x12c] sm:$0xf]
    %v8841 = vld [vmem:[%s17 + $0x130] sm:$0xf]
    %v8842 = vld [vmem:[%s17 + $0x134] sm:$0xf]
    %v8843 = vld [vmem:[%s17 + $0x138] sm:$0xf]
    %v8844 = vld [vmem:[%s17 + $0x13c] sm:$0xf]
    %v8845 = vld [vmem:[%s17 + $0x140] sm:$0xf]
    %v8846 = vld [vmem:[%s17 + $0x144] sm:$0xf]
    %v8847 = vld [vmem:[%s17 + $0x148] sm:$0xf]
    %v8848 = vld [vmem:[%s17 + $0x14c] sm:$0xf]
    %v8849 = vld [vmem:[%s17 + $0x150] sm:$0xf]
    %v8850 = vld [vmem:[%s17 + $0x154] sm:$0xf]
    %v8851 = vld [vmem:[%s17 + $0x158] sm:$0xf]
    %v8852 = vld [vmem:[%s17 + $0x15c] sm:$0xf]
    %v8853 = vld [vmem:[%s17 + $0x160] sm:$0xf]
    %v8854 = vld [vmem:[%s17 + $0x164] sm:$0xf]
    %v8855 = vld [vmem:[%s17 + $0x168] sm:$0xf]
    %v8856 = vld [vmem:[%s17 + $0x16c] sm:$0xf]
    %v8857 = vld [vmem:[%s17 + $0x170] sm:$0xf]
    %v8858 = vld [vmem:[%s17 + $0x174] sm:$0xf]
    %v8859 = vld [vmem:[%s17 + $0x178] sm:$0xf]
    %v8860 = vld [vmem:[%s17 + $0x17c] sm:$0xf]
    %v8861 = vld [vmem:[%s17 + $0x180] sm:$0xf]
    %v8862 = vld [vmem:[%s17 + $0x184] sm:$0xf]
    %v8863 = vld [vmem:[%s17 + $0x188] sm:$0xf]
    %v8864 = vld [vmem:[%s17 + $0x18c] sm:$0xf]
    %v8865 = vld [vmem:[%s17 + $0x190] sm:$0xf]
    %v8866 = vld [vmem:[%s17 + $0x194] sm:$0xf]
    %v8867 = vld [vmem:[%s17 + $0x198] sm:$0xf]
    %v8868 = vld [vmem:[%s17 + $0x19c] sm:$0xf]
    %v8869 = vld [vmem:[%s17 + $0x1a0] sm:$0xf]
    %v8870 = vld [vmem:[%s17 + $0x1a4] sm:$0xf]
    %v8871 = vld [vmem:[%s17 + $0x1a8] sm:$0xf]
    %v8872 = vld [vmem:[%s17 + $0x1ac] sm:$0xf]
    %v8873 = vld [vmem:[%s17 + $0x1b0] sm:$0xf]
    %v8874 = vld [vmem:[%s17 + $0x1b4] sm:$0xf]
    %v8875 = vld [vmem:[%s17 + $0x1b8] sm:$0xf]
    %v8876 = vld [vmem:[%s17 + $0x1bc] sm:$0xf]
    %v8877 = vld [vmem:[%s17 + $0x1c0] sm:$0xf]
    %v8878 = vld [vmem:[%s17 + $0x1c4] sm:$0xf]
    %v8879 = vld [vmem:[%s17 + $0x1c8] sm:$0xf]
    %v8880 = vld [vmem:[%s17 + $0x1cc] sm:$0xf]
    %v8881 = vld [vmem:[%s17 + $0x1d0] sm:$0xf]
    %v8882 = vld [vmem:[%s17 + $0x1d4] sm:$0xf]
    %v8883 = vld [vmem:[%s17 + $0x1d8] sm:$0xf]
    %v8884 = vld [vmem:[%s17 + $0x1dc] sm:$0xf]
    %v8885 = vld [vmem:[%s17 + $0x1e0] sm:$0xf]
    %v8886 = vld [vmem:[%s17 + $0x1e4] sm:$0xf]
    %v8887 = vld [vmem:[%s17 + $0x1e8] sm:$0xf]
    %v8888 = vld [vmem:[%s17 + $0x1ec] sm:$0xf]
    %v8889 = vld [vmem:[%s17 + $0x1f0] sm:$0xf]
    %v8890 = vld [vmem:[%s17 + $0x1f4] sm:$0xf]
    %v8891 = vld [vmem:[%s17 + $0x1f8] sm:$0xf]
    %v8892 = vld [vmem:[%s17 + $0x1fc] sm:$0xf]
    %v8894 = vlaneseq
    %v8895 = vshrl.u32 %v8894, 7
    %v8896 = vsub.s32 0, %v8895
    %v8897 = vrot.slane %v8756, %v8896
    %v9027 = vunpack.c.l.b16 %v8765
    %v9028 = vunpack.c.l.b16 %v8766
    %v9029 = vunpack.c.l.b16 %v8767
    %v9030 = vunpack.c.l.b16 %v8768
    %v9031 = vunpack.c.l.b16 %v8769
    %v9032 = vunpack.c.l.b16 %v8770
    %v9033 = vunpack.c.l.b16 %v8771
    %v9034 = vunpack.c.l.b16 %v8772
    %v9035 = vunpack.c.l.b16 %v8773
    %v9036 = vunpack.c.l.b16 %v8774
    %v9037 = vunpack.c.l.b16 %v8775
    %v9038 = vunpack.c.l.b16 %v8776
    %v9039 = vunpack.c.l.b16 %v8777
    %v9040 = vunpack.c.l.b16 %v8778
    %v9041 = vunpack.c.l.b16 %v8779
    %v9042 = vunpack.c.l.b16 %v8780
    %v9043 = vunpack.c.l.b16 %v8781
    %v9044 = vunpack.c.l.b16 %v8782
    %v9045 = vunpack.c.l.b16 %v8783
    %v9046 = vunpack.c.l.b16 %v8784
    %v9047 = vunpack.c.l.b16 %v8785
    %v9048 = vunpack.c.l.b16 %v8786
    %v9049 = vunpack.c.l.b16 %v8787
    %v9050 = vunpack.c.l.b16 %v8788
    %v9051 = vunpack.c.l.b16 %v8789
    %v9052 = vunpack.c.l.b16 %v8790
    %v9053 = vunpack.c.l.b16 %v8791
    %v9054 = vunpack.c.l.b16 %v8792
    %v9055 = vunpack.c.l.b16 %v8793
    %v9056 = vunpack.c.l.b16 %v8794
    %v9057 = vunpack.c.l.b16 %v8795
    %v9058 = vunpack.c.l.b16 %v8796
    %v9059 = vunpack.c.l.b16 %v8797
    %v9060 = vunpack.c.l.b16 %v8798
    %v9061 = vunpack.c.l.b16 %v8799
    %v9062 = vunpack.c.l.b16 %v8800
    %v9063 = vunpack.c.l.b16 %v8801
    %v9064 = vunpack.c.l.b16 %v8802
    %v9065 = vunpack.c.l.b16 %v8803
    %v9066 = vunpack.c.l.b16 %v8804
    %v9067 = vunpack.c.l.b16 %v8805
    %v9068 = vunpack.c.l.b16 %v8806
    %v9069 = vunpack.c.l.b16 %v8807
    %v9070 = vunpack.c.l.b16 %v8808
    %v9071 = vunpack.c.l.b16 %v8809
    %v9072 = vunpack.c.l.b16 %v8810
    %v9073 = vunpack.c.l.b16 %v8811
    %v9074 = vunpack.c.l.b16 %v8812
    %v9075 = vunpack.c.l.b16 %v8813
    %v9076 = vunpack.c.l.b16 %v8814
    %v9077 = vunpack.c.l.b16 %v8815
    %v9078 = vunpack.c.l.b16 %v8816
    %v9079 = vunpack.c.l.b16 %v8817
    %v9080 = vunpack.c.l.b16 %v8818
    %v9081 = vunpack.c.l.b16 %v8819
    %v9082 = vunpack.c.l.b16 %v8820
    %v9083 = vunpack.c.l.b16 %v8821
    %v9084 = vunpack.c.l.b16 %v8822
    %v9085 = vunpack.c.l.b16 %v8823
    %v9086 = vunpack.c.l.b16 %v8824
    %v9087 = vunpack.c.l.b16 %v8825
    %v9088 = vunpack.c.l.b16 %v8826
    %v9089 = vunpack.c.l.b16 %v8827
    %v9090 = vunpack.c.l.b16 %v8828
    %v9091 = vunpack.c.l.b16 %v8829
    %v9092 = vunpack.c.l.b16 %v8830
    %v9093 = vunpack.c.l.b16 %v8831
    %v9094 = vunpack.c.l.b16 %v8832
    %v9095 = vunpack.c.l.b16 %v8833
    %v9096 = vunpack.c.l.b16 %v8834
    %v9097 = vunpack.c.l.b16 %v8835
    %v9098 = vunpack.c.l.b16 %v8836
    %v9099 = vunpack.c.l.b16 %v8837
    %v9100 = vunpack.c.l.b16 %v8838
    %v9101 = vunpack.c.l.b16 %v8839
    %v9102 = vunpack.c.l.b16 %v8840
    %v9103 = vunpack.c.l.b16 %v8841
    %v9104 = vunpack.c.l.b16 %v8842
    %v9105 = vunpack.c.l.b16 %v8843
    %v9106 = vunpack.c.l.b16 %v8844
    %v9107 = vunpack.c.l.b16 %v8845
    %v9108 = vunpack.c.l.b16 %v8846
    %v9109 = vunpack.c.l.b16 %v8847
    %v9110 = vunpack.c.l.b16 %v8848
    %v9111 = vunpack.c.l.b16 %v8849
    %v9112 = vunpack.c.l.b16 %v8850
    %v9113 = vunpack.c.l.b16 %v8851
    %v9114 = vunpack.c.l.b16 %v8852
    %v9115 = vunpack.c.l.b16 %v8853
    %v9116 = vunpack.c.l.b16 %v8854
    %v9117 = vunpack.c.l.b16 %v8855
    %v9118 = vunpack.c.l.b16 %v8856
    %v9119 = vunpack.c.l.b16 %v8857
    %v9120 = vunpack.c.l.b16 %v8858
    %v9121 = vunpack.c.l.b16 %v8859
    %v9122 = vunpack.c.l.b16 %v8860
    %v9123 = vunpack.c.l.b16 %v8861
    %v9124 = vunpack.c.l.b16 %v8862
    %v9125 = vunpack.c.l.b16 %v8863
    %v9126 = vunpack.c.l.b16 %v8864
    %v9127 = vunpack.c.l.b16 %v8865
    %v9128 = vunpack.c.l.b16 %v8866
    %v9129 = vunpack.c.l.b16 %v8867
    %v9130 = vunpack.c.l.b16 %v8868
    %v9131 = vunpack.c.l.b16 %v8869
    %v9132 = vunpack.c.l.b16 %v8870
    %v9133 = vunpack.c.l.b16 %v8871
    %v9134 = vunpack.c.l.b16 %v8872
    %v9135 = vunpack.c.l.b16 %v8873
    %v9136 = vunpack.c.l.b16 %v8874
    %v9137 = vunpack.c.l.b16 %v8875
    %v9138 = vunpack.c.l.b16 %v8876
    %v9139 = vunpack.c.l.b16 %v8877
    %v9140 = vunpack.c.l.b16 %v8878
    %v9141 = vunpack.c.l.b16 %v8879
    %v9142 = vunpack.c.l.b16 %v8880
    %v9143 = vunpack.c.l.b16 %v8881
    %v9144 = vunpack.c.l.b16 %v8882
    %v9145 = vunpack.c.l.b16 %v8883
    %v9146 = vunpack.c.l.b16 %v8884
    %v9147 = vunpack.c.l.b16 %v8885
    %v9148 = vunpack.c.l.b16 %v8886
    %v9149 = vunpack.c.l.b16 %v8887
    %v9150 = vunpack.c.l.b16 %v8888
    %v9151 = vunpack.c.l.b16 %v8889
    %v9152 = vunpack.c.l.b16 %v8890
    %v9153 = vunpack.c.l.b16 %v8891
    %v9154 = vunpack.c.l.b16 %v8892
    %v9155 = vpack.c.b16 %v9028, %v9027
    %v9156 = vpack.c.b16 %v9030, %v9029
    %v9157 = vpack.c.b16 %v9032, %v9031
    %v9158 = vpack.c.b16 %v9034, %v9033
    %v9159 = vpack.c.b16 %v9036, %v9035
    %v9160 = vpack.c.b16 %v9038, %v9037
    %v9161 = vpack.c.b16 %v9040, %v9039
    %v9162 = vpack.c.b16 %v9042, %v9041
    %v9163 = vpack.c.b16 %v9044, %v9043
    %v9164 = vpack.c.b16 %v9046, %v9045
    %v9165 = vpack.c.b16 %v9048, %v9047
    %v9166 = vpack.c.b16 %v9050, %v9049
    %v9167 = vpack.c.b16 %v9052, %v9051
    %v9168 = vpack.c.b16 %v9054, %v9053
    %v9169 = vpack.c.b16 %v9056, %v9055
    %v9170 = vpack.c.b16 %v9058, %v9057
    %v9171 = vpack.c.b16 %v9060, %v9059
    %v9172 = vpack.c.b16 %v9062, %v9061
    %v9173 = vpack.c.b16 %v9064, %v9063
    %v9174 = vpack.c.b16 %v9066, %v9065
    %v9175 = vpack.c.b16 %v9068, %v9067
    %v9176 = vpack.c.b16 %v9070, %v9069
    %v9177 = vpack.c.b16 %v9072, %v9071
    %v9178 = vpack.c.b16 %v9074, %v9073
    %v9179 = vpack.c.b16 %v9076, %v9075
    %v9180 = vpack.c.b16 %v9078, %v9077
    %v9181 = vpack.c.b16 %v9080, %v9079
    %v9182 = vpack.c.b16 %v9082, %v9081
    %v9183 = vpack.c.b16 %v9084, %v9083
    %v9184 = vpack.c.b16 %v9086, %v9085
    %v9185 = vpack.c.b16 %v9088, %v9087
    %v9186 = vpack.c.b16 %v9090, %v9089
    %v9187 = vpack.c.b16 %v9092, %v9091
    %v9188 = vpack.c.b16 %v9094, %v9093
    %v9189 = vpack.c.b16 %v9096, %v9095
    %v9190 = vpack.c.b16 %v9098, %v9097
    %v9191 = vpack.c.b16 %v9100, %v9099
    %v9192 = vpack.c.b16 %v9102, %v9101
    %v9193 = vpack.c.b16 %v9104, %v9103
    %v9194 = vpack.c.b16 %v9106, %v9105
    %v9195 = vpack.c.b16 %v9108, %v9107
    %v9196 = vpack.c.b16 %v9110, %v9109
    %v9197 = vpack.c.b16 %v9112, %v9111
    %v9198 = vpack.c.b16 %v9114, %v9113
    %v9199 = vpack.c.b16 %v9116, %v9115
    %v9200 = vpack.c.b16 %v9118, %v9117
    %v9201 = vpack.c.b16 %v9120, %v9119
    %v9202 = vpack.c.b16 %v9122, %v9121
    %v9203 = vpack.c.b16 %v9124, %v9123
    %v9204 = vpack.c.b16 %v9126, %v9125
    %v9205 = vpack.c.b16 %v9128, %v9127
    %v9206 = vpack.c.b16 %v9130, %v9129
    %v9207 = vpack.c.b16 %v9132, %v9131
    %v9208 = vpack.c.b16 %v9134, %v9133
    %v9209 = vpack.c.b16 %v9136, %v9135
    %v9210 = vpack.c.b16 %v9138, %v9137
    %v9211 = vpack.c.b16 %v9140, %v9139
    %v9212 = vpack.c.b16 %v9142, %v9141
    %v9213 = vpack.c.b16 %v9144, %v9143
    %v9214 = vpack.c.b16 %v9146, %v9145
    %v9215 = vpack.c.b16 %v9148, %v9147
    %v9216 = vpack.c.b16 %v9150, %v9149
    %v9217 = vpack.c.b16 %v9152, %v9151
    %v9218 = vpack.c.b16 %v9154, %v9153
    %9283 = vmatprep.subr.bf16.mxu0 0
    %9284 = vmatpush1.bf16.msra.mxu0 %v9162
    %9285 = vmatprep.subr.bf16.mxu0 0
    %9286 = vmatpush1.bf16.msra.mxu0 %v9161
    %9287 = vmatprep.subr.bf16.mxu0 0
    %9288 = vmatpush1.bf16.msra.mxu0 %v9160
    %9289 = vmatprep.subr.bf16.mxu0 0
    %9290 = vmatpush1.bf16.msra.mxu0 %v9159
    %9291 = vmatprep.subr.bf16.mxu0 0
    %9292 = vmatpush1.bf16.msra.mxu0 %v9158
    %9293 = vmatprep.subr.bf16.mxu0 0
    %9294 = vmatpush1.bf16.msra.mxu0 %v9157
    %9295 = vmatprep.subr.bf16.mxu0 0
    %9296 = vmatpush1.bf16.msra.mxu0 %v9156
    %9297 = vmatprep.subr.bf16.mxu0 0
    %9298 = vmatpush1.bf16.msra.mxu0 %v9155
    %9299 = vmatprep.subr.bf16.mxu0 0
    %9300 = vmatpush2.bf16.msra.mxu0 %v9170
    %9301 = vmatprep.subr.bf16.mxu0 0
    %9302 = vmatpush2.bf16.msra.mxu0 %v9169
    %9303 = vmatprep.subr.bf16.mxu0 0
    %9304 = vmatpush2.bf16.msra.mxu0 %v9168
    %9305 = vmatprep.subr.bf16.mxu0 0
    %9306 = vmatpush2.bf16.msra.mxu0 %v9167
    %9307 = vmatprep.subr.bf16.mxu0 0
    %9308 = vmatpush2.bf16.msra.mxu0 %v9166
    %9309 = vmatprep.subr.bf16.mxu0 0
    %9310 = vmatpush2.bf16.msra.mxu0 %v9165
    %9311 = vmatprep.subr.bf16.mxu0 0
    %9312 = vmatpush2.bf16.msra.mxu0 %v9164
    %9313 = vmatprep.subr.bf16.mxu0 0
    %9314 = vmatpush2.bf16.msra.mxu0 %v9163
    %9315 = vmatprep.mubr.bf16.mxu0 %v8758
    %9316 = vmatmul.mubr.bf16.gmra.mxu0 %v8757
    %v9317 = vpop.f32.mrf.mxu0
    %v9318 = vadd.f32 %v8897, %v9317
    %v9319 = vpop.f32.mrf.mxu0
    %v9320 = vpop.f32.mrf.mxu0
    %v9321 = vpop.f32.mrf.mxu0
    %9322 = vdwg.mxu0
    %9323 = vmatprep.subr.bf16.mxu0 0
    %9324 = vmatpush1.bf16.msra.mxu0 %v9178
    %9325 = vmatprep.subr.bf16.mxu0 0
    %9326 = vmatpush1.bf16.msra.mxu0 %v9177
    %9327 = vmatprep.subr.bf16.mxu0 0
    %9328 = vmatpush1.bf16.msra.mxu0 %v9176
    %9329 = vmatprep.subr.bf16.mxu0 0
    %9330 = vmatpush1.bf16.msra.mxu0 %v9175
    %9331 = vmatprep.subr.bf16.mxu0 0
    %9332 = vmatpush1.bf16.msra.mxu0 %v9174
    %9333 = vmatprep.subr.bf16.mxu0 0
    %9334 = vmatpush1.bf16.msra.mxu0 %v9173
    %9335 = vmatprep.subr.bf16.mxu0 0
    %9336 = vmatpush1.bf16.msra.mxu0 %v9172
    %9337 = vmatprep.subr.bf16.mxu0 0
    %9338 = vmatpush1.bf16.msra.mxu0 %v9171
    %9339 = vmatprep.subr.bf16.mxu0 0
    %9340 = vmatpush2.bf16.msra.mxu0 %v9186
    %9341 = vmatprep.subr.bf16.mxu0 0
    %9342 = vmatpush2.bf16.msra.mxu0 %v9185
    %9343 = vmatprep.subr.bf16.mxu0 0
    %9344 = vmatpush2.bf16.msra.mxu0 %v9184
    %9345 = vmatprep.subr.bf16.mxu0 0
    %9346 = vmatpush2.bf16.msra.mxu0 %v9183
    %9347 = vmatprep.subr.bf16.mxu0 0
    %9348 = vmatpush2.bf16.msra.mxu0 %v9182
    %9349 = vmatprep.subr.bf16.mxu0 0
    %9350 = vmatpush2.bf16.msra.mxu0 %v9181
    %9351 = vmatprep.subr.bf16.mxu0 0
    %9352 = vmatpush2.bf16.msra.mxu0 %v9180
    %9353 = vmatprep.subr.bf16.mxu0 0
    %9354 = vmatpush2.bf16.msra.mxu0 %v9179
    %9355 = vmatprep.mubr.bf16.mxu0 %v8760
    %9356 = vmatmul.mubr.bf16.gmra.mxu0 %v8759
    %v9357 = vpop.f32.mrf.mxu0
    %v9358 = vadd.f32 %v9318, %v9357
    %v9359 = vpop.f32.mrf.mxu0
    %v9360 = vpop.f32.mrf.mxu0
    %v9361 = vpop.f32.mrf.mxu0
    %9362 = vdwg.mxu0
    %9363 = vmatprep.subr.bf16.mxu0 0
    %9364 = vmatpush1.bf16.msra.mxu0 %v9194
    %9365 = vmatprep.subr.bf16.mxu0 0
    %9366 = vmatpush1.bf16.msra.mxu0 %v9193
    %9367 = vmatprep.subr.bf16.mxu0 0
    %9368 = vmatpush1.bf16.msra.mxu0 %v9192
    %9369 = vmatprep.subr.bf16.mxu0 0
    %9370 = vmatpush1.bf16.msra.mxu0 %v9191
    %9371 = vmatprep.subr.bf16.mxu0 0
    %9372 = vmatpush1.bf16.msra.mxu0 %v9190
    %9373 = vmatprep.subr.bf16.mxu0 0
    %9374 = vmatpush1.bf16.msra.mxu0 %v9189
    %9375 = vmatprep.subr.bf16.mxu0 0
    %9376 = vmatpush1.bf16.msra.mxu0 %v9188
    %9377 = vmatprep.subr.bf16.mxu0 0
    %9378 = vmatpush1.bf16.msra.mxu0 %v9187
    %9379 = vmatprep.subr.bf16.mxu0 0
    %9380 = vmatpush2.bf16.msra.mxu0 %v9202
    %9381 = vmatprep.subr.bf16.mxu0 0
    %9382 = vmatpush2.bf16.msra.mxu0 %v9201
    %9383 = vmatprep.subr.bf16.mxu0 0
    %9384 = vmatpush2.bf16.msra.mxu0 %v9200
    %9385 = vmatprep.subr.bf16.mxu0 0
    %9386 = vmatpush2.bf16.msra.mxu0 %v9199
    %9387 = vmatprep.subr.bf16.mxu0 0
    %9388 = vmatpush2.bf16.msra.mxu0 %v9198
    %9389 = vmatprep.subr.bf16.mxu0 0
    %9390 = vmatpush2.bf16.msra.mxu0 %v9197
    %9391 = vmatprep.subr.bf16.mxu0 0
    %9392 = vmatpush2.bf16.msra.mxu0 %v9196
    %9393 = vmatprep.subr.bf16.mxu0 0
    %9394 = vmatpush2.bf16.msra.mxu0 %v9195
    %9395 = vmatprep.mubr.bf16.mxu0 %v8762
    %9396 = vmatmul.mubr.bf16.gmra.mxu0 %v8761
    %v9397 = vpop.f32.mrf.mxu0
    %v9398 = vadd.f32 %v9358, %v9397
    %v9399 = vpop.f32.mrf.mxu0
    %v9400 = vpop.f32.mrf.mxu0
    %v9401 = vpop.f32.mrf.mxu0
    %9402 = vdwg.mxu0
    %9403 = vmatprep.subr.bf16.mxu0 0
    %9404 = vmatpush1.bf16.msra.mxu0 %v9210
    %9405 = vmatprep.subr.bf16.mxu0 0
    %9406 = vmatpush1.bf16.msra.mxu0 %v9209
    %9407 = vmatprep.subr.bf16.mxu0 0
    %9408 = vmatpush1.bf16.msra.mxu0 %v9208
    %9409 = vmatprep.subr.bf16.mxu0 0
    %9410 = vmatpush1.bf16.msra.mxu0 %v9207
    %9411 = vmatprep.subr.bf16.mxu0 0
    %9412 = vmatpush1.bf16.msra.mxu0 %v9206
    %9413 = vmatprep.subr.bf16.mxu0 0
    %9414 = vmatpush1.bf16.msra.mxu0 %v9205
    %9415 = vmatprep.subr.bf16.mxu0 0
    %9416 = vmatpush1.bf16.msra.mxu0 %v9204
    %9417 = vmatprep.subr.bf16.mxu0 0
    %9418 = vmatpush1.bf16.msra.mxu0 %v9203
    %9419 = vmatprep.subr.bf16.mxu0 0
    %9420 = vmatpush2.bf16.msra.mxu0 %v9218
    %9421 = vmatprep.subr.bf16.mxu0 0
    %9422 = vmatpush2.bf16.msra.mxu0 %v9217
    %9423 = vmatprep.subr.bf16.mxu0 0
    %9424 = vmatpush2.bf16.msra.mxu0 %v9216
    %9425 = vmatprep.subr.bf16.mxu0 0
    %9426 = vmatpush2.bf16.msra.mxu0 %v9215
    %9427 = vmatprep.subr.bf16.mxu0 0
    %9428 = vmatpush2.bf16.msra.mxu0 %v9214
    %9429 = vmatprep.subr.bf16.mxu0 0
    %9430 = vmatpush2.bf16.msra.mxu0 %v9213
    %9431 = vmatprep.subr.bf16.mxu0 0
    %9432 = vmatpush2.bf16.msra.mxu0 %v9212
    %9433 = vmatprep.subr.bf16.mxu0 0
    %9434 = vmatpush2.bf16.msra.mxu0 %v9211
    %9435 = vmatprep.mubr.bf16.mxu0 %v8764
    %9436 = vmatmul.mubr.bf16.gmra.mxu0 %v8763
    %v9437 = vpop.f32.mrf.mxu0
    %v9438 = vadd.f32 %v9398, %v9437
    %v9439 = vpop.f32.mrf.mxu0
    %v9440 = vpop.f32.mrf.mxu0
    %v9441 = vpop.f32.mrf.mxu0
    %9442 = vdwg.mxu0
    %v9443 = vld [vmem:[%s1 + $0x3c] sm:$0x1]
    %v9444 = vpack.c.bf16 %v9438, %v9438
    %v9445 = vld [vmem:[%s18] sm:$0xf]
    %v9446 = vld [vmem:[%s18 + $0x4] sm:$0xf]
    %v9447 = vld [vmem:[%s18 + $0x8] sm:$0xf]
    %v9448 = vld [vmem:[%s18 + $0xc] sm:$0xf]
    %v9450 = vlaneseq
    %v9451 = vshrl.u32 %v9450, 7
    %v9452 = vsub.s32 0, %v9451
    %v9453 = vrot.slane %v9443, %v9452
    %v9459 = vunpack.c.l.b16 %v9445
    %v9460 = vunpack.c.l.b16 %v9446
    %v9461 = vunpack.c.l.b16 %v9447
    %v9462 = vunpack.c.l.b16 %v9448
    %v9463 = vpack.c.b16 %v9460, %v9459
    %v9464 = vpack.c.b16 %v9462, %v9461
    %v9468 = vsel %vm381, %v9444, 0
    %9470 = vmatprep.subr.bf16.mxu0 0
    %9471 = vmatpush1.bf16.msra.mxu0 0
    %9472 = vmatprep.subr.bf16.mxu0 0
    %9473 = vmatpush1.bf16.msra.mxu0 0
    %9474 = vmatprep.subr.bf16.mxu0 0
    %9475 = vmatpush1.bf16.msra.mxu0 0
    %9476 = vmatprep.subr.bf16.mxu0 0
    %9477 = vmatpush1.bf16.msra.mxu0 0
    %9478 = vmatprep.subr.bf16.mxu0 0
    %9479 = vmatpush1.bf16.msra.mxu0 0
    %9480 = vmatprep.subr.bf16.mxu0 0
    %9481 = vmatpush1.bf16.msra.mxu0 0
    %9482 = vmatprep.subr.bf16.mxu0 0
    %9483 = vmatpush1.bf16.msra.mxu0 %v9464
    %9484 = vmatprep.subr.bf16.mxu0 0
    %9485 = vmatpush1.bf16.msra.mxu0 %v9463
    %9486 = vmatprep.subr.bf16.mxu0 0
    %9487 = vmatpush2.bf16.msra.mxu0 0
    %9488 = vmatprep.subr.bf16.mxu0 0
    %9489 = vmatpush2.bf16.msra.mxu0 0
    %9490 = vmatprep.subr.bf16.mxu0 0
    %9491 = vmatpush2.bf16.msra.mxu0 0
    %9492 = vmatprep.subr.bf16.mxu0 0
    %9493 = vmatpush2.bf16.msra.mxu0 0
    %9494 = vmatprep.subr.bf16.mxu0 0
    %9495 = vmatpush2.bf16.msra.mxu0 0
    %9496 = vmatprep.subr.bf16.mxu0 0
    %9497 = vmatpush2.bf16.msra.mxu0 0
    %9498 = vmatprep.subr.bf16.mxu0 0
    %9499 = vmatpush2.bf16.msra.mxu0 0
    %9500 = vmatprep.subr.bf16.mxu0 0
    %9501 = vmatpush2.bf16.msra.mxu0 0
    %9502 = vmatprep.mubr.bf16.mxu0 0
    %9503 = vmatmul.mubr.bf16.gmra.mxu0 %v9468
    %v9504 = vpop.f32.mrf.mxu0
    %v9505 = vadd.f32 %v9453, %v9504
    %v9506 = vpop.f32.mrf.mxu0
    %v9507 = vpop.f32.mrf.mxu0
    %v9508 = vpop.f32.mrf.mxu0
    %9509 = vdwg.mxu0
    %v9510 = vsel %vm381, %v9505, 0.0
    %9511 = vadd.xlane.f32.xlu0 %v9510
    %v9512 = vpop.xlane.xlu0 %9511
    %v9513 = vrcp.pop 32.0
    %v9514 = vmul.f32 %v9512, %v9513
    %v9515 = vsub.f32 %v9505, %v9514
    %v9516 = vmul.f32 %v9515, %v9515
    %v9517 = vsel %vm381, %v9516, 0.0
    %9518 = vadd.xlane.f32.xlu0 %v9517
    %v9519 = vpop.xlane.xlu0 %9518
    %v9520 = vmul.f32 %v9519, %v9513
    %v9521 = vadd.f32 %v9520, 1e-05
    %v9522 = vrsqrt.pop %v9521
    %v9523 = vmul.f32 %v9515, %v9522
    %v9524 = vld [vmem:[%s1 + $0x3d] sm:$0x1]
    %v9526 = vlaneseq
    %v9527 = vshrl.u32 %v9526, 7
    %v9528 = vsub.s32 0, %v9527
    %v9529 = vrot.slane %v9524, %v9528
    %v9531 = vmul.f32 %v9523, %v9529
    %v9532 = vld [vmem:[%s1 + $0x3e] sm:$0x1]
    %v9534 = vlaneseq
    %v9535 = vshrl.u32 %v9534, 7
    %v9536 = vsub.s32 0, %v9535
    %v9537 = vrot.slane %v9532, %v9536
    %v9539 = vadd.f32 %v9531, %v9537
    %vm9540 = vcmp.ge.f32.partialorder %v9539, 0.0
    %v9541 = vmul.f32 %v9539, 0.01
    %v9542 = vsel %vm9540, %v9539, %v9541
    %v9543 = vld [vmem:[%s1 + $0x3f] sm:$0x1]
    %v9544 = vpack.c.bf16 %v9542, %v9542
    %v9545 = vld [vmem:[#allocation22] sm:$0xf]
    %v9546 = vld [vmem:[#allocation22 + $0x4] sm:$0xf]
    %v9547 = vld [vmem:[#allocation22 + $0x8] sm:$0xf]
    %v9548 = vld [vmem:[#allocation22 + $0xc] sm:$0xf]
    %v9550 = vlaneseq
    %v9551 = vshrl.u32 %v9550, 7
    %v9552 = vsub.s32 0, %v9551
    %v9553 = vrot.slane %v9543, %v9552
    %v9559 = vunpack.c.l.b16 %v9545
    %v9560 = vunpack.c.l.b16 %v9546
    %v9561 = vunpack.c.l.b16 %v9547
    %v9562 = vunpack.c.l.b16 %v9548
    %v9563 = vpack.c.b16 %v9560, %v9559
    %v9564 = vpack.c.b16 %v9562, %v9561
    %v9568 = vsel %vm381, %v9544, 0
    %9570 = vmatprep.subr.bf16.mxu0 0
    %9571 = vmatpush1.bf16.msra.mxu0 0
    %9572 = vmatprep.subr.bf16.mxu0 0
    %9573 = vmatpush1.bf16.msra.mxu0 0
    %9574 = vmatprep.subr.bf16.mxu0 0
    %9575 = vmatpush1.bf16.msra.mxu0 0
    %9576 = vmatprep.subr.bf16.mxu0 0
    %9577 = vmatpush1.bf16.msra.mxu0 0
    %9578 = vmatprep.subr.bf16.mxu0 0
    %9579 = vmatpush1.bf16.msra.mxu0 0
    %9580 = vmatprep.subr.bf16.mxu0 0
    %9581 = vmatpush1.bf16.msra.mxu0 0
    %9582 = vmatprep.subr.bf16.mxu0 0
    %9583 = vmatpush1.bf16.msra.mxu0 %v9564
    %9584 = vmatprep.subr.bf16.mxu0 0
    %9585 = vmatpush1.bf16.msra.mxu0 %v9563
    %9586 = vmatprep.subr.bf16.mxu0 0
    %9587 = vmatpush2.bf16.msra.mxu0 0
    %9588 = vmatprep.subr.bf16.mxu0 0
    %9589 = vmatpush2.bf16.msra.mxu0 0
    %9590 = vmatprep.subr.bf16.mxu0 0
    %9591 = vmatpush2.bf16.msra.mxu0 0
    %9592 = vmatprep.subr.bf16.mxu0 0
    %9593 = vmatpush2.bf16.msra.mxu0 0
    %9594 = vmatprep.subr.bf16.mxu0 0
    %9595 = vmatpush2.bf16.msra.mxu0 0
    %9596 = vmatprep.subr.bf16.mxu0 0
    %9597 = vmatpush2.bf16.msra.mxu0 0
    %9598 = vmatprep.subr.bf16.mxu0 0
    %9599 = vmatpush2.bf16.msra.mxu0 0
    %9600 = vmatprep.subr.bf16.mxu0 0
    %9601 = vmatpush2.bf16.msra.mxu0 0
    %9602 = vmatprep.mubr.bf16.mxu0 0
    %9603 = vmatmul.mubr.bf16.gmra.mxu0 %v9568
    %v9604 = vpop.f32.mrf.mxu0
    %v9605 = vadd.f32 %v9553, %v9604
    %v9606 = vpop.f32.mrf.mxu0
    %v9607 = vpop.f32.mrf.mxu0
    %v9608 = vpop.f32.mrf.mxu0
    %9609 = vdwg.mxu0
    %v9610 = vadd.f32 %v9438, %v9605
    %9611 = vst.msk [vmem:[#allocation23] sm:$0xff] %vm381, %v9610
    // Predicated region
    $region134: #{_lambda_.1} parent=1 // pred_check
      _
    $region135: #{_lambda_.1} parent=1 // pred_check_branch
      %9613 = sbr.rel (0) target = $region137
    $region136: #{_lambda_.1} parent=1 // pred_region
      %s9615 = ssub.s32 128, 128
      %9616 = vsyncadd [#allocation4], %s9615
      %s9618 = sshll.u32 [#allocation23], 4
      %s9619 = int_to_ptr.vmem [resolvable:$true] %s9618
      %9621 = dma.vmem_to_hbm [thread:$0]  %s9619, 128, %s20, [#allocation4]
    $region137: #{_lambda_.1} parent=1 // pred_fallthru
      _
    // Predicated region
    $region138: #{_lambda_.1} parent=1 // pred_check
      _
    $region139: #{_lambda_.1} parent=1 // pred_check_branch
      %9623 = sbr.rel (0) target = $region141
    $region140: #{_lambda_.1} parent=1 // pred_region
      %9624 = dma.done [#allocation4], 128
    $region141: #{_lambda_.1} parent=1 // pred_fallthru
      _
    %9625 = vsyncpa [#allocation3], 1
    %9626 = vsyncpa [#allocation6], 1
    %9627 = vsyncpa [#allocation9], 1
    %9628 = vsyncpa [#allocation12], 1
    %9629 = vsyncpa [#allocation15], 1
    %9630 = vsyncpa [#allocation18], 1
    %9631 = vsyncpa [#allocation21], 1
    %9632 = vsyncpa [#allocation4], 1

</llo_original>
